<compile_context>
chip_gen: v7x
topology: tpu7x:2x2x1
jax: 0.10.0
libtpu: 0.0.40
codegen_flags: <defaults>
</compile_context>

<pallas_src>
import functools

import jax
import jax.numpy as jnp
from jax.experimental import pallas as pl
from jax.experimental.pallas import tpu as pltpu

n_embed = 384
block_size = 256  # causal-mask buffer size in the torch module (T <= block_size)


# --------------------------------------------------------------------------
# Fused multi-head attention kernel: one grid step = one batch element.
# --------------------------------------------------------------------------
def _mha_kernel(x_ref, wq_ref, wk_ref, wv_ref, wp_ref, bp_ref, o_ref,
                *, n_heads, head_size, scale):
    # x_ref: (1, T, C); wq/wk/wv: (C, H*hs) bf16; wp: (H*hs, C) bf16;
    # bp: (1, C) f32; o_ref: (1, T, C)
    x = x_ref[0].astype(jnp.bfloat16)                       # (T, C)
    T = x.shape[0]

    wq = wq_ref[...]                                        # already bf16
    wk = wk_ref[...]
    wv = wv_ref[...]

    # Fused QKV projections (x is read from HBM once, weights resident in VMEM).
    # Scale folded into q (T*hs multiplies instead of T*T after the score matmul).
    q = jnp.dot(x, wq, preferred_element_type=jnp.float32) * scale   # (T, H*hs) f32
    k = jnp.dot(x, wk, preferred_element_type=jnp.float32)           # (T, H*hs) f32
    v = jnp.dot(x, wv, preferred_element_type=jnp.float32)           # (T, H*hs) f32

    # Causal mask (tril), computed once and reused for every head.
    # -inf is safe: every row includes the (finite) diagonal score.
    row = jax.lax.broadcasted_iota(jnp.int32, (T, T), 0)
    col = jax.lax.broadcasted_iota(jnp.int32, (T, T), 1)
    causal = col <= row

    heads = []
    for h in range(n_heads):                                 # static Python loop
        lo, hi = h * head_size, (h + 1) * head_size
        qh = q[:, lo:hi].astype(jnp.bfloat16)                # (T, hs)
        kh = k[:, lo:hi].astype(jnp.bfloat16)                # (T, hs)
        vh = v[:, lo:hi].astype(jnp.bfloat16)                # (T, hs)

        # q @ k^T without materializing a transpose: contract last axes of both.
        s = jax.lax.dot_general(qh, kh, (((1,), (1,)), ((), ())),
                                preferred_element_type=jnp.float32)  # (T, T) f32
        s = jnp.where(causal, s, -jnp.inf)

        # Softmax in f32; approx reciprocal runs on the (otherwise idle) EUP slot.
        s = s - jnp.max(s, axis=-1, keepdims=True)
        p = jnp.exp(s)
        p = p * pl.reciprocal(jnp.sum(p, axis=-1, keepdims=True), approx=True)

        oh = jnp.dot(p.astype(jnp.bfloat16), vh,
                     preferred_element_type=jnp.float32)     # (T, hs) f32
        heads.append(oh)

    # Concatenate heads on the lane axis and apply the output projection + bias.
    o_cat = jnp.concatenate(heads, axis=-1).astype(jnp.bfloat16)     # (T, H*hs)
    out = jnp.dot(o_cat, wp_ref[...], preferred_element_type=jnp.float32) + bp_ref[...]
    o_ref[0] = out.astype(o_ref.dtype)                       # lane-dense (T, C) store


def multi_head_attention(x, params, *, n_heads, head_size):
    """x: (B, T, C=n_embed)  ->  (B, T, n_embed). Fully fused single pallas_call."""
    B, T, C = x.shape
    Hh = n_heads * head_size

    # Cast weights to bf16 once (they feed the MXU as bf16 anyway): halves their
    # HBM->VMEM DMA and removes per-grid-step cast work inside the kernel.
    wq = params["wq"].astype(jnp.bfloat16)
    wk = params["wk"].astype(jnp.bfloat16)
    wv = params["wv"].astype(jnp.bfloat16)
    wp = params["wp"].astype(jnp.bfloat16)
    bp = params["bp"].astype(jnp.float32)

    kern = functools.partial(
        _mha_kernel, n_heads=n_heads, head_size=head_size, scale=float(C) ** -0.5
    )
    return pl.pallas_call(
        kern,
        out_shape=jax.ShapeDtypeStruct((B, T, C), x.dtype),
        grid_spec=pltpu.PrefetchScalarGridSpec(
            num_scalar_prefetch=0,
            grid=(B,),
            in_specs=[
                pl.BlockSpec((1, T, C), lambda b: (b, 0, 0)),   # x: one batch slab
                pl.BlockSpec((C, Hh), lambda b: (0, 0)),        # wq (resident, bf16)
                pl.BlockSpec((C, Hh), lambda b: (0, 0)),        # wk (resident, bf16)
                pl.BlockSpec((C, Hh), lambda b: (0, 0)),        # wv (resident, bf16)
                pl.BlockSpec((Hh, C), lambda b: (0, 0)),        # wp (resident, bf16)
                pl.BlockSpec((1, C), lambda b: (0, 0)),         # bp (resident, f32)
            ],
            out_specs=pl.BlockSpec((1, T, C), lambda b: (b, 0, 0)),
        ),
        compiler_params=pltpu.CompilerParams(
            dimension_semantics=("parallel",),                  # B splits across v7x TCs
        ),
    )(x, wq, wk, wv, wp, bp)


# --------------------------------------------------------------------------
# Pure-JAX f32 reference (for sanity check)
# --------------------------------------------------------------------------
def multi_head_attention_ref(x, params, *, n_heads, head_size):
    B, T, C = x.shape
    q = x @ params["wq"]
    k = x @ params["wk"]
    v = x @ params["wv"]

    def sh(t):
        return t.reshape(B, T, n_heads, head_size).transpose(0, 2, 1, 3)

    qh, kh, vh = sh(q), sh(k), sh(v)
    s = jnp.einsum("bhqd,bhkd->bhqk", qh, kh) * (float(C) ** -0.5)
    mask = jnp.tril(jnp.ones((T, T), bool))
    s = jnp.where(mask, s, -jnp.inf)
    p = jax.nn.softmax(s, axis=-1)
    oh = jnp.einsum("bhqk,bhkd->bhqd", p, vh)
    o = oh.transpose(0, 2, 1, 3).reshape(B, T, n_heads * head_size)
    return o @ params["wp"] + params["bp"]


# --------------------------------------------------------------------------
if __name__ == "__main__":
    n_heads = 6
    head_size = n_embed // n_heads  # 64
    B, T = 2, 128                   # T <= block_size

    key = jax.random.PRNGKey(0)
    kx, kq, kk, kv, kp, kb = jax.random.split(key, 6)

    x = jax.random.normal(kx, (B, T, n_embed), jnp.float32)

    # Per-head Linear(n_embed, head_size, bias=False) weights stored transposed and
    # concatenated over heads: (C, H*hs).  Proj: (H*hs, C) plus bias (1, C).
    s_in = 0.02
    params = {
        "wq": jax.random.normal(kq, (n_embed, n_heads * head_size), jnp.float32) * s_in,
        "wk": jax.random.normal(kk, (n_embed, n_heads * head_size), jnp.float32) * s_in,
        "wv": jax.random.normal(kv, (n_embed, n_heads * head_size), jnp.float32) * s_in,
        "wp": jax.random.normal(kp, (n_heads * head_size, n_embed), jnp.float32) * s_in,
        "bp": jax.random.normal(kb, (1, n_embed), jnp.float32) * s_in,
    }

    fwd = jax.jit(
        functools.partial(multi_head_attention, n_heads=n_heads, head_size=head_size)
    )
    out = jax.block_until_ready(fwd(x, params))

    ref = multi_head_attention_ref(x, params, n_heads=n_heads, head_size=head_size)
    assert out.shape == (B, T, n_embed)
    max_err = float(jnp.max(jnp.abs(out - ref)))
    # bf16 MXU operands + approx reciprocal -> slightly looser tolerance than pure f32.
    assert jnp.allclose(out, ref, atol=2e-2, rtol=2e-2), (
        f"mismatch vs reference (max abs err {max_err:.3e})"
    )

    print("KERNEL_OK")
</pallas_src>

<mosaic_0001>
module attributes {stable_mosaic.version = 11 : i64} {
  func.func @_mha_kernel(%arg0: i32, %arg1: memref<1x128x384xf32, #tpu.memory_space<vmem>>, %arg2: memref<384x384xbf16, #tpu.memory_space<vmem>>, %arg3: memref<384x384xbf16, #tpu.memory_space<vmem>>, %arg4: memref<384x384xbf16, #tpu.memory_space<vmem>>, %arg5: memref<384x384xbf16, #tpu.memory_space<vmem>>, %arg6: memref<1x384xf32, #tpu.memory_space<vmem>>, %arg7: memref<1x128x384xf32, #tpu.memory_space<vmem>>) attributes {dimension_semantics = [#tpu.dimension_semantics<parallel>], iteration_bounds = array<i64: 2>, scalar_prefetch = 0 : i64, scratch_operands = 0 : i64, tpu.core_type = #tpu.core_type<tc>, window_params = [{transform_indices = @transform_0, window_bounds = array<i64: 1, 128, 384>}, {pipeline_mode = #tpu.pipeline_mode<synchronous>, transform_indices = @transform_1, window_bounds = array<i64: 384, 384>}, {pipeline_mode = #tpu.pipeline_mode<synchronous>, transform_indices = @transform_2, window_bounds = array<i64: 384, 384>}, {pipeline_mode = #tpu.pipeline_mode<synchronous>, transform_indices = @transform_3, window_bounds = array<i64: 384, 384>}, {pipeline_mode = #tpu.pipeline_mode<synchronous>, transform_indices = @transform_4, window_bounds = array<i64: 384, 384>}, {pipeline_mode = #tpu.pipeline_mode<synchronous>, transform_indices = @transform_5, window_bounds = array<i64: 1, 384>}, {transform_indices = @transform_6, window_bounds = array<i64: 1, 128, 384>}]} {
    %c0 = arith.constant 0 : index
    %c0_0 = arith.constant 0 : index
    %c0_1 = arith.constant 0 : index
    %0 = vector.load %arg1[%c0, %c0_0, %c0_1] : memref<1x128x384xf32, #tpu.memory_space<vmem>>, vector<1x128x384xf32>
    %1 = vector.shape_cast %0 : vector<1x128x384xf32> to vector<128x384xf32>
    %2 = arith.truncf %1 : vector<128x384xf32> to vector<128x384xbf16>
    %c0_2 = arith.constant 0 : index
    %c0_3 = arith.constant 0 : index
    %3 = vector.load %arg2[%c0_2, %c0_3] : memref<384x384xbf16, #tpu.memory_space<vmem>>, vector<384x384xbf16>
    %c0_4 = arith.constant 0 : index
    %c0_5 = arith.constant 0 : index
    %4 = vector.load %arg3[%c0_4, %c0_5] : memref<384x384xbf16, #tpu.memory_space<vmem>>, vector<384x384xbf16>
    %c0_6 = arith.constant 0 : index
    %c0_7 = arith.constant 0 : index
    %5 = vector.load %arg4[%c0_6, %c0_7] : memref<384x384xbf16, #tpu.memory_space<vmem>>, vector<384x384xbf16>
    %cst = arith.constant dense<0.000000e+00> : vector<128x384xf32>
    %6 = tpu.matmul %2, %3, %cst {dimension_numbers = #tpu.dot_dimension_numbers<[1], [0], [0], [1], [0, 0, 1, 1], [], []>} : vector<128x384xbf16>, vector<384x384xbf16>, vector<128x384xf32> -> vector<128x384xf32>
    %cst_8 = arith.constant 0.0510310382 : f32
    %7 = vector.broadcast %cst_8 : f32 to vector<128x384xf32>
    %8 = arith.mulf %6, %7 : vector<128x384xf32>
    %cst_9 = arith.constant dense<0.000000e+00> : vector<128x384xf32>
    %9 = tpu.matmul %2, %4, %cst_9 {dimension_numbers = #tpu.dot_dimension_numbers<[1], [0], [0], [1], [0, 0, 1, 1], [], []>} : vector<128x384xbf16>, vector<384x384xbf16>, vector<128x384xf32> -> vector<128x384xf32>
    %cst_10 = arith.constant dense<0.000000e+00> : vector<128x384xf32>
    %10 = tpu.matmul %2, %5, %cst_10 {dimension_numbers = #tpu.dot_dimension_numbers<[1], [0], [0], [1], [0, 0, 1, 1], [], []>} : vector<128x384xbf16>, vector<384x384xbf16>, vector<128x384xf32> -> vector<128x384xf32>
    %11 = tpu.iota {dimensions = array<i32: 0>} : vector<128x128xi32>
    %12 = tpu.iota {dimensions = array<i32: 1>} : vector<128x128xi32>
    %13 = arith.cmpi sle, %12, %11 : vector<128x128xi32>
    %14 = vector.extract_strided_slice %8 {offsets = [0, 0], sizes = [128, 64], strides = [1, 1]} : vector<128x384xf32> to vector<128x64xf32>
    %15 = arith.truncf %14 : vector<128x64xf32> to vector<128x64xbf16>
    %16 = vector.extract_strided_slice %9 {offsets = [0, 0], sizes = [128, 64], strides = [1, 1]} : vector<128x384xf32> to vector<128x64xf32>
    %17 = arith.truncf %16 : vector<128x64xf32> to vector<128x64xbf16>
    %18 = vector.extract_strided_slice %10 {offsets = [0, 0], sizes = [128, 64], strides = [1, 1]} : vector<128x384xf32> to vector<128x64xf32>
    %19 = arith.truncf %18 : vector<128x64xf32> to vector<128x64xbf16>
    %cst_11 = arith.constant dense<0.000000e+00> : vector<128x128xf32>
    %20 = tpu.matmul %15, %17, %cst_11 {dimension_numbers = #tpu.dot_dimension_numbers<[1], [1], [0], [0], [0, 0, 1, 0], [], []>} : vector<128x64xbf16>, vector<128x64xbf16>, vector<128x128xf32> -> vector<128x128xf32>
    %cst_12 = arith.constant 0xFF800000 : f32
    %21 = vector.broadcast %cst_12 : f32 to vector<128x128xf32>
    %22 = arith.select %13, %20, %21 : vector<128x128xi1>, vector<128x128xf32>
    %cst_13 = arith.constant dense<0xFF800000> : vector<128xf32>
    %23 = vector.multi_reduction <maximumf>, %22, %cst_13 [1] : vector<128x128xf32> to vector<128xf32>
    %24 = vector.shape_cast %23 : vector<128xf32> to vector<128x1xf32>
    %25 = vector.broadcast %24 : vector<128x1xf32> to vector<128x128xf32>
    %26 = arith.subf %22, %25 : vector<128x128xf32>
    %27 = math.exp %26 : vector<128x128xf32>
    %cst_14 = arith.constant dense<0.000000e+00> : vector<128xf32>
    %28 = vector.multi_reduction <add>, %27, %cst_14 [1] : vector<128x128xf32> to vector<128xf32>
    %29 = vector.shape_cast %28 : vector<128xf32> to vector<128x1xf32>
    %30 = tpu.reciprocal %29 {approx = true} : vector<128x1xf32> -> vector<128x1xf32>
    %31 = vector.broadcast %30 : vector<128x1xf32> to vector<128x128xf32>
    %32 = arith.mulf %27, %31 : vector<128x128xf32>
    %33 = arith.truncf %32 : vector<128x128xf32> to vector<128x128xbf16>
    %cst_15 = arith.constant dense<0.000000e+00> : vector<128x64xf32>
    %34 = tpu.matmul %33, %19, %cst_15 {dimension_numbers = #tpu.dot_dimension_numbers<[1], [0], [0], [1], [0, 0, 1, 1], [], []>} : vector<128x128xbf16>, vector<128x64xbf16>, vector<128x64xf32> -> vector<128x64xf32>
    %35 = vector.extract_strided_slice %8 {offsets = [0, 64], sizes = [128, 64], strides = [1, 1]} : vector<128x384xf32> to vector<128x64xf32>
    %36 = arith.truncf %35 : vector<128x64xf32> to vector<128x64xbf16>
    %37 = vector.extract_strided_slice %9 {offsets = [0, 64], sizes = [128, 64], strides = [1, 1]} : vector<128x384xf32> to vector<128x64xf32>
    %38 = arith.truncf %37 : vector<128x64xf32> to vector<128x64xbf16>
    %39 = vector.extract_strided_slice %10 {offsets = [0, 64], sizes = [128, 64], strides = [1, 1]} : vector<128x384xf32> to vector<128x64xf32>
    %40 = arith.truncf %39 : vector<128x64xf32> to vector<128x64xbf16>
    %cst_16 = arith.constant dense<0.000000e+00> : vector<128x128xf32>
    %41 = tpu.matmul %36, %38, %cst_16 {dimension_numbers = #tpu.dot_dimension_numbers<[1], [1], [0], [0], [0, 0, 1, 0], [], []>} : vector<128x64xbf16>, vector<128x64xbf16>, vector<128x128xf32> -> vector<128x128xf32>
    %cst_17 = arith.constant 0xFF800000 : f32
    %42 = vector.broadcast %cst_17 : f32 to vector<128x128xf32>
    %43 = arith.select %13, %41, %42 : vector<128x128xi1>, vector<128x128xf32>
    %cst_18 = arith.constant dense<0xFF800000> : vector<128xf32>
    %44 = vector.multi_reduction <maximumf>, %43, %cst_18 [1] : vector<128x128xf32> to vector<128xf32>
    %45 = vector.shape_cast %44 : vector<128xf32> to vector<128x1xf32>
    %46 = vector.broadcast %45 : vector<128x1xf32> to vector<128x128xf32>
    %47 = arith.subf %43, %46 : vector<128x128xf32>
    %48 = math.exp %47 : vector<128x128xf32>
    %cst_19 = arith.constant dense<0.000000e+00> : vector<128xf32>
    %49 = vector.multi_reduction <add>, %48, %cst_19 [1] : vector<128x128xf32> to vector<128xf32>
    %50 = vector.shape_cast %49 : vector<128xf32> to vector<128x1xf32>
    %51 = tpu.reciprocal %50 {approx = true} : vector<128x1xf32> -> vector<128x1xf32>
    %52 = vector.broadcast %51 : vector<128x1xf32> to vector<128x128xf32>
    %53 = arith.mulf %48, %52 : vector<128x128xf32>
    %54 = arith.truncf %53 : vector<128x128xf32> to vector<128x128xbf16>
    %cst_20 = arith.constant dense<0.000000e+00> : vector<128x64xf32>
    %55 = tpu.matmul %54, %40, %cst_20 {dimension_numbers = #tpu.dot_dimension_numbers<[1], [0], [0], [1], [0, 0, 1, 1], [], []>} : vector<128x128xbf16>, vector<128x64xbf16>, vector<128x64xf32> -> vector<128x64xf32>
    %56 = vector.extract_strided_slice %8 {offsets = [0, 128], sizes = [128, 64], strides = [1, 1]} : vector<128x384xf32> to vector<128x64xf32>
    %57 = arith.truncf %56 : vector<128x64xf32> to vector<128x64xbf16>
    %58 = vector.extract_strided_slice %9 {offsets = [0, 128], sizes = [128, 64], strides = [1, 1]} : vector<128x384xf32> to vector<128x64xf32>
    %59 = arith.truncf %58 : vector<128x64xf32> to vector<128x64xbf16>
    %60 = vector.extract_strided_slice %10 {offsets = [0, 128], sizes = [128, 64], strides = [1, 1]} : vector<128x384xf32> to vector<128x64xf32>
    %61 = arith.truncf %60 : vector<128x64xf32> to vector<128x64xbf16>
    %cst_21 = arith.constant dense<0.000000e+00> : vector<128x128xf32>
    %62 = tpu.matmul %57, %59, %cst_21 {dimension_numbers = #tpu.dot_dimension_numbers<[1], [1], [0], [0], [0, 0, 1, 0], [], []>} : vector<128x64xbf16>, vector<128x64xbf16>, vector<128x128xf32> -> vector<128x128xf32>
    %cst_22 = arith.constant 0xFF800000 : f32
    %63 = vector.broadcast %cst_22 : f32 to vector<128x128xf32>
    %64 = arith.select %13, %62, %63 : vector<128x128xi1>, vector<128x128xf32>
    %cst_23 = arith.constant dense<0xFF800000> : vector<128xf32>
    %65 = vector.multi_reduction <maximumf>, %64, %cst_23 [1] : vector<128x128xf32> to vector<128xf32>
    %66 = vector.shape_cast %65 : vector<128xf32> to vector<128x1xf32>
    %67 = vector.broadcast %66 : vector<128x1xf32> to vector<128x128xf32>
    %68 = arith.subf %64, %67 : vector<128x128xf32>
    %69 = math.exp %68 : vector<128x128xf32>
    %cst_24 = arith.constant dense<0.000000e+00> : vector<128xf32>
    %70 = vector.multi_reduction <add>, %69, %cst_24 [1] : vector<128x128xf32> to vector<128xf32>
    %71 = vector.shape_cast %70 : vector<128xf32> to vector<128x1xf32>
    %72 = tpu.reciprocal %71 {approx = true} : vector<128x1xf32> -> vector<128x1xf32>
    %73 = vector.broadcast %72 : vector<128x1xf32> to vector<128x128xf32>
    %74 = arith.mulf %69, %73 : vector<128x128xf32>
    %75 = arith.truncf %74 : vector<128x128xf32> to vector<128x128xbf16>
    %cst_25 = arith.constant dense<0.000000e+00> : vector<128x64xf32>
    %76 = tpu.matmul %75, %61, %cst_25 {dimension_numbers = #tpu.dot_dimension_numbers<[1], [0], [0], [1], [0, 0, 1, 1], [], []>} : vector<128x128xbf16>, vector<128x64xbf16>, vector<128x64xf32> -> vector<128x64xf32>
    %77 = vector.extract_strided_slice %8 {offsets = [0, 192], sizes = [128, 64], strides = [1, 1]} : vector<128x384xf32> to vector<128x64xf32>
    %78 = arith.truncf %77 : vector<128x64xf32> to vector<128x64xbf16>
    %79 = vector.extract_strided_slice %9 {offsets = [0, 192], sizes = [128, 64], strides = [1, 1]} : vector<128x384xf32> to vector<128x64xf32>
    %80 = arith.truncf %79 : vector<128x64xf32> to vector<128x64xbf16>
    %81 = vector.extract_strided_slice %10 {offsets = [0, 192], sizes = [128, 64], strides = [1, 1]} : vector<128x384xf32> to vector<128x64xf32>
    %82 = arith.truncf %81 : vector<128x64xf32> to vector<128x64xbf16>
    %cst_26 = arith.constant dense<0.000000e+00> : vector<128x128xf32>
    %83 = tpu.matmul %78, %80, %cst_26 {dimension_numbers = #tpu.dot_dimension_numbers<[1], [1], [0], [0], [0, 0, 1, 0], [], []>} : vector<128x64xbf16>, vector<128x64xbf16>, vector<128x128xf32> -> vector<128x128xf32>
    %cst_27 = arith.constant 0xFF800000 : f32
    %84 = vector.broadcast %cst_27 : f32 to vector<128x128xf32>
    %85 = arith.select %13, %83, %84 : vector<128x128xi1>, vector<128x128xf32>
    %cst_28 = arith.constant dense<0xFF800000> : vector<128xf32>
    %86 = vector.multi_reduction <maximumf>, %85, %cst_28 [1] : vector<128x128xf32> to vector<128xf32>
    %87 = vector.shape_cast %86 : vector<128xf32> to vector<128x1xf32>
    %88 = vector.broadcast %87 : vector<128x1xf32> to vector<128x128xf32>
    %89 = arith.subf %85, %88 : vector<128x128xf32>
    %90 = math.exp %89 : vector<128x128xf32>
    %cst_29 = arith.constant dense<0.000000e+00> : vector<128xf32>
    %91 = vector.multi_reduction <add>, %90, %cst_29 [1] : vector<128x128xf32> to vector<128xf32>
    %92 = vector.shape_cast %91 : vector<128xf32> to vector<128x1xf32>
    %93 = tpu.reciprocal %92 {approx = true} : vector<128x1xf32> -> vector<128x1xf32>
    %94 = vector.broadcast %93 : vector<128x1xf32> to vector<128x128xf32>
    %95 = arith.mulf %90, %94 : vector<128x128xf32>
    %96 = arith.truncf %95 : vector<128x128xf32> to vector<128x128xbf16>
    %cst_30 = arith.constant dense<0.000000e+00> : vector<128x64xf32>
    %97 = tpu.matmul %96, %82, %cst_30 {dimension_numbers = #tpu.dot_dimension_numbers<[1], [0], [0], [1], [0, 0, 1, 1], [], []>} : vector<128x128xbf16>, vector<128x64xbf16>, vector<128x64xf32> -> vector<128x64xf32>
    %98 = vector.extract_strided_slice %8 {offsets = [0, 256], sizes = [128, 64], strides = [1, 1]} : vector<128x384xf32> to vector<128x64xf32>
    %99 = arith.truncf %98 : vector<128x64xf32> to vector<128x64xbf16>
    %100 = vector.extract_strided_slice %9 {offsets = [0, 256], sizes = [128, 64], strides = [1, 1]} : vector<128x384xf32> to vector<128x64xf32>
    %101 = arith.truncf %100 : vector<128x64xf32> to vector<128x64xbf16>
    %102 = vector.extract_strided_slice %10 {offsets = [0, 256], sizes = [128, 64], strides = [1, 1]} : vector<128x384xf32> to vector<128x64xf32>
    %103 = arith.truncf %102 : vector<128x64xf32> to vector<128x64xbf16>
    %cst_31 = arith.constant dense<0.000000e+00> : vector<128x128xf32>
    %104 = tpu.matmul %99, %101, %cst_31 {dimension_numbers = #tpu.dot_dimension_numbers<[1], [1], [0], [0], [0, 0, 1, 0], [], []>} : vector<128x64xbf16>, vector<128x64xbf16>, vector<128x128xf32> -> vector<128x128xf32>
    %cst_32 = arith.constant 0xFF800000 : f32
    %105 = vector.broadcast %cst_32 : f32 to vector<128x128xf32>
    %106 = arith.select %13, %104, %105 : vector<128x128xi1>, vector<128x128xf32>
    %cst_33 = arith.constant dense<0xFF800000> : vector<128xf32>
    %107 = vector.multi_reduction <maximumf>, %106, %cst_33 [1] : vector<128x128xf32> to vector<128xf32>
    %108 = vector.shape_cast %107 : vector<128xf32> to vector<128x1xf32>
    %109 = vector.broadcast %108 : vector<128x1xf32> to vector<128x128xf32>
    %110 = arith.subf %106, %109 : vector<128x128xf32>
    %111 = math.exp %110 : vector<128x128xf32>
    %cst_34 = arith.constant dense<0.000000e+00> : vector<128xf32>
    %112 = vector.multi_reduction <add>, %111, %cst_34 [1] : vector<128x128xf32> to vector<128xf32>
    %113 = vector.shape_cast %112 : vector<128xf32> to vector<128x1xf32>
    %114 = tpu.reciprocal %113 {approx = true} : vector<128x1xf32> -> vector<128x1xf32>
    %115 = vector.broadcast %114 : vector<128x1xf32> to vector<128x128xf32>
    %116 = arith.mulf %111, %115 : vector<128x128xf32>
    %117 = arith.truncf %116 : vector<128x128xf32> to vector<128x128xbf16>
    %cst_35 = arith.constant dense<0.000000e+00> : vector<128x64xf32>
    %118 = tpu.matmul %117, %103, %cst_35 {dimension_numbers = #tpu.dot_dimension_numbers<[1], [0], [0], [1], [0, 0, 1, 1], [], []>} : vector<128x128xbf16>, vector<128x64xbf16>, vector<128x64xf32> -> vector<128x64xf32>
    %119 = vector.extract_strided_slice %8 {offsets = [0, 320], sizes = [128, 64], strides = [1, 1]} : vector<128x384xf32> to vector<128x64xf32>
    %120 = arith.truncf %119 : vector<128x64xf32> to vector<128x64xbf16>
    %121 = vector.extract_strided_slice %9 {offsets = [0, 320], sizes = [128, 64], strides = [1, 1]} : vector<128x384xf32> to vector<128x64xf32>
    %122 = arith.truncf %121 : vector<128x64xf32> to vector<128x64xbf16>
    %123 = vector.extract_strided_slice %10 {offsets = [0, 320], sizes = [128, 64], strides = [1, 1]} : vector<128x384xf32> to vector<128x64xf32>
    %124 = arith.truncf %123 : vector<128x64xf32> to vector<128x64xbf16>
    %cst_36 = arith.constant dense<0.000000e+00> : vector<128x128xf32>
    %125 = tpu.matmul %120, %122, %cst_36 {dimension_numbers = #tpu.dot_dimension_numbers<[1], [1], [0], [0], [0, 0, 1, 0], [], []>} : vector<128x64xbf16>, vector<128x64xbf16>, vector<128x128xf32> -> vector<128x128xf32>
    %cst_37 = arith.constant 0xFF800000 : f32
    %126 = vector.broadcast %cst_37 : f32 to vector<128x128xf32>
    %127 = arith.select %13, %125, %126 : vector<128x128xi1>, vector<128x128xf32>
    %cst_38 = arith.constant dense<0xFF800000> : vector<128xf32>
    %128 = vector.multi_reduction <maximumf>, %127, %cst_38 [1] : vector<128x128xf32> to vector<128xf32>
    %129 = vector.shape_cast %128 : vector<128xf32> to vector<128x1xf32>
    %130 = vector.broadcast %129 : vector<128x1xf32> to vector<128x128xf32>
    %131 = arith.subf %127, %130 : vector<128x128xf32>
    %132 = math.exp %131 : vector<128x128xf32>
    %cst_39 = arith.constant dense<0.000000e+00> : vector<128xf32>
    %133 = vector.multi_reduction <add>, %132, %cst_39 [1] : vector<128x128xf32> to vector<128xf32>
    %134 = vector.shape_cast %133 : vector<128xf32> to vector<128x1xf32>
    %135 = tpu.reciprocal %134 {approx = true} : vector<128x1xf32> -> vector<128x1xf32>
    %136 = vector.broadcast %135 : vector<128x1xf32> to vector<128x128xf32>
    %137 = arith.mulf %132, %136 : vector<128x128xf32>
    %138 = arith.truncf %137 : vector<128x128xf32> to vector<128x128xbf16>
    %cst_40 = arith.constant dense<0.000000e+00> : vector<128x64xf32>
    %139 = tpu.matmul %138, %124, %cst_40 {dimension_numbers = #tpu.dot_dimension_numbers<[1], [0], [0], [1], [0, 0, 1, 1], [], []>} : vector<128x128xbf16>, vector<128x64xbf16>, vector<128x64xf32> -> vector<128x64xf32>
    %140 = tpu.concatenate %34, %55, %76, %97, %118, %139 in 1 : vector<128x64xf32>, vector<128x64xf32>, vector<128x64xf32>, vector<128x64xf32>, vector<128x64xf32>, vector<128x64xf32> -> vector<128x384xf32>
    %141 = arith.truncf %140 : vector<128x384xf32> to vector<128x384xbf16>
    %c0_41 = arith.constant 0 : index
    %c0_42 = arith.constant 0 : index
    %142 = vector.load %arg5[%c0_41, %c0_42] : memref<384x384xbf16, #tpu.memory_space<vmem>>, vector<384x384xbf16>
    %cst_43 = arith.constant dense<0.000000e+00> : vector<128x384xf32>
    %143 = tpu.matmul %141, %142, %cst_43 {dimension_numbers = #tpu.dot_dimension_numbers<[1], [0], [0], [1], [0, 0, 1, 1], [], []>} : vector<128x384xbf16>, vector<384x384xbf16>, vector<128x384xf32> -> vector<128x384xf32>
    %c0_44 = arith.constant 0 : index
    %c0_45 = arith.constant 0 : index
    %144 = vector.load %arg6[%c0_44, %c0_45] : memref<1x384xf32, #tpu.memory_space<vmem>>, vector<1x384xf32>
    %145 = vector.broadcast %144 : vector<1x384xf32> to vector<128x384xf32>
    %146 = arith.addf %143, %145 : vector<128x384xf32>
    %c0_46 = arith.constant 0 : index
    %c0_47 = arith.constant 0 : index
    %c0_48 = arith.constant 0 : index
    %147 = vector.load %arg7[%c0_46, %c0_47, %c0_48] : memref<1x128x384xf32, #tpu.memory_space<vmem>>, vector<1x128x384xf32>
    %148 = vector.shape_cast %147 : vector<1x128x384xf32> to vector<128x384xf32>
    %149 = vector.shape_cast %146 : vector<128x384xf32> to vector<1x128x384xf32>
    tpu.vector_store %arg7[%c0_46, %c0_47, %c0_48], %149 {strides = array<i32>} : memref<1x128x384xf32, #tpu.memory_space<vmem>>, vector<1x128x384xf32>,
    return
  }
  func.func @transform_0(%arg0: i32) -> (i32, i32, i32) {
    %c0_i32 = arith.constant 0 : i32
    %c0_i32_0 = arith.constant 0 : i32
    %c0_i32_1 = arith.constant 0 : i32
    return %arg0, %c0_i32, %c0_i32_0 : i32, i32, i32
  }
  func.func @transform_1(%arg0: i32) -> (i32, i32) {
    %c0_i32 = arith.constant 0 : i32
    %c0_i32_0 = arith.constant 0 : i32
    %c0_i32_1 = arith.constant 0 : i32
    return %c0_i32, %c0_i32_0 : i32, i32
  }
  func.func @transform_2(%arg0: i32) -> (i32, i32) {
    %c0_i32 = arith.constant 0 : i32
    %c0_i32_0 = arith.constant 0 : i32
    %c0_i32_1 = arith.constant 0 : i32
    return %c0_i32, %c0_i32_0 : i32, i32
  }
  func.func @transform_3(%arg0: i32) -> (i32, i32) {
    %c0_i32 = arith.constant 0 : i32
    %c0_i32_0 = arith.constant 0 : i32
    %c0_i32_1 = arith.constant 0 : i32
    return %c0_i32, %c0_i32_0 : i32, i32
  }
  func.func @transform_4(%arg0: i32) -> (i32, i32) {
    %c0_i32 = arith.constant 0 : i32
    %c0_i32_0 = arith.constant 0 : i32
    %c0_i32_1 = arith.constant 0 : i32
    return %c0_i32, %c0_i32_0 : i32, i32
  }
  func.func @transform_5(%arg0: i32) -> (i32, i32) {
    %c0_i32 = arith.constant 0 : i32
    %c0_i32_0 = arith.constant 0 : i32
    %c0_i32_1 = arith.constant 0 : i32
    return %c0_i32, %c0_i32_0 : i32, i32
  }
  func.func @transform_6(%arg0: i32) -> (i32, i32, i32) {
    %c0_i32 = arith.constant 0 : i32
    %c0_i32_0 = arith.constant 0 : i32
    %c0_i32_1 = arith.constant 0 : i32
    return %arg0, %c0_i32, %c0_i32_0 : i32, i32, i32
  }
}

</mosaic_0001>

<llo_original>
// kernel: multi_head_attention.1
$region0: #{multi_head_attention.1}
  #allocation0 [shape = 'u32[]', space=smem, size = 0x4, offset = 0x4, fixed_abs, tag = 'smem constant byte address 0x4 - core index']
  #allocation1 [shape = 'u32[144,128]{1,0:T(1,128)}', space=vmem, size = 0x12000, scoped, tag = 'internal scratch']
  %s0 = inlined_call_operand.vmem [shape: f32[2,128,384], index: 0, kind: input, shape index: {}]
  %s1 = inlined_call_operand.vmem [shape: bf16[384,384], index: 1, kind: input, shape index: {}]
  %s2 = inlined_call_operand.vmem [shape: bf16[384,384], index: 2, kind: input, shape index: {}]
  %s3 = inlined_call_operand.vmem [shape: bf16[384,384], index: 3, kind: input, shape index: {}]
  %s4 = inlined_call_operand.vmem [shape: bf16[384,384], index: 4, kind: input, shape index: {}]
  %s5 = inlined_call_operand.vmem [shape: f32[1,384], index: 5, kind: input, shape index: {}]
  %s6 = inlined_call_operand.hbm [shape: f32[2,128,384], index: 6, kind: output, shape index: {}]
  %s7 = sld [smem:[#allocation0]]
  $region57: #{multi_head_attention.1} parent=0
    _
  %s9 = ssub.s32 1, %s7
  %s10 = scalar_select 0, %s9, %s7
  $region1: #{multi_head_attention.1} parent=0
    #allocation2 [shape = 'u8[393216]{0}', space=vmem, size = 0x60000, scoped, tag = 'output window, operand 0']
    #allocation3 [shape = 's32[2]{0}', space=sflag, size = 0x8, scoped, tag = 'scoped memory for multi_head_attention.1']
    %11 = vsyncpa [#allocation3], 0
    %s12 = scalar_lea.sflag [#allocation3], 1
    %13 = vsyncpa %s12, 0
    loop: start=0, step=1, limit=4
    $region2: #{multi_head_attention.1} parent=1 // loop_pre_header
      _
    $region3: #{multi_head_attention.1} parent=1 // loop_header
      %s15 = sphi 0, %s19
      %p16 = scmp.ge.s32.totalorder %s15, 4
      %s25 = sphi 0, %s27
      %s28 = sphi 0, %s25
      %s29 = sphi 0, %s28
      %s45 = sphi 0, %s29
      %s49 = sphi 0, %s49
      %s51 = sphi 0, %s49
      %s52 = sphi 0, %s51
      %s66 = sphi 0, %s52
      %s70 = sphi 0, %s70
      %s72 = sphi 0, %s70
      %s73 = sphi 0, %s72
      %s87 = sphi 0, %s73
      %s91 = sphi 0, %s91
      %s93 = sphi 0, %s91
      %s94 = sphi 0, %s93
      %s108 = sphi 0, %s94
      %s112 = sphi 0, %s112
      %s114 = sphi 0, %s112
      %s115 = sphi 0, %s114
      %s129 = sphi 0, %s115
      %s133 = sphi 0, %s133
      %s135 = sphi 0, %s133
      %s136 = sphi 0, %s135
      %s150 = sphi 0, %s136
      %s156 = sphi 0, %s158
      %s159 = sphi 0, %s156
      %s160 = sphi 0, %s159
      %s176 = sphi 0, %s160
    $region4: #{multi_head_attention.1} parent=1 // loop_header_branch
      %18 = sbr.rel (%p16) target = $region8
    $region5: #{multi_head_attention.1} parent=1 // loop_body
      %s20 = ssub.s32 %s15, 1
      %s21 = ssub.s32 %s15, 2
      %s22 = sadd.s32 %s15, 1
      %s23 = ssub.s32 %s15, %s22
      %p24 = scmp.eq.s32.totalorder %s23, 0
      %s26 = sadd.s32 %s25, 1
      %s27 = scalar_select %p24, %s25, %s26
      %p30 = pneg %p24
      %p31 = scmp.eq.s32.totalorder %s15, 1
      %p32 = por %p30, %p31
      %p33 = scmp.ne.s32.totalorder %s25, %s28
      %p34 = scmp.eq.s32.totalorder %s15, 0
      %p35 = por %p33, %p34
      %p36 = scmp.ne.s32.totalorder %s25, %s28
      %p37 = scmp.eq.s32.totalorder %s20, 1
      %p38 = por %p36, %p37
      %p39 = scmp.ne.s32.totalorder %s28, %s29
      %p40 = scmp.eq.s32.totalorder %s20, 0
      %p41 = por %p39, %p40
      %p42 = scmp.ne.s32.totalorder %s28, %s29
      %p43 = scmp.eq.s32.totalorder %s21, 1
      %p44 = por %p42, %p43
      %p46 = scmp.ne.s32.totalorder %s29, %s45
      %p47 = scmp.eq.s32.totalorder %s21, 0
      %p48 = por %p46, %p47
      %s50 = sadd.s32 %s49, 1
      %p53 = scmp.eq.s32.totalorder %s15, 1
      %p54 = scmp.ne.s32.totalorder %s49, %s51
      %p55 = scmp.eq.s32.totalorder %s15, 0
      %p56 = por %p54, %p55
      %p57 = scmp.ne.s32.totalorder %s49, %s51
      %p58 = scmp.eq.s32.totalorder %s20, 1
      %p59 = por %p57, %p58
      %p60 = scmp.ne.s32.totalorder %s51, %s52
      %p61 = scmp.eq.s32.totalorder %s20, 0
      %p62 = por %p60, %p61
      %p63 = scmp.ne.s32.totalorder %s51, %s52
      %p64 = scmp.eq.s32.totalorder %s21, 1
      %p65 = por %p63, %p64
      %p67 = scmp.ne.s32.totalorder %s52, %s66
      %p68 = scmp.eq.s32.totalorder %s21, 0
      %p69 = por %p67, %p68
      %s71 = sadd.s32 %s70, 1
      %p74 = scmp.eq.s32.totalorder %s15, 1
      %p75 = scmp.ne.s32.totalorder %s70, %s72
      %p76 = scmp.eq.s32.totalorder %s15, 0
      %p77 = por %p75, %p76
      %p78 = scmp.ne.s32.totalorder %s70, %s72
      %p79 = scmp.eq.s32.totalorder %s20, 1
      %p80 = por %p78, %p79
      %p81 = scmp.ne.s32.totalorder %s72, %s73
      %p82 = scmp.eq.s32.totalorder %s20, 0
      %p83 = por %p81, %p82
      %p84 = scmp.ne.s32.totalorder %s72, %s73
      %p85 = scmp.eq.s32.totalorder %s21, 1
      %p86 = por %p84, %p85
      %p88 = scmp.ne.s32.totalorder %s73, %s87
      %p89 = scmp.eq.s32.totalorder %s21, 0
      %p90 = por %p88, %p89
      %s92 = sadd.s32 %s91, 1
      %p95 = scmp.eq.s32.totalorder %s15, 1
      %p96 = scmp.ne.s32.totalorder %s91, %s93
      %p97 = scmp.eq.s32.totalorder %s15, 0
      %p98 = por %p96, %p97
      %p99 = scmp.ne.s32.totalorder %s91, %s93
      %p100 = scmp.eq.s32.totalorder %s20, 1
      %p101 = por %p99, %p100
      %p102 = scmp.ne.s32.totalorder %s93, %s94
      %p103 = scmp.eq.s32.totalorder %s20, 0
      %p104 = por %p102, %p103
      %p105 = scmp.ne.s32.totalorder %s93, %s94
      %p106 = scmp.eq.s32.totalorder %s21, 1
      %p107 = por %p105, %p106
      %p109 = scmp.ne.s32.totalorder %s94, %s108
      %p110 = scmp.eq.s32.totalorder %s21, 0
      %p111 = por %p109, %p110
      %s113 = sadd.s32 %s112, 1
      %p116 = scmp.eq.s32.totalorder %s15, 1
      %p117 = scmp.ne.s32.totalorder %s112, %s114
      %p118 = scmp.eq.s32.totalorder %s15, 0
      %p119 = por %p117, %p118
      %p120 = scmp.ne.s32.totalorder %s112, %s114
      %p121 = scmp.eq.s32.totalorder %s20, 1
      %p122 = por %p120, %p121
      %p123 = scmp.ne.s32.totalorder %s114, %s115
      %p124 = scmp.eq.s32.totalorder %s20, 0
      %p125 = por %p123, %p124
      %p126 = scmp.ne.s32.totalorder %s114, %s115
      %p127 = scmp.eq.s32.totalorder %s21, 1
      %p128 = por %p126, %p127
      %p130 = scmp.ne.s32.totalorder %s115, %s129
      %p131 = scmp.eq.s32.totalorder %s21, 0
      %p132 = por %p130, %p131
      %s134 = sadd.s32 %s133, 1
      %p137 = scmp.eq.s32.totalorder %s15, 1
      %p138 = scmp.ne.s32.totalorder %s133, %s135
      %p139 = scmp.eq.s32.totalorder %s15, 0
      %p140 = por %p138, %p139
      %p141 = scmp.ne.s32.totalorder %s133, %s135
      %p142 = scmp.eq.s32.totalorder %s20, 1
      %p143 = por %p141, %p142
      %p144 = scmp.ne.s32.totalorder %s135, %s136
      %p145 = scmp.eq.s32.totalorder %s20, 0
      %p146 = por %p144, %p145
      %p147 = scmp.ne.s32.totalorder %s135, %s136
      %p148 = scmp.eq.s32.totalorder %s21, 1
      %p149 = por %p147, %p148
      %p151 = scmp.ne.s32.totalorder %s136, %s150
      %p152 = scmp.eq.s32.totalorder %s21, 0
      %p153 = por %p151, %p152
      %s154 = ssub.s32 %s15, %s22
      %p155 = scmp.eq.s32.totalorder %s154, 0
      %s157 = sadd.s32 %s156, 1
      %s158 = scalar_select %p155, %s156, %s157
      %p161 = pneg %p155
      %p162 = scmp.eq.s32.totalorder %s15, 1
      %p163 = por %p161, %p162
      %p164 = scmp.ne.s32.totalorder %s156, %s159
      %p165 = scmp.eq.s32.totalorder %s15, 0
      %p166 = por %p164, %p165
      %p167 = scmp.ne.s32.totalorder %s156, %s159
      %p168 = scmp.eq.s32.totalorder %s20, 1
      %p169 = por %p167, %p168
      %p170 = scmp.ne.s32.totalorder %s159, %s160
      %p171 = scmp.eq.s32.totalorder %s20, 0
      %p172 = por %p170, %p171
      %p173 = scmp.ne.s32.totalorder %s159, %s160
      %p174 = scmp.eq.s32.totalorder %s21, 1
      %p175 = por %p173, %p174
      %p177 = scmp.ne.s32.totalorder %s160, %s176
      %p178 = scmp.eq.s32.totalorder %s21, 0
      %p179 = por %p177, %p178
      %p180 = scmp.le.s32.totalorder 1, %s15
      %p181 = scmp.lt.s32.totalorder %s15, 3
      %p182 = pnand %p180, %p181
      %p183 = pneg %p182
      // Predicated region
      $region9: #{multi_head_attention.1} parent=5 // pred_check
        _
      $region10: #{multi_head_attention.1} parent=5 // pred_check_branch
        %185 = sbr.rel (%p182) target = $region12
      $region11: #{multi_head_attention.1} parent=5 // pred_region
        %s186 = ssub.s32 %s15, 1
        // Predicated region
        $region13: #{multi_head_attention.1} parent=11 // pred_check
          %p187 = pneg %p62
        $region14: #{multi_head_attention.1} parent=11 // pred_check_branch
          %189 = sbr.rel (%p187) target = $region16
        $region15: #{multi_head_attention.1} parent=11 // pred_region
          _
        $region16: #{multi_head_attention.1} parent=11 // pred_fallthru
          _
        // Predicated region
        $region17: #{multi_head_attention.1} parent=11 // pred_check
          %p190 = pneg %p83
        $region18: #{multi_head_attention.1} parent=11 // pred_check_branch
          %192 = sbr.rel (%p190) target = $region20
        $region19: #{multi_head_attention.1} parent=11 // pred_region
          _
        $region20: #{multi_head_attention.1} parent=11 // pred_fallthru
          _
        // Predicated region
        $region21: #{multi_head_attention.1} parent=11 // pred_check
          %p193 = pneg %p104
        $region22: #{multi_head_attention.1} parent=11 // pred_check_branch
          %195 = sbr.rel (%p193) target = $region24
        $region23: #{multi_head_attention.1} parent=11 // pred_region
          _
        $region24: #{multi_head_attention.1} parent=11 // pred_fallthru
          _
        // Predicated region
        $region25: #{multi_head_attention.1} parent=11 // pred_check
          %p196 = pneg %p125
        $region26: #{multi_head_attention.1} parent=11 // pred_check_branch
          %198 = sbr.rel (%p196) target = $region28
        $region27: #{multi_head_attention.1} parent=11 // pred_region
          _
        $region28: #{multi_head_attention.1} parent=11 // pred_fallthru
          _
        // Predicated region
        $region29: #{multi_head_attention.1} parent=11 // pred_check
          %p199 = pneg %p146
        $region30: #{multi_head_attention.1} parent=11 // pred_check_branch
          %201 = sbr.rel (%p199) target = $region32
        $region31: #{multi_head_attention.1} parent=11 // pred_region
          _
        $region32: #{multi_head_attention.1} parent=11 // pred_fallthru
          _
      $region12: #{multi_head_attention.1} parent=5 // pred_fallthru
        _
      %p202 = scmp.lt.s32.totalorder %s15, 2
      // Predicated region
      $region33: #{multi_head_attention.1} parent=5 // pred_check
        %p203 = pneg %p202
      $region34: #{multi_head_attention.1} parent=5 // pred_check_branch
        %205 = sbr.rel (%p203) target = $region36
      $region35: #{multi_head_attention.1} parent=5 // pred_region
        // Predicated region
        $region37: #{multi_head_attention.1} parent=35 // pred_check
          %p206 = pneg %p35
        $region38: #{multi_head_attention.1} parent=35 // pred_check_branch
          %208 = sbr.rel (%p206) target = $region40
        $region39: #{multi_head_attention.1} parent=35 // pred_region
          %p209 = scmp.lt.s32.totalorder %s15, 1
          %s210 = scalar_select %p209, %s15, 1
          %s211 = smul.addr %s210, 48
          %s212 = smul.addr %s211, 8
          %s213 = scalar_lea.vmem %s0, %s212
        $region40: #{multi_head_attention.1} parent=35 // pred_fallthru
          _
      $region36: #{multi_head_attention.1} parent=5 // pred_fallthru
        _
      %p214 = scmp.le.s32.totalorder 1, %s15
      %p215 = scmp.lt.s32.totalorder %s15, 3
      %p216 = pnand %p214, %p215
      %p217 = pneg %p216
      // Predicated region
      $region41: #{multi_head_attention.1} parent=5 // pred_check
        _
      $region42: #{multi_head_attention.1} parent=5 // pred_check_branch
        %219 = sbr.rel (%p216) target = $region44
      $region43: #{multi_head_attention.1} parent=5 // pred_region
        %s220 = ssub.s32 %s15, 1
        %p221 = scmp.lt.s32.totalorder %s20, 1
        %s222 = scalar_select %p221, %s20, 1
        %s223 = smul.addr %s222, 48
        %s224 = smul.addr %s223, 8
        %s225 = scalar_lea.vmem %s0, %s224
        %p226 = pneg %p41
        %p227 = pneg %p38
        %p228 = pneg %p62
        %p229 = pneg %p59
        %p230 = pneg %p83
        %p231 = pneg %p80
        %p232 = pneg %p104
        %p233 = pneg %p101
        %p234 = pneg %p125
        %p235 = pneg %p122
        %p236 = pneg %p146
        %p237 = pneg %p143
        %p238 = pneg %p172
        %p239 = pneg %p169
        %s240 = sand.u32 %s159, 1
        %s241 = scalar_lea.sflag [#allocation3], %s240
        %s242 = sand.u32 %s159, 1
        %s243 = smul.addr %s242, 384
        %s244 = scalar_lea.vmem [#allocation2], %s243
        %p245 = scmp.lt.s32.totalorder %s20, 1
        %s246 = scalar_select %p245, %s20, 1
        %s247 = smul.addr %s246, 48
        %s248 = smul.addr %s247, 8
        %s249 = scalar_lea.vmem %s0, %s248
        %v251 = vld [vmem:[%s249] sm:$0xff]
        %v252 = vld [vmem:[%s249 + $0x8] sm:$0xff]
        %v253 = vld [vmem:[%s249 + $0x10] sm:$0xff]
        %v254 = vld [vmem:[%s249 + $0x18] sm:$0xff]
        %v255 = vld [vmem:[%s249 + $0x20] sm:$0xff]
        %v256 = vld [vmem:[%s249 + $0x28] sm:$0xff]
        %v257 = vld [vmem:[%s249 + $0x30] sm:$0xff]
        %v258 = vld [vmem:[%s249 + $0x38] sm:$0xff]
        %v259 = vld [vmem:[%s249 + $0x40] sm:$0xff]
        %v260 = vld [vmem:[%s249 + $0x48] sm:$0xff]
        %v261 = vld [vmem:[%s249 + $0x50] sm:$0xff]
        %v262 = vld [vmem:[%s249 + $0x58] sm:$0xff]
        %v263 = vld [vmem:[%s249 + $0x60] sm:$0xff]
        %v264 = vld [vmem:[%s249 + $0x68] sm:$0xff]
        %v265 = vld [vmem:[%s249 + $0x70] sm:$0xff]
        %v266 = vld [vmem:[%s249 + $0x78] sm:$0xff]
        %v267 = vld [vmem:[%s249 + $0x80] sm:$0xff]
        %v268 = vld [vmem:[%s249 + $0x88] sm:$0xff]
        %v269 = vld [vmem:[%s249 + $0x90] sm:$0xff]
        %v270 = vld [vmem:[%s249 + $0x98] sm:$0xff]
        %v271 = vld [vmem:[%s249 + $0xa0] sm:$0xff]
        %v272 = vld [vmem:[%s249 + $0xa8] sm:$0xff]
        %v273 = vld [vmem:[%s249 + $0xb0] sm:$0xff]
        %v274 = vld [vmem:[%s249 + $0xb8] sm:$0xff]
        %v275 = vld [vmem:[%s249 + $0xc0] sm:$0xff]
        %v276 = vld [vmem:[%s249 + $0xc8] sm:$0xff]
        %v277 = vld [vmem:[%s249 + $0xd0] sm:$0xff]
        %v278 = vld [vmem:[%s249 + $0xd8] sm:$0xff]
        %v279 = vld [vmem:[%s249 + $0xe0] sm:$0xff]
        %v280 = vld [vmem:[%s249 + $0xe8] sm:$0xff]
        %v281 = vld [vmem:[%s249 + $0xf0] sm:$0xff]
        %v282 = vld [vmem:[%s249 + $0xf8] sm:$0xff]
        %v283 = vld [vmem:[%s249 + $0x100] sm:$0xff]
        %v284 = vld [vmem:[%s249 + $0x108] sm:$0xff]
        %v285 = vld [vmem:[%s249 + $0x110] sm:$0xff]
        %v286 = vld [vmem:[%s249 + $0x118] sm:$0xff]
        %v287 = vld [vmem:[%s249 + $0x120] sm:$0xff]
        %v288 = vld [vmem:[%s249 + $0x128] sm:$0xff]
        %v289 = vld [vmem:[%s249 + $0x130] sm:$0xff]
        %v290 = vld [vmem:[%s249 + $0x138] sm:$0xff]
        %v291 = vld [vmem:[%s249 + $0x140] sm:$0xff]
        %v292 = vld [vmem:[%s249 + $0x148] sm:$0xff]
        %v293 = vld [vmem:[%s249 + $0x150] sm:$0xff]
        %v294 = vld [vmem:[%s249 + $0x158] sm:$0xff]
        %v295 = vld [vmem:[%s249 + $0x160] sm:$0xff]
        %v296 = vld [vmem:[%s249 + $0x168] sm:$0xff]
        %v297 = vld [vmem:[%s249 + $0x170] sm:$0xff]
        %v298 = vld [vmem:[%s249 + $0x178] sm:$0xff]
        %v299 = vpack.c.bf16 %v254, %v251
        %v300 = vpack.c.bf16 %v255, %v252
        %v301 = vpack.c.bf16 %v256, %v253
        %v302 = vpack.c.bf16 %v260, %v257
        %v303 = vpack.c.bf16 %v261, %v258
        %v304 = vpack.c.bf16 %v262, %v259
        %v305 = vpack.c.bf16 %v266, %v263
        %v306 = vpack.c.bf16 %v267, %v264
        %v307 = vpack.c.bf16 %v268, %v265
        %v308 = vpack.c.bf16 %v272, %v269
        %v309 = vpack.c.bf16 %v273, %v270
        %v310 = vpack.c.bf16 %v274, %v271
        %v311 = vpack.c.bf16 %v278, %v275
        %v312 = vpack.c.bf16 %v279, %v276
        %v313 = vpack.c.bf16 %v280, %v277
        %v314 = vpack.c.bf16 %v284, %v281
        %v315 = vpack.c.bf16 %v285, %v282
        %v316 = vpack.c.bf16 %v286, %v283
        %v317 = vpack.c.bf16 %v290, %v287
        %v318 = vpack.c.bf16 %v291, %v288
        %v319 = vpack.c.bf16 %v292, %v289
        %v320 = vpack.c.bf16 %v296, %v293
        %v321 = vpack.c.bf16 %v297, %v294
        %v322 = vpack.c.bf16 %v298, %v295
        %v323 = vld [vmem:[%s1] sm:$0xff]
        %v324 = vld [vmem:[%s1 + $0x8] sm:$0xf]
        %v325 = vld [vmem:[%s1 + $0xc] sm:$0xff]
        %v326 = vld [vmem:[%s1 + $0x14] sm:$0xf]
        %v327 = vld [vmem:[%s1 + $0x18] sm:$0xff]
        %v328 = vld [vmem:[%s1 + $0x20] sm:$0xf]
        %v329 = vld [vmem:[%s1 + $0x24] sm:$0xff]
        %v330 = vld [vmem:[%s1 + $0x2c] sm:$0xf]
        %v331 = vld [vmem:[%s1 + $0x30] sm:$0xff]
        %v332 = vld [vmem:[%s1 + $0x38] sm:$0xf]
        %v333 = vld [vmem:[%s1 + $0x3c] sm:$0xff]
        %v334 = vld [vmem:[%s1 + $0x44] sm:$0xf]
        %v335 = vld [vmem:[%s1 + $0x48] sm:$0xff]
        %v336 = vld [vmem:[%s1 + $0x50] sm:$0xf]
        %v337 = vld [vmem:[%s1 + $0x54] sm:$0xff]
        %v338 = vld [vmem:[%s1 + $0x5c] sm:$0xf]
        %v339 = vld [vmem:[%s1 + $0x60] sm:$0xff]
        %v340 = vld [vmem:[%s1 + $0x68] sm:$0xf]
        %v341 = vld [vmem:[%s1 + $0x6c] sm:$0xff]
        %v342 = vld [vmem:[%s1 + $0x74] sm:$0xf]
        %v343 = vld [vmem:[%s1 + $0x78] sm:$0xff]
        %v344 = vld [vmem:[%s1 + $0x80] sm:$0xf]
        %v345 = vld [vmem:[%s1 + $0x84] sm:$0xff]
        %v346 = vld [vmem:[%s1 + $0x8c] sm:$0xf]
        %v347 = vld [vmem:[%s1 + $0x90] sm:$0xff]
        %v348 = vld [vmem:[%s1 + $0x98] sm:$0xf]
        %v349 = vld [vmem:[%s1 + $0x9c] sm:$0xff]
        %v350 = vld [vmem:[%s1 + $0xa4] sm:$0xf]
        %v351 = vld [vmem:[%s1 + $0xa8] sm:$0xff]
        %v352 = vld [vmem:[%s1 + $0xb0] sm:$0xf]
        %v353 = vld [vmem:[%s1 + $0xb4] sm:$0xff]
        %v354 = vld [vmem:[%s1 + $0xbc] sm:$0xf]
        %v355 = vld [vmem:[%s1 + $0xc0] sm:$0xff]
        %v356 = vld [vmem:[%s1 + $0xc8] sm:$0xf]
        %v357 = vld [vmem:[%s1 + $0xcc] sm:$0xff]
        %v358 = vld [vmem:[%s1 + $0xd4] sm:$0xf]
        %v359 = vld [vmem:[%s1 + $0xd8] sm:$0xff]
        %v360 = vld [vmem:[%s1 + $0xe0] sm:$0xf]
        %v361 = vld [vmem:[%s1 + $0xe4] sm:$0xff]
        %v362 = vld [vmem:[%s1 + $0xec] sm:$0xf]
        %v363 = vld [vmem:[%s1 + $0xf0] sm:$0xff]
        %v364 = vld [vmem:[%s1 + $0xf8] sm:$0xf]
        %v365 = vld [vmem:[%s1 + $0xfc] sm:$0xff]
        %v366 = vld [vmem:[%s1 + $0x104] sm:$0xf]
        %v367 = vld [vmem:[%s1 + $0x108] sm:$0xff]
        %v368 = vld [vmem:[%s1 + $0x110] sm:$0xf]
        %v369 = vld [vmem:[%s1 + $0x114] sm:$0xff]
        %v370 = vld [vmem:[%s1 + $0x11c] sm:$0xf]
        %v371 = vld [vmem:[%s1 + $0x120] sm:$0xff]
        %v372 = vld [vmem:[%s1 + $0x128] sm:$0xf]
        %v373 = vld [vmem:[%s1 + $0x12c] sm:$0xff]
        %v374 = vld [vmem:[%s1 + $0x134] sm:$0xf]
        %v375 = vld [vmem:[%s1 + $0x138] sm:$0xff]
        %v376 = vld [vmem:[%s1 + $0x140] sm:$0xf]
        %v377 = vld [vmem:[%s1 + $0x144] sm:$0xff]
        %v378 = vld [vmem:[%s1 + $0x14c] sm:$0xf]
        %v379 = vld [vmem:[%s1 + $0x150] sm:$0xff]
        %v380 = vld [vmem:[%s1 + $0x158] sm:$0xf]
        %v381 = vld [vmem:[%s1 + $0x15c] sm:$0xff]
        %v382 = vld [vmem:[%s1 + $0x164] sm:$0xf]
        %v383 = vld [vmem:[%s1 + $0x168] sm:$0xff]
        %v384 = vld [vmem:[%s1 + $0x170] sm:$0xf]
        %v385 = vld [vmem:[%s1 + $0x174] sm:$0xff]
        %v386 = vld [vmem:[%s1 + $0x17c] sm:$0xf]
        %v387 = vld [vmem:[%s1 + $0x180] sm:$0xff]
        %v388 = vld [vmem:[%s1 + $0x188] sm:$0xf]
        %v389 = vld [vmem:[%s1 + $0x18c] sm:$0xff]
        %v390 = vld [vmem:[%s1 + $0x194] sm:$0xf]
        %v391 = vld [vmem:[%s1 + $0x198] sm:$0xff]
        %v392 = vld [vmem:[%s1 + $0x1a0] sm:$0xf]
        %v393 = vld [vmem:[%s1 + $0x1a4] sm:$0xff]
        %v394 = vld [vmem:[%s1 + $0x1ac] sm:$0xf]
        %v395 = vld [vmem:[%s1 + $0x1b0] sm:$0xff]
        %v396 = vld [vmem:[%s1 + $0x1b8] sm:$0xf]
        %v397 = vld [vmem:[%s1 + $0x1bc] sm:$0xff]
        %v398 = vld [vmem:[%s1 + $0x1c4] sm:$0xf]
        %v399 = vld [vmem:[%s1 + $0x1c8] sm:$0xff]
        %v400 = vld [vmem:[%s1 + $0x1d0] sm:$0xf]
        %v401 = vld [vmem:[%s1 + $0x1d4] sm:$0xff]
        %v402 = vld [vmem:[%s1 + $0x1dc] sm:$0xf]
        %v403 = vld [vmem:[%s1 + $0x1e0] sm:$0xff]
        %v404 = vld [vmem:[%s1 + $0x1e8] sm:$0xf]
        %v405 = vld [vmem:[%s1 + $0x1ec] sm:$0xff]
        %v406 = vld [vmem:[%s1 + $0x1f4] sm:$0xf]
        %v407 = vld [vmem:[%s1 + $0x1f8] sm:$0xff]
        %v408 = vld [vmem:[%s1 + $0x200] sm:$0xf]
        %v409 = vld [vmem:[%s1 + $0x204] sm:$0xff]
        %v410 = vld [vmem:[%s1 + $0x20c] sm:$0xf]
        %v411 = vld [vmem:[%s1 + $0x210] sm:$0xff]
        %v412 = vld [vmem:[%s1 + $0x218] sm:$0xf]
        %v413 = vld [vmem:[%s1 + $0x21c] sm:$0xff]
        %v414 = vld [vmem:[%s1 + $0x224] sm:$0xf]
        %v415 = vld [vmem:[%s1 + $0x228] sm:$0xff]
        %v416 = vld [vmem:[%s1 + $0x230] sm:$0xf]
        %v417 = vld [vmem:[%s1 + $0x234] sm:$0xff]
        %v418 = vld [vmem:[%s1 + $0x23c] sm:$0xf]
        %v419 = vld [vmem:[%s2] sm:$0xff]
        %v420 = vld [vmem:[%s2 + $0x8] sm:$0xf]
        %v421 = vld [vmem:[%s2 + $0xc] sm:$0xff]
        %v422 = vld [vmem:[%s2 + $0x14] sm:$0xf]
        %v423 = vld [vmem:[%s2 + $0x18] sm:$0xff]
        %v424 = vld [vmem:[%s2 + $0x20] sm:$0xf]
        %v425 = vld [vmem:[%s2 + $0x24] sm:$0xff]
        %v426 = vld [vmem:[%s2 + $0x2c] sm:$0xf]
        %v427 = vld [vmem:[%s2 + $0x30] sm:$0xff]
        %v428 = vld [vmem:[%s2 + $0x38] sm:$0xf]
        %v429 = vld [vmem:[%s2 + $0x3c] sm:$0xff]
        %v430 = vld [vmem:[%s2 + $0x44] sm:$0xf]
        %v431 = vld [vmem:[%s2 + $0x48] sm:$0xff]
        %v432 = vld [vmem:[%s2 + $0x50] sm:$0xf]
        %v433 = vld [vmem:[%s2 + $0x54] sm:$0xff]
        %v434 = vld [vmem:[%s2 + $0x5c] sm:$0xf]
        %v435 = vld [vmem:[%s2 + $0x60] sm:$0xff]
        %v436 = vld [vmem:[%s2 + $0x68] sm:$0xf]
        %v437 = vld [vmem:[%s2 + $0x6c] sm:$0xff]
        %v438 = vld [vmem:[%s2 + $0x74] sm:$0xf]
        %v439 = vld [vmem:[%s2 + $0x78] sm:$0xff]
        %v440 = vld [vmem:[%s2 + $0x80] sm:$0xf]
        %v441 = vld [vmem:[%s2 + $0x84] sm:$0xff]
        %v442 = vld [vmem:[%s2 + $0x8c] sm:$0xf]
        %v443 = vld [vmem:[%s2 + $0x90] sm:$0xff]
        %v444 = vld [vmem:[%s2 + $0x98] sm:$0xf]
        %v445 = vld [vmem:[%s2 + $0x9c] sm:$0xff]
        %v446 = vld [vmem:[%s2 + $0xa4] sm:$0xf]
        %v447 = vld [vmem:[%s2 + $0xa8] sm:$0xff]
        %v448 = vld [vmem:[%s2 + $0xb0] sm:$0xf]
        %v449 = vld [vmem:[%s2 + $0xb4] sm:$0xff]
        %v450 = vld [vmem:[%s2 + $0xbc] sm:$0xf]
        %v451 = vld [vmem:[%s2 + $0xc0] sm:$0xff]
        %v452 = vld [vmem:[%s2 + $0xc8] sm:$0xf]
        %v453 = vld [vmem:[%s2 + $0xcc] sm:$0xff]
        %v454 = vld [vmem:[%s2 + $0xd4] sm:$0xf]
        %v455 = vld [vmem:[%s2 + $0xd8] sm:$0xff]
        %v456 = vld [vmem:[%s2 + $0xe0] sm:$0xf]
        %v457 = vld [vmem:[%s2 + $0xe4] sm:$0xff]
        %v458 = vld [vmem:[%s2 + $0xec] sm:$0xf]
        %v459 = vld [vmem:[%s2 + $0xf0] sm:$0xff]
        %v460 = vld [vmem:[%s2 + $0xf8] sm:$0xf]
        %v461 = vld [vmem:[%s2 + $0xfc] sm:$0xff]
        %v462 = vld [vmem:[%s2 + $0x104] sm:$0xf]
        %v463 = vld [vmem:[%s2 + $0x108] sm:$0xff]
        %v464 = vld [vmem:[%s2 + $0x110] sm:$0xf]
        %v465 = vld [vmem:[%s2 + $0x114] sm:$0xff]
        %v466 = vld [vmem:[%s2 + $0x11c] sm:$0xf]
        %v467 = vld [vmem:[%s2 + $0x120] sm:$0xff]
        %v468 = vld [vmem:[%s2 + $0x128] sm:$0xf]
        %v469 = vld [vmem:[%s2 + $0x12c] sm:$0xff]
        %v470 = vld [vmem:[%s2 + $0x134] sm:$0xf]
        %v471 = vld [vmem:[%s2 + $0x138] sm:$0xff]
        %v472 = vld [vmem:[%s2 + $0x140] sm:$0xf]
        %v473 = vld [vmem:[%s2 + $0x144] sm:$0xff]
        %v474 = vld [vmem:[%s2 + $0x14c] sm:$0xf]
        %v475 = vld [vmem:[%s2 + $0x150] sm:$0xff]
        %v476 = vld [vmem:[%s2 + $0x158] sm:$0xf]
        %v477 = vld [vmem:[%s2 + $0x15c] sm:$0xff]
        %v478 = vld [vmem:[%s2 + $0x164] sm:$0xf]
        %v479 = vld [vmem:[%s2 + $0x168] sm:$0xff]
        %v480 = vld [vmem:[%s2 + $0x170] sm:$0xf]
        %v481 = vld [vmem:[%s2 + $0x174] sm:$0xff]
        %v482 = vld [vmem:[%s2 + $0x17c] sm:$0xf]
        %v483 = vld [vmem:[%s2 + $0x180] sm:$0xff]
        %v484 = vld [vmem:[%s2 + $0x188] sm:$0xf]
        %v485 = vld [vmem:[%s2 + $0x18c] sm:$0xff]
        %v486 = vld [vmem:[%s2 + $0x194] sm:$0xf]
        %v487 = vld [vmem:[%s2 + $0x198] sm:$0xff]
        %v488 = vld [vmem:[%s2 + $0x1a0] sm:$0xf]
        %v489 = vld [vmem:[%s2 + $0x1a4] sm:$0xff]
        %v490 = vld [vmem:[%s2 + $0x1ac] sm:$0xf]
        %v491 = vld [vmem:[%s2 + $0x1b0] sm:$0xff]
        %v492 = vld [vmem:[%s2 + $0x1b8] sm:$0xf]
        %v493 = vld [vmem:[%s2 + $0x1bc] sm:$0xff]
        %v494 = vld [vmem:[%s2 + $0x1c4] sm:$0xf]
        %v495 = vld [vmem:[%s2 + $0x1c8] sm:$0xff]
        %v496 = vld [vmem:[%s2 + $0x1d0] sm:$0xf]
        %v497 = vld [vmem:[%s2 + $0x1d4] sm:$0xff]
        %v498 = vld [vmem:[%s2 + $0x1dc] sm:$0xf]
        %v499 = vld [vmem:[%s2 + $0x1e0] sm:$0xff]
        %v500 = vld [vmem:[%s2 + $0x1e8] sm:$0xf]
        %v501 = vld [vmem:[%s2 + $0x1ec] sm:$0xff]
        %v502 = vld [vmem:[%s2 + $0x1f4] sm:$0xf]
        %v503 = vld [vmem:[%s2 + $0x1f8] sm:$0xff]
        %v504 = vld [vmem:[%s2 + $0x200] sm:$0xf]
        %v505 = vld [vmem:[%s2 + $0x204] sm:$0xff]
        %v506 = vld [vmem:[%s2 + $0x20c] sm:$0xf]
        %v507 = vld [vmem:[%s2 + $0x210] sm:$0xff]
        %v508 = vld [vmem:[%s2 + $0x218] sm:$0xf]
        %v509 = vld [vmem:[%s2 + $0x21c] sm:$0xff]
        %v510 = vld [vmem:[%s2 + $0x224] sm:$0xf]
        %v511 = vld [vmem:[%s2 + $0x228] sm:$0xff]
        %v512 = vld [vmem:[%s2 + $0x230] sm:$0xf]
        %v513 = vld [vmem:[%s2 + $0x234] sm:$0xff]
        %v514 = vld [vmem:[%s2 + $0x23c] sm:$0xf]
        %v515 = vld [vmem:[%s3] sm:$0xff]
        %v516 = vld [vmem:[%s3 + $0x8] sm:$0xf]
        %v517 = vld [vmem:[%s3 + $0xc] sm:$0xff]
        %v518 = vld [vmem:[%s3 + $0x14] sm:$0xf]
        %v519 = vld [vmem:[%s3 + $0x18] sm:$0xff]
        %v520 = vld [vmem:[%s3 + $0x20] sm:$0xf]
        %v521 = vld [vmem:[%s3 + $0x24] sm:$0xff]
        %v522 = vld [vmem:[%s3 + $0x2c] sm:$0xf]
        %v523 = vld [vmem:[%s3 + $0x30] sm:$0xff]
        %v524 = vld [vmem:[%s3 + $0x38] sm:$0xf]
        %v525 = vld [vmem:[%s3 + $0x3c] sm:$0xff]
        %v526 = vld [vmem:[%s3 + $0x44] sm:$0xf]
        %v527 = vld [vmem:[%s3 + $0x48] sm:$0xff]
        %v528 = vld [vmem:[%s3 + $0x50] sm:$0xf]
        %v529 = vld [vmem:[%s3 + $0x54] sm:$0xff]
        %v530 = vld [vmem:[%s3 + $0x5c] sm:$0xf]
        %v531 = vld [vmem:[%s3 + $0x60] sm:$0xff]
        %v532 = vld [vmem:[%s3 + $0x68] sm:$0xf]
        %v533 = vld [vmem:[%s3 + $0x6c] sm:$0xff]
        %v534 = vld [vmem:[%s3 + $0x74] sm:$0xf]
        %v535 = vld [vmem:[%s3 + $0x78] sm:$0xff]
        %v536 = vld [vmem:[%s3 + $0x80] sm:$0xf]
        %v537 = vld [vmem:[%s3 + $0x84] sm:$0xff]
        %v538 = vld [vmem:[%s3 + $0x8c] sm:$0xf]
        %v539 = vld [vmem:[%s3 + $0x90] sm:$0xff]
        %v540 = vld [vmem:[%s3 + $0x98] sm:$0xf]
        %v541 = vld [vmem:[%s3 + $0x9c] sm:$0xff]
        %v542 = vld [vmem:[%s3 + $0xa4] sm:$0xf]
        %v543 = vld [vmem:[%s3 + $0xa8] sm:$0xff]
        %v544 = vld [vmem:[%s3 + $0xb0] sm:$0xf]
        %v545 = vld [vmem:[%s3 + $0xb4] sm:$0xff]
        %v546 = vld [vmem:[%s3 + $0xbc] sm:$0xf]
        %v547 = vld [vmem:[%s3 + $0xc0] sm:$0xff]
        %v548 = vld [vmem:[%s3 + $0xc8] sm:$0xf]
        %v549 = vld [vmem:[%s3 + $0xcc] sm:$0xff]
        %v550 = vld [vmem:[%s3 + $0xd4] sm:$0xf]
        %v551 = vld [vmem:[%s3 + $0xd8] sm:$0xff]
        %v552 = vld [vmem:[%s3 + $0xe0] sm:$0xf]
        %v553 = vld [vmem:[%s3 + $0xe4] sm:$0xff]
        %v554 = vld [vmem:[%s3 + $0xec] sm:$0xf]
        %v555 = vld [vmem:[%s3 + $0xf0] sm:$0xff]
        %v556 = vld [vmem:[%s3 + $0xf8] sm:$0xf]
        %v557 = vld [vmem:[%s3 + $0xfc] sm:$0xff]
        %v558 = vld [vmem:[%s3 + $0x104] sm:$0xf]
        %v559 = vld [vmem:[%s3 + $0x108] sm:$0xff]
        %v560 = vld [vmem:[%s3 + $0x110] sm:$0xf]
        %v561 = vld [vmem:[%s3 + $0x114] sm:$0xff]
        %v562 = vld [vmem:[%s3 + $0x11c] sm:$0xf]
        %v563 = vld [vmem:[%s3 + $0x120] sm:$0xff]
        %v564 = vld [vmem:[%s3 + $0x128] sm:$0xf]
        %v565 = vld [vmem:[%s3 + $0x12c] sm:$0xff]
        %v566 = vld [vmem:[%s3 + $0x134] sm:$0xf]
        %v567 = vld [vmem:[%s3 + $0x138] sm:$0xff]
        %v568 = vld [vmem:[%s3 + $0x140] sm:$0xf]
        %v569 = vld [vmem:[%s3 + $0x144] sm:$0xff]
        %v570 = vld [vmem:[%s3 + $0x14c] sm:$0xf]
        %v571 = vld [vmem:[%s3 + $0x150] sm:$0xff]
        %v572 = vld [vmem:[%s3 + $0x158] sm:$0xf]
        %v573 = vld [vmem:[%s3 + $0x15c] sm:$0xff]
        %v574 = vld [vmem:[%s3 + $0x164] sm:$0xf]
        %v575 = vld [vmem:[%s3 + $0x168] sm:$0xff]
        %v576 = vld [vmem:[%s3 + $0x170] sm:$0xf]
        %v577 = vld [vmem:[%s3 + $0x174] sm:$0xff]
        %v578 = vld [vmem:[%s3 + $0x17c] sm:$0xf]
        %v579 = vld [vmem:[%s3 + $0x180] sm:$0xff]
        %v580 = vld [vmem:[%s3 + $0x188] sm:$0xf]
        %v581 = vld [vmem:[%s3 + $0x18c] sm:$0xff]
        %v582 = vld [vmem:[%s3 + $0x194] sm:$0xf]
        %v583 = vld [vmem:[%s3 + $0x198] sm:$0xff]
        %v584 = vld [vmem:[%s3 + $0x1a0] sm:$0xf]
        %v585 = vld [vmem:[%s3 + $0x1a4] sm:$0xff]
        %v586 = vld [vmem:[%s3 + $0x1ac] sm:$0xf]
        %v587 = vld [vmem:[%s3 + $0x1b0] sm:$0xff]
        %v588 = vld [vmem:[%s3 + $0x1b8] sm:$0xf]
        %v589 = vld [vmem:[%s3 + $0x1bc] sm:$0xff]
        %v590 = vld [vmem:[%s3 + $0x1c4] sm:$0xf]
        %v591 = vld [vmem:[%s3 + $0x1c8] sm:$0xff]
        %v592 = vld [vmem:[%s3 + $0x1d0] sm:$0xf]
        %v593 = vld [vmem:[%s3 + $0x1d4] sm:$0xff]
        %v594 = vld [vmem:[%s3 + $0x1dc] sm:$0xf]
        %v595 = vld [vmem:[%s3 + $0x1e0] sm:$0xff]
        %v596 = vld [vmem:[%s3 + $0x1e8] sm:$0xf]
        %v597 = vld [vmem:[%s3 + $0x1ec] sm:$0xff]
        %v598 = vld [vmem:[%s3 + $0x1f4] sm:$0xf]
        %v599 = vld [vmem:[%s3 + $0x1f8] sm:$0xff]
        %v600 = vld [vmem:[%s3 + $0x200] sm:$0xf]
        %v601 = vld [vmem:[%s3 + $0x204] sm:$0xff]
        %v602 = vld [vmem:[%s3 + $0x20c] sm:$0xf]
        %v603 = vld [vmem:[%s3 + $0x210] sm:$0xff]
        %v604 = vld [vmem:[%s3 + $0x218] sm:$0xf]
        %v605 = vld [vmem:[%s3 + $0x21c] sm:$0xff]
        %v606 = vld [vmem:[%s3 + $0x224] sm:$0xf]
        %v607 = vld [vmem:[%s3 + $0x228] sm:$0xff]
        %v608 = vld [vmem:[%s3 + $0x230] sm:$0xf]
        %v609 = vld [vmem:[%s3 + $0x234] sm:$0xff]
        %v610 = vld [vmem:[%s3 + $0x23c] sm:$0xf]
        %v707 = vunpack.c.l.b16 %v323
        %v708 = vunpack.c.h.b16 %v323
        %v709 = vunpack.c.l.b16 %v324
        %v710 = vunpack.c.l.b16 %v325
        %v711 = vunpack.c.h.b16 %v325
        %v712 = vunpack.c.l.b16 %v326
        %v713 = vunpack.c.l.b16 %v327
        %v714 = vunpack.c.h.b16 %v327
        %v715 = vunpack.c.l.b16 %v328
        %v716 = vunpack.c.l.b16 %v329
        %v717 = vunpack.c.h.b16 %v329
        %v718 = vunpack.c.l.b16 %v330
        %v719 = vunpack.c.l.b16 %v331
        %v720 = vunpack.c.h.b16 %v331
        %v721 = vunpack.c.l.b16 %v332
        %v722 = vunpack.c.l.b16 %v333
        %v723 = vunpack.c.h.b16 %v333
        %v724 = vunpack.c.l.b16 %v334
        %v725 = vunpack.c.l.b16 %v335
        %v726 = vunpack.c.h.b16 %v335
        %v727 = vunpack.c.l.b16 %v336
        %v728 = vunpack.c.l.b16 %v337
        %v729 = vunpack.c.h.b16 %v337
        %v730 = vunpack.c.l.b16 %v338
        %v731 = vunpack.c.l.b16 %v339
        %v732 = vunpack.c.h.b16 %v339
        %v733 = vunpack.c.l.b16 %v340
        %v734 = vunpack.c.l.b16 %v341
        %v735 = vunpack.c.h.b16 %v341
        %v736 = vunpack.c.l.b16 %v342
        %v737 = vunpack.c.l.b16 %v343
        %v738 = vunpack.c.h.b16 %v343
        %v739 = vunpack.c.l.b16 %v344
        %v740 = vunpack.c.l.b16 %v345
        %v741 = vunpack.c.h.b16 %v345
        %v742 = vunpack.c.l.b16 %v346
        %v743 = vunpack.c.l.b16 %v347
        %v744 = vunpack.c.h.b16 %v347
        %v745 = vunpack.c.l.b16 %v348
        %v746 = vunpack.c.l.b16 %v349
        %v747 = vunpack.c.h.b16 %v349
        %v748 = vunpack.c.l.b16 %v350
        %v749 = vunpack.c.l.b16 %v351
        %v750 = vunpack.c.h.b16 %v351
        %v751 = vunpack.c.l.b16 %v352
        %v752 = vunpack.c.l.b16 %v353
        %v753 = vunpack.c.h.b16 %v353
        %v754 = vunpack.c.l.b16 %v354
        %v755 = vunpack.c.l.b16 %v355
        %v756 = vunpack.c.h.b16 %v355
        %v757 = vunpack.c.l.b16 %v356
        %v758 = vunpack.c.l.b16 %v357
        %v759 = vunpack.c.h.b16 %v357
        %v760 = vunpack.c.l.b16 %v358
        %v761 = vunpack.c.l.b16 %v359
        %v762 = vunpack.c.h.b16 %v359
        %v763 = vunpack.c.l.b16 %v360
        %v764 = vunpack.c.l.b16 %v361
        %v765 = vunpack.c.h.b16 %v361
        %v766 = vunpack.c.l.b16 %v362
        %v767 = vunpack.c.l.b16 %v363
        %v768 = vunpack.c.h.b16 %v363
        %v769 = vunpack.c.l.b16 %v364
        %v770 = vunpack.c.l.b16 %v365
        %v771 = vunpack.c.h.b16 %v365
        %v772 = vunpack.c.l.b16 %v366
        %v773 = vunpack.c.l.b16 %v367
        %v774 = vunpack.c.h.b16 %v367
        %v775 = vunpack.c.l.b16 %v368
        %v776 = vunpack.c.l.b16 %v369
        %v777 = vunpack.c.h.b16 %v369
        %v778 = vunpack.c.l.b16 %v370
        %v779 = vunpack.c.l.b16 %v371
        %v780 = vunpack.c.h.b16 %v371
        %v781 = vunpack.c.l.b16 %v372
        %v782 = vunpack.c.l.b16 %v373
        %v783 = vunpack.c.h.b16 %v373
        %v784 = vunpack.c.l.b16 %v374
        %v785 = vunpack.c.l.b16 %v375
        %v786 = vunpack.c.h.b16 %v375
        %v787 = vunpack.c.l.b16 %v376
        %v788 = vunpack.c.l.b16 %v377
        %v789 = vunpack.c.h.b16 %v377
        %v790 = vunpack.c.l.b16 %v378
        %v791 = vunpack.c.l.b16 %v379
        %v792 = vunpack.c.h.b16 %v379
        %v793 = vunpack.c.l.b16 %v380
        %v794 = vunpack.c.l.b16 %v381
        %v795 = vunpack.c.h.b16 %v381
        %v796 = vunpack.c.l.b16 %v382
        %v797 = vunpack.c.l.b16 %v383
        %v798 = vunpack.c.h.b16 %v383
        %v799 = vunpack.c.l.b16 %v384
        %v800 = vunpack.c.l.b16 %v385
        %v801 = vunpack.c.h.b16 %v385
        %v802 = vunpack.c.l.b16 %v386
        %v803 = vunpack.c.l.b16 %v387
        %v804 = vunpack.c.h.b16 %v387
        %v805 = vunpack.c.l.b16 %v388
        %v806 = vunpack.c.l.b16 %v389
        %v807 = vunpack.c.h.b16 %v389
        %v808 = vunpack.c.l.b16 %v390
        %v809 = vunpack.c.l.b16 %v391
        %v810 = vunpack.c.h.b16 %v391
        %v811 = vunpack.c.l.b16 %v392
        %v812 = vunpack.c.l.b16 %v393
        %v813 = vunpack.c.h.b16 %v393
        %v814 = vunpack.c.l.b16 %v394
        %v815 = vunpack.c.l.b16 %v395
        %v816 = vunpack.c.h.b16 %v395
        %v817 = vunpack.c.l.b16 %v396
        %v818 = vunpack.c.l.b16 %v397
        %v819 = vunpack.c.h.b16 %v397
        %v820 = vunpack.c.l.b16 %v398
        %v821 = vunpack.c.l.b16 %v399
        %v822 = vunpack.c.h.b16 %v399
        %v823 = vunpack.c.l.b16 %v400
        %v824 = vunpack.c.l.b16 %v401
        %v825 = vunpack.c.h.b16 %v401
        %v826 = vunpack.c.l.b16 %v402
        %v827 = vunpack.c.l.b16 %v403
        %v828 = vunpack.c.h.b16 %v403
        %v829 = vunpack.c.l.b16 %v404
        %v830 = vunpack.c.l.b16 %v405
        %v831 = vunpack.c.h.b16 %v405
        %v832 = vunpack.c.l.b16 %v406
        %v833 = vunpack.c.l.b16 %v407
        %v834 = vunpack.c.h.b16 %v407
        %v835 = vunpack.c.l.b16 %v408
        %v836 = vunpack.c.l.b16 %v409
        %v837 = vunpack.c.h.b16 %v409
        %v838 = vunpack.c.l.b16 %v410
        %v839 = vunpack.c.l.b16 %v411
        %v840 = vunpack.c.h.b16 %v411
        %v841 = vunpack.c.l.b16 %v412
        %v842 = vunpack.c.l.b16 %v413
        %v843 = vunpack.c.h.b16 %v413
        %v844 = vunpack.c.l.b16 %v414
        %v845 = vunpack.c.l.b16 %v415
        %v846 = vunpack.c.h.b16 %v415
        %v847 = vunpack.c.l.b16 %v416
        %v848 = vunpack.c.l.b16 %v417
        %v849 = vunpack.c.h.b16 %v417
        %v850 = vunpack.c.l.b16 %v418
        %v851 = vpack.c.b16 %v710, %v707
        %v852 = vpack.c.b16 %v711, %v708
        %v853 = vpack.c.b16 %v712, %v709
        %v854 = vpack.c.b16 %v716, %v713
        %v855 = vpack.c.b16 %v717, %v714
        %v856 = vpack.c.b16 %v718, %v715
        %v857 = vpack.c.b16 %v722, %v719
        %v858 = vpack.c.b16 %v723, %v720
        %v859 = vpack.c.b16 %v724, %v721
        %v860 = vpack.c.b16 %v728, %v725
        %v861 = vpack.c.b16 %v729, %v726
        %v862 = vpack.c.b16 %v730, %v727
        %v863 = vpack.c.b16 %v734, %v731
        %v864 = vpack.c.b16 %v735, %v732
        %v865 = vpack.c.b16 %v736, %v733
        %v866 = vpack.c.b16 %v740, %v737
        %v867 = vpack.c.b16 %v741, %v738
        %v868 = vpack.c.b16 %v742, %v739
        %v869 = vpack.c.b16 %v746, %v743
        %v870 = vpack.c.b16 %v747, %v744
        %v871 = vpack.c.b16 %v748, %v745
        %v872 = vpack.c.b16 %v752, %v749
        %v873 = vpack.c.b16 %v753, %v750
        %v874 = vpack.c.b16 %v754, %v751
        %v875 = vpack.c.b16 %v758, %v755
        %v876 = vpack.c.b16 %v759, %v756
        %v877 = vpack.c.b16 %v760, %v757
        %v878 = vpack.c.b16 %v764, %v761
        %v879 = vpack.c.b16 %v765, %v762
        %v880 = vpack.c.b16 %v766, %v763
        %v881 = vpack.c.b16 %v770, %v767
        %v882 = vpack.c.b16 %v771, %v768
        %v883 = vpack.c.b16 %v772, %v769
        %v884 = vpack.c.b16 %v776, %v773
        %v885 = vpack.c.b16 %v777, %v774
        %v886 = vpack.c.b16 %v778, %v775
        %v887 = vpack.c.b16 %v782, %v779
        %v888 = vpack.c.b16 %v783, %v780
        %v889 = vpack.c.b16 %v784, %v781
        %v890 = vpack.c.b16 %v788, %v785
        %v891 = vpack.c.b16 %v789, %v786
        %v892 = vpack.c.b16 %v790, %v787
        %v893 = vpack.c.b16 %v794, %v791
        %v894 = vpack.c.b16 %v795, %v792
        %v895 = vpack.c.b16 %v796, %v793
        %v896 = vpack.c.b16 %v800, %v797
        %v897 = vpack.c.b16 %v801, %v798
        %v898 = vpack.c.b16 %v802, %v799
        %v899 = vpack.c.b16 %v806, %v803
        %v900 = vpack.c.b16 %v807, %v804
        %v901 = vpack.c.b16 %v808, %v805
        %v902 = vpack.c.b16 %v812, %v809
        %v903 = vpack.c.b16 %v813, %v810
        %v904 = vpack.c.b16 %v814, %v811
        %v905 = vpack.c.b16 %v818, %v815
        %v906 = vpack.c.b16 %v819, %v816
        %v907 = vpack.c.b16 %v820, %v817
        %v908 = vpack.c.b16 %v824, %v821
        %v909 = vpack.c.b16 %v825, %v822
        %v910 = vpack.c.b16 %v826, %v823
        %v911 = vpack.c.b16 %v830, %v827
        %v912 = vpack.c.b16 %v831, %v828
        %v913 = vpack.c.b16 %v832, %v829
        %v914 = vpack.c.b16 %v836, %v833
        %v915 = vpack.c.b16 %v837, %v834
        %v916 = vpack.c.b16 %v838, %v835
        %v917 = vpack.c.b16 %v842, %v839
        %v918 = vpack.c.b16 %v843, %v840
        %v919 = vpack.c.b16 %v844, %v841
        %v920 = vpack.c.b16 %v848, %v845
        %v921 = vpack.c.b16 %v849, %v846
        %v922 = vpack.c.b16 %v850, %v847
        %995 = vmatprep.subr.bf16.mxu0 %v852
        %996 = vmatpush1.bf16.msra.mxu0 %v851
        %997 = vmatprep.subr.bf16.mxu0 %v855
        %998 = vmatpush1.bf16.msra.mxu0 %v854
        %999 = vmatprep.subr.bf16.mxu0 %v858
        %1000 = vmatpush1.bf16.msra.mxu0 %v857
        %1001 = vmatprep.subr.bf16.mxu0 %v861
        %1002 = vmatpush1.bf16.msra.mxu0 %v860
        %1003 = vmatprep.subr.bf16.mxu0 %v864
        %1004 = vmatpush1.bf16.msra.mxu0 %v863
        %1005 = vmatprep.subr.bf16.mxu0 %v867
        %1006 = vmatpush1.bf16.msra.mxu0 %v866
        %1007 = vmatprep.subr.bf16.mxu0 %v870
        %1008 = vmatpush1.bf16.msra.mxu0 %v869
        %1009 = vmatprep.subr.bf16.mxu0 %v873
        %1010 = vmatpush1.bf16.msra.mxu0 %v872
        %1011 = vmatprep.subr.bf16.mxu0 %v876
        %1012 = vmatpush1.bf16.msra.mxu0 %v875
        %1013 = vmatprep.subr.bf16.mxu0 %v879
        %1014 = vmatpush1.bf16.msra.mxu0 %v878
        %1015 = vmatprep.subr.bf16.mxu0 %v882
        %1016 = vmatpush1.bf16.msra.mxu0 %v881
        %1017 = vmatprep.subr.bf16.mxu0 %v885
        %1018 = vmatpush1.bf16.msra.mxu0 %v884
        %1019 = vmatprep.subr.bf16.mxu0 %v888
        %1020 = vmatpush1.bf16.msra.mxu0 %v887
        %1021 = vmatprep.subr.bf16.mxu0 %v891
        %1022 = vmatpush1.bf16.msra.mxu0 %v890
        %1023 = vmatprep.subr.bf16.mxu0 %v894
        %1024 = vmatpush1.bf16.msra.mxu0 %v893
        %1025 = vmatprep.subr.bf16.mxu0 %v897
        %1026 = vmatpush1.bf16.msra.mxu0 %v896
        %1027 = vmatprep.mubr.bf16.mxu0 %v300
        %1028 = vmatmul.mubr.bf16.gmra.mrb[0].mxu0 %v299
        %v1029 = vpop.f32.mrb[0].mxu0
        %v1030 = vadd.f32 0.0, %v1029
        %v1031 = vpop.f32.mrb[0].mxu0
        %v1032 = vadd.f32 0.0, %v1031
        %v1033 = vpop.f32.mrb[0].mxu0
        %v1034 = vadd.f32 0.0, %v1033
        %v1035 = vpop.f32.mrb[0].mxu0
        %v1036 = vadd.f32 0.0, %v1035
        %1037 = vmatprep.mubr.bf16.mxu0 %v303
        %1038 = vmatmul.mubr.bf16.gmra.mrb[0].mxu0 %v302
        %v1039 = vpop.f32.mrb[0].mxu0
        %v1040 = vadd.f32 0.0, %v1039
        %v1041 = vpop.f32.mrb[0].mxu0
        %v1042 = vadd.f32 0.0, %v1041
        %v1043 = vpop.f32.mrb[0].mxu0
        %v1044 = vadd.f32 0.0, %v1043
        %v1045 = vpop.f32.mrb[0].mxu0
        %v1046 = vadd.f32 0.0, %v1045
        %1047 = vmatprep.mubr.bf16.mxu0 %v306
        %1048 = vmatmul.mubr.bf16.gmra.mrb[0].mxu0 %v305
        %v1049 = vpop.f32.mrb[0].mxu0
        %v1050 = vadd.f32 0.0, %v1049
        %v1051 = vpop.f32.mrb[0].mxu0
        %v1052 = vadd.f32 0.0, %v1051
        %v1053 = vpop.f32.mrb[0].mxu0
        %v1054 = vadd.f32 0.0, %v1053
        %v1055 = vpop.f32.mrb[0].mxu0
        %v1056 = vadd.f32 0.0, %v1055
        %1057 = vmatprep.mubr.bf16.mxu0 %v309
        %1058 = vmatmul.mubr.bf16.gmra.mrb[0].mxu0 %v308
        %v1059 = vpop.f32.mrb[0].mxu0
        %v1060 = vadd.f32 0.0, %v1059
        %v1061 = vpop.f32.mrb[0].mxu0
        %v1062 = vadd.f32 0.0, %v1061
        %v1063 = vpop.f32.mrb[0].mxu0
        %v1064 = vadd.f32 0.0, %v1063
        %v1065 = vpop.f32.mrb[0].mxu0
        %v1066 = vadd.f32 0.0, %v1065
        %1067 = vmatprep.mubr.bf16.mxu0 %v312
        %1068 = vmatmul.mubr.bf16.gmra.mrb[0].mxu0 %v311
        %v1069 = vpop.f32.mrb[0].mxu0
        %v1070 = vadd.f32 0.0, %v1069
        %v1071 = vpop.f32.mrb[0].mxu0
        %v1072 = vadd.f32 0.0, %v1071
        %v1073 = vpop.f32.mrb[0].mxu0
        %v1074 = vadd.f32 0.0, %v1073
        %v1075 = vpop.f32.mrb[0].mxu0
        %v1076 = vadd.f32 0.0, %v1075
        %1077 = vmatprep.mubr.bf16.mxu0 %v315
        %1078 = vmatmul.mubr.bf16.gmra.mrb[0].mxu0 %v314
        %v1079 = vpop.f32.mrb[0].mxu0
        %v1080 = vadd.f32 0.0, %v1079
        %v1081 = vpop.f32.mrb[0].mxu0
        %v1082 = vadd.f32 0.0, %v1081
        %v1083 = vpop.f32.mrb[0].mxu0
        %v1084 = vadd.f32 0.0, %v1083
        %v1085 = vpop.f32.mrb[0].mxu0
        %v1086 = vadd.f32 0.0, %v1085
        %1087 = vmatprep.mubr.bf16.mxu0 %v318
        %1088 = vmatmul.mubr.bf16.gmra.mrb[0].mxu0 %v317
        %v1089 = vpop.f32.mrb[0].mxu0
        %v1090 = vadd.f32 0.0, %v1089
        %v1091 = vpop.f32.mrb[0].mxu0
        %v1092 = vadd.f32 0.0, %v1091
        %v1093 = vpop.f32.mrb[0].mxu0
        %v1094 = vadd.f32 0.0, %v1093
        %v1095 = vpop.f32.mrb[0].mxu0
        %v1096 = vadd.f32 0.0, %v1095
        %1097 = vmatprep.mubr.bf16.mxu0 %v321
        %1098 = vmatmul.mubr.bf16.gmra.mrb[0].mxu0 %v320
        %v1099 = vpop.f32.mrb[0].mxu0
        %v1100 = vadd.f32 0.0, %v1099
        %v1101 = vpop.f32.mrb[0].mxu0
        %v1102 = vadd.f32 0.0, %v1101
        %v1103 = vpop.f32.mrb[0].mxu0
        %v1104 = vadd.f32 0.0, %v1103
        %v1105 = vpop.f32.mrb[0].mxu0
        %v1106 = vadd.f32 0.0, %v1105
        %1107 = vdwg.mxu0
        %1108 = vmatprep.subr.bf16.mxu0 %v900
        %1109 = vmatpush1.bf16.msra.mxu0 %v899
        %1110 = vmatprep.subr.bf16.mxu0 %v903
        %1111 = vmatpush1.bf16.msra.mxu0 %v902
        %1112 = vmatprep.subr.bf16.mxu0 %v906
        %1113 = vmatpush1.bf16.msra.mxu0 %v905
        %1114 = vmatprep.subr.bf16.mxu0 %v909
        %1115 = vmatpush1.bf16.msra.mxu0 %v908
        %1116 = vmatprep.subr.bf16.mxu0 %v912
        %1117 = vmatpush1.bf16.msra.mxu0 %v911
        %1118 = vmatprep.subr.bf16.mxu0 %v915
        %1119 = vmatpush1.bf16.msra.mxu0 %v914
        %1120 = vmatprep.subr.bf16.mxu0 %v918
        %1121 = vmatpush1.bf16.msra.mxu0 %v917
        %1122 = vmatprep.subr.bf16.mxu0 %v921
        %1123 = vmatpush1.bf16.msra.mxu0 %v920
        %1124 = vmatprep.subr.bf16.mxu0 0
        %1125 = vmatpush1.bf16.msra.mxu0 0
        %1126 = vmatprep.subr.bf16.mxu0 0
        %1127 = vmatpush1.bf16.msra.mxu0 0
        %1128 = vmatprep.subr.bf16.mxu0 0
        %1129 = vmatpush1.bf16.msra.mxu0 0
        %1130 = vmatprep.subr.bf16.mxu0 0
        %1131 = vmatpush1.bf16.msra.mxu0 0
        %1132 = vmatprep.subr.bf16.mxu0 0
        %1133 = vmatpush1.bf16.msra.mxu0 0
        %1134 = vmatprep.subr.bf16.mxu0 0
        %1135 = vmatpush1.bf16.msra.mxu0 0
        %1136 = vmatprep.subr.bf16.mxu0 0
        %1137 = vmatpush1.bf16.msra.mxu0 0
        %1138 = vmatprep.subr.bf16.mxu0 0
        %1139 = vmatpush1.bf16.msra.mxu0 0
        %1140 = vmatprep.mubr.bf16.mxu0 0
        %1141 = vmatmul.mubr.bf16.gmra.mrb[0].mxu0 %v301
        %v1142 = vpop.f32.mrb[0].mxu0
        %v1143 = vadd.f32 %v1030, %v1142
        %v1144 = vpop.f32.mrb[0].mxu0
        %v1145 = vadd.f32 %v1032, %v1144
        %v1146 = vpop.f32.mrb[0].mxu0
        %v1147 = vadd.f32 %v1034, %v1146
        %v1148 = vpop.f32.mrb[0].mxu0
        %v1149 = vadd.f32 %v1036, %v1148
        %1150 = vmatprep.mubr.bf16.mxu0 0
        %1151 = vmatmul.mubr.bf16.gmra.mrb[0].mxu0 %v304
        %v1152 = vpop.f32.mrb[0].mxu0
        %v1153 = vadd.f32 %v1040, %v1152
        %v1154 = vpop.f32.mrb[0].mxu0
        %v1155 = vadd.f32 %v1042, %v1154
        %v1156 = vpop.f32.mrb[0].mxu0
        %v1157 = vadd.f32 %v1044, %v1156
        %v1158 = vpop.f32.mrb[0].mxu0
        %v1159 = vadd.f32 %v1046, %v1158
        %1160 = vmatprep.mubr.bf16.mxu0 0
        %1161 = vmatmul.mubr.bf16.gmra.mrb[0].mxu0 %v307
        %v1162 = vpop.f32.mrb[0].mxu0
        %v1163 = vadd.f32 %v1050, %v1162
        %v1164 = vpop.f32.mrb[0].mxu0
        %v1165 = vadd.f32 %v1052, %v1164
        %v1166 = vpop.f32.mrb[0].mxu0
        %v1167 = vadd.f32 %v1054, %v1166
        %v1168 = vpop.f32.mrb[0].mxu0
        %v1169 = vadd.f32 %v1056, %v1168
        %1170 = vmatprep.mubr.bf16.mxu0 0
        %1171 = vmatmul.mubr.bf16.gmra.mrb[0].mxu0 %v310
        %v1172 = vpop.f32.mrb[0].mxu0
        %v1173 = vadd.f32 %v1060, %v1172
        %v1174 = vpop.f32.mrb[0].mxu0
        %v1175 = vadd.f32 %v1062, %v1174
        %v1176 = vpop.f32.mrb[0].mxu0
        %v1177 = vadd.f32 %v1064, %v1176
        %v1178 = vpop.f32.mrb[0].mxu0
        %v1179 = vadd.f32 %v1066, %v1178
        %1180 = vmatprep.mubr.bf16.mxu0 0
        %1181 = vmatmul.mubr.bf16.gmra.mrb[0].mxu0 %v313
        %v1182 = vpop.f32.mrb[0].mxu0
        %v1183 = vadd.f32 %v1070, %v1182
        %v1184 = vpop.f32.mrb[0].mxu0
        %v1185 = vadd.f32 %v1072, %v1184
        %v1186 = vpop.f32.mrb[0].mxu0
        %v1187 = vadd.f32 %v1074, %v1186
        %v1188 = vpop.f32.mrb[0].mxu0
        %v1189 = vadd.f32 %v1076, %v1188
        %1190 = vmatprep.mubr.bf16.mxu0 0
        %1191 = vmatmul.mubr.bf16.gmra.mrb[0].mxu0 %v316
        %v1192 = vpop.f32.mrb[0].mxu0
        %v1193 = vadd.f32 %v1080, %v1192
        %v1194 = vpop.f32.mrb[0].mxu0
        %v1195 = vadd.f32 %v1082, %v1194
        %v1196 = vpop.f32.mrb[0].mxu0
        %v1197 = vadd.f32 %v1084, %v1196
        %v1198 = vpop.f32.mrb[0].mxu0
        %v1199 = vadd.f32 %v1086, %v1198
        %1200 = vmatprep.mubr.bf16.mxu0 0
        %1201 = vmatmul.mubr.bf16.gmra.mrb[0].mxu0 %v319
        %v1202 = vpop.f32.mrb[0].mxu0
        %v1203 = vadd.f32 %v1090, %v1202
        %v1204 = vpop.f32.mrb[0].mxu0
        %v1205 = vadd.f32 %v1092, %v1204
        %v1206 = vpop.f32.mrb[0].mxu0
        %v1207 = vadd.f32 %v1094, %v1206
        %v1208 = vpop.f32.mrb[0].mxu0
        %v1209 = vadd.f32 %v1096, %v1208
        %1210 = vmatprep.mubr.bf16.mxu0 0
        %1211 = vmatmul.mubr.bf16.gmra.mrb[0].mxu0 %v322
        %v1212 = vpop.f32.mrb[0].mxu0
        %v1213 = vadd.f32 %v1100, %v1212
        %v1214 = vpop.f32.mrb[0].mxu0
        %v1215 = vadd.f32 %v1102, %v1214
        %v1216 = vpop.f32.mrb[0].mxu0
        %v1217 = vadd.f32 %v1104, %v1216
        %v1218 = vpop.f32.mrb[0].mxu0
        %v1219 = vadd.f32 %v1106, %v1218
        %1220 = vdwg.mxu0
        %1221 = vmatprep.subr.bf16.mxu0 0
        %1222 = vmatpush1.bf16.msra.mxu0 %v853
        %1223 = vmatprep.subr.bf16.mxu0 0
        %1224 = vmatpush1.bf16.msra.mxu0 %v856
        %1225 = vmatprep.subr.bf16.mxu0 0
        %1226 = vmatpush1.bf16.msra.mxu0 %v859
        %1227 = vmatprep.subr.bf16.mxu0 0
        %1228 = vmatpush1.bf16.msra.mxu0 %v862
        %1229 = vmatprep.subr.bf16.mxu0 0
        %1230 = vmatpush1.bf16.msra.mxu0 %v865
        %1231 = vmatprep.subr.bf16.mxu0 0
        %1232 = vmatpush1.bf16.msra.mxu0 %v868
        %1233 = vmatprep.subr.bf16.mxu0 0
        %1234 = vmatpush1.bf16.msra.mxu0 %v871
        %1235 = vmatprep.subr.bf16.mxu0 0
        %1236 = vmatpush1.bf16.msra.mxu0 %v874
        %1237 = vmatprep.subr.bf16.mxu0 0
        %1238 = vmatpush1.bf16.msra.mxu0 %v877
        %1239 = vmatprep.subr.bf16.mxu0 0
        %1240 = vmatpush1.bf16.msra.mxu0 %v880
        %1241 = vmatprep.subr.bf16.mxu0 0
        %1242 = vmatpush1.bf16.msra.mxu0 %v883
        %1243 = vmatprep.subr.bf16.mxu0 0
        %1244 = vmatpush1.bf16.msra.mxu0 %v886
        %1245 = vmatprep.subr.bf16.mxu0 0
        %1246 = vmatpush1.bf16.msra.mxu0 %v889
        %1247 = vmatprep.subr.bf16.mxu0 0
        %1248 = vmatpush1.bf16.msra.mxu0 %v892
        %1249 = vmatprep.subr.bf16.mxu0 0
        %1250 = vmatpush1.bf16.msra.mxu0 %v895
        %1251 = vmatprep.subr.bf16.mxu0 0
        %1252 = vmatpush1.bf16.msra.mxu0 %v898
        %1253 = vmatprep.mubr.bf16.mxu0 %v300
        %1254 = vmatmul.mubr.bf16.gmra.mrb[0].mxu0 %v299
        %v1255 = vpop.f32.mrb[0].mxu0
        %v1256 = vadd.f32 0.0, %v1255
        %v1257 = vpop.f32.mrb[0].mxu0
        %v1258 = vpop.f32.mrb[0].mxu0
        %v1259 = vadd.f32 0.0, %v1258
        %v1260 = vpop.f32.mrb[0].mxu0
        %1261 = vmatprep.mubr.bf16.mxu0 %v303
        %1262 = vmatmul.mubr.bf16.gmra.mrb[0].mxu0 %v302
        %v1263 = vpop.f32.mrb[0].mxu0
        %v1264 = vadd.f32 0.0, %v1263
        %v1265 = vpop.f32.mrb[0].mxu0
        %v1266 = vpop.f32.mrb[0].mxu0
        %v1267 = vadd.f32 0.0, %v1266
        %v1268 = vpop.f32.mrb[0].mxu0
        %1269 = vmatprep.mubr.bf16.mxu0 %v306
        %1270 = vmatmul.mubr.bf16.gmra.mrb[0].mxu0 %v305
        %v1271 = vpop.f32.mrb[0].mxu0
        %v1272 = vadd.f32 0.0, %v1271
        %v1273 = vpop.f32.mrb[0].mxu0
        %v1274 = vpop.f32.mrb[0].mxu0
        %v1275 = vadd.f32 0.0, %v1274
        %v1276 = vpop.f32.mrb[0].mxu0
        %1277 = vmatprep.mubr.bf16.mxu0 %v309
        %1278 = vmatmul.mubr.bf16.gmra.mrb[0].mxu0 %v308
        %v1279 = vpop.f32.mrb[0].mxu0
        %v1280 = vadd.f32 0.0, %v1279
        %v1281 = vpop.f32.mrb[0].mxu0
        %v1282 = vpop.f32.mrb[0].mxu0
        %v1283 = vadd.f32 0.0, %v1282
        %v1284 = vpop.f32.mrb[0].mxu0
        %1285 = vmatprep.mubr.bf16.mxu0 %v312
        %1286 = vmatmul.mubr.bf16.gmra.mrb[0].mxu0 %v311
        %v1287 = vpop.f32.mrb[0].mxu0
        %v1288 = vadd.f32 0.0, %v1287
        %v1289 = vpop.f32.mrb[0].mxu0
        %v1290 = vpop.f32.mrb[0].mxu0
        %v1291 = vadd.f32 0.0, %v1290
        %v1292 = vpop.f32.mrb[0].mxu0
        %1293 = vmatprep.mubr.bf16.mxu0 %v315
        %1294 = vmatmul.mubr.bf16.gmra.mrb[0].mxu0 %v314
        %v1295 = vpop.f32.mrb[0].mxu0
        %v1296 = vadd.f32 0.0, %v1295
        %v1297 = vpop.f32.mrb[0].mxu0
        %v1298 = vpop.f32.mrb[0].mxu0
        %v1299 = vadd.f32 0.0, %v1298
        %v1300 = vpop.f32.mrb[0].mxu0
        %1301 = vmatprep.mubr.bf16.mxu0 %v318
        %1302 = vmatmul.mubr.bf16.gmra.mrb[0].mxu0 %v317
        %v1303 = vpop.f32.mrb[0].mxu0
        %v1304 = vadd.f32 0.0, %v1303
        %v1305 = vpop.f32.mrb[0].mxu0
        %v1306 = vpop.f32.mrb[0].mxu0
        %v1307 = vadd.f32 0.0, %v1306
        %v1308 = vpop.f32.mrb[0].mxu0
        %1309 = vmatprep.mubr.bf16.mxu0 %v321
        %1310 = vmatmul.mubr.bf16.gmra.mrb[0].mxu0 %v320
        %v1311 = vpop.f32.mrb[0].mxu0
        %v1312 = vadd.f32 0.0, %v1311
        %v1313 = vpop.f32.mrb[0].mxu0
        %v1314 = vpop.f32.mrb[0].mxu0
        %v1315 = vadd.f32 0.0, %v1314
        %v1316 = vpop.f32.mrb[0].mxu0
        %1317 = vdwg.mxu0
        %1318 = vmatprep.subr.bf16.mxu0 0
        %1319 = vmatpush1.bf16.msra.mxu0 %v901
        %1320 = vmatprep.subr.bf16.mxu0 0
        %1321 = vmatpush1.bf16.msra.mxu0 %v904
        %1322 = vmatprep.subr.bf16.mxu0 0
        %1323 = vmatpush1.bf16.msra.mxu0 %v907
        %1324 = vmatprep.subr.bf16.mxu0 0
        %1325 = vmatpush1.bf16.msra.mxu0 %v910
        %1326 = vmatprep.subr.bf16.mxu0 0
        %1327 = vmatpush1.bf16.msra.mxu0 %v913
        %1328 = vmatprep.subr.bf16.mxu0 0
        %1329 = vmatpush1.bf16.msra.mxu0 %v916
        %1330 = vmatprep.subr.bf16.mxu0 0
        %1331 = vmatpush1.bf16.msra.mxu0 %v919
        %1332 = vmatprep.subr.bf16.mxu0 0
        %1333 = vmatpush1.bf16.msra.mxu0 %v922
        %1334 = vmatprep.subr.bf16.mxu0 0
        %1335 = vmatpush1.bf16.msra.mxu0 0
        %1336 = vmatprep.subr.bf16.mxu0 0
        %1337 = vmatpush1.bf16.msra.mxu0 0
        %1338 = vmatprep.subr.bf16.mxu0 0
        %1339 = vmatpush1.bf16.msra.mxu0 0
        %1340 = vmatprep.subr.bf16.mxu0 0
        %1341 = vmatpush1.bf16.msra.mxu0 0
        %1342 = vmatprep.subr.bf16.mxu0 0
        %1343 = vmatpush1.bf16.msra.mxu0 0
        %1344 = vmatprep.subr.bf16.mxu0 0
        %1345 = vmatpush1.bf16.msra.mxu0 0
        %1346 = vmatprep.subr.bf16.mxu0 0
        %1347 = vmatpush1.bf16.msra.mxu0 0
        %1348 = vmatprep.subr.bf16.mxu0 0
        %1349 = vmatpush1.bf16.msra.mxu0 0
        %1350 = vmatprep.mubr.bf16.mxu0 0
        %1351 = vmatmul.mubr.bf16.gmra.mrb[0].mxu0 %v301
        %v1352 = vpop.f32.mrb[0].mxu0
        %v1353 = vadd.f32 %v1256, %v1352
        %v1354 = vpop.f32.mrb[0].mxu0
        %v1355 = vpop.f32.mrb[0].mxu0
        %v1356 = vadd.f32 %v1259, %v1355
        %v1357 = vpop.f32.mrb[0].mxu0
        %1358 = vmatprep.mubr.bf16.mxu0 0
        %1359 = vmatmul.mubr.bf16.gmra.mrb[0].mxu0 %v304
        %v1360 = vpop.f32.mrb[0].mxu0
        %v1361 = vadd.f32 %v1264, %v1360
        %v1362 = vpop.f32.mrb[0].mxu0
        %v1363 = vpop.f32.mrb[0].mxu0
        %v1364 = vadd.f32 %v1267, %v1363
        %v1365 = vpop.f32.mrb[0].mxu0
        %1366 = vmatprep.mubr.bf16.mxu0 0
        %1367 = vmatmul.mubr.bf16.gmra.mrb[0].mxu0 %v307
        %v1368 = vpop.f32.mrb[0].mxu0
        %v1369 = vadd.f32 %v1272, %v1368
        %v1370 = vpop.f32.mrb[0].mxu0
        %v1371 = vpop.f32.mrb[0].mxu0
        %v1372 = vadd.f32 %v1275, %v1371
        %v1373 = vpop.f32.mrb[0].mxu0
        %1374 = vmatprep.mubr.bf16.mxu0 0
        %1375 = vmatmul.mubr.bf16.gmra.mrb[0].mxu0 %v310
        %v1376 = vpop.f32.mrb[0].mxu0
        %v1377 = vadd.f32 %v1280, %v1376
        %v1378 = vpop.f32.mrb[0].mxu0
        %v1379 = vpop.f32.mrb[0].mxu0
        %v1380 = vadd.f32 %v1283, %v1379
        %v1381 = vpop.f32.mrb[0].mxu0
        %1382 = vmatprep.mubr.bf16.mxu0 0
        %1383 = vmatmul.mubr.bf16.gmra.mrb[0].mxu0 %v313
        %v1384 = vpop.f32.mrb[0].mxu0
        %v1385 = vadd.f32 %v1288, %v1384
        %v1386 = vpop.f32.mrb[0].mxu0
        %v1387 = vpop.f32.mrb[0].mxu0
        %v1388 = vadd.f32 %v1291, %v1387
        %v1389 = vpop.f32.mrb[0].mxu0
        %1390 = vmatprep.mubr.bf16.mxu0 0
        %1391 = vmatmul.mubr.bf16.gmra.mrb[0].mxu0 %v316
        %v1392 = vpop.f32.mrb[0].mxu0
        %v1393 = vadd.f32 %v1296, %v1392
        %v1394 = vpop.f32.mrb[0].mxu0
        %v1395 = vpop.f32.mrb[0].mxu0
        %v1396 = vadd.f32 %v1299, %v1395
        %v1397 = vpop.f32.mrb[0].mxu0
        %1398 = vmatprep.mubr.bf16.mxu0 0
        %1399 = vmatmul.mubr.bf16.gmra.mrb[0].mxu0 %v319
        %v1400 = vpop.f32.mrb[0].mxu0
        %v1401 = vadd.f32 %v1304, %v1400
        %v1402 = vpop.f32.mrb[0].mxu0
        %v1403 = vpop.f32.mrb[0].mxu0
        %v1404 = vadd.f32 %v1307, %v1403
        %v1405 = vpop.f32.mrb[0].mxu0
        %1406 = vmatprep.mubr.bf16.mxu0 0
        %1407 = vmatmul.mubr.bf16.gmra.mrb[0].mxu0 %v322
        %v1408 = vpop.f32.mrb[0].mxu0
        %v1409 = vadd.f32 %v1312, %v1408
        %v1410 = vpop.f32.mrb[0].mxu0
        %v1411 = vpop.f32.mrb[0].mxu0
        %v1412 = vadd.f32 %v1315, %v1411
        %v1413 = vpop.f32.mrb[0].mxu0
        %1414 = vdwg.mxu0
        %v1415 = vmul.f32 %v1143, 0.05103104
        %v1416 = vmul.f32 %v1145, 0.05103104
        %v1417 = vmul.f32 %v1353, 0.05103104
        %v1418 = vmul.f32 %v1147, 0.05103104
        %v1419 = vmul.f32 %v1149, 0.05103104
        %v1420 = vmul.f32 %v1356, 0.05103104
        %v1421 = vmul.f32 %v1153, 0.05103104
        %v1422 = vmul.f32 %v1155, 0.05103104
        %v1423 = vmul.f32 %v1361, 0.05103104
        %v1424 = vmul.f32 %v1157, 0.05103104
        %v1425 = vmul.f32 %v1159, 0.05103104
        %v1426 = vmul.f32 %v1364, 0.05103104
        %v1427 = vmul.f32 %v1163, 0.05103104
        %v1428 = vmul.f32 %v1165, 0.05103104
        %v1429 = vmul.f32 %v1369, 0.05103104
        %v1430 = vmul.f32 %v1167, 0.05103104
        %v1431 = vmul.f32 %v1169, 0.05103104
        %v1432 = vmul.f32 %v1372, 0.05103104
        %v1433 = vmul.f32 %v1173, 0.05103104
        %v1434 = vmul.f32 %v1175, 0.05103104
        %v1435 = vmul.f32 %v1377, 0.05103104
        %v1436 = vmul.f32 %v1177, 0.05103104
        %v1437 = vmul.f32 %v1179, 0.05103104
        %v1438 = vmul.f32 %v1380, 0.05103104
        %v1439 = vmul.f32 %v1183, 0.05103104
        %v1440 = vmul.f32 %v1185, 0.05103104
        %v1441 = vmul.f32 %v1385, 0.05103104
        %v1442 = vmul.f32 %v1187, 0.05103104
        %v1443 = vmul.f32 %v1189, 0.05103104
        %v1444 = vmul.f32 %v1388, 0.05103104
        %v1445 = vmul.f32 %v1193, 0.05103104
        %v1446 = vmul.f32 %v1195, 0.05103104
        %v1447 = vmul.f32 %v1393, 0.05103104
        %v1448 = vmul.f32 %v1197, 0.05103104
        %v1449 = vmul.f32 %v1199, 0.05103104
        %v1450 = vmul.f32 %v1396, 0.05103104
        %v1451 = vmul.f32 %v1203, 0.05103104
        %v1452 = vmul.f32 %v1205, 0.05103104
        %v1453 = vmul.f32 %v1401, 0.05103104
        %v1454 = vmul.f32 %v1207, 0.05103104
        %v1455 = vmul.f32 %v1209, 0.05103104
        %v1456 = vmul.f32 %v1404, 0.05103104
        %v1457 = vmul.f32 %v1213, 0.05103104
        %v1458 = vmul.f32 %v1215, 0.05103104
        %v1459 = vmul.f32 %v1409, 0.05103104
        %v1460 = vmul.f32 %v1217, 0.05103104
        %v1461 = vmul.f32 %v1219, 0.05103104
        %v1462 = vmul.f32 %v1412, 0.05103104
        %v1559 = vunpack.c.l.b16 %v419
        %v1560 = vunpack.c.h.b16 %v419
        %v1561 = vunpack.c.l.b16 %v420
        %v1562 = vunpack.c.l.b16 %v421
        %v1563 = vunpack.c.h.b16 %v421
        %v1564 = vunpack.c.l.b16 %v422
        %v1565 = vunpack.c.l.b16 %v423
        %v1566 = vunpack.c.h.b16 %v423
        %v1567 = vunpack.c.l.b16 %v424
        %v1568 = vunpack.c.l.b16 %v425
        %v1569 = vunpack.c.h.b16 %v425
        %v1570 = vunpack.c.l.b16 %v426
        %v1571 = vunpack.c.l.b16 %v427
        %v1572 = vunpack.c.h.b16 %v427
        %v1573 = vunpack.c.l.b16 %v428
        %v1574 = vunpack.c.l.b16 %v429
        %v1575 = vunpack.c.h.b16 %v429
        %v1576 = vunpack.c.l.b16 %v430
        %v1577 = vunpack.c.l.b16 %v431
        %v1578 = vunpack.c.h.b16 %v431
        %v1579 = vunpack.c.l.b16 %v432
        %v1580 = vunpack.c.l.b16 %v433
        %v1581 = vunpack.c.h.b16 %v433
        %v1582 = vunpack.c.l.b16 %v434
        %v1583 = vunpack.c.l.b16 %v435
        %v1584 = vunpack.c.h.b16 %v435
        %v1585 = vunpack.c.l.b16 %v436
        %v1586 = vunpack.c.l.b16 %v437
        %v1587 = vunpack.c.h.b16 %v437
        %v1588 = vunpack.c.l.b16 %v438
        %v1589 = vunpack.c.l.b16 %v439
        %v1590 = vunpack.c.h.b16 %v439
        %v1591 = vunpack.c.l.b16 %v440
        %v1592 = vunpack.c.l.b16 %v441
        %v1593 = vunpack.c.h.b16 %v441
        %v1594 = vunpack.c.l.b16 %v442
        %v1595 = vunpack.c.l.b16 %v443
        %v1596 = vunpack.c.h.b16 %v443
        %v1597 = vunpack.c.l.b16 %v444
        %v1598 = vunpack.c.l.b16 %v445
        %v1599 = vunpack.c.h.b16 %v445
        %v1600 = vunpack.c.l.b16 %v446
        %v1601 = vunpack.c.l.b16 %v447
        %v1602 = vunpack.c.h.b16 %v447
        %v1603 = vunpack.c.l.b16 %v448
        %v1604 = vunpack.c.l.b16 %v449
        %v1605 = vunpack.c.h.b16 %v449
        %v1606 = vunpack.c.l.b16 %v450
        %v1607 = vunpack.c.l.b16 %v451
        %v1608 = vunpack.c.h.b16 %v451
        %v1609 = vunpack.c.l.b16 %v452
        %v1610 = vunpack.c.l.b16 %v453
        %v1611 = vunpack.c.h.b16 %v453
        %v1612 = vunpack.c.l.b16 %v454
        %v1613 = vunpack.c.l.b16 %v455
        %v1614 = vunpack.c.h.b16 %v455
        %v1615 = vunpack.c.l.b16 %v456
        %v1616 = vunpack.c.l.b16 %v457
        %v1617 = vunpack.c.h.b16 %v457
        %v1618 = vunpack.c.l.b16 %v458
        %v1619 = vunpack.c.l.b16 %v459
        %v1620 = vunpack.c.h.b16 %v459
        %v1621 = vunpack.c.l.b16 %v460
        %v1622 = vunpack.c.l.b16 %v461
        %v1623 = vunpack.c.h.b16 %v461
        %v1624 = vunpack.c.l.b16 %v462
        %v1625 = vunpack.c.l.b16 %v463
        %v1626 = vunpack.c.h.b16 %v463
        %v1627 = vunpack.c.l.b16 %v464
        %v1628 = vunpack.c.l.b16 %v465
        %v1629 = vunpack.c.h.b16 %v465
        %v1630 = vunpack.c.l.b16 %v466
        %v1631 = vunpack.c.l.b16 %v467
        %v1632 = vunpack.c.h.b16 %v467
        %v1633 = vunpack.c.l.b16 %v468
        %v1634 = vunpack.c.l.b16 %v469
        %v1635 = vunpack.c.h.b16 %v469
        %v1636 = vunpack.c.l.b16 %v470
        %v1637 = vunpack.c.l.b16 %v471
        %v1638 = vunpack.c.h.b16 %v471
        %v1639 = vunpack.c.l.b16 %v472
        %v1640 = vunpack.c.l.b16 %v473
        %v1641 = vunpack.c.h.b16 %v473
        %v1642 = vunpack.c.l.b16 %v474
        %v1643 = vunpack.c.l.b16 %v475
        %v1644 = vunpack.c.h.b16 %v475
        %v1645 = vunpack.c.l.b16 %v476
        %v1646 = vunpack.c.l.b16 %v477
        %v1647 = vunpack.c.h.b16 %v477
        %v1648 = vunpack.c.l.b16 %v478
        %v1649 = vunpack.c.l.b16 %v479
        %v1650 = vunpack.c.h.b16 %v479
        %v1651 = vunpack.c.l.b16 %v480
        %v1652 = vunpack.c.l.b16 %v481
        %v1653 = vunpack.c.h.b16 %v481
        %v1654 = vunpack.c.l.b16 %v482
        %v1655 = vunpack.c.l.b16 %v483
        %v1656 = vunpack.c.h.b16 %v483
        %v1657 = vunpack.c.l.b16 %v484
        %v1658 = vunpack.c.l.b16 %v485
        %v1659 = vunpack.c.h.b16 %v485
        %v1660 = vunpack.c.l.b16 %v486
        %v1661 = vunpack.c.l.b16 %v487
        %v1662 = vunpack.c.h.b16 %v487
        %v1663 = vunpack.c.l.b16 %v488
        %v1664 = vunpack.c.l.b16 %v489
        %v1665 = vunpack.c.h.b16 %v489
        %v1666 = vunpack.c.l.b16 %v490
        %v1667 = vunpack.c.l.b16 %v491
        %v1668 = vunpack.c.h.b16 %v491
        %v1669 = vunpack.c.l.b16 %v492
        %v1670 = vunpack.c.l.b16 %v493
        %v1671 = vunpack.c.h.b16 %v493
        %v1672 = vunpack.c.l.b16 %v494
        %v1673 = vunpack.c.l.b16 %v495
        %v1674 = vunpack.c.h.b16 %v495
        %v1675 = vunpack.c.l.b16 %v496
        %v1676 = vunpack.c.l.b16 %v497
        %v1677 = vunpack.c.h.b16 %v497
        %v1678 = vunpack.c.l.b16 %v498
        %v1679 = vunpack.c.l.b16 %v499
        %v1680 = vunpack.c.h.b16 %v499
        %v1681 = vunpack.c.l.b16 %v500
        %v1682 = vunpack.c.l.b16 %v501
        %v1683 = vunpack.c.h.b16 %v501
        %v1684 = vunpack.c.l.b16 %v502
        %v1685 = vunpack.c.l.b16 %v503
        %v1686 = vunpack.c.h.b16 %v503
        %v1687 = vunpack.c.l.b16 %v504
        %v1688 = vunpack.c.l.b16 %v505
        %v1689 = vunpack.c.h.b16 %v505
        %v1690 = vunpack.c.l.b16 %v506
        %v1691 = vunpack.c.l.b16 %v507
        %v1692 = vunpack.c.h.b16 %v507
        %v1693 = vunpack.c.l.b16 %v508
        %v1694 = vunpack.c.l.b16 %v509
        %v1695 = vunpack.c.h.b16 %v509
        %v1696 = vunpack.c.l.b16 %v510
        %v1697 = vunpack.c.l.b16 %v511
        %v1698 = vunpack.c.h.b16 %v511
        %v1699 = vunpack.c.l.b16 %v512
        %v1700 = vunpack.c.l.b16 %v513
        %v1701 = vunpack.c.h.b16 %v513
        %v1702 = vunpack.c.l.b16 %v514
        %v1703 = vpack.c.b16 %v1562, %v1559
        %v1704 = vpack.c.b16 %v1563, %v1560
        %v1705 = vpack.c.b16 %v1564, %v1561
        %v1706 = vpack.c.b16 %v1568, %v1565
        %v1707 = vpack.c.b16 %v1569, %v1566
        %v1708 = vpack.c.b16 %v1570, %v1567
        %v1709 = vpack.c.b16 %v1574, %v1571
        %v1710 = vpack.c.b16 %v1575, %v1572
        %v1711 = vpack.c.b16 %v1576, %v1573
        %v1712 = vpack.c.b16 %v1580, %v1577
        %v1713 = vpack.c.b16 %v1581, %v1578
        %v1714 = vpack.c.b16 %v1582, %v1579
        %v1715 = vpack.c.b16 %v1586, %v1583
        %v1716 = vpack.c.b16 %v1587, %v1584
        %v1717 = vpack.c.b16 %v1588, %v1585
        %v1718 = vpack.c.b16 %v1592, %v1589
        %v1719 = vpack.c.b16 %v1593, %v1590
        %v1720 = vpack.c.b16 %v1594, %v1591
        %v1721 = vpack.c.b16 %v1598, %v1595
        %v1722 = vpack.c.b16 %v1599, %v1596
        %v1723 = vpack.c.b16 %v1600, %v1597
        %v1724 = vpack.c.b16 %v1604, %v1601
        %v1725 = vpack.c.b16 %v1605, %v1602
        %v1726 = vpack.c.b16 %v1606, %v1603
        %v1727 = vpack.c.b16 %v1610, %v1607
        %v1728 = vpack.c.b16 %v1611, %v1608
        %v1729 = vpack.c.b16 %v1612, %v1609
        %v1730 = vpack.c.b16 %v1616, %v1613
        %v1731 = vpack.c.b16 %v1617, %v1614
        %v1732 = vpack.c.b16 %v1618, %v1615
        %v1733 = vpack.c.b16 %v1622, %v1619
        %v1734 = vpack.c.b16 %v1623, %v1620
        %v1735 = vpack.c.b16 %v1624, %v1621
        %v1736 = vpack.c.b16 %v1628, %v1625
        %v1737 = vpack.c.b16 %v1629, %v1626
        %v1738 = vpack.c.b16 %v1630, %v1627
        %v1739 = vpack.c.b16 %v1634, %v1631
        %v1740 = vpack.c.b16 %v1635, %v1632
        %v1741 = vpack.c.b16 %v1636, %v1633
        %v1742 = vpack.c.b16 %v1640, %v1637
        %v1743 = vpack.c.b16 %v1641, %v1638
        %v1744 = vpack.c.b16 %v1642, %v1639
        %v1745 = vpack.c.b16 %v1646, %v1643
        %v1746 = vpack.c.b16 %v1647, %v1644
        %v1747 = vpack.c.b16 %v1648, %v1645
        %v1748 = vpack.c.b16 %v1652, %v1649
        %v1749 = vpack.c.b16 %v1653, %v1650
        %v1750 = vpack.c.b16 %v1654, %v1651
        %v1751 = vpack.c.b16 %v1658, %v1655
        %v1752 = vpack.c.b16 %v1659, %v1656
        %v1753 = vpack.c.b16 %v1660, %v1657
        %v1754 = vpack.c.b16 %v1664, %v1661
        %v1755 = vpack.c.b16 %v1665, %v1662
        %v1756 = vpack.c.b16 %v1666, %v1663
        %v1757 = vpack.c.b16 %v1670, %v1667
        %v1758 = vpack.c.b16 %v1671, %v1668
        %v1759 = vpack.c.b16 %v1672, %v1669
        %v1760 = vpack.c.b16 %v1676, %v1673
        %v1761 = vpack.c.b16 %v1677, %v1674
        %v1762 = vpack.c.b16 %v1678, %v1675
        %v1763 = vpack.c.b16 %v1682, %v1679
        %v1764 = vpack.c.b16 %v1683, %v1680
        %v1765 = vpack.c.b16 %v1684, %v1681
        %v1766 = vpack.c.b16 %v1688, %v1685
        %v1767 = vpack.c.b16 %v1689, %v1686
        %v1768 = vpack.c.b16 %v1690, %v1687
        %v1769 = vpack.c.b16 %v1694, %v1691
        %v1770 = vpack.c.b16 %v1695, %v1692
        %v1771 = vpack.c.b16 %v1696, %v1693
        %v1772 = vpack.c.b16 %v1700, %v1697
        %v1773 = vpack.c.b16 %v1701, %v1698
        %v1774 = vpack.c.b16 %v1702, %v1699
        %1847 = vmatprep.subr.bf16.mxu0 %v1704
        %1848 = vmatpush1.bf16.msra.mxu0 %v1703
        %1849 = vmatprep.subr.bf16.mxu0 %v1707
        %1850 = vmatpush1.bf16.msra.mxu0 %v1706
        %1851 = vmatprep.subr.bf16.mxu0 %v1710
        %1852 = vmatpush1.bf16.msra.mxu0 %v1709
        %1853 = vmatprep.subr.bf16.mxu0 %v1713
        %1854 = vmatpush1.bf16.msra.mxu0 %v1712
        %1855 = vmatprep.subr.bf16.mxu0 %v1716
        %1856 = vmatpush1.bf16.msra.mxu0 %v1715
        %1857 = vmatprep.subr.bf16.mxu0 %v1719
        %1858 = vmatpush1.bf16.msra.mxu0 %v1718
        %1859 = vmatprep.subr.bf16.mxu0 %v1722
        %1860 = vmatpush1.bf16.msra.mxu0 %v1721
        %1861 = vmatprep.subr.bf16.mxu0 %v1725
        %1862 = vmatpush1.bf16.msra.mxu0 %v1724
        %1863 = vmatprep.subr.bf16.mxu0 %v1728
        %1864 = vmatpush1.bf16.msra.mxu0 %v1727
        %1865 = vmatprep.subr.bf16.mxu0 %v1731
        %1866 = vmatpush1.bf16.msra.mxu0 %v1730
        %1867 = vmatprep.subr.bf16.mxu0 %v1734
        %1868 = vmatpush1.bf16.msra.mxu0 %v1733
        %1869 = vmatprep.subr.bf16.mxu0 %v1737
        %1870 = vmatpush1.bf16.msra.mxu0 %v1736
        %1871 = vmatprep.subr.bf16.mxu0 %v1740
        %1872 = vmatpush1.bf16.msra.mxu0 %v1739
        %1873 = vmatprep.subr.bf16.mxu0 %v1743
        %1874 = vmatpush1.bf16.msra.mxu0 %v1742
        %1875 = vmatprep.subr.bf16.mxu0 %v1746
        %1876 = vmatpush1.bf16.msra.mxu0 %v1745
        %1877 = vmatprep.subr.bf16.mxu0 %v1749
        %1878 = vmatpush1.bf16.msra.mxu0 %v1748
        %1879 = vmatprep.mubr.bf16.mxu0 %v300
        %1880 = vmatmul.mubr.bf16.gmra.mrb[0].mxu0 %v299
        %v1881 = vpop.f32.mrb[0].mxu0
        %v1882 = vadd.f32 0.0, %v1881
        %v1883 = vpop.f32.mrb[0].mxu0
        %v1884 = vadd.f32 0.0, %v1883
        %v1885 = vpop.f32.mrb[0].mxu0
        %v1886 = vadd.f32 0.0, %v1885
        %v1887 = vpop.f32.mrb[0].mxu0
        %v1888 = vadd.f32 0.0, %v1887
        %1889 = vmatprep.mubr.bf16.mxu0 %v303
        %1890 = vmatmul.mubr.bf16.gmra.mrb[0].mxu0 %v302
        %v1891 = vpop.f32.mrb[0].mxu0
        %v1892 = vadd.f32 0.0, %v1891
        %v1893 = vpop.f32.mrb[0].mxu0
        %v1894 = vadd.f32 0.0, %v1893
        %v1895 = vpop.f32.mrb[0].mxu0
        %v1896 = vadd.f32 0.0, %v1895
        %v1897 = vpop.f32.mrb[0].mxu0
        %v1898 = vadd.f32 0.0, %v1897
        %1899 = vmatprep.mubr.bf16.mxu0 %v306
        %1900 = vmatmul.mubr.bf16.gmra.mrb[0].mxu0 %v305
        %v1901 = vpop.f32.mrb[0].mxu0
        %v1902 = vadd.f32 0.0, %v1901
        %v1903 = vpop.f32.mrb[0].mxu0
        %v1904 = vadd.f32 0.0, %v1903
        %v1905 = vpop.f32.mrb[0].mxu0
        %v1906 = vadd.f32 0.0, %v1905
        %v1907 = vpop.f32.mrb[0].mxu0
        %v1908 = vadd.f32 0.0, %v1907
        %1909 = vmatprep.mubr.bf16.mxu0 %v309
        %1910 = vmatmul.mubr.bf16.gmra.mrb[0].mxu0 %v308
        %v1911 = vpop.f32.mrb[0].mxu0
        %v1912 = vadd.f32 0.0, %v1911
        %v1913 = vpop.f32.mrb[0].mxu0
        %v1914 = vadd.f32 0.0, %v1913
        %v1915 = vpop.f32.mrb[0].mxu0
        %v1916 = vadd.f32 0.0, %v1915
        %v1917 = vpop.f32.mrb[0].mxu0
        %v1918 = vadd.f32 0.0, %v1917
        %1919 = vmatprep.mubr.bf16.mxu0 %v312
        %1920 = vmatmul.mubr.bf16.gmra.mrb[0].mxu0 %v311
        %v1921 = vpop.f32.mrb[0].mxu0
        %v1922 = vadd.f32 0.0, %v1921
        %v1923 = vpop.f32.mrb[0].mxu0
        %v1924 = vadd.f32 0.0, %v1923
        %v1925 = vpop.f32.mrb[0].mxu0
        %v1926 = vadd.f32 0.0, %v1925
        %v1927 = vpop.f32.mrb[0].mxu0
        %v1928 = vadd.f32 0.0, %v1927
        %1929 = vmatprep.mubr.bf16.mxu0 %v315
        %1930 = vmatmul.mubr.bf16.gmra.mrb[0].mxu0 %v314
        %v1931 = vpop.f32.mrb[0].mxu0
        %v1932 = vadd.f32 0.0, %v1931
        %v1933 = vpop.f32.mrb[0].mxu0
        %v1934 = vadd.f32 0.0, %v1933
        %v1935 = vpop.f32.mrb[0].mxu0
        %v1936 = vadd.f32 0.0, %v1935
        %v1937 = vpop.f32.mrb[0].mxu0
        %v1938 = vadd.f32 0.0, %v1937
        %1939 = vmatprep.mubr.bf16.mxu0 %v318
        %1940 = vmatmul.mubr.bf16.gmra.mrb[0].mxu0 %v317
        %v1941 = vpop.f32.mrb[0].mxu0
        %v1942 = vadd.f32 0.0, %v1941
        %v1943 = vpop.f32.mrb[0].mxu0
        %v1944 = vadd.f32 0.0, %v1943
        %v1945 = vpop.f32.mrb[0].mxu0
        %v1946 = vadd.f32 0.0, %v1945
        %v1947 = vpop.f32.mrb[0].mxu0
        %v1948 = vadd.f32 0.0, %v1947
        %1949 = vmatprep.mubr.bf16.mxu0 %v321
        %1950 = vmatmul.mubr.bf16.gmra.mrb[0].mxu0 %v320
        %v1951 = vpop.f32.mrb[0].mxu0
        %v1952 = vadd.f32 0.0, %v1951
        %v1953 = vpop.f32.mrb[0].mxu0
        %v1954 = vadd.f32 0.0, %v1953
        %v1955 = vpop.f32.mrb[0].mxu0
        %v1956 = vadd.f32 0.0, %v1955
        %v1957 = vpop.f32.mrb[0].mxu0
        %v1958 = vadd.f32 0.0, %v1957
        %1959 = vdwg.mxu0
        %1960 = vmatprep.subr.bf16.mxu0 %v1752
        %1961 = vmatpush1.bf16.msra.mxu0 %v1751
        %1962 = vmatprep.subr.bf16.mxu0 %v1755
        %1963 = vmatpush1.bf16.msra.mxu0 %v1754
        %1964 = vmatprep.subr.bf16.mxu0 %v1758
        %1965 = vmatpush1.bf16.msra.mxu0 %v1757
        %1966 = vmatprep.subr.bf16.mxu0 %v1761
        %1967 = vmatpush1.bf16.msra.mxu0 %v1760
        %1968 = vmatprep.subr.bf16.mxu0 %v1764
        %1969 = vmatpush1.bf16.msra.mxu0 %v1763
        %1970 = vmatprep.subr.bf16.mxu0 %v1767
        %1971 = vmatpush1.bf16.msra.mxu0 %v1766
        %1972 = vmatprep.subr.bf16.mxu0 %v1770
        %1973 = vmatpush1.bf16.msra.mxu0 %v1769
        %1974 = vmatprep.subr.bf16.mxu0 %v1773
        %1975 = vmatpush1.bf16.msra.mxu0 %v1772
        %1976 = vmatprep.subr.bf16.mxu0 0
        %1977 = vmatpush1.bf16.msra.mxu0 0
        %1978 = vmatprep.subr.bf16.mxu0 0
        %1979 = vmatpush1.bf16.msra.mxu0 0
        %1980 = vmatprep.subr.bf16.mxu0 0
        %1981 = vmatpush1.bf16.msra.mxu0 0
        %1982 = vmatprep.subr.bf16.mxu0 0
        %1983 = vmatpush1.bf16.msra.mxu0 0
        %1984 = vmatprep.subr.bf16.mxu0 0
        %1985 = vmatpush1.bf16.msra.mxu0 0
        %1986 = vmatprep.subr.bf16.mxu0 0
        %1987 = vmatpush1.bf16.msra.mxu0 0
        %1988 = vmatprep.subr.bf16.mxu0 0
        %1989 = vmatpush1.bf16.msra.mxu0 0
        %1990 = vmatprep.subr.bf16.mxu0 0
        %1991 = vmatpush1.bf16.msra.mxu0 0
        %1992 = vmatprep.mubr.bf16.mxu0 0
        %1993 = vmatmul.mubr.bf16.gmra.mrb[0].mxu0 %v301
        %v1994 = vpop.f32.mrb[0].mxu0
        %v1995 = vadd.f32 %v1882, %v1994
        %v1996 = vpop.f32.mrb[0].mxu0
        %v1997 = vadd.f32 %v1884, %v1996
        %v1998 = vpop.f32.mrb[0].mxu0
        %v1999 = vadd.f32 %v1886, %v1998
        %v2000 = vpop.f32.mrb[0].mxu0
        %v2001 = vadd.f32 %v1888, %v2000
        %2002 = vmatprep.mubr.bf16.mxu0 0
        %2003 = vmatmul.mubr.bf16.gmra.mrb[0].mxu0 %v304
        %v2004 = vpop.f32.mrb[0].mxu0
        %v2005 = vadd.f32 %v1892, %v2004
        %v2006 = vpop.f32.mrb[0].mxu0
        %v2007 = vadd.f32 %v1894, %v2006
        %v2008 = vpop.f32.mrb[0].mxu0
        %v2009 = vadd.f32 %v1896, %v2008
        %v2010 = vpop.f32.mrb[0].mxu0
        %v2011 = vadd.f32 %v1898, %v2010
        %2012 = vmatprep.mubr.bf16.mxu0 0
        %2013 = vmatmul.mubr.bf16.gmra.mrb[0].mxu0 %v307
        %v2014 = vpop.f32.mrb[0].mxu0
        %v2015 = vadd.f32 %v1902, %v2014
        %v2016 = vpop.f32.mrb[0].mxu0
        %v2017 = vadd.f32 %v1904, %v2016
        %v2018 = vpop.f32.mrb[0].mxu0
        %v2019 = vadd.f32 %v1906, %v2018
        %v2020 = vpop.f32.mrb[0].mxu0
        %v2021 = vadd.f32 %v1908, %v2020
        %2022 = vmatprep.mubr.bf16.mxu0 0
        %2023 = vmatmul.mubr.bf16.gmra.mrb[0].mxu0 %v310
        %v2024 = vpop.f32.mrb[0].mxu0
        %v2025 = vadd.f32 %v1912, %v2024
        %v2026 = vpop.f32.mrb[0].mxu0
        %v2027 = vadd.f32 %v1914, %v2026
        %v2028 = vpop.f32.mrb[0].mxu0
        %v2029 = vadd.f32 %v1916, %v2028
        %v2030 = vpop.f32.mrb[0].mxu0
        %v2031 = vadd.f32 %v1918, %v2030
        %2032 = vmatprep.mubr.bf16.mxu0 0
        %2033 = vmatmul.mubr.bf16.gmra.mrb[0].mxu0 %v313
        %v2034 = vpop.f32.mrb[0].mxu0
        %v2035 = vadd.f32 %v1922, %v2034
        %v2036 = vpop.f32.mrb[0].mxu0
        %v2037 = vadd.f32 %v1924, %v2036
        %v2038 = vpop.f32.mrb[0].mxu0
        %v2039 = vadd.f32 %v1926, %v2038
        %v2040 = vpop.f32.mrb[0].mxu0
        %v2041 = vadd.f32 %v1928, %v2040
        %2042 = vmatprep.mubr.bf16.mxu0 0
        %2043 = vmatmul.mubr.bf16.gmra.mrb[0].mxu0 %v316
        %v2044 = vpop.f32.mrb[0].mxu0
        %v2045 = vadd.f32 %v1932, %v2044
        %v2046 = vpop.f32.mrb[0].mxu0
        %v2047 = vadd.f32 %v1934, %v2046
        %v2048 = vpop.f32.mrb[0].mxu0
        %v2049 = vadd.f32 %v1936, %v2048
        %v2050 = vpop.f32.mrb[0].mxu0
        %v2051 = vadd.f32 %v1938, %v2050
        %2052 = vmatprep.mubr.bf16.mxu0 0
        %2053 = vmatmul.mubr.bf16.gmra.mrb[0].mxu0 %v319
        %v2054 = vpop.f32.mrb[0].mxu0
        %v2055 = vadd.f32 %v1942, %v2054
        %v2056 = vpop.f32.mrb[0].mxu0
        %v2057 = vadd.f32 %v1944, %v2056
        %v2058 = vpop.f32.mrb[0].mxu0
        %v2059 = vadd.f32 %v1946, %v2058
        %v2060 = vpop.f32.mrb[0].mxu0
        %v2061 = vadd.f32 %v1948, %v2060
        %2062 = vmatprep.mubr.bf16.mxu0 0
        %2063 = vmatmul.mubr.bf16.gmra.mrb[0].mxu0 %v322
        %v2064 = vpop.f32.mrb[0].mxu0
        %v2065 = vadd.f32 %v1952, %v2064
        %v2066 = vpop.f32.mrb[0].mxu0
        %v2067 = vadd.f32 %v1954, %v2066
        %v2068 = vpop.f32.mrb[0].mxu0
        %v2069 = vadd.f32 %v1956, %v2068
        %v2070 = vpop.f32.mrb[0].mxu0
        %v2071 = vadd.f32 %v1958, %v2070
        %2072 = vdwg.mxu0
        %2073 = vmatprep.subr.bf16.mxu0 0
        %2074 = vmatpush1.bf16.msra.mxu0 %v1705
        %2075 = vmatprep.subr.bf16.mxu0 0
        %2076 = vmatpush1.bf16.msra.mxu0 %v1708
        %2077 = vmatprep.subr.bf16.mxu0 0
        %2078 = vmatpush1.bf16.msra.mxu0 %v1711
        %2079 = vmatprep.subr.bf16.mxu0 0
        %2080 = vmatpush1.bf16.msra.mxu0 %v1714
        %2081 = vmatprep.subr.bf16.mxu0 0
        %2082 = vmatpush1.bf16.msra.mxu0 %v1717
        %2083 = vmatprep.subr.bf16.mxu0 0
        %2084 = vmatpush1.bf16.msra.mxu0 %v1720
        %2085 = vmatprep.subr.bf16.mxu0 0
        %2086 = vmatpush1.bf16.msra.mxu0 %v1723
        %2087 = vmatprep.subr.bf16.mxu0 0
        %2088 = vmatpush1.bf16.msra.mxu0 %v1726
        %2089 = vmatprep.subr.bf16.mxu0 0
        %2090 = vmatpush1.bf16.msra.mxu0 %v1729
        %2091 = vmatprep.subr.bf16.mxu0 0
        %2092 = vmatpush1.bf16.msra.mxu0 %v1732
        %2093 = vmatprep.subr.bf16.mxu0 0
        %2094 = vmatpush1.bf16.msra.mxu0 %v1735
        %2095 = vmatprep.subr.bf16.mxu0 0
        %2096 = vmatpush1.bf16.msra.mxu0 %v1738
        %2097 = vmatprep.subr.bf16.mxu0 0
        %2098 = vmatpush1.bf16.msra.mxu0 %v1741
        %2099 = vmatprep.subr.bf16.mxu0 0
        %2100 = vmatpush1.bf16.msra.mxu0 %v1744
        %2101 = vmatprep.subr.bf16.mxu0 0
        %2102 = vmatpush1.bf16.msra.mxu0 %v1747
        %2103 = vmatprep.subr.bf16.mxu0 0
        %2104 = vmatpush1.bf16.msra.mxu0 %v1750
        %2105 = vmatprep.mubr.bf16.mxu0 %v300
        %2106 = vmatmul.mubr.bf16.gmra.mrb[0].mxu0 %v299
        %v2107 = vpop.f32.mrb[0].mxu0
        %v2108 = vadd.f32 0.0, %v2107
        %v2109 = vpop.f32.mrb[0].mxu0
        %v2110 = vpop.f32.mrb[0].mxu0
        %v2111 = vadd.f32 0.0, %v2110
        %v2112 = vpop.f32.mrb[0].mxu0
        %2113 = vmatprep.mubr.bf16.mxu0 %v303
        %2114 = vmatmul.mubr.bf16.gmra.mrb[0].mxu0 %v302
        %v2115 = vpop.f32.mrb[0].mxu0
        %v2116 = vadd.f32 0.0, %v2115
        %v2117 = vpop.f32.mrb[0].mxu0
        %v2118 = vpop.f32.mrb[0].mxu0
        %v2119 = vadd.f32 0.0, %v2118
        %v2120 = vpop.f32.mrb[0].mxu0
        %2121 = vmatprep.mubr.bf16.mxu0 %v306
        %2122 = vmatmul.mubr.bf16.gmra.mrb[0].mxu0 %v305
        %v2123 = vpop.f32.mrb[0].mxu0
        %v2124 = vadd.f32 0.0, %v2123
        %v2125 = vpop.f32.mrb[0].mxu0
        %v2126 = vpop.f32.mrb[0].mxu0
        %v2127 = vadd.f32 0.0, %v2126
        %v2128 = vpop.f32.mrb[0].mxu0
        %2129 = vmatprep.mubr.bf16.mxu0 %v309
        %2130 = vmatmul.mubr.bf16.gmra.mrb[0].mxu0 %v308
        %v2131 = vpop.f32.mrb[0].mxu0
        %v2132 = vadd.f32 0.0, %v2131
        %v2133 = vpop.f32.mrb[0].mxu0
        %v2134 = vpop.f32.mrb[0].mxu0
        %v2135 = vadd.f32 0.0, %v2134
        %v2136 = vpop.f32.mrb[0].mxu0
        %2137 = vmatprep.mubr.bf16.mxu0 %v312
        %2138 = vmatmul.mubr.bf16.gmra.mrb[0].mxu0 %v311
        %v2139 = vpop.f32.mrb[0].mxu0
        %v2140 = vadd.f32 0.0, %v2139
        %v2141 = vpop.f32.mrb[0].mxu0
        %v2142 = vpop.f32.mrb[0].mxu0
        %v2143 = vadd.f32 0.0, %v2142
        %v2144 = vpop.f32.mrb[0].mxu0
        %2145 = vmatprep.mubr.bf16.mxu0 %v315
        %2146 = vmatmul.mubr.bf16.gmra.mrb[0].mxu0 %v314
        %v2147 = vpop.f32.mrb[0].mxu0
        %v2148 = vadd.f32 0.0, %v2147
        %v2149 = vpop.f32.mrb[0].mxu0
        %v2150 = vpop.f32.mrb[0].mxu0
        %v2151 = vadd.f32 0.0, %v2150
        %v2152 = vpop.f32.mrb[0].mxu0
        %2153 = vmatprep.mubr.bf16.mxu0 %v318
        %2154 = vmatmul.mubr.bf16.gmra.mrb[0].mxu0 %v317
        %v2155 = vpop.f32.mrb[0].mxu0
        %v2156 = vadd.f32 0.0, %v2155
        %v2157 = vpop.f32.mrb[0].mxu0
        %v2158 = vpop.f32.mrb[0].mxu0
        %v2159 = vadd.f32 0.0, %v2158
        %v2160 = vpop.f32.mrb[0].mxu0
        %2161 = vmatprep.mubr.bf16.mxu0 %v321
        %2162 = vmatmul.mubr.bf16.gmra.mrb[0].mxu0 %v320
        %v2163 = vpop.f32.mrb[0].mxu0
        %v2164 = vadd.f32 0.0, %v2163
        %v2165 = vpop.f32.mrb[0].mxu0
        %v2166 = vpop.f32.mrb[0].mxu0
        %v2167 = vadd.f32 0.0, %v2166
        %v2168 = vpop.f32.mrb[0].mxu0
        %2169 = vdwg.mxu0
        %2170 = vmatprep.subr.bf16.mxu0 0
        %2171 = vmatpush1.bf16.msra.mxu0 %v1753
        %2172 = vmatprep.subr.bf16.mxu0 0
        %2173 = vmatpush1.bf16.msra.mxu0 %v1756
        %2174 = vmatprep.subr.bf16.mxu0 0
        %2175 = vmatpush1.bf16.msra.mxu0 %v1759
        %2176 = vmatprep.subr.bf16.mxu0 0
        %2177 = vmatpush1.bf16.msra.mxu0 %v1762
        %2178 = vmatprep.subr.bf16.mxu0 0
        %2179 = vmatpush1.bf16.msra.mxu0 %v1765
        %2180 = vmatprep.subr.bf16.mxu0 0
        %2181 = vmatpush1.bf16.msra.mxu0 %v1768
        %2182 = vmatprep.subr.bf16.mxu0 0
        %2183 = vmatpush1.bf16.msra.mxu0 %v1771
        %2184 = vmatprep.subr.bf16.mxu0 0
        %2185 = vmatpush1.bf16.msra.mxu0 %v1774
        %2186 = vmatprep.subr.bf16.mxu0 0
        %2187 = vmatpush1.bf16.msra.mxu0 0
        %2188 = vmatprep.subr.bf16.mxu0 0
        %2189 = vmatpush1.bf16.msra.mxu0 0
        %2190 = vmatprep.subr.bf16.mxu0 0
        %2191 = vmatpush1.bf16.msra.mxu0 0
        %2192 = vmatprep.subr.bf16.mxu0 0
        %2193 = vmatpush1.bf16.msra.mxu0 0
        %2194 = vmatprep.subr.bf16.mxu0 0
        %2195 = vmatpush1.bf16.msra.mxu0 0
        %2196 = vmatprep.subr.bf16.mxu0 0
        %2197 = vmatpush1.bf16.msra.mxu0 0
        %2198 = vmatprep.subr.bf16.mxu0 0
        %2199 = vmatpush1.bf16.msra.mxu0 0
        %2200 = vmatprep.subr.bf16.mxu0 0
        %2201 = vmatpush1.bf16.msra.mxu0 0
        %2202 = vmatprep.mubr.bf16.mxu0 0
        %2203 = vmatmul.mubr.bf16.gmra.mrb[0].mxu0 %v301
        %v2204 = vpop.f32.mrb[0].mxu0
        %v2205 = vadd.f32 %v2108, %v2204
        %v2206 = vpop.f32.mrb[0].mxu0
        %v2207 = vpop.f32.mrb[0].mxu0
        %v2208 = vadd.f32 %v2111, %v2207
        %v2209 = vpop.f32.mrb[0].mxu0
        %2210 = vmatprep.mubr.bf16.mxu0 0
        %2211 = vmatmul.mubr.bf16.gmra.mrb[0].mxu0 %v304
        %v2212 = vpop.f32.mrb[0].mxu0
        %v2213 = vadd.f32 %v2116, %v2212
        %v2214 = vpop.f32.mrb[0].mxu0
        %v2215 = vpop.f32.mrb[0].mxu0
        %v2216 = vadd.f32 %v2119, %v2215
        %v2217 = vpop.f32.mrb[0].mxu0
        %2218 = vmatprep.mubr.bf16.mxu0 0
        %2219 = vmatmul.mubr.bf16.gmra.mrb[0].mxu0 %v307
        %v2220 = vpop.f32.mrb[0].mxu0
        %v2221 = vadd.f32 %v2124, %v2220
        %v2222 = vpop.f32.mrb[0].mxu0
        %v2223 = vpop.f32.mrb[0].mxu0
        %v2224 = vadd.f32 %v2127, %v2223
        %v2225 = vpop.f32.mrb[0].mxu0
        %2226 = vmatprep.mubr.bf16.mxu0 0
        %2227 = vmatmul.mubr.bf16.gmra.mrb[0].mxu0 %v310
        %v2228 = vpop.f32.mrb[0].mxu0
        %v2229 = vadd.f32 %v2132, %v2228
        %v2230 = vpop.f32.mrb[0].mxu0
        %v2231 = vpop.f32.mrb[0].mxu0
        %v2232 = vadd.f32 %v2135, %v2231
        %v2233 = vpop.f32.mrb[0].mxu0
        %2234 = vmatprep.mubr.bf16.mxu0 0
        %2235 = vmatmul.mubr.bf16.gmra.mrb[0].mxu0 %v313
        %v2236 = vpop.f32.mrb[0].mxu0
        %v2237 = vadd.f32 %v2140, %v2236
        %v2238 = vpop.f32.mrb[0].mxu0
        %v2239 = vpop.f32.mrb[0].mxu0
        %v2240 = vadd.f32 %v2143, %v2239
        %v2241 = vpop.f32.mrb[0].mxu0
        %2242 = vmatprep.mubr.bf16.mxu0 0
        %2243 = vmatmul.mubr.bf16.gmra.mrb[0].mxu0 %v316
        %v2244 = vpop.f32.mrb[0].mxu0
        %v2245 = vadd.f32 %v2148, %v2244
        %v2246 = vpop.f32.mrb[0].mxu0
        %v2247 = vpop.f32.mrb[0].mxu0
        %v2248 = vadd.f32 %v2151, %v2247
        %v2249 = vpop.f32.mrb[0].mxu0
        %2250 = vmatprep.mubr.bf16.mxu0 0
        %2251 = vmatmul.mubr.bf16.gmra.mrb[0].mxu0 %v319
        %v2252 = vpop.f32.mrb[0].mxu0
        %v2253 = vadd.f32 %v2156, %v2252
        %v2254 = vpop.f32.mrb[0].mxu0
        %v2255 = vpop.f32.mrb[0].mxu0
        %v2256 = vadd.f32 %v2159, %v2255
        %v2257 = vpop.f32.mrb[0].mxu0
        %2258 = vmatprep.mubr.bf16.mxu0 0
        %2259 = vmatmul.mubr.bf16.gmra.mrb[0].mxu0 %v322
        %v2260 = vpop.f32.mrb[0].mxu0
        %v2261 = vadd.f32 %v2164, %v2260
        %v2262 = vpop.f32.mrb[0].mxu0
        %v2263 = vpop.f32.mrb[0].mxu0
        %v2264 = vadd.f32 %v2167, %v2263
        %v2265 = vpop.f32.mrb[0].mxu0
        %2266 = vdwg.mxu0
        %v2363 = vunpack.c.l.b16 %v515
        %v2364 = vunpack.c.h.b16 %v515
        %v2365 = vunpack.c.l.b16 %v516
        %v2366 = vunpack.c.l.b16 %v517
        %v2367 = vunpack.c.h.b16 %v517
        %v2368 = vunpack.c.l.b16 %v518
        %v2369 = vunpack.c.l.b16 %v519
        %v2370 = vunpack.c.h.b16 %v519
        %v2371 = vunpack.c.l.b16 %v520
        %v2372 = vunpack.c.l.b16 %v521
        %v2373 = vunpack.c.h.b16 %v521
        %v2374 = vunpack.c.l.b16 %v522
        %v2375 = vunpack.c.l.b16 %v523
        %v2376 = vunpack.c.h.b16 %v523
        %v2377 = vunpack.c.l.b16 %v524
        %v2378 = vunpack.c.l.b16 %v525
        %v2379 = vunpack.c.h.b16 %v525
        %v2380 = vunpack.c.l.b16 %v526
        %v2381 = vunpack.c.l.b16 %v527
        %v2382 = vunpack.c.h.b16 %v527
        %v2383 = vunpack.c.l.b16 %v528
        %v2384 = vunpack.c.l.b16 %v529
        %v2385 = vunpack.c.h.b16 %v529
        %v2386 = vunpack.c.l.b16 %v530
        %v2387 = vunpack.c.l.b16 %v531
        %v2388 = vunpack.c.h.b16 %v531
        %v2389 = vunpack.c.l.b16 %v532
        %v2390 = vunpack.c.l.b16 %v533
        %v2391 = vunpack.c.h.b16 %v533
        %v2392 = vunpack.c.l.b16 %v534
        %v2393 = vunpack.c.l.b16 %v535
        %v2394 = vunpack.c.h.b16 %v535
        %v2395 = vunpack.c.l.b16 %v536
        %v2396 = vunpack.c.l.b16 %v537
        %v2397 = vunpack.c.h.b16 %v537
        %v2398 = vunpack.c.l.b16 %v538
        %v2399 = vunpack.c.l.b16 %v539
        %v2400 = vunpack.c.h.b16 %v539
        %v2401 = vunpack.c.l.b16 %v540
        %v2402 = vunpack.c.l.b16 %v541
        %v2403 = vunpack.c.h.b16 %v541
        %v2404 = vunpack.c.l.b16 %v542
        %v2405 = vunpack.c.l.b16 %v543
        %v2406 = vunpack.c.h.b16 %v543
        %v2407 = vunpack.c.l.b16 %v544
        %v2408 = vunpack.c.l.b16 %v545
        %v2409 = vunpack.c.h.b16 %v545
        %v2410 = vunpack.c.l.b16 %v546
        %v2411 = vunpack.c.l.b16 %v547
        %v2412 = vunpack.c.h.b16 %v547
        %v2413 = vunpack.c.l.b16 %v548
        %v2414 = vunpack.c.l.b16 %v549
        %v2415 = vunpack.c.h.b16 %v549
        %v2416 = vunpack.c.l.b16 %v550
        %v2417 = vunpack.c.l.b16 %v551
        %v2418 = vunpack.c.h.b16 %v551
        %v2419 = vunpack.c.l.b16 %v552
        %v2420 = vunpack.c.l.b16 %v553
        %v2421 = vunpack.c.h.b16 %v553
        %v2422 = vunpack.c.l.b16 %v554
        %v2423 = vunpack.c.l.b16 %v555
        %v2424 = vunpack.c.h.b16 %v555
        %v2425 = vunpack.c.l.b16 %v556
        %v2426 = vunpack.c.l.b16 %v557
        %v2427 = vunpack.c.h.b16 %v557
        %v2428 = vunpack.c.l.b16 %v558
        %v2429 = vunpack.c.l.b16 %v559
        %v2430 = vunpack.c.h.b16 %v559
        %v2431 = vunpack.c.l.b16 %v560
        %v2432 = vunpack.c.l.b16 %v561
        %v2433 = vunpack.c.h.b16 %v561
        %v2434 = vunpack.c.l.b16 %v562
        %v2435 = vunpack.c.l.b16 %v563
        %v2436 = vunpack.c.h.b16 %v563
        %v2437 = vunpack.c.l.b16 %v564
        %v2438 = vunpack.c.l.b16 %v565
        %v2439 = vunpack.c.h.b16 %v565
        %v2440 = vunpack.c.l.b16 %v566
        %v2441 = vunpack.c.l.b16 %v567
        %v2442 = vunpack.c.h.b16 %v567
        %v2443 = vunpack.c.l.b16 %v568
        %v2444 = vunpack.c.l.b16 %v569
        %v2445 = vunpack.c.h.b16 %v569
        %v2446 = vunpack.c.l.b16 %v570
        %v2447 = vunpack.c.l.b16 %v571
        %v2448 = vunpack.c.h.b16 %v571
        %v2449 = vunpack.c.l.b16 %v572
        %v2450 = vunpack.c.l.b16 %v573
        %v2451 = vunpack.c.h.b16 %v573
        %v2452 = vunpack.c.l.b16 %v574
        %v2453 = vunpack.c.l.b16 %v575
        %v2454 = vunpack.c.h.b16 %v575
        %v2455 = vunpack.c.l.b16 %v576
        %v2456 = vunpack.c.l.b16 %v577
        %v2457 = vunpack.c.h.b16 %v577
        %v2458 = vunpack.c.l.b16 %v578
        %v2459 = vunpack.c.l.b16 %v579
        %v2460 = vunpack.c.h.b16 %v579
        %v2461 = vunpack.c.l.b16 %v580
        %v2462 = vunpack.c.l.b16 %v581
        %v2463 = vunpack.c.h.b16 %v581
        %v2464 = vunpack.c.l.b16 %v582
        %v2465 = vunpack.c.l.b16 %v583
        %v2466 = vunpack.c.h.b16 %v583
        %v2467 = vunpack.c.l.b16 %v584
        %v2468 = vunpack.c.l.b16 %v585
        %v2469 = vunpack.c.h.b16 %v585
        %v2470 = vunpack.c.l.b16 %v586
        %v2471 = vunpack.c.l.b16 %v587
        %v2472 = vunpack.c.h.b16 %v587
        %v2473 = vunpack.c.l.b16 %v588
        %v2474 = vunpack.c.l.b16 %v589
        %v2475 = vunpack.c.h.b16 %v589
        %v2476 = vunpack.c.l.b16 %v590
        %v2477 = vunpack.c.l.b16 %v591
        %v2478 = vunpack.c.h.b16 %v591
        %v2479 = vunpack.c.l.b16 %v592
        %v2480 = vunpack.c.l.b16 %v593
        %v2481 = vunpack.c.h.b16 %v593
        %v2482 = vunpack.c.l.b16 %v594
        %v2483 = vunpack.c.l.b16 %v595
        %v2484 = vunpack.c.h.b16 %v595
        %v2485 = vunpack.c.l.b16 %v596
        %v2486 = vunpack.c.l.b16 %v597
        %v2487 = vunpack.c.h.b16 %v597
        %v2488 = vunpack.c.l.b16 %v598
        %v2489 = vunpack.c.l.b16 %v599
        %v2490 = vunpack.c.h.b16 %v599
        %v2491 = vunpack.c.l.b16 %v600
        %v2492 = vunpack.c.l.b16 %v601
        %v2493 = vunpack.c.h.b16 %v601
        %v2494 = vunpack.c.l.b16 %v602
        %v2495 = vunpack.c.l.b16 %v603
        %v2496 = vunpack.c.h.b16 %v603
        %v2497 = vunpack.c.l.b16 %v604
        %v2498 = vunpack.c.l.b16 %v605
        %v2499 = vunpack.c.h.b16 %v605
        %v2500 = vunpack.c.l.b16 %v606
        %v2501 = vunpack.c.l.b16 %v607
        %v2502 = vunpack.c.h.b16 %v607
        %v2503 = vunpack.c.l.b16 %v608
        %v2504 = vunpack.c.l.b16 %v609
        %v2505 = vunpack.c.h.b16 %v609
        %v2506 = vunpack.c.l.b16 %v610
        %v2507 = vpack.c.b16 %v2366, %v2363
        %v2508 = vpack.c.b16 %v2367, %v2364
        %v2509 = vpack.c.b16 %v2368, %v2365
        %v2510 = vpack.c.b16 %v2372, %v2369
        %v2511 = vpack.c.b16 %v2373, %v2370
        %v2512 = vpack.c.b16 %v2374, %v2371
        %v2513 = vpack.c.b16 %v2378, %v2375
        %v2514 = vpack.c.b16 %v2379, %v2376
        %v2515 = vpack.c.b16 %v2380, %v2377
        %v2516 = vpack.c.b16 %v2384, %v2381
        %v2517 = vpack.c.b16 %v2385, %v2382
        %v2518 = vpack.c.b16 %v2386, %v2383
        %v2519 = vpack.c.b16 %v2390, %v2387
        %v2520 = vpack.c.b16 %v2391, %v2388
        %v2521 = vpack.c.b16 %v2392, %v2389
        %v2522 = vpack.c.b16 %v2396, %v2393
        %v2523 = vpack.c.b16 %v2397, %v2394
        %v2524 = vpack.c.b16 %v2398, %v2395
        %v2525 = vpack.c.b16 %v2402, %v2399
        %v2526 = vpack.c.b16 %v2403, %v2400
        %v2527 = vpack.c.b16 %v2404, %v2401
        %v2528 = vpack.c.b16 %v2408, %v2405
        %v2529 = vpack.c.b16 %v2409, %v2406
        %v2530 = vpack.c.b16 %v2410, %v2407
        %v2531 = vpack.c.b16 %v2414, %v2411
        %v2532 = vpack.c.b16 %v2415, %v2412
        %v2533 = vpack.c.b16 %v2416, %v2413
        %v2534 = vpack.c.b16 %v2420, %v2417
        %v2535 = vpack.c.b16 %v2421, %v2418
        %v2536 = vpack.c.b16 %v2422, %v2419
        %v2537 = vpack.c.b16 %v2426, %v2423
        %v2538 = vpack.c.b16 %v2427, %v2424
        %v2539 = vpack.c.b16 %v2428, %v2425
        %v2540 = vpack.c.b16 %v2432, %v2429
        %v2541 = vpack.c.b16 %v2433, %v2430
        %v2542 = vpack.c.b16 %v2434, %v2431
        %v2543 = vpack.c.b16 %v2438, %v2435
        %v2544 = vpack.c.b16 %v2439, %v2436
        %v2545 = vpack.c.b16 %v2440, %v2437
        %v2546 = vpack.c.b16 %v2444, %v2441
        %v2547 = vpack.c.b16 %v2445, %v2442
        %v2548 = vpack.c.b16 %v2446, %v2443
        %v2549 = vpack.c.b16 %v2450, %v2447
        %v2550 = vpack.c.b16 %v2451, %v2448
        %v2551 = vpack.c.b16 %v2452, %v2449
        %v2552 = vpack.c.b16 %v2456, %v2453
        %v2553 = vpack.c.b16 %v2457, %v2454
        %v2554 = vpack.c.b16 %v2458, %v2455
        %v2555 = vpack.c.b16 %v2462, %v2459
        %v2556 = vpack.c.b16 %v2463, %v2460
        %v2557 = vpack.c.b16 %v2464, %v2461
        %v2558 = vpack.c.b16 %v2468, %v2465
        %v2559 = vpack.c.b16 %v2469, %v2466
        %v2560 = vpack.c.b16 %v2470, %v2467
        %v2561 = vpack.c.b16 %v2474, %v2471
        %v2562 = vpack.c.b16 %v2475, %v2472
        %v2563 = vpack.c.b16 %v2476, %v2473
        %v2564 = vpack.c.b16 %v2480, %v2477
        %v2565 = vpack.c.b16 %v2481, %v2478
        %v2566 = vpack.c.b16 %v2482, %v2479
        %v2567 = vpack.c.b16 %v2486, %v2483
        %v2568 = vpack.c.b16 %v2487, %v2484
        %v2569 = vpack.c.b16 %v2488, %v2485
        %v2570 = vpack.c.b16 %v2492, %v2489
        %v2571 = vpack.c.b16 %v2493, %v2490
        %v2572 = vpack.c.b16 %v2494, %v2491
        %v2573 = vpack.c.b16 %v2498, %v2495
        %v2574 = vpack.c.b16 %v2499, %v2496
        %v2575 = vpack.c.b16 %v2500, %v2497
        %v2576 = vpack.c.b16 %v2504, %v2501
        %v2577 = vpack.c.b16 %v2505, %v2502
        %v2578 = vpack.c.b16 %v2506, %v2503
        %2651 = vmatprep.subr.bf16.mxu0 %v2508
        %2652 = vmatpush1.bf16.msra.mxu0 %v2507
        %2653 = vmatprep.subr.bf16.mxu0 %v2511
        %2654 = vmatpush1.bf16.msra.mxu0 %v2510
        %2655 = vmatprep.subr.bf16.mxu0 %v2514
        %2656 = vmatpush1.bf16.msra.mxu0 %v2513
        %2657 = vmatprep.subr.bf16.mxu0 %v2517
        %2658 = vmatpush1.bf16.msra.mxu0 %v2516
        %2659 = vmatprep.subr.bf16.mxu0 %v2520
        %2660 = vmatpush1.bf16.msra.mxu0 %v2519
        %2661 = vmatprep.subr.bf16.mxu0 %v2523
        %2662 = vmatpush1.bf16.msra.mxu0 %v2522
        %2663 = vmatprep.subr.bf16.mxu0 %v2526
        %2664 = vmatpush1.bf16.msra.mxu0 %v2525
        %2665 = vmatprep.subr.bf16.mxu0 %v2529
        %2666 = vmatpush1.bf16.msra.mxu0 %v2528
        %2667 = vmatprep.subr.bf16.mxu0 %v2532
        %2668 = vmatpush1.bf16.msra.mxu0 %v2531
        %2669 = vmatprep.subr.bf16.mxu0 %v2535
        %2670 = vmatpush1.bf16.msra.mxu0 %v2534
        %2671 = vmatprep.subr.bf16.mxu0 %v2538
        %2672 = vmatpush1.bf16.msra.mxu0 %v2537
        %2673 = vmatprep.subr.bf16.mxu0 %v2541
        %2674 = vmatpush1.bf16.msra.mxu0 %v2540
        %2675 = vmatprep.subr.bf16.mxu0 %v2544
        %2676 = vmatpush1.bf16.msra.mxu0 %v2543
        %2677 = vmatprep.subr.bf16.mxu0 %v2547
        %2678 = vmatpush1.bf16.msra.mxu0 %v2546
        %2679 = vmatprep.subr.bf16.mxu0 %v2550
        %2680 = vmatpush1.bf16.msra.mxu0 %v2549
        %2681 = vmatprep.subr.bf16.mxu0 %v2553
        %2682 = vmatpush1.bf16.msra.mxu0 %v2552
        %2683 = vmatprep.mubr.bf16.mxu0 %v300
        %2684 = vmatmul.mubr.bf16.gmra.mrb[0].mxu0 %v299
        %v2685 = vpop.f32.mrb[0].mxu0
        %v2686 = vadd.f32 0.0, %v2685
        %v2687 = vpop.f32.mrb[0].mxu0
        %v2688 = vadd.f32 0.0, %v2687
        %v2689 = vpop.f32.mrb[0].mxu0
        %v2690 = vadd.f32 0.0, %v2689
        %v2691 = vpop.f32.mrb[0].mxu0
        %v2692 = vadd.f32 0.0, %v2691
        %2693 = vmatprep.mubr.bf16.mxu0 %v303
        %2694 = vmatmul.mubr.bf16.gmra.mrb[0].mxu0 %v302
        %v2695 = vpop.f32.mrb[0].mxu0
        %v2696 = vadd.f32 0.0, %v2695
        %v2697 = vpop.f32.mrb[0].mxu0
        %v2698 = vadd.f32 0.0, %v2697
        %v2699 = vpop.f32.mrb[0].mxu0
        %v2700 = vadd.f32 0.0, %v2699
        %v2701 = vpop.f32.mrb[0].mxu0
        %v2702 = vadd.f32 0.0, %v2701
        %2703 = vmatprep.mubr.bf16.mxu0 %v306
        %2704 = vmatmul.mubr.bf16.gmra.mrb[0].mxu0 %v305
        %v2705 = vpop.f32.mrb[0].mxu0
        %v2706 = vadd.f32 0.0, %v2705
        %v2707 = vpop.f32.mrb[0].mxu0
        %v2708 = vadd.f32 0.0, %v2707
        %v2709 = vpop.f32.mrb[0].mxu0
        %v2710 = vadd.f32 0.0, %v2709
        %v2711 = vpop.f32.mrb[0].mxu0
        %v2712 = vadd.f32 0.0, %v2711
        %2713 = vmatprep.mubr.bf16.mxu0 %v309
        %2714 = vmatmul.mubr.bf16.gmra.mrb[0].mxu0 %v308
        %v2715 = vpop.f32.mrb[0].mxu0
        %v2716 = vadd.f32 0.0, %v2715
        %v2717 = vpop.f32.mrb[0].mxu0
        %v2718 = vadd.f32 0.0, %v2717
        %v2719 = vpop.f32.mrb[0].mxu0
        %v2720 = vadd.f32 0.0, %v2719
        %v2721 = vpop.f32.mrb[0].mxu0
        %v2722 = vadd.f32 0.0, %v2721
        %2723 = vmatprep.mubr.bf16.mxu0 %v312
        %2724 = vmatmul.mubr.bf16.gmra.mrb[0].mxu0 %v311
        %v2725 = vpop.f32.mrb[0].mxu0
        %v2726 = vadd.f32 0.0, %v2725
        %v2727 = vpop.f32.mrb[0].mxu0
        %v2728 = vadd.f32 0.0, %v2727
        %v2729 = vpop.f32.mrb[0].mxu0
        %v2730 = vadd.f32 0.0, %v2729
        %v2731 = vpop.f32.mrb[0].mxu0
        %v2732 = vadd.f32 0.0, %v2731
        %2733 = vmatprep.mubr.bf16.mxu0 %v315
        %2734 = vmatmul.mubr.bf16.gmra.mrb[0].mxu0 %v314
        %v2735 = vpop.f32.mrb[0].mxu0
        %v2736 = vadd.f32 0.0, %v2735
        %v2737 = vpop.f32.mrb[0].mxu0
        %v2738 = vadd.f32 0.0, %v2737
        %v2739 = vpop.f32.mrb[0].mxu0
        %v2740 = vadd.f32 0.0, %v2739
        %v2741 = vpop.f32.mrb[0].mxu0
        %v2742 = vadd.f32 0.0, %v2741
        %2743 = vmatprep.mubr.bf16.mxu0 %v318
        %2744 = vmatmul.mubr.bf16.gmra.mrb[0].mxu0 %v317
        %v2745 = vpop.f32.mrb[0].mxu0
        %v2746 = vadd.f32 0.0, %v2745
        %v2747 = vpop.f32.mrb[0].mxu0
        %v2748 = vadd.f32 0.0, %v2747
        %v2749 = vpop.f32.mrb[0].mxu0
        %v2750 = vadd.f32 0.0, %v2749
        %v2751 = vpop.f32.mrb[0].mxu0
        %v2752 = vadd.f32 0.0, %v2751
        %2753 = vmatprep.mubr.bf16.mxu0 %v321
        %2754 = vmatmul.mubr.bf16.gmra.mrb[0].mxu0 %v320
        %v2755 = vpop.f32.mrb[0].mxu0
        %v2756 = vadd.f32 0.0, %v2755
        %v2757 = vpop.f32.mrb[0].mxu0
        %v2758 = vadd.f32 0.0, %v2757
        %v2759 = vpop.f32.mrb[0].mxu0
        %v2760 = vadd.f32 0.0, %v2759
        %v2761 = vpop.f32.mrb[0].mxu0
        %v2762 = vadd.f32 0.0, %v2761
        %2763 = vdwg.mxu0
        %2764 = vmatprep.subr.bf16.mxu0 %v2556
        %2765 = vmatpush1.bf16.msra.mxu0 %v2555
        %2766 = vmatprep.subr.bf16.mxu0 %v2559
        %2767 = vmatpush1.bf16.msra.mxu0 %v2558
        %2768 = vmatprep.subr.bf16.mxu0 %v2562
        %2769 = vmatpush1.bf16.msra.mxu0 %v2561
        %2770 = vmatprep.subr.bf16.mxu0 %v2565
        %2771 = vmatpush1.bf16.msra.mxu0 %v2564
        %2772 = vmatprep.subr.bf16.mxu0 %v2568
        %2773 = vmatpush1.bf16.msra.mxu0 %v2567
        %2774 = vmatprep.subr.bf16.mxu0 %v2571
        %2775 = vmatpush1.bf16.msra.mxu0 %v2570
        %2776 = vmatprep.subr.bf16.mxu0 %v2574
        %2777 = vmatpush1.bf16.msra.mxu0 %v2573
        %2778 = vmatprep.subr.bf16.mxu0 %v2577
        %2779 = vmatpush1.bf16.msra.mxu0 %v2576
        %2780 = vmatprep.subr.bf16.mxu0 0
        %2781 = vmatpush1.bf16.msra.mxu0 0
        %2782 = vmatprep.subr.bf16.mxu0 0
        %2783 = vmatpush1.bf16.msra.mxu0 0
        %2784 = vmatprep.subr.bf16.mxu0 0
        %2785 = vmatpush1.bf16.msra.mxu0 0
        %2786 = vmatprep.subr.bf16.mxu0 0
        %2787 = vmatpush1.bf16.msra.mxu0 0
        %2788 = vmatprep.subr.bf16.mxu0 0
        %2789 = vmatpush1.bf16.msra.mxu0 0
        %2790 = vmatprep.subr.bf16.mxu0 0
        %2791 = vmatpush1.bf16.msra.mxu0 0
        %2792 = vmatprep.subr.bf16.mxu0 0
        %2793 = vmatpush1.bf16.msra.mxu0 0
        %2794 = vmatprep.subr.bf16.mxu0 0
        %2795 = vmatpush1.bf16.msra.mxu0 0
        %2796 = vmatprep.mubr.bf16.mxu0 0
        %2797 = vmatmul.mubr.bf16.gmra.mrb[0].mxu0 %v301
        %v2798 = vpop.f32.mrb[0].mxu0
        %v2799 = vadd.f32 %v2686, %v2798
        %v2800 = vpop.f32.mrb[0].mxu0
        %v2801 = vadd.f32 %v2688, %v2800
        %v2802 = vpop.f32.mrb[0].mxu0
        %v2803 = vadd.f32 %v2690, %v2802
        %v2804 = vpop.f32.mrb[0].mxu0
        %v2805 = vadd.f32 %v2692, %v2804
        %2806 = vmatprep.mubr.bf16.mxu0 0
        %2807 = vmatmul.mubr.bf16.gmra.mrb[0].mxu0 %v304
        %v2808 = vpop.f32.mrb[0].mxu0
        %v2809 = vadd.f32 %v2696, %v2808
        %v2810 = vpop.f32.mrb[0].mxu0
        %v2811 = vadd.f32 %v2698, %v2810
        %v2812 = vpop.f32.mrb[0].mxu0
        %v2813 = vadd.f32 %v2700, %v2812
        %v2814 = vpop.f32.mrb[0].mxu0
        %v2815 = vadd.f32 %v2702, %v2814
        %2816 = vmatprep.mubr.bf16.mxu0 0
        %2817 = vmatmul.mubr.bf16.gmra.mrb[0].mxu0 %v307
        %v2818 = vpop.f32.mrb[0].mxu0
        %v2819 = vadd.f32 %v2706, %v2818
        %v2820 = vpop.f32.mrb[0].mxu0
        %v2821 = vadd.f32 %v2708, %v2820
        %v2822 = vpop.f32.mrb[0].mxu0
        %v2823 = vadd.f32 %v2710, %v2822
        %v2824 = vpop.f32.mrb[0].mxu0
        %v2825 = vadd.f32 %v2712, %v2824
        %2826 = vmatprep.mubr.bf16.mxu0 0
        %2827 = vmatmul.mubr.bf16.gmra.mrb[0].mxu0 %v310
        %v2828 = vpop.f32.mrb[0].mxu0
        %v2829 = vadd.f32 %v2716, %v2828
        %v2830 = vpop.f32.mrb[0].mxu0
        %v2831 = vadd.f32 %v2718, %v2830
        %v2832 = vpop.f32.mrb[0].mxu0
        %v2833 = vadd.f32 %v2720, %v2832
        %v2834 = vpop.f32.mrb[0].mxu0
        %v2835 = vadd.f32 %v2722, %v2834
        %2836 = vmatprep.mubr.bf16.mxu0 0
        %2837 = vmatmul.mubr.bf16.gmra.mrb[0].mxu0 %v313
        %v2838 = vpop.f32.mrb[0].mxu0
        %v2839 = vadd.f32 %v2726, %v2838
        %v2840 = vpop.f32.mrb[0].mxu0
        %v2841 = vadd.f32 %v2728, %v2840
        %v2842 = vpop.f32.mrb[0].mxu0
        %v2843 = vadd.f32 %v2730, %v2842
        %v2844 = vpop.f32.mrb[0].mxu0
        %v2845 = vadd.f32 %v2732, %v2844
        %2846 = vmatprep.mubr.bf16.mxu0 0
        %2847 = vmatmul.mubr.bf16.gmra.mrb[0].mxu0 %v316
        %v2848 = vpop.f32.mrb[0].mxu0
        %v2849 = vadd.f32 %v2736, %v2848
        %v2850 = vpop.f32.mrb[0].mxu0
        %v2851 = vadd.f32 %v2738, %v2850
        %v2852 = vpop.f32.mrb[0].mxu0
        %v2853 = vadd.f32 %v2740, %v2852
        %v2854 = vpop.f32.mrb[0].mxu0
        %v2855 = vadd.f32 %v2742, %v2854
        %2856 = vmatprep.mubr.bf16.mxu0 0
        %2857 = vmatmul.mubr.bf16.gmra.mrb[0].mxu0 %v319
        %v2858 = vpop.f32.mrb[0].mxu0
        %v2859 = vadd.f32 %v2746, %v2858
        %v2860 = vpop.f32.mrb[0].mxu0
        %v2861 = vadd.f32 %v2748, %v2860
        %v2862 = vpop.f32.mrb[0].mxu0
        %v2863 = vadd.f32 %v2750, %v2862
        %v2864 = vpop.f32.mrb[0].mxu0
        %v2865 = vadd.f32 %v2752, %v2864
        %2866 = vmatprep.mubr.bf16.mxu0 0
        %2867 = vmatmul.mubr.bf16.gmra.mrb[0].mxu0 %v322
        %v2868 = vpop.f32.mrb[0].mxu0
        %v2869 = vadd.f32 %v2756, %v2868
        %v2870 = vpop.f32.mrb[0].mxu0
        %v2871 = vadd.f32 %v2758, %v2870
        %v2872 = vpop.f32.mrb[0].mxu0
        %v2873 = vadd.f32 %v2760, %v2872
        %v2874 = vpop.f32.mrb[0].mxu0
        %v2875 = vadd.f32 %v2762, %v2874
        %2876 = vdwg.mxu0
        %2877 = vmatprep.subr.bf16.mxu0 0
        %2878 = vmatpush1.bf16.msra.mxu0 %v2509
        %2879 = vmatprep.subr.bf16.mxu0 0
        %2880 = vmatpush1.bf16.msra.mxu0 %v2512
        %2881 = vmatprep.subr.bf16.mxu0 0
        %2882 = vmatpush1.bf16.msra.mxu0 %v2515
        %2883 = vmatprep.subr.bf16.mxu0 0
        %2884 = vmatpush1.bf16.msra.mxu0 %v2518
        %2885 = vmatprep.subr.bf16.mxu0 0
        %2886 = vmatpush1.bf16.msra.mxu0 %v2521
        %2887 = vmatprep.subr.bf16.mxu0 0
        %2888 = vmatpush1.bf16.msra.mxu0 %v2524
        %2889 = vmatprep.subr.bf16.mxu0 0
        %2890 = vmatpush1.bf16.msra.mxu0 %v2527
        %2891 = vmatprep.subr.bf16.mxu0 0
        %2892 = vmatpush1.bf16.msra.mxu0 %v2530
        %2893 = vmatprep.subr.bf16.mxu0 0
        %2894 = vmatpush1.bf16.msra.mxu0 %v2533
        %2895 = vmatprep.subr.bf16.mxu0 0
        %2896 = vmatpush1.bf16.msra.mxu0 %v2536
        %2897 = vmatprep.subr.bf16.mxu0 0
        %2898 = vmatpush1.bf16.msra.mxu0 %v2539
        %2899 = vmatprep.subr.bf16.mxu0 0
        %2900 = vmatpush1.bf16.msra.mxu0 %v2542
        %2901 = vmatprep.subr.bf16.mxu0 0
        %2902 = vmatpush1.bf16.msra.mxu0 %v2545
        %2903 = vmatprep.subr.bf16.mxu0 0
        %2904 = vmatpush1.bf16.msra.mxu0 %v2548
        %2905 = vmatprep.subr.bf16.mxu0 0
        %2906 = vmatpush1.bf16.msra.mxu0 %v2551
        %2907 = vmatprep.subr.bf16.mxu0 0
        %2908 = vmatpush1.bf16.msra.mxu0 %v2554
        %2909 = vmatprep.mubr.bf16.mxu0 %v300
        %2910 = vmatmul.mubr.bf16.gmra.mrb[0].mxu0 %v299
        %v2911 = vpop.f32.mrb[0].mxu0
        %v2912 = vadd.f32 0.0, %v2911
        %v2913 = vpop.f32.mrb[0].mxu0
        %v2914 = vpop.f32.mrb[0].mxu0
        %v2915 = vadd.f32 0.0, %v2914
        %v2916 = vpop.f32.mrb[0].mxu0
        %2917 = vmatprep.mubr.bf16.mxu0 %v303
        %2918 = vmatmul.mubr.bf16.gmra.mrb[0].mxu0 %v302
        %v2919 = vpop.f32.mrb[0].mxu0
        %v2920 = vadd.f32 0.0, %v2919
        %v2921 = vpop.f32.mrb[0].mxu0
        %v2922 = vpop.f32.mrb[0].mxu0
        %v2923 = vadd.f32 0.0, %v2922
        %v2924 = vpop.f32.mrb[0].mxu0
        %2925 = vmatprep.mubr.bf16.mxu0 %v306
        %2926 = vmatmul.mubr.bf16.gmra.mrb[0].mxu0 %v305
        %v2927 = vpop.f32.mrb[0].mxu0
        %v2928 = vadd.f32 0.0, %v2927
        %v2929 = vpop.f32.mrb[0].mxu0
        %v2930 = vpop.f32.mrb[0].mxu0
        %v2931 = vadd.f32 0.0, %v2930
        %v2932 = vpop.f32.mrb[0].mxu0
        %2933 = vmatprep.mubr.bf16.mxu0 %v309
        %2934 = vmatmul.mubr.bf16.gmra.mrb[0].mxu0 %v308
        %v2935 = vpop.f32.mrb[0].mxu0
        %v2936 = vadd.f32 0.0, %v2935
        %v2937 = vpop.f32.mrb[0].mxu0
        %v2938 = vpop.f32.mrb[0].mxu0
        %v2939 = vadd.f32 0.0, %v2938
        %v2940 = vpop.f32.mrb[0].mxu0
        %2941 = vmatprep.mubr.bf16.mxu0 %v312
        %2942 = vmatmul.mubr.bf16.gmra.mrb[0].mxu0 %v311
        %v2943 = vpop.f32.mrb[0].mxu0
        %v2944 = vadd.f32 0.0, %v2943
        %v2945 = vpop.f32.mrb[0].mxu0
        %v2946 = vpop.f32.mrb[0].mxu0
        %v2947 = vadd.f32 0.0, %v2946
        %v2948 = vpop.f32.mrb[0].mxu0
        %2949 = vmatprep.mubr.bf16.mxu0 %v315
        %2950 = vmatmul.mubr.bf16.gmra.mrb[0].mxu0 %v314
        %v2951 = vpop.f32.mrb[0].mxu0
        %v2952 = vadd.f32 0.0, %v2951
        %v2953 = vpop.f32.mrb[0].mxu0
        %v2954 = vpop.f32.mrb[0].mxu0
        %v2955 = vadd.f32 0.0, %v2954
        %v2956 = vpop.f32.mrb[0].mxu0
        %2957 = vmatprep.mubr.bf16.mxu0 %v318
        %2958 = vmatmul.mubr.bf16.gmra.mrb[0].mxu0 %v317
        %v2959 = vpop.f32.mrb[0].mxu0
        %v2960 = vadd.f32 0.0, %v2959
        %v2961 = vpop.f32.mrb[0].mxu0
        %v2962 = vpop.f32.mrb[0].mxu0
        %v2963 = vadd.f32 0.0, %v2962
        %v2964 = vpop.f32.mrb[0].mxu0
        %2965 = vmatprep.mubr.bf16.mxu0 %v321
        %2966 = vmatmul.mubr.bf16.gmra.mrb[0].mxu0 %v320
        %v2967 = vpop.f32.mrb[0].mxu0
        %v2968 = vadd.f32 0.0, %v2967
        %v2969 = vpop.f32.mrb[0].mxu0
        %v2970 = vpop.f32.mrb[0].mxu0
        %v2971 = vadd.f32 0.0, %v2970
        %v2972 = vpop.f32.mrb[0].mxu0
        %2973 = vdwg.mxu0
        %2974 = vmatprep.subr.bf16.mxu0 0
        %2975 = vmatpush1.bf16.msra.mxu0 %v2557
        %2976 = vmatprep.subr.bf16.mxu0 0
        %2977 = vmatpush1.bf16.msra.mxu0 %v2560
        %2978 = vmatprep.subr.bf16.mxu0 0
        %2979 = vmatpush1.bf16.msra.mxu0 %v2563
        %2980 = vmatprep.subr.bf16.mxu0 0
        %2981 = vmatpush1.bf16.msra.mxu0 %v2566
        %2982 = vmatprep.subr.bf16.mxu0 0
        %2983 = vmatpush1.bf16.msra.mxu0 %v2569
        %2984 = vmatprep.subr.bf16.mxu0 0
        %2985 = vmatpush1.bf16.msra.mxu0 %v2572
        %2986 = vmatprep.subr.bf16.mxu0 0
        %2987 = vmatpush1.bf16.msra.mxu0 %v2575
        %2988 = vmatprep.subr.bf16.mxu0 0
        %2989 = vmatpush1.bf16.msra.mxu0 %v2578
        %2990 = vmatprep.subr.bf16.mxu0 0
        %2991 = vmatpush1.bf16.msra.mxu0 0
        %2992 = vmatprep.subr.bf16.mxu0 0
        %2993 = vmatpush1.bf16.msra.mxu0 0
        %2994 = vmatprep.subr.bf16.mxu0 0
        %2995 = vmatpush1.bf16.msra.mxu0 0
        %2996 = vmatprep.subr.bf16.mxu0 0
        %2997 = vmatpush1.bf16.msra.mxu0 0
        %2998 = vmatprep.subr.bf16.mxu0 0
        %2999 = vmatpush1.bf16.msra.mxu0 0
        %3000 = vmatprep.subr.bf16.mxu0 0
        %3001 = vmatpush1.bf16.msra.mxu0 0
        %3002 = vmatprep.subr.bf16.mxu0 0
        %3003 = vmatpush1.bf16.msra.mxu0 0
        %3004 = vmatprep.subr.bf16.mxu0 0
        %3005 = vmatpush1.bf16.msra.mxu0 0
        %3006 = vmatprep.mubr.bf16.mxu0 0
        %3007 = vmatmul.mubr.bf16.gmra.mrb[0].mxu0 %v301
        %v3008 = vpop.f32.mrb[0].mxu0
        %v3009 = vadd.f32 %v2912, %v3008
        %v3010 = vpop.f32.mrb[0].mxu0
        %v3011 = vpop.f32.mrb[0].mxu0
        %v3012 = vadd.f32 %v2915, %v3011
        %v3013 = vpop.f32.mrb[0].mxu0
        %3014 = vmatprep.mubr.bf16.mxu0 0
        %3015 = vmatmul.mubr.bf16.gmra.mrb[0].mxu0 %v304
        %v3016 = vpop.f32.mrb[0].mxu0
        %v3017 = vadd.f32 %v2920, %v3016
        %v3018 = vpop.f32.mrb[0].mxu0
        %v3019 = vpop.f32.mrb[0].mxu0
        %v3020 = vadd.f32 %v2923, %v3019
        %v3021 = vpop.f32.mrb[0].mxu0
        %3022 = vmatprep.mubr.bf16.mxu0 0
        %3023 = vmatmul.mubr.bf16.gmra.mrb[0].mxu0 %v307
        %v3024 = vpop.f32.mrb[0].mxu0
        %v3025 = vadd.f32 %v2928, %v3024
        %v3026 = vpop.f32.mrb[0].mxu0
        %v3027 = vpop.f32.mrb[0].mxu0
        %v3028 = vadd.f32 %v2931, %v3027
        %v3029 = vpop.f32.mrb[0].mxu0
        %3030 = vmatprep.mubr.bf16.mxu0 0
        %3031 = vmatmul.mubr.bf16.gmra.mrb[0].mxu0 %v310
        %v3032 = vpop.f32.mrb[0].mxu0
        %v3033 = vadd.f32 %v2936, %v3032
        %v3034 = vpop.f32.mrb[0].mxu0
        %v3035 = vpop.f32.mrb[0].mxu0
        %v3036 = vadd.f32 %v2939, %v3035
        %v3037 = vpop.f32.mrb[0].mxu0
        %3038 = vmatprep.mubr.bf16.mxu0 0
        %3039 = vmatmul.mubr.bf16.gmra.mrb[0].mxu0 %v313
        %v3040 = vpop.f32.mrb[0].mxu0
        %v3041 = vadd.f32 %v2944, %v3040
        %v3042 = vpop.f32.mrb[0].mxu0
        %v3043 = vpop.f32.mrb[0].mxu0
        %v3044 = vadd.f32 %v2947, %v3043
        %v3045 = vpop.f32.mrb[0].mxu0
        %3046 = vmatprep.mubr.bf16.mxu0 0
        %3047 = vmatmul.mubr.bf16.gmra.mrb[0].mxu0 %v316
        %v3048 = vpop.f32.mrb[0].mxu0
        %v3049 = vadd.f32 %v2952, %v3048
        %v3050 = vpop.f32.mrb[0].mxu0
        %v3051 = vpop.f32.mrb[0].mxu0
        %v3052 = vadd.f32 %v2955, %v3051
        %v3053 = vpop.f32.mrb[0].mxu0
        %3054 = vmatprep.mubr.bf16.mxu0 0
        %3055 = vmatmul.mubr.bf16.gmra.mrb[0].mxu0 %v319
        %v3056 = vpop.f32.mrb[0].mxu0
        %v3057 = vadd.f32 %v2960, %v3056
        %v3058 = vpop.f32.mrb[0].mxu0
        %v3059 = vpop.f32.mrb[0].mxu0
        %v3060 = vadd.f32 %v2963, %v3059
        %v3061 = vpop.f32.mrb[0].mxu0
        %3062 = vmatprep.mubr.bf16.mxu0 0
        %3063 = vmatmul.mubr.bf16.gmra.mrb[0].mxu0 %v322
        %v3064 = vpop.f32.mrb[0].mxu0
        %v3065 = vadd.f32 %v2968, %v3064
        %v3066 = vpop.f32.mrb[0].mxu0
        %v3067 = vpop.f32.mrb[0].mxu0
        %v3068 = vadd.f32 %v2971, %v3067
        %v3069 = vpop.f32.mrb[0].mxu0
        %3070 = vdwg.mxu0
        %v3071 = vlaneseq
        %v3072 = vshrl.u32 %v3071, 7
        %v3073 = vadd.s32 %v3072, 8
        %v3074 = vadd.s32 %v3072, 16
        %v3075 = vadd.s32 %v3072, 24
        %v3076 = vadd.s32 %v3072, 32
        %v3077 = vadd.s32 %v3072, 40
        %v3078 = vadd.s32 %v3072, 48
        %v3079 = vadd.s32 %v3072, 56
        %v3080 = vadd.s32 %v3072, 64
        %v3081 = vadd.s32 %v3072, 72
        %v3082 = vadd.s32 %v3072, 80
        %v3083 = vadd.s32 %v3072, 88
        %v3084 = vadd.s32 %v3072, 96
        %v3085 = vadd.s32 %v3072, 104
        %v3086 = vadd.s32 %v3072, 112
        %v3087 = vadd.s32 %v3072, 120
        %v3088 = vlaneseq
        %v3089 = vand.u32 %v3088, 127
        %vm3090 = vcmp.le.s32.totalorder %v3089, %v3072
        %vm3091 = vcmp.le.s32.totalorder %v3089, %v3073
        %vm3092 = vcmp.le.s32.totalorder %v3089, %v3074
        %vm3093 = vcmp.le.s32.totalorder %v3089, %v3075
        %vm3094 = vcmp.le.s32.totalorder %v3089, %v3076
        %vm3095 = vcmp.le.s32.totalorder %v3089, %v3077
        %vm3096 = vcmp.le.s32.totalorder %v3089, %v3078
        %vm3097 = vcmp.le.s32.totalorder %v3089, %v3079
        %vm3098 = vcmp.le.s32.totalorder %v3089, %v3080
        %vm3099 = vcmp.le.s32.totalorder %v3089, %v3081
        %vm3100 = vcmp.le.s32.totalorder %v3089, %v3082
        %vm3101 = vcmp.le.s32.totalorder %v3089, %v3083
        %vm3102 = vcmp.le.s32.totalorder %v3089, %v3084
        %vm3103 = vcmp.le.s32.totalorder %v3089, %v3085
        %vm3104 = vcmp.le.s32.totalorder %v3089, %v3086
        %vm3105 = vcmp.le.s32.totalorder %v3089, %v3087
        %v3106 = vpack.c.bf16 %v1418, %v1415
        %v3107 = vpack.c.bf16 %v1424, %v1421
        %v3108 = vpack.c.bf16 %v1430, %v1427
        %v3109 = vpack.c.bf16 %v1436, %v1433
        %v3110 = vpack.c.bf16 %v1442, %v1439
        %v3111 = vpack.c.bf16 %v1448, %v1445
        %v3112 = vpack.c.bf16 %v1454, %v1451
        %v3113 = vpack.c.bf16 %v1460, %v1457
        %v3114 = vpack.c.bf16 %v1999, %v1995
        %v3115 = vpack.c.bf16 %v2009, %v2005
        %v3116 = vpack.c.bf16 %v2019, %v2015
        %v3117 = vpack.c.bf16 %v2029, %v2025
        %v3118 = vpack.c.bf16 %v2039, %v2035
        %v3119 = vpack.c.bf16 %v2049, %v2045
        %v3120 = vpack.c.bf16 %v2059, %v2055
        %v3121 = vpack.c.bf16 %v2069, %v2065
        %v3122 = vpack.c.bf16 %v2803, %v2799
        %v3123 = vpack.c.bf16 %v2813, %v2809
        %v3124 = vpack.c.bf16 %v2823, %v2819
        %v3125 = vpack.c.bf16 %v2833, %v2829
        %v3126 = vpack.c.bf16 %v2843, %v2839
        %v3127 = vpack.c.bf16 %v2853, %v2849
        %v3128 = vpack.c.bf16 %v2863, %v2859
        %v3129 = vpack.c.bf16 %v2873, %v2869
        %vm3130 = vcmask 523264
        %v3132 = vsel %vm3130, %v3106, 0
        %v3135 = vsel %vm3130, %v3107, 0
        %v3138 = vsel %vm3130, %v3108, 0
        %v3141 = vsel %vm3130, %v3109, 0
        %v3144 = vsel %vm3130, %v3110, 0
        %v3147 = vsel %vm3130, %v3111, 0
        %v3150 = vsel %vm3130, %v3112, 0
        %v3153 = vsel %vm3130, %v3113, 0
        %v3156 = vsel %vm3130, %v3114, 0
        %v3159 = vsel %vm3130, %v3115, 0
        %v3162 = vsel %vm3130, %v3116, 0
        %v3165 = vsel %vm3130, %v3117, 0
        %v3168 = vsel %vm3130, %v3118, 0
        %v3171 = vsel %vm3130, %v3119, 0
        %v3174 = vsel %vm3130, %v3120, 0
        %v3177 = vsel %vm3130, %v3121, 0
        %3179 = vmatprep.subr.bf16.mxu0 0
        %3180 = vmatpush1.bf16.xpose.msra.mxu0 %v3156
        %3181 = vmatprep.subr.bf16.mxu0 0
        %3182 = vmatpush1.bf16.xpose.msra.mxu0 %v3159
        %3183 = vmatprep.subr.bf16.mxu0 0
        %3184 = vmatpush1.bf16.xpose.msra.mxu0 %v3162
        %3185 = vmatprep.subr.bf16.mxu0 0
        %3186 = vmatpush1.bf16.xpose.msra.mxu0 %v3165
        %3187 = vmatprep.subr.bf16.mxu0 0
        %3188 = vmatpush1.bf16.xpose.msra.mxu0 %v3168
        %3189 = vmatprep.subr.bf16.mxu0 0
        %3190 = vmatpush1.bf16.xpose.msra.mxu0 %v3171
        %3191 = vmatprep.subr.bf16.mxu0 0
        %3192 = vmatpush1.bf16.xpose.msra.mxu0 %v3174
        %3193 = vmatprep.subr.bf16.mxu0 0
        %3194 = vmatpush1.bf16.xpose.msra.mxu0 %v3177
        %3195 = vmatprep.subr.bf16.mxu0 0
        %3196 = vmatpush1.bf16.xpose.msra.mxu0 0
        %3197 = vmatprep.subr.bf16.mxu0 0
        %3198 = vmatpush1.bf16.xpose.msra.mxu0 0
        %3199 = vmatprep.subr.bf16.mxu0 0
        %3200 = vmatpush1.bf16.xpose.msra.mxu0 0
        %3201 = vmatprep.subr.bf16.mxu0 0
        %3202 = vmatpush1.bf16.xpose.msra.mxu0 0
        %3203 = vmatprep.subr.bf16.mxu0 0
        %3204 = vmatpush1.bf16.xpose.msra.mxu0 0
        %3205 = vmatprep.subr.bf16.mxu0 0
        %3206 = vmatpush1.bf16.xpose.msra.mxu0 0
        %3207 = vmatprep.subr.bf16.mxu0 0
        %3208 = vmatpush1.bf16.xpose.msra.mxu0 0
        %3209 = vmatprep.subr.bf16.mxu0 0
        %3210 = vmatpush1.bf16.xpose.msra.mxu0 0
        %3211 = vmatprep.mubr.bf16.mxu0 0
        %3212 = vmatmul.mubr.bf16.gmra.mrb[0].mxu0 %v3132
        %v3213 = vpop.f32.mrb[0].mxu0
        %v3214 = vadd.f32 0.0, %v3213
        %v3215 = vpop.f32.mrb[0].mxu0
        %v3216 = vpop.f32.mrb[0].mxu0
        %v3217 = vadd.f32 0.0, %v3216
        %v3218 = vpop.f32.mrb[0].mxu0
        %3219 = vmatprep.mubr.bf16.mxu0 0
        %3220 = vmatmul.mubr.bf16.gmra.mrb[0].mxu0 %v3135
        %v3221 = vpop.f32.mrb[0].mxu0
        %v3222 = vadd.f32 0.0, %v3221
        %v3223 = vpop.f32.mrb[0].mxu0
        %v3224 = vpop.f32.mrb[0].mxu0
        %v3225 = vadd.f32 0.0, %v3224
        %v3226 = vpop.f32.mrb[0].mxu0
        %3227 = vmatprep.mubr.bf16.mxu0 0
        %3228 = vmatmul.mubr.bf16.gmra.mrb[0].mxu0 %v3138
        %v3229 = vpop.f32.mrb[0].mxu0
        %v3230 = vadd.f32 0.0, %v3229
        %v3231 = vpop.f32.mrb[0].mxu0
        %v3232 = vpop.f32.mrb[0].mxu0
        %v3233 = vadd.f32 0.0, %v3232
        %v3234 = vpop.f32.mrb[0].mxu0
        %3235 = vmatprep.mubr.bf16.mxu0 0
        %3236 = vmatmul.mubr.bf16.gmra.mrb[0].mxu0 %v3141
        %v3237 = vpop.f32.mrb[0].mxu0
        %v3238 = vadd.f32 0.0, %v3237
        %v3239 = vpop.f32.mrb[0].mxu0
        %v3240 = vpop.f32.mrb[0].mxu0
        %v3241 = vadd.f32 0.0, %v3240
        %v3242 = vpop.f32.mrb[0].mxu0
        %3243 = vmatprep.mubr.bf16.mxu0 0
        %3244 = vmatmul.mubr.bf16.gmra.mrb[0].mxu0 %v3144
        %v3245 = vpop.f32.mrb[0].mxu0
        %v3246 = vadd.f32 0.0, %v3245
        %v3247 = vpop.f32.mrb[0].mxu0
        %v3248 = vpop.f32.mrb[0].mxu0
        %v3249 = vadd.f32 0.0, %v3248
        %v3250 = vpop.f32.mrb[0].mxu0
        %3251 = vmatprep.mubr.bf16.mxu0 0
        %3252 = vmatmul.mubr.bf16.gmra.mrb[0].mxu0 %v3147
        %v3253 = vpop.f32.mrb[0].mxu0
        %v3254 = vadd.f32 0.0, %v3253
        %v3255 = vpop.f32.mrb[0].mxu0
        %v3256 = vpop.f32.mrb[0].mxu0
        %v3257 = vadd.f32 0.0, %v3256
        %v3258 = vpop.f32.mrb[0].mxu0
        %3259 = vmatprep.mubr.bf16.mxu0 0
        %3260 = vmatmul.mubr.bf16.gmra.mrb[0].mxu0 %v3150
        %v3261 = vpop.f32.mrb[0].mxu0
        %v3262 = vadd.f32 0.0, %v3261
        %v3263 = vpop.f32.mrb[0].mxu0
        %v3264 = vpop.f32.mrb[0].mxu0
        %v3265 = vadd.f32 0.0, %v3264
        %v3266 = vpop.f32.mrb[0].mxu0
        %3267 = vmatprep.mubr.bf16.mxu0 0
        %3268 = vmatmul.mubr.bf16.gmra.mrb[0].mxu0 %v3153
        %v3269 = vpop.f32.mrb[0].mxu0
        %v3270 = vadd.f32 0.0, %v3269
        %v3271 = vpop.f32.mrb[0].mxu0
        %v3272 = vpop.f32.mrb[0].mxu0
        %v3273 = vadd.f32 0.0, %v3272
        %v3274 = vpop.f32.mrb[0].mxu0
        %3275 = vdwg.mxu0
        %v3276 = vsel %vm3090, %v3214, -inf
        %v3277 = vsel %vm3091, %v3217, -inf
        %v3278 = vsel %vm3092, %v3222, -inf
        %v3279 = vsel %vm3093, %v3225, -inf
        %v3280 = vsel %vm3094, %v3230, -inf
        %v3281 = vsel %vm3095, %v3233, -inf
        %v3282 = vsel %vm3096, %v3238, -inf
        %v3283 = vsel %vm3097, %v3241, -inf
        %v3284 = vsel %vm3098, %v3246, -inf
        %v3285 = vsel %vm3099, %v3249, -inf
        %v3286 = vsel %vm3100, %v3254, -inf
        %v3287 = vsel %vm3101, %v3257, -inf
        %v3288 = vsel %vm3102, %v3262, -inf
        %v3289 = vsel %vm3103, %v3265, -inf
        %v3290 = vsel %vm3104, %v3270, -inf
        %v3291 = vsel %vm3105, %v3273, -inf
        %3292 = vmax.xlane.f32.xlu0 %v3276
        %v3293 = vpop.xlane.xlu0 %3292
        %3294 = vmax.xlane.f32.xlu0 %v3277
        %v3295 = vpop.xlane.xlu0 %3294
        %3296 = vmax.xlane.f32.xlu0 %v3278
        %v3297 = vpop.xlane.xlu0 %3296
        %3298 = vmax.xlane.f32.xlu0 %v3279
        %v3299 = vpop.xlane.xlu0 %3298
        %3300 = vmax.xlane.f32.xlu0 %v3280
        %v3301 = vpop.xlane.xlu0 %3300
        %3302 = vmax.xlane.f32.xlu0 %v3281
        %v3303 = vpop.xlane.xlu0 %3302
        %3304 = vmax.xlane.f32.xlu0 %v3282
        %v3305 = vpop.xlane.xlu0 %3304
        %3306 = vmax.xlane.f32.xlu0 %v3283
        %v3307 = vpop.xlane.xlu0 %3306
        %3308 = vmax.xlane.f32.xlu0 %v3284
        %v3309 = vpop.xlane.xlu0 %3308
        %3310 = vmax.xlane.f32.xlu0 %v3285
        %v3311 = vpop.xlane.xlu0 %3310
        %3312 = vmax.xlane.f32.xlu0 %v3286
        %v3313 = vpop.xlane.xlu0 %3312
        %3314 = vmax.xlane.f32.xlu0 %v3287
        %v3315 = vpop.xlane.xlu0 %3314
        %3316 = vmax.xlane.f32.xlu0 %v3288
        %v3317 = vpop.xlane.xlu0 %3316
        %3318 = vmax.xlane.f32.xlu0 %v3289
        %v3319 = vpop.xlane.xlu0 %3318
        %3320 = vmax.xlane.f32.xlu0 %v3290
        %v3321 = vpop.xlane.xlu0 %3320
        %3322 = vmax.xlane.f32.xlu0 %v3291
        %v3323 = vpop.xlane.xlu0 %3322
        %v3324 = vsub.f32 %v3276, %v3293
        %v3325 = vsub.f32 %v3277, %v3295
        %v3326 = vsub.f32 %v3278, %v3297
        %v3327 = vsub.f32 %v3279, %v3299
        %v3328 = vsub.f32 %v3280, %v3301
        %v3329 = vsub.f32 %v3281, %v3303
        %v3330 = vsub.f32 %v3282, %v3305
        %v3331 = vsub.f32 %v3283, %v3307
        %v3332 = vsub.f32 %v3284, %v3309
        %v3333 = vsub.f32 %v3285, %v3311
        %v3334 = vsub.f32 %v3286, %v3313
        %v3335 = vsub.f32 %v3287, %v3315
        %v3336 = vsub.f32 %v3288, %v3317
        %v3337 = vsub.f32 %v3289, %v3319
        %v3338 = vsub.f32 %v3290, %v3321
        %v3339 = vsub.f32 %v3291, %v3323
        %v3340 = vmul.f32 %v3324, 1.442695
        %v3341 = vpow.pop %v3340
        %v3342 = vmul.f32 %v3325, 1.442695
        %v3343 = vpow.pop %v3342
        %v3344 = vmul.f32 %v3326, 1.442695
        %v3345 = vpow.pop %v3344
        %v3346 = vmul.f32 %v3327, 1.442695
        %v3347 = vpow.pop %v3346
        %v3348 = vmul.f32 %v3328, 1.442695
        %v3349 = vpow.pop %v3348
        %v3350 = vmul.f32 %v3329, 1.442695
        %v3351 = vpow.pop %v3350
        %v3352 = vmul.f32 %v3330, 1.442695
        %v3353 = vpow.pop %v3352
        %v3354 = vmul.f32 %v3331, 1.442695
        %v3355 = vpow.pop %v3354
        %v3356 = vmul.f32 %v3332, 1.442695
        %v3357 = vpow.pop %v3356
        %v3358 = vmul.f32 %v3333, 1.442695
        %v3359 = vpow.pop %v3358
        %v3360 = vmul.f32 %v3334, 1.442695
        %v3361 = vpow.pop %v3360
        %v3362 = vmul.f32 %v3335, 1.442695
        %v3363 = vpow.pop %v3362
        %v3364 = vmul.f32 %v3336, 1.442695
        %v3365 = vpow.pop %v3364
        %v3366 = vmul.f32 %v3337, 1.442695
        %v3367 = vpow.pop %v3366
        %v3368 = vmul.f32 %v3338, 1.442695
        %v3369 = vpow.pop %v3368
        %v3370 = vmul.f32 %v3339, 1.442695
        %v3371 = vpow.pop %v3370
        %3372 = vadd.xlane.f32.xlu0 %v3341
        %v3373 = vpop.xlane.xlu0 %3372
        %3374 = vadd.xlane.f32.xlu0 %v3343
        %v3375 = vpop.xlane.xlu0 %3374
        %3376 = vadd.xlane.f32.xlu0 %v3345
        %v3377 = vpop.xlane.xlu0 %3376
        %3378 = vadd.xlane.f32.xlu0 %v3347
        %v3379 = vpop.xlane.xlu0 %3378
        %3380 = vadd.xlane.f32.xlu0 %v3349
        %v3381 = vpop.xlane.xlu0 %3380
        %3382 = vadd.xlane.f32.xlu0 %v3351
        %v3383 = vpop.xlane.xlu0 %3382
        %3384 = vadd.xlane.f32.xlu0 %v3353
        %v3385 = vpop.xlane.xlu0 %3384
        %3386 = vadd.xlane.f32.xlu0 %v3355
        %v3387 = vpop.xlane.xlu0 %3386
        %3388 = vadd.xlane.f32.xlu0 %v3357
        %v3389 = vpop.xlane.xlu0 %3388
        %3390 = vadd.xlane.f32.xlu0 %v3359
        %v3391 = vpop.xlane.xlu0 %3390
        %3392 = vadd.xlane.f32.xlu0 %v3361
        %v3393 = vpop.xlane.xlu0 %3392
        %3394 = vadd.xlane.f32.xlu0 %v3363
        %v3395 = vpop.xlane.xlu0 %3394
        %3396 = vadd.xlane.f32.xlu0 %v3365
        %v3397 = vpop.xlane.xlu0 %3396
        %3398 = vadd.xlane.f32.xlu0 %v3367
        %v3399 = vpop.xlane.xlu0 %3398
        %3400 = vadd.xlane.f32.xlu0 %v3369
        %v3401 = vpop.xlane.xlu0 %3400
        %3402 = vadd.xlane.f32.xlu0 %v3371
        %v3403 = vpop.xlane.xlu0 %3402
        %v3404 = vrcp.pop %v3373
        %v3405 = vrcp.pop %v3375
        %v3406 = vrcp.pop %v3377
        %v3407 = vrcp.pop %v3379
        %v3408 = vrcp.pop %v3381
        %v3409 = vrcp.pop %v3383
        %v3410 = vrcp.pop %v3385
        %v3411 = vrcp.pop %v3387
        %v3412 = vrcp.pop %v3389
        %v3413 = vrcp.pop %v3391
        %v3414 = vrcp.pop %v3393
        %v3415 = vrcp.pop %v3395
        %v3416 = vrcp.pop %v3397
        %v3417 = vrcp.pop %v3399
        %v3418 = vrcp.pop %v3401
        %v3419 = vrcp.pop %v3403
        %v3420 = vmul.f32 %v3341, %v3404
        %v3421 = vmul.f32 %v3343, %v3405
        %v3422 = vmul.f32 %v3345, %v3406
        %v3423 = vmul.f32 %v3347, %v3407
        %v3424 = vmul.f32 %v3349, %v3408
        %v3425 = vmul.f32 %v3351, %v3409
        %v3426 = vmul.f32 %v3353, %v3410
        %v3427 = vmul.f32 %v3355, %v3411
        %v3428 = vmul.f32 %v3357, %v3412
        %v3429 = vmul.f32 %v3359, %v3413
        %v3430 = vmul.f32 %v3361, %v3414
        %v3431 = vmul.f32 %v3363, %v3415
        %v3432 = vmul.f32 %v3365, %v3416
        %v3433 = vmul.f32 %v3367, %v3417
        %v3434 = vmul.f32 %v3369, %v3418
        %v3435 = vmul.f32 %v3371, %v3419
        %v3436 = vpack.c.bf16 %v3421, %v3420
        %v3437 = vpack.c.bf16 %v3423, %v3422
        %v3438 = vpack.c.bf16 %v3425, %v3424
        %v3439 = vpack.c.bf16 %v3427, %v3426
        %v3440 = vpack.c.bf16 %v3429, %v3428
        %v3441 = vpack.c.bf16 %v3431, %v3430
        %v3442 = vpack.c.bf16 %v3433, %v3432
        %v3443 = vpack.c.bf16 %v3435, %v3434
        %3444 = vmatprep.subr.bf16.mxu0 0
        %3445 = vmatpush1.bf16.msra.mxu0 %v3122
        %3446 = vmatprep.subr.bf16.mxu0 0
        %3447 = vmatpush1.bf16.msra.mxu0 %v3123
        %3448 = vmatprep.subr.bf16.mxu0 0
        %3449 = vmatpush1.bf16.msra.mxu0 %v3124
        %3450 = vmatprep.subr.bf16.mxu0 0
        %3451 = vmatpush1.bf16.msra.mxu0 %v3125
        %3452 = vmatprep.subr.bf16.mxu0 0
        %3453 = vmatpush1.bf16.msra.mxu0 %v3126
        %3454 = vmatprep.subr.bf16.mxu0 0
        %3455 = vmatpush1.bf16.msra.mxu0 %v3127
        %3456 = vmatprep.subr.bf16.mxu0 0
        %3457 = vmatpush1.bf16.msra.mxu0 %v3128
        %3458 = vmatprep.subr.bf16.mxu0 0
        %3459 = vmatpush1.bf16.msra.mxu0 %v3129
        %3460 = vmatprep.subr.bf16.mxu0 0
        %3461 = vmatpush1.bf16.msra.mxu0 0
        %3462 = vmatprep.subr.bf16.mxu0 0
        %3463 = vmatpush1.bf16.msra.mxu0 0
        %3464 = vmatprep.subr.bf16.mxu0 0
        %3465 = vmatpush1.bf16.msra.mxu0 0
        %3466 = vmatprep.subr.bf16.mxu0 0
        %3467 = vmatpush1.bf16.msra.mxu0 0
        %3468 = vmatprep.subr.bf16.mxu0 0
        %3469 = vmatpush1.bf16.msra.mxu0 0
        %3470 = vmatprep.subr.bf16.mxu0 0
        %3471 = vmatpush1.bf16.msra.mxu0 0
        %3472 = vmatprep.subr.bf16.mxu0 0
        %3473 = vmatpush1.bf16.msra.mxu0 0
        %3474 = vmatprep.subr.bf16.mxu0 0
        %3475 = vmatpush1.bf16.msra.mxu0 0
        %3476 = vmatprep.mubr.bf16.mxu0 0
        %3477 = vmatmul.mubr.bf16.gmra.mrb[0].mxu0 %v3436
        %v3478 = vpop.f32.mrb[0].mxu0
        %v3479 = vadd.f32 0.0, %v3478
        %v3480 = vpop.f32.mrb[0].mxu0
        %v3481 = vpop.f32.mrb[0].mxu0
        %v3482 = vadd.f32 0.0, %v3481
        %v3483 = vpop.f32.mrb[0].mxu0
        %3484 = vmatprep.mubr.bf16.mxu0 0
        %3485 = vmatmul.mubr.bf16.gmra.mrb[0].mxu0 %v3437
        %v3486 = vpop.f32.mrb[0].mxu0
        %v3487 = vadd.f32 0.0, %v3486
        %v3488 = vpop.f32.mrb[0].mxu0
        %v3489 = vpop.f32.mrb[0].mxu0
        %v3490 = vadd.f32 0.0, %v3489
        %v3491 = vpop.f32.mrb[0].mxu0
        %3492 = vmatprep.mubr.bf16.mxu0 0
        %3493 = vmatmul.mubr.bf16.gmra.mrb[0].mxu0 %v3438
        %v3494 = vpop.f32.mrb[0].mxu0
        %v3495 = vadd.f32 0.0, %v3494
        %v3496 = vpop.f32.mrb[0].mxu0
        %v3497 = vpop.f32.mrb[0].mxu0
        %v3498 = vadd.f32 0.0, %v3497
        %v3499 = vpop.f32.mrb[0].mxu0
        %3500 = vmatprep.mubr.bf16.mxu0 0
        %3501 = vmatmul.mubr.bf16.gmra.mrb[0].mxu0 %v3439
        %v3502 = vpop.f32.mrb[0].mxu0
        %v3503 = vadd.f32 0.0, %v3502
        %v3504 = vpop.f32.mrb[0].mxu0
        %v3505 = vpop.f32.mrb[0].mxu0
        %v3506 = vadd.f32 0.0, %v3505
        %v3507 = vpop.f32.mrb[0].mxu0
        %3508 = vmatprep.mubr.bf16.mxu0 0
        %3509 = vmatmul.mubr.bf16.gmra.mrb[0].mxu0 %v3440
        %v3510 = vpop.f32.mrb[0].mxu0
        %v3511 = vadd.f32 0.0, %v3510
        %v3512 = vpop.f32.mrb[0].mxu0
        %v3513 = vpop.f32.mrb[0].mxu0
        %v3514 = vadd.f32 0.0, %v3513
        %v3515 = vpop.f32.mrb[0].mxu0
        %3516 = vmatprep.mubr.bf16.mxu0 0
        %3517 = vmatmul.mubr.bf16.gmra.mrb[0].mxu0 %v3441
        %v3518 = vpop.f32.mrb[0].mxu0
        %v3519 = vadd.f32 0.0, %v3518
        %v3520 = vpop.f32.mrb[0].mxu0
        %v3521 = vpop.f32.mrb[0].mxu0
        %v3522 = vadd.f32 0.0, %v3521
        %v3523 = vpop.f32.mrb[0].mxu0
        %3524 = vmatprep.mubr.bf16.mxu0 0
        %3525 = vmatmul.mubr.bf16.gmra.mrb[0].mxu0 %v3442
        %v3526 = vpop.f32.mrb[0].mxu0
        %v3527 = vadd.f32 0.0, %v3526
        %v3528 = vpop.f32.mrb[0].mxu0
        %v3529 = vpop.f32.mrb[0].mxu0
        %v3530 = vadd.f32 0.0, %v3529
        %v3531 = vpop.f32.mrb[0].mxu0
        %3532 = vmatprep.mubr.bf16.mxu0 0
        %3533 = vmatmul.mubr.bf16.gmra.mrb[0].mxu0 %v3443
        %v3534 = vpop.f32.mrb[0].mxu0
        %v3535 = vadd.f32 0.0, %v3534
        %v3536 = vpop.f32.mrb[0].mxu0
        %v3537 = vpop.f32.mrb[0].mxu0
        %v3538 = vadd.f32 0.0, %v3537
        %v3539 = vpop.f32.mrb[0].mxu0
        %3540 = vdwg.mxu0
        %3549 = vrot.lane.b32.xlu0 %v3106, 64
        %v3550 = vpop.permute.xlu0 %3549
        %3551 = vrot.lane.b32.xlu0 %v3107, 64
        %v3552 = vpop.permute.xlu0 %3551
        %3553 = vrot.lane.b32.xlu0 %v3108, 64
        %v3554 = vpop.permute.xlu0 %3553
        %3555 = vrot.lane.b32.xlu0 %v3109, 64
        %v3556 = vpop.permute.xlu0 %3555
        %3557 = vrot.lane.b32.xlu0 %v3110, 64
        %v3558 = vpop.permute.xlu0 %3557
        %3559 = vrot.lane.b32.xlu0 %v3111, 64
        %v3560 = vpop.permute.xlu0 %3559
        %3561 = vrot.lane.b32.xlu0 %v3112, 64
        %v3562 = vpop.permute.xlu0 %3561
        %3563 = vrot.lane.b32.xlu0 %v3113, 64
        %v3564 = vpop.permute.xlu0 %3563
        %3573 = vrot.lane.b32.xlu0 %v3114, 64
        %v3574 = vpop.permute.xlu0 %3573
        %3575 = vrot.lane.b32.xlu0 %v3115, 64
        %v3576 = vpop.permute.xlu0 %3575
        %3577 = vrot.lane.b32.xlu0 %v3116, 64
        %v3578 = vpop.permute.xlu0 %3577
        %3579 = vrot.lane.b32.xlu0 %v3117, 64
        %v3580 = vpop.permute.xlu0 %3579
        %3581 = vrot.lane.b32.xlu0 %v3118, 64
        %v3582 = vpop.permute.xlu0 %3581
        %3583 = vrot.lane.b32.xlu0 %v3119, 64
        %v3584 = vpop.permute.xlu0 %3583
        %3585 = vrot.lane.b32.xlu0 %v3120, 64
        %v3586 = vpop.permute.xlu0 %3585
        %3587 = vrot.lane.b32.xlu0 %v3121, 64
        %v3588 = vpop.permute.xlu0 %3587
        %v3590 = vsel %vm3130, %v3550, 0
        %v3593 = vsel %vm3130, %v3552, 0
        %v3596 = vsel %vm3130, %v3554, 0
        %v3599 = vsel %vm3130, %v3556, 0
        %v3602 = vsel %vm3130, %v3558, 0
        %v3605 = vsel %vm3130, %v3560, 0
        %v3608 = vsel %vm3130, %v3562, 0
        %v3611 = vsel %vm3130, %v3564, 0
        %v3614 = vsel %vm3130, %v3574, 0
        %v3617 = vsel %vm3130, %v3576, 0
        %v3620 = vsel %vm3130, %v3578, 0
        %v3623 = vsel %vm3130, %v3580, 0
        %v3626 = vsel %vm3130, %v3582, 0
        %v3629 = vsel %vm3130, %v3584, 0
        %v3632 = vsel %vm3130, %v3586, 0
        %v3635 = vsel %vm3130, %v3588, 0
        %3637 = vmatprep.subr.bf16.mxu0 0
        %3638 = vmatpush1.bf16.xpose.msra.mxu0 %v3614
        %3639 = vmatprep.subr.bf16.mxu0 0
        %3640 = vmatpush1.bf16.xpose.msra.mxu0 %v3617
        %3641 = vmatprep.subr.bf16.mxu0 0
        %3642 = vmatpush1.bf16.xpose.msra.mxu0 %v3620
        %3643 = vmatprep.subr.bf16.mxu0 0
        %3644 = vmatpush1.bf16.xpose.msra.mxu0 %v3623
        %3645 = vmatprep.subr.bf16.mxu0 0
        %3646 = vmatpush1.bf16.xpose.msra.mxu0 %v3626
        %3647 = vmatprep.subr.bf16.mxu0 0
        %3648 = vmatpush1.bf16.xpose.msra.mxu0 %v3629
        %3649 = vmatprep.subr.bf16.mxu0 0
        %3650 = vmatpush1.bf16.xpose.msra.mxu0 %v3632
        %3651 = vmatprep.subr.bf16.mxu0 0
        %3652 = vmatpush1.bf16.xpose.msra.mxu0 %v3635
        %3653 = vmatprep.subr.bf16.mxu0 0
        %3654 = vmatpush1.bf16.xpose.msra.mxu0 0
        %3655 = vmatprep.subr.bf16.mxu0 0
        %3656 = vmatpush1.bf16.xpose.msra.mxu0 0
        %3657 = vmatprep.subr.bf16.mxu0 0
        %3658 = vmatpush1.bf16.xpose.msra.mxu0 0
        %3659 = vmatprep.subr.bf16.mxu0 0
        %3660 = vmatpush1.bf16.xpose.msra.mxu0 0
        %3661 = vmatprep.subr.bf16.mxu0 0
        %3662 = vmatpush1.bf16.xpose.msra.mxu0 0
        %3663 = vmatprep.subr.bf16.mxu0 0
        %3664 = vmatpush1.bf16.xpose.msra.mxu0 0
        %3665 = vmatprep.subr.bf16.mxu0 0
        %3666 = vmatpush1.bf16.xpose.msra.mxu0 0
        %3667 = vmatprep.subr.bf16.mxu0 0
        %3668 = vmatpush1.bf16.xpose.msra.mxu0 0
        %3669 = vmatprep.mubr.bf16.mxu0 0
        %3670 = vmatmul.mubr.bf16.gmra.mrb[0].mxu0 %v3590
        %v3671 = vpop.f32.mrb[0].mxu0
        %v3672 = vadd.f32 0.0, %v3671
        %v3673 = vpop.f32.mrb[0].mxu0
        %v3674 = vpop.f32.mrb[0].mxu0
        %v3675 = vadd.f32 0.0, %v3674
        %v3676 = vpop.f32.mrb[0].mxu0
        %3677 = vmatprep.mubr.bf16.mxu0 0
        %3678 = vmatmul.mubr.bf16.gmra.mrb[0].mxu0 %v3593
        %v3679 = vpop.f32.mrb[0].mxu0
        %v3680 = vadd.f32 0.0, %v3679
        %v3681 = vpop.f32.mrb[0].mxu0
        %v3682 = vpop.f32.mrb[0].mxu0
        %v3683 = vadd.f32 0.0, %v3682
        %v3684 = vpop.f32.mrb[0].mxu0
        %3685 = vmatprep.mubr.bf16.mxu0 0
        %3686 = vmatmul.mubr.bf16.gmra.mrb[0].mxu0 %v3596
        %v3687 = vpop.f32.mrb[0].mxu0
        %v3688 = vadd.f32 0.0, %v3687
        %v3689 = vpop.f32.mrb[0].mxu0
        %v3690 = vpop.f32.mrb[0].mxu0
        %v3691 = vadd.f32 0.0, %v3690
        %v3692 = vpop.f32.mrb[0].mxu0
        %3693 = vmatprep.mubr.bf16.mxu0 0
        %3694 = vmatmul.mubr.bf16.gmra.mrb[0].mxu0 %v3599
        %v3695 = vpop.f32.mrb[0].mxu0
        %v3696 = vadd.f32 0.0, %v3695
        %v3697 = vpop.f32.mrb[0].mxu0
        %v3698 = vpop.f32.mrb[0].mxu0
        %v3699 = vadd.f32 0.0, %v3698
        %v3700 = vpop.f32.mrb[0].mxu0
        %3701 = vmatprep.mubr.bf16.mxu0 0
        %3702 = vmatmul.mubr.bf16.gmra.mrb[0].mxu0 %v3602
        %v3703 = vpop.f32.mrb[0].mxu0
        %v3704 = vadd.f32 0.0, %v3703
        %v3705 = vpop.f32.mrb[0].mxu0
        %v3706 = vpop.f32.mrb[0].mxu0
        %v3707 = vadd.f32 0.0, %v3706
        %v3708 = vpop.f32.mrb[0].mxu0
        %3709 = vmatprep.mubr.bf16.mxu0 0
        %3710 = vmatmul.mubr.bf16.gmra.mrb[0].mxu0 %v3605
        %v3711 = vpop.f32.mrb[0].mxu0
        %v3712 = vadd.f32 0.0, %v3711
        %v3713 = vpop.f32.mrb[0].mxu0
        %v3714 = vpop.f32.mrb[0].mxu0
        %v3715 = vadd.f32 0.0, %v3714
        %v3716 = vpop.f32.mrb[0].mxu0
        %3717 = vmatprep.mubr.bf16.mxu0 0
        %3718 = vmatmul.mubr.bf16.gmra.mrb[0].mxu0 %v3608
        %v3719 = vpop.f32.mrb[0].mxu0
        %v3720 = vadd.f32 0.0, %v3719
        %v3721 = vpop.f32.mrb[0].mxu0
        %v3722 = vpop.f32.mrb[0].mxu0
        %v3723 = vadd.f32 0.0, %v3722
        %v3724 = vpop.f32.mrb[0].mxu0
        %3725 = vmatprep.mubr.bf16.mxu0 0
        %3726 = vmatmul.mubr.bf16.gmra.mrb[0].mxu0 %v3611
        %v3727 = vpop.f32.mrb[0].mxu0
        %v3728 = vadd.f32 0.0, %v3727
        %v3729 = vpop.f32.mrb[0].mxu0
        %v3730 = vpop.f32.mrb[0].mxu0
        %v3731 = vadd.f32 0.0, %v3730
        %v3732 = vpop.f32.mrb[0].mxu0
        %3733 = vdwg.mxu0
        %v3734 = vsel %vm3090, %v3672, -inf
        %v3735 = vsel %vm3091, %v3675, -inf
        %v3736 = vsel %vm3092, %v3680, -inf
        %v3737 = vsel %vm3093, %v3683, -inf
        %v3738 = vsel %vm3094, %v3688, -inf
        %v3739 = vsel %vm3095, %v3691, -inf
        %v3740 = vsel %vm3096, %v3696, -inf
        %v3741 = vsel %vm3097, %v3699, -inf
        %v3742 = vsel %vm3098, %v3704, -inf
        %v3743 = vsel %vm3099, %v3707, -inf
        %v3744 = vsel %vm3100, %v3712, -inf
        %v3745 = vsel %vm3101, %v3715, -inf
        %v3746 = vsel %vm3102, %v3720, -inf
        %v3747 = vsel %vm3103, %v3723, -inf
        %v3748 = vsel %vm3104, %v3728, -inf
        %v3749 = vsel %vm3105, %v3731, -inf
        %3750 = vmax.xlane.f32.xlu0 %v3734
        %v3751 = vpop.xlane.xlu0 %3750
        %3752 = vmax.xlane.f32.xlu0 %v3735
        %v3753 = vpop.xlane.xlu0 %3752
        %3754 = vmax.xlane.f32.xlu0 %v3736
        %v3755 = vpop.xlane.xlu0 %3754
        %3756 = vmax.xlane.f32.xlu0 %v3737
        %v3757 = vpop.xlane.xlu0 %3756
        %3758 = vmax.xlane.f32.xlu0 %v3738
        %v3759 = vpop.xlane.xlu0 %3758
        %3760 = vmax.xlane.f32.xlu0 %v3739
        %v3761 = vpop.xlane.xlu0 %3760
        %3762 = vmax.xlane.f32.xlu0 %v3740
        %v3763 = vpop.xlane.xlu0 %3762
        %3764 = vmax.xlane.f32.xlu0 %v3741
        %v3765 = vpop.xlane.xlu0 %3764
        %3766 = vmax.xlane.f32.xlu0 %v3742
        %v3767 = vpop.xlane.xlu0 %3766
        %3768 = vmax.xlane.f32.xlu0 %v3743
        %v3769 = vpop.xlane.xlu0 %3768
        %3770 = vmax.xlane.f32.xlu0 %v3744
        %v3771 = vpop.xlane.xlu0 %3770
        %3772 = vmax.xlane.f32.xlu0 %v3745
        %v3773 = vpop.xlane.xlu0 %3772
        %3774 = vmax.xlane.f32.xlu0 %v3746
        %v3775 = vpop.xlane.xlu0 %3774
        %3776 = vmax.xlane.f32.xlu0 %v3747
        %v3777 = vpop.xlane.xlu0 %3776
        %3778 = vmax.xlane.f32.xlu0 %v3748
        %v3779 = vpop.xlane.xlu0 %3778
        %3780 = vmax.xlane.f32.xlu0 %v3749
        %v3781 = vpop.xlane.xlu0 %3780
        %v3782 = vsub.f32 %v3734, %v3751
        %v3783 = vsub.f32 %v3735, %v3753
        %v3784 = vsub.f32 %v3736, %v3755
        %v3785 = vsub.f32 %v3737, %v3757
        %v3786 = vsub.f32 %v3738, %v3759
        %v3787 = vsub.f32 %v3739, %v3761
        %v3788 = vsub.f32 %v3740, %v3763
        %v3789 = vsub.f32 %v3741, %v3765
        %v3790 = vsub.f32 %v3742, %v3767
        %v3791 = vsub.f32 %v3743, %v3769
        %v3792 = vsub.f32 %v3744, %v3771
        %v3793 = vsub.f32 %v3745, %v3773
        %v3794 = vsub.f32 %v3746, %v3775
        %v3795 = vsub.f32 %v3747, %v3777
        %v3796 = vsub.f32 %v3748, %v3779
        %v3797 = vsub.f32 %v3749, %v3781
        %v3798 = vmul.f32 %v3782, 1.442695
        %v3799 = vpow.pop %v3798
        %v3800 = vmul.f32 %v3783, 1.442695
        %v3801 = vpow.pop %v3800
        %v3802 = vmul.f32 %v3784, 1.442695
        %v3803 = vpow.pop %v3802
        %v3804 = vmul.f32 %v3785, 1.442695
        %v3805 = vpow.pop %v3804
        %v3806 = vmul.f32 %v3786, 1.442695
        %v3807 = vpow.pop %v3806
        %v3808 = vmul.f32 %v3787, 1.442695
        %v3809 = vpow.pop %v3808
        %v3810 = vmul.f32 %v3788, 1.442695
        %v3811 = vpow.pop %v3810
        %v3812 = vmul.f32 %v3789, 1.442695
        %v3813 = vpow.pop %v3812
        %v3814 = vmul.f32 %v3790, 1.442695
        %v3815 = vpow.pop %v3814
        %v3816 = vmul.f32 %v3791, 1.442695
        %v3817 = vpow.pop %v3816
        %v3818 = vmul.f32 %v3792, 1.442695
        %v3819 = vpow.pop %v3818
        %v3820 = vmul.f32 %v3793, 1.442695
        %v3821 = vpow.pop %v3820
        %v3822 = vmul.f32 %v3794, 1.442695
        %v3823 = vpow.pop %v3822
        %v3824 = vmul.f32 %v3795, 1.442695
        %v3825 = vpow.pop %v3824
        %v3826 = vmul.f32 %v3796, 1.442695
        %v3827 = vpow.pop %v3826
        %v3828 = vmul.f32 %v3797, 1.442695
        %v3829 = vpow.pop %v3828
        %3830 = vadd.xlane.f32.xlu0 %v3799
        %v3831 = vpop.xlane.xlu0 %3830
        %3832 = vadd.xlane.f32.xlu0 %v3801
        %v3833 = vpop.xlane.xlu0 %3832
        %3834 = vadd.xlane.f32.xlu0 %v3803
        %v3835 = vpop.xlane.xlu0 %3834
        %3836 = vadd.xlane.f32.xlu0 %v3805
        %v3837 = vpop.xlane.xlu0 %3836
        %3838 = vadd.xlane.f32.xlu0 %v3807
        %v3839 = vpop.xlane.xlu0 %3838
        %3840 = vadd.xlane.f32.xlu0 %v3809
        %v3841 = vpop.xlane.xlu0 %3840
        %3842 = vadd.xlane.f32.xlu0 %v3811
        %v3843 = vpop.xlane.xlu0 %3842
        %3844 = vadd.xlane.f32.xlu0 %v3813
        %v3845 = vpop.xlane.xlu0 %3844
        %3846 = vadd.xlane.f32.xlu0 %v3815
        %v3847 = vpop.xlane.xlu0 %3846
        %3848 = vadd.xlane.f32.xlu0 %v3817
        %v3849 = vpop.xlane.xlu0 %3848
        %3850 = vadd.xlane.f32.xlu0 %v3819
        %v3851 = vpop.xlane.xlu0 %3850
        %3852 = vadd.xlane.f32.xlu0 %v3821
        %v3853 = vpop.xlane.xlu0 %3852
        %3854 = vadd.xlane.f32.xlu0 %v3823
        %v3855 = vpop.xlane.xlu0 %3854
        %3856 = vadd.xlane.f32.xlu0 %v3825
        %v3857 = vpop.xlane.xlu0 %3856
        %3858 = vadd.xlane.f32.xlu0 %v3827
        %v3859 = vpop.xlane.xlu0 %3858
        %3860 = vadd.xlane.f32.xlu0 %v3829
        %v3861 = vpop.xlane.xlu0 %3860
        %v3862 = vrcp.pop %v3831
        %v3863 = vrcp.pop %v3833
        %v3864 = vrcp.pop %v3835
        %v3865 = vrcp.pop %v3837
        %v3866 = vrcp.pop %v3839
        %v3867 = vrcp.pop %v3841
        %v3868 = vrcp.pop %v3843
        %v3869 = vrcp.pop %v3845
        %v3870 = vrcp.pop %v3847
        %v3871 = vrcp.pop %v3849
        %v3872 = vrcp.pop %v3851
        %v3873 = vrcp.pop %v3853
        %v3874 = vrcp.pop %v3855
        %v3875 = vrcp.pop %v3857
        %v3876 = vrcp.pop %v3859
        %v3877 = vrcp.pop %v3861
        %v3878 = vmul.f32 %v3799, %v3862
        %v3879 = vmul.f32 %v3801, %v3863
        %v3880 = vmul.f32 %v3803, %v3864
        %v3881 = vmul.f32 %v3805, %v3865
        %v3882 = vmul.f32 %v3807, %v3866
        %v3883 = vmul.f32 %v3809, %v3867
        %v3884 = vmul.f32 %v3811, %v3868
        %v3885 = vmul.f32 %v3813, %v3869
        %v3886 = vmul.f32 %v3815, %v3870
        %v3887 = vmul.f32 %v3817, %v3871
        %v3888 = vmul.f32 %v3819, %v3872
        %v3889 = vmul.f32 %v3821, %v3873
        %v3890 = vmul.f32 %v3823, %v3874
        %v3891 = vmul.f32 %v3825, %v3875
        %v3892 = vmul.f32 %v3827, %v3876
        %v3893 = vmul.f32 %v3829, %v3877
        %v3894 = vpack.c.bf16 %v3879, %v3878
        %v3895 = vpack.c.bf16 %v3881, %v3880
        %v3896 = vpack.c.bf16 %v3883, %v3882
        %v3897 = vpack.c.bf16 %v3885, %v3884
        %v3898 = vpack.c.bf16 %v3887, %v3886
        %v3899 = vpack.c.bf16 %v3889, %v3888
        %v3900 = vpack.c.bf16 %v3891, %v3890
        %v3901 = vpack.c.bf16 %v3893, %v3892
        %3910 = vrot.lane.b32.xlu0 %v3122, 64
        %v3911 = vpop.permute.xlu0 %3910
        %3912 = vrot.lane.b32.xlu0 %v3123, 64
        %v3913 = vpop.permute.xlu0 %3912
        %3914 = vrot.lane.b32.xlu0 %v3124, 64
        %v3915 = vpop.permute.xlu0 %3914
        %3916 = vrot.lane.b32.xlu0 %v3125, 64
        %v3917 = vpop.permute.xlu0 %3916
        %3918 = vrot.lane.b32.xlu0 %v3126, 64
        %v3919 = vpop.permute.xlu0 %3918
        %3920 = vrot.lane.b32.xlu0 %v3127, 64
        %v3921 = vpop.permute.xlu0 %3920
        %3922 = vrot.lane.b32.xlu0 %v3128, 64
        %v3923 = vpop.permute.xlu0 %3922
        %3924 = vrot.lane.b32.xlu0 %v3129, 64
        %v3925 = vpop.permute.xlu0 %3924
        %3934 = vmatprep.subr.bf16.mxu0 0
        %3935 = vmatpush1.bf16.msra.mxu0 %v3911
        %3936 = vmatprep.subr.bf16.mxu0 0
        %3937 = vmatpush1.bf16.msra.mxu0 %v3913
        %3938 = vmatprep.subr.bf16.mxu0 0
        %3939 = vmatpush1.bf16.msra.mxu0 %v3915
        %3940 = vmatprep.subr.bf16.mxu0 0
        %3941 = vmatpush1.bf16.msra.mxu0 %v3917
        %3942 = vmatprep.subr.bf16.mxu0 0
        %3943 = vmatpush1.bf16.msra.mxu0 %v3919
        %3944 = vmatprep.subr.bf16.mxu0 0
        %3945 = vmatpush1.bf16.msra.mxu0 %v3921
        %3946 = vmatprep.subr.bf16.mxu0 0
        %3947 = vmatpush1.bf16.msra.mxu0 %v3923
        %3948 = vmatprep.subr.bf16.mxu0 0
        %3949 = vmatpush1.bf16.msra.mxu0 %v3925
        %3950 = vmatprep.subr.bf16.mxu0 0
        %3951 = vmatpush1.bf16.msra.mxu0 0
        %3952 = vmatprep.subr.bf16.mxu0 0
        %3953 = vmatpush1.bf16.msra.mxu0 0
        %3954 = vmatprep.subr.bf16.mxu0 0
        %3955 = vmatpush1.bf16.msra.mxu0 0
        %3956 = vmatprep.subr.bf16.mxu0 0
        %3957 = vmatpush1.bf16.msra.mxu0 0
        %3958 = vmatprep.subr.bf16.mxu0 0
        %3959 = vmatpush1.bf16.msra.mxu0 0
        %3960 = vmatprep.subr.bf16.mxu0 0
        %3961 = vmatpush1.bf16.msra.mxu0 0
        %3962 = vmatprep.subr.bf16.mxu0 0
        %3963 = vmatpush1.bf16.msra.mxu0 0
        %3964 = vmatprep.subr.bf16.mxu0 0
        %3965 = vmatpush1.bf16.msra.mxu0 0
        %3966 = vmatprep.mubr.bf16.mxu0 0
        %3967 = vmatmul.mubr.bf16.gmra.mrb[0].mxu0 %v3894
        %v3968 = vpop.f32.mrb[0].mxu0
        %v3969 = vadd.f32 0.0, %v3968
        %v3970 = vpop.f32.mrb[0].mxu0
        %v3971 = vpop.f32.mrb[0].mxu0
        %v3972 = vadd.f32 0.0, %v3971
        %v3973 = vpop.f32.mrb[0].mxu0
        %3974 = vmatprep.mubr.bf16.mxu0 0
        %3975 = vmatmul.mubr.bf16.gmra.mrb[0].mxu0 %v3895
        %v3976 = vpop.f32.mrb[0].mxu0
        %v3977 = vadd.f32 0.0, %v3976
        %v3978 = vpop.f32.mrb[0].mxu0
        %v3979 = vpop.f32.mrb[0].mxu0
        %v3980 = vadd.f32 0.0, %v3979
        %v3981 = vpop.f32.mrb[0].mxu0
        %3982 = vmatprep.mubr.bf16.mxu0 0
        %3983 = vmatmul.mubr.bf16.gmra.mrb[0].mxu0 %v3896
        %v3984 = vpop.f32.mrb[0].mxu0
        %v3985 = vadd.f32 0.0, %v3984
        %v3986 = vpop.f32.mrb[0].mxu0
        %v3987 = vpop.f32.mrb[0].mxu0
        %v3988 = vadd.f32 0.0, %v3987
        %v3989 = vpop.f32.mrb[0].mxu0
        %3990 = vmatprep.mubr.bf16.mxu0 0
        %3991 = vmatmul.mubr.bf16.gmra.mrb[0].mxu0 %v3897
        %v3992 = vpop.f32.mrb[0].mxu0
        %v3993 = vadd.f32 0.0, %v3992
        %v3994 = vpop.f32.mrb[0].mxu0
        %v3995 = vpop.f32.mrb[0].mxu0
        %v3996 = vadd.f32 0.0, %v3995
        %v3997 = vpop.f32.mrb[0].mxu0
        %3998 = vmatprep.mubr.bf16.mxu0 0
        %3999 = vmatmul.mubr.bf16.gmra.mrb[0].mxu0 %v3898
        %v4000 = vpop.f32.mrb[0].mxu0
        %v4001 = vadd.f32 0.0, %v4000
        %v4002 = vpop.f32.mrb[0].mxu0
        %v4003 = vpop.f32.mrb[0].mxu0
        %v4004 = vadd.f32 0.0, %v4003
        %v4005 = vpop.f32.mrb[0].mxu0
        %4006 = vmatprep.mubr.bf16.mxu0 0
        %4007 = vmatmul.mubr.bf16.gmra.mrb[0].mxu0 %v3899
        %v4008 = vpop.f32.mrb[0].mxu0
        %v4009 = vadd.f32 0.0, %v4008
        %v4010 = vpop.f32.mrb[0].mxu0
        %v4011 = vpop.f32.mrb[0].mxu0
        %v4012 = vadd.f32 0.0, %v4011
        %v4013 = vpop.f32.mrb[0].mxu0
        %4014 = vmatprep.mubr.bf16.mxu0 0
        %4015 = vmatmul.mubr.bf16.gmra.mrb[0].mxu0 %v3900
        %v4016 = vpop.f32.mrb[0].mxu0
        %v4017 = vadd.f32 0.0, %v4016
        %v4018 = vpop.f32.mrb[0].mxu0
        %v4019 = vpop.f32.mrb[0].mxu0
        %v4020 = vadd.f32 0.0, %v4019
        %v4021 = vpop.f32.mrb[0].mxu0
        %4022 = vmatprep.mubr.bf16.mxu0 0
        %4023 = vmatmul.mubr.bf16.gmra.mrb[0].mxu0 %v3901
        %v4024 = vpop.f32.mrb[0].mxu0
        %v4025 = vadd.f32 0.0, %v4024
        %v4026 = vpop.f32.mrb[0].mxu0
        %v4027 = vpop.f32.mrb[0].mxu0
        %v4028 = vadd.f32 0.0, %v4027
        %v4029 = vpop.f32.mrb[0].mxu0
        %4030 = vdwg.mxu0
        %v4031 = vpack.c.bf16 %v1419, %v1416
        %v4032 = vpack.c.bf16 %v1425, %v1422
        %v4033 = vpack.c.bf16 %v1431, %v1428
        %v4034 = vpack.c.bf16 %v1437, %v1434
        %v4035 = vpack.c.bf16 %v1443, %v1440
        %v4036 = vpack.c.bf16 %v1449, %v1446
        %v4037 = vpack.c.bf16 %v1455, %v1452
        %v4038 = vpack.c.bf16 %v1461, %v1458
        %v4039 = vpack.c.bf16 %v2001, %v1997
        %v4040 = vpack.c.bf16 %v2011, %v2007
        %v4041 = vpack.c.bf16 %v2021, %v2017
        %v4042 = vpack.c.bf16 %v2031, %v2027
        %v4043 = vpack.c.bf16 %v2041, %v2037
        %v4044 = vpack.c.bf16 %v2051, %v2047
        %v4045 = vpack.c.bf16 %v2061, %v2057
        %v4046 = vpack.c.bf16 %v2071, %v2067
        %v4047 = vpack.c.bf16 %v2805, %v2801
        %v4048 = vpack.c.bf16 %v2815, %v2811
        %v4049 = vpack.c.bf16 %v2825, %v2821
        %v4050 = vpack.c.bf16 %v2835, %v2831
        %v4051 = vpack.c.bf16 %v2845, %v2841
        %v4052 = vpack.c.bf16 %v2855, %v2851
        %v4053 = vpack.c.bf16 %v2865, %v2861
        %v4054 = vpack.c.bf16 %v2875, %v2871
        %v4056 = vsel %vm3130, %v4031, 0
        %v4059 = vsel %vm3130, %v4032, 0
        %v4062 = vsel %vm3130, %v4033, 0
        %v4065 = vsel %vm3130, %v4034, 0
        %v4068 = vsel %vm3130, %v4035, 0
        %v4071 = vsel %vm3130, %v4036, 0
        %v4074 = vsel %vm3130, %v4037, 0
        %v4077 = vsel %vm3130, %v4038, 0
        %v4080 = vsel %vm3130, %v4039, 0
        %v4083 = vsel %vm3130, %v4040, 0
        %v4086 = vsel %vm3130, %v4041, 0
        %v4089 = vsel %vm3130, %v4042, 0
        %v4092 = vsel %vm3130, %v4043, 0
        %v4095 = vsel %vm3130, %v4044, 0
        %v4098 = vsel %vm3130, %v4045, 0
        %v4101 = vsel %vm3130, %v4046, 0
        %4103 = vmatprep.subr.bf16.mxu0 0
        %4104 = vmatpush1.bf16.xpose.msra.mxu0 %v4080
        %4105 = vmatprep.subr.bf16.mxu0 0
        %4106 = vmatpush1.bf16.xpose.msra.mxu0 %v4083
        %4107 = vmatprep.subr.bf16.mxu0 0
        %4108 = vmatpush1.bf16.xpose.msra.mxu0 %v4086
        %4109 = vmatprep.subr.bf16.mxu0 0
        %4110 = vmatpush1.bf16.xpose.msra.mxu0 %v4089
        %4111 = vmatprep.subr.bf16.mxu0 0
        %4112 = vmatpush1.bf16.xpose.msra.mxu0 %v4092
        %4113 = vmatprep.subr.bf16.mxu0 0
        %4114 = vmatpush1.bf16.xpose.msra.mxu0 %v4095
        %4115 = vmatprep.subr.bf16.mxu0 0
        %4116 = vmatpush1.bf16.xpose.msra.mxu0 %v4098
        %4117 = vmatprep.subr.bf16.mxu0 0
        %4118 = vmatpush1.bf16.xpose.msra.mxu0 %v4101
        %4119 = vmatprep.subr.bf16.mxu0 0
        %4120 = vmatpush1.bf16.xpose.msra.mxu0 0
        %4121 = vmatprep.subr.bf16.mxu0 0
        %4122 = vmatpush1.bf16.xpose.msra.mxu0 0
        %4123 = vmatprep.subr.bf16.mxu0 0
        %4124 = vmatpush1.bf16.xpose.msra.mxu0 0
        %4125 = vmatprep.subr.bf16.mxu0 0
        %4126 = vmatpush1.bf16.xpose.msra.mxu0 0
        %4127 = vmatprep.subr.bf16.mxu0 0
        %4128 = vmatpush1.bf16.xpose.msra.mxu0 0
        %4129 = vmatprep.subr.bf16.mxu0 0
        %4130 = vmatpush1.bf16.xpose.msra.mxu0 0
        %4131 = vmatprep.subr.bf16.mxu0 0
        %4132 = vmatpush1.bf16.xpose.msra.mxu0 0
        %4133 = vmatprep.subr.bf16.mxu0 0
        %4134 = vmatpush1.bf16.xpose.msra.mxu0 0
        %4135 = vmatprep.mubr.bf16.mxu0 0
        %4136 = vmatmul.mubr.bf16.gmra.mrb[0].mxu0 %v4056
        %v4137 = vpop.f32.mrb[0].mxu0
        %v4138 = vadd.f32 0.0, %v4137
        %v4139 = vpop.f32.mrb[0].mxu0
        %v4140 = vpop.f32.mrb[0].mxu0
        %v4141 = vadd.f32 0.0, %v4140
        %v4142 = vpop.f32.mrb[0].mxu0
        %4143 = vmatprep.mubr.bf16.mxu0 0
        %4144 = vmatmul.mubr.bf16.gmra.mrb[0].mxu0 %v4059
        %v4145 = vpop.f32.mrb[0].mxu0
        %v4146 = vadd.f32 0.0, %v4145
        %v4147 = vpop.f32.mrb[0].mxu0
        %v4148 = vpop.f32.mrb[0].mxu0
        %v4149 = vadd.f32 0.0, %v4148
        %v4150 = vpop.f32.mrb[0].mxu0
        %4151 = vmatprep.mubr.bf16.mxu0 0
        %4152 = vmatmul.mubr.bf16.gmra.mrb[0].mxu0 %v4062
        %v4153 = vpop.f32.mrb[0].mxu0
        %v4154 = vadd.f32 0.0, %v4153
        %v4155 = vpop.f32.mrb[0].mxu0
        %v4156 = vpop.f32.mrb[0].mxu0
        %v4157 = vadd.f32 0.0, %v4156
        %v4158 = vpop.f32.mrb[0].mxu0
        %4159 = vmatprep.mubr.bf16.mxu0 0
        %4160 = vmatmul.mubr.bf16.gmra.mrb[0].mxu0 %v4065
        %v4161 = vpop.f32.mrb[0].mxu0
        %v4162 = vadd.f32 0.0, %v4161
        %v4163 = vpop.f32.mrb[0].mxu0
        %v4164 = vpop.f32.mrb[0].mxu0
        %v4165 = vadd.f32 0.0, %v4164
        %v4166 = vpop.f32.mrb[0].mxu0
        %4167 = vmatprep.mubr.bf16.mxu0 0
        %4168 = vmatmul.mubr.bf16.gmra.mrb[0].mxu0 %v4068
        %v4169 = vpop.f32.mrb[0].mxu0
        %v4170 = vadd.f32 0.0, %v4169
        %v4171 = vpop.f32.mrb[0].mxu0
        %v4172 = vpop.f32.mrb[0].mxu0
        %v4173 = vadd.f32 0.0, %v4172
        %v4174 = vpop.f32.mrb[0].mxu0
        %4175 = vmatprep.mubr.bf16.mxu0 0
        %4176 = vmatmul.mubr.bf16.gmra.mrb[0].mxu0 %v4071
        %v4177 = vpop.f32.mrb[0].mxu0
        %v4178 = vadd.f32 0.0, %v4177
        %v4179 = vpop.f32.mrb[0].mxu0
        %v4180 = vpop.f32.mrb[0].mxu0
        %v4181 = vadd.f32 0.0, %v4180
        %v4182 = vpop.f32.mrb[0].mxu0
        %4183 = vmatprep.mubr.bf16.mxu0 0
        %4184 = vmatmul.mubr.bf16.gmra.mrb[0].mxu0 %v4074
        %v4185 = vpop.f32.mrb[0].mxu0
        %v4186 = vadd.f32 0.0, %v4185
        %v4187 = vpop.f32.mrb[0].mxu0
        %v4188 = vpop.f32.mrb[0].mxu0
        %v4189 = vadd.f32 0.0, %v4188
        %v4190 = vpop.f32.mrb[0].mxu0
        %4191 = vmatprep.mubr.bf16.mxu0 0
        %4192 = vmatmul.mubr.bf16.gmra.mrb[0].mxu0 %v4077
        %v4193 = vpop.f32.mrb[0].mxu0
        %v4194 = vadd.f32 0.0, %v4193
        %v4195 = vpop.f32.mrb[0].mxu0
        %v4196 = vpop.f32.mrb[0].mxu0
        %v4197 = vadd.f32 0.0, %v4196
        %v4198 = vpop.f32.mrb[0].mxu0
        %4199 = vdwg.mxu0
        %v4200 = vsel %vm3090, %v4138, -inf
        %v4201 = vsel %vm3091, %v4141, -inf
        %v4202 = vsel %vm3092, %v4146, -inf
        %v4203 = vsel %vm3093, %v4149, -inf
        %v4204 = vsel %vm3094, %v4154, -inf
        %v4205 = vsel %vm3095, %v4157, -inf
        %v4206 = vsel %vm3096, %v4162, -inf
        %v4207 = vsel %vm3097, %v4165, -inf
        %v4208 = vsel %vm3098, %v4170, -inf
        %v4209 = vsel %vm3099, %v4173, -inf
        %v4210 = vsel %vm3100, %v4178, -inf
        %v4211 = vsel %vm3101, %v4181, -inf
        %v4212 = vsel %vm3102, %v4186, -inf
        %v4213 = vsel %vm3103, %v4189, -inf
        %v4214 = vsel %vm3104, %v4194, -inf
        %v4215 = vsel %vm3105, %v4197, -inf
        %4216 = vmax.xlane.f32.xlu0 %v4200
        %v4217 = vpop.xlane.xlu0 %4216
        %4218 = vmax.xlane.f32.xlu0 %v4201
        %v4219 = vpop.xlane.xlu0 %4218
        %4220 = vmax.xlane.f32.xlu0 %v4202
        %v4221 = vpop.xlane.xlu0 %4220
        %4222 = vmax.xlane.f32.xlu0 %v4203
        %v4223 = vpop.xlane.xlu0 %4222
        %4224 = vmax.xlane.f32.xlu0 %v4204
        %v4225 = vpop.xlane.xlu0 %4224
        %4226 = vmax.xlane.f32.xlu0 %v4205
        %v4227 = vpop.xlane.xlu0 %4226
        %4228 = vmax.xlane.f32.xlu0 %v4206
        %v4229 = vpop.xlane.xlu0 %4228
        %4230 = vmax.xlane.f32.xlu0 %v4207
        %v4231 = vpop.xlane.xlu0 %4230
        %4232 = vmax.xlane.f32.xlu0 %v4208
        %v4233 = vpop.xlane.xlu0 %4232
        %4234 = vmax.xlane.f32.xlu0 %v4209
        %v4235 = vpop.xlane.xlu0 %4234
        %4236 = vmax.xlane.f32.xlu0 %v4210
        %v4237 = vpop.xlane.xlu0 %4236
        %4238 = vmax.xlane.f32.xlu0 %v4211
        %v4239 = vpop.xlane.xlu0 %4238
        %4240 = vmax.xlane.f32.xlu0 %v4212
        %v4241 = vpop.xlane.xlu0 %4240
        %4242 = vmax.xlane.f32.xlu0 %v4213
        %v4243 = vpop.xlane.xlu0 %4242
        %4244 = vmax.xlane.f32.xlu0 %v4214
        %v4245 = vpop.xlane.xlu0 %4244
        %4246 = vmax.xlane.f32.xlu0 %v4215
        %v4247 = vpop.xlane.xlu0 %4246
        %v4248 = vsub.f32 %v4200, %v4217
        %v4249 = vsub.f32 %v4201, %v4219
        %v4250 = vsub.f32 %v4202, %v4221
        %v4251 = vsub.f32 %v4203, %v4223
        %v4252 = vsub.f32 %v4204, %v4225
        %v4253 = vsub.f32 %v4205, %v4227
        %v4254 = vsub.f32 %v4206, %v4229
        %v4255 = vsub.f32 %v4207, %v4231
        %v4256 = vsub.f32 %v4208, %v4233
        %v4257 = vsub.f32 %v4209, %v4235
        %v4258 = vsub.f32 %v4210, %v4237
        %v4259 = vsub.f32 %v4211, %v4239
        %v4260 = vsub.f32 %v4212, %v4241
        %v4261 = vsub.f32 %v4213, %v4243
        %v4262 = vsub.f32 %v4214, %v4245
        %v4263 = vsub.f32 %v4215, %v4247
        %v4264 = vmul.f32 %v4248, 1.442695
        %v4265 = vpow.pop %v4264
        %v4266 = vmul.f32 %v4249, 1.442695
        %v4267 = vpow.pop %v4266
        %v4268 = vmul.f32 %v4250, 1.442695
        %v4269 = vpow.pop %v4268
        %v4270 = vmul.f32 %v4251, 1.442695
        %v4271 = vpow.pop %v4270
        %v4272 = vmul.f32 %v4252, 1.442695
        %v4273 = vpow.pop %v4272
        %v4274 = vmul.f32 %v4253, 1.442695
        %v4275 = vpow.pop %v4274
        %v4276 = vmul.f32 %v4254, 1.442695
        %v4277 = vpow.pop %v4276
        %v4278 = vmul.f32 %v4255, 1.442695
        %v4279 = vpow.pop %v4278
        %v4280 = vmul.f32 %v4256, 1.442695
        %v4281 = vpow.pop %v4280
        %v4282 = vmul.f32 %v4257, 1.442695
        %v4283 = vpow.pop %v4282
        %v4284 = vmul.f32 %v4258, 1.442695
        %v4285 = vpow.pop %v4284
        %v4286 = vmul.f32 %v4259, 1.442695
        %v4287 = vpow.pop %v4286
        %v4288 = vmul.f32 %v4260, 1.442695
        %v4289 = vpow.pop %v4288
        %v4290 = vmul.f32 %v4261, 1.442695
        %v4291 = vpow.pop %v4290
        %v4292 = vmul.f32 %v4262, 1.442695
        %v4293 = vpow.pop %v4292
        %v4294 = vmul.f32 %v4263, 1.442695
        %v4295 = vpow.pop %v4294
        %4296 = vadd.xlane.f32.xlu0 %v4265
        %v4297 = vpop.xlane.xlu0 %4296
        %4298 = vadd.xlane.f32.xlu0 %v4267
        %v4299 = vpop.xlane.xlu0 %4298
        %4300 = vadd.xlane.f32.xlu0 %v4269
        %v4301 = vpop.xlane.xlu0 %4300
        %4302 = vadd.xlane.f32.xlu0 %v4271
        %v4303 = vpop.xlane.xlu0 %4302
        %4304 = vadd.xlane.f32.xlu0 %v4273
        %v4305 = vpop.xlane.xlu0 %4304
        %4306 = vadd.xlane.f32.xlu0 %v4275
        %v4307 = vpop.xlane.xlu0 %4306
        %4308 = vadd.xlane.f32.xlu0 %v4277
        %v4309 = vpop.xlane.xlu0 %4308
        %4310 = vadd.xlane.f32.xlu0 %v4279
        %v4311 = vpop.xlane.xlu0 %4310
        %4312 = vadd.xlane.f32.xlu0 %v4281
        %v4313 = vpop.xlane.xlu0 %4312
        %4314 = vadd.xlane.f32.xlu0 %v4283
        %v4315 = vpop.xlane.xlu0 %4314
        %4316 = vadd.xlane.f32.xlu0 %v4285
        %v4317 = vpop.xlane.xlu0 %4316
        %4318 = vadd.xlane.f32.xlu0 %v4287
        %v4319 = vpop.xlane.xlu0 %4318
        %4320 = vadd.xlane.f32.xlu0 %v4289
        %v4321 = vpop.xlane.xlu0 %4320
        %4322 = vadd.xlane.f32.xlu0 %v4291
        %v4323 = vpop.xlane.xlu0 %4322
        %4324 = vadd.xlane.f32.xlu0 %v4293
        %v4325 = vpop.xlane.xlu0 %4324
        %4326 = vadd.xlane.f32.xlu0 %v4295
        %v4327 = vpop.xlane.xlu0 %4326
        %v4328 = vrcp.pop %v4297
        %v4329 = vrcp.pop %v4299
        %v4330 = vrcp.pop %v4301
        %v4331 = vrcp.pop %v4303
        %v4332 = vrcp.pop %v4305
        %v4333 = vrcp.pop %v4307
        %v4334 = vrcp.pop %v4309
        %v4335 = vrcp.pop %v4311
        %v4336 = vrcp.pop %v4313
        %v4337 = vrcp.pop %v4315
        %v4338 = vrcp.pop %v4317
        %v4339 = vrcp.pop %v4319
        %v4340 = vrcp.pop %v4321
        %v4341 = vrcp.pop %v4323
        %v4342 = vrcp.pop %v4325
        %v4343 = vrcp.pop %v4327
        %v4344 = vmul.f32 %v4265, %v4328
        %v4345 = vmul.f32 %v4267, %v4329
        %v4346 = vmul.f32 %v4269, %v4330
        %v4347 = vmul.f32 %v4271, %v4331
        %v4348 = vmul.f32 %v4273, %v4332
        %v4349 = vmul.f32 %v4275, %v4333
        %v4350 = vmul.f32 %v4277, %v4334
        %v4351 = vmul.f32 %v4279, %v4335
        %v4352 = vmul.f32 %v4281, %v4336
        %v4353 = vmul.f32 %v4283, %v4337
        %v4354 = vmul.f32 %v4285, %v4338
        %v4355 = vmul.f32 %v4287, %v4339
        %v4356 = vmul.f32 %v4289, %v4340
        %v4357 = vmul.f32 %v4291, %v4341
        %v4358 = vmul.f32 %v4293, %v4342
        %v4359 = vmul.f32 %v4295, %v4343
        %v4360 = vpack.c.bf16 %v4345, %v4344
        %v4361 = vpack.c.bf16 %v4347, %v4346
        %v4362 = vpack.c.bf16 %v4349, %v4348
        %v4363 = vpack.c.bf16 %v4351, %v4350
        %v4364 = vpack.c.bf16 %v4353, %v4352
        %v4365 = vpack.c.bf16 %v4355, %v4354
        %v4366 = vpack.c.bf16 %v4357, %v4356
        %v4367 = vpack.c.bf16 %v4359, %v4358
        %4368 = vmatprep.subr.bf16.mxu0 0
        %4369 = vmatpush1.bf16.msra.mxu0 %v4047
        %4370 = vmatprep.subr.bf16.mxu0 0
        %4371 = vmatpush1.bf16.msra.mxu0 %v4048
        %4372 = vmatprep.subr.bf16.mxu0 0
        %4373 = vmatpush1.bf16.msra.mxu0 %v4049
        %4374 = vmatprep.subr.bf16.mxu0 0
        %4375 = vmatpush1.bf16.msra.mxu0 %v4050
        %4376 = vmatprep.subr.bf16.mxu0 0
        %4377 = vmatpush1.bf16.msra.mxu0 %v4051
        %4378 = vmatprep.subr.bf16.mxu0 0
        %4379 = vmatpush1.bf16.msra.mxu0 %v4052
        %4380 = vmatprep.subr.bf16.mxu0 0
        %4381 = vmatpush1.bf16.msra.mxu0 %v4053
        %4382 = vmatprep.subr.bf16.mxu0 0
        %4383 = vmatpush1.bf16.msra.mxu0 %v4054
        %4384 = vmatprep.subr.bf16.mxu0 0
        %4385 = vmatpush1.bf16.msra.mxu0 0
        %4386 = vmatprep.subr.bf16.mxu0 0
        %4387 = vmatpush1.bf16.msra.mxu0 0
        %4388 = vmatprep.subr.bf16.mxu0 0
        %4389 = vmatpush1.bf16.msra.mxu0 0
        %4390 = vmatprep.subr.bf16.mxu0 0
        %4391 = vmatpush1.bf16.msra.mxu0 0
        %4392 = vmatprep.subr.bf16.mxu0 0
        %4393 = vmatpush1.bf16.msra.mxu0 0
        %4394 = vmatprep.subr.bf16.mxu0 0
        %4395 = vmatpush1.bf16.msra.mxu0 0
        %4396 = vmatprep.subr.bf16.mxu0 0
        %4397 = vmatpush1.bf16.msra.mxu0 0
        %4398 = vmatprep.subr.bf16.mxu0 0
        %4399 = vmatpush1.bf16.msra.mxu0 0
        %4400 = vmatprep.mubr.bf16.mxu0 0
        %4401 = vmatmul.mubr.bf16.gmra.mrb[0].mxu0 %v4360
        %v4402 = vpop.f32.mrb[0].mxu0
        %v4403 = vadd.f32 0.0, %v4402
        %v4404 = vpop.f32.mrb[0].mxu0
        %v4405 = vpop.f32.mrb[0].mxu0
        %v4406 = vadd.f32 0.0, %v4405
        %v4407 = vpop.f32.mrb[0].mxu0
        %4408 = vmatprep.mubr.bf16.mxu0 0
        %4409 = vmatmul.mubr.bf16.gmra.mrb[0].mxu0 %v4361
        %v4410 = vpop.f32.mrb[0].mxu0
        %v4411 = vadd.f32 0.0, %v4410
        %v4412 = vpop.f32.mrb[0].mxu0
        %v4413 = vpop.f32.mrb[0].mxu0
        %v4414 = vadd.f32 0.0, %v4413
        %v4415 = vpop.f32.mrb[0].mxu0
        %4416 = vmatprep.mubr.bf16.mxu0 0
        %4417 = vmatmul.mubr.bf16.gmra.mrb[0].mxu0 %v4362
        %v4418 = vpop.f32.mrb[0].mxu0
        %v4419 = vadd.f32 0.0, %v4418
        %v4420 = vpop.f32.mrb[0].mxu0
        %v4421 = vpop.f32.mrb[0].mxu0
        %v4422 = vadd.f32 0.0, %v4421
        %v4423 = vpop.f32.mrb[0].mxu0
        %4424 = vmatprep.mubr.bf16.mxu0 0
        %4425 = vmatmul.mubr.bf16.gmra.mrb[0].mxu0 %v4363
        %v4426 = vpop.f32.mrb[0].mxu0
        %v4427 = vadd.f32 0.0, %v4426
        %v4428 = vpop.f32.mrb[0].mxu0
        %v4429 = vpop.f32.mrb[0].mxu0
        %v4430 = vadd.f32 0.0, %v4429
        %v4431 = vpop.f32.mrb[0].mxu0
        %4432 = vmatprep.mubr.bf16.mxu0 0
        %4433 = vmatmul.mubr.bf16.gmra.mrb[0].mxu0 %v4364
        %v4434 = vpop.f32.mrb[0].mxu0
        %v4435 = vadd.f32 0.0, %v4434
        %v4436 = vpop.f32.mrb[0].mxu0
        %v4437 = vpop.f32.mrb[0].mxu0
        %v4438 = vadd.f32 0.0, %v4437
        %v4439 = vpop.f32.mrb[0].mxu0
        %4440 = vmatprep.mubr.bf16.mxu0 0
        %4441 = vmatmul.mubr.bf16.gmra.mrb[0].mxu0 %v4365
        %v4442 = vpop.f32.mrb[0].mxu0
        %v4443 = vadd.f32 0.0, %v4442
        %v4444 = vpop.f32.mrb[0].mxu0
        %v4445 = vpop.f32.mrb[0].mxu0
        %v4446 = vadd.f32 0.0, %v4445
        %v4447 = vpop.f32.mrb[0].mxu0
        %4448 = vmatprep.mubr.bf16.mxu0 0
        %4449 = vmatmul.mubr.bf16.gmra.mrb[0].mxu0 %v4366
        %v4450 = vpop.f32.mrb[0].mxu0
        %v4451 = vadd.f32 0.0, %v4450
        %v4452 = vpop.f32.mrb[0].mxu0
        %v4453 = vpop.f32.mrb[0].mxu0
        %v4454 = vadd.f32 0.0, %v4453
        %v4455 = vpop.f32.mrb[0].mxu0
        %4456 = vmatprep.mubr.bf16.mxu0 0
        %4457 = vmatmul.mubr.bf16.gmra.mrb[0].mxu0 %v4367
        %v4458 = vpop.f32.mrb[0].mxu0
        %v4459 = vadd.f32 0.0, %v4458
        %v4460 = vpop.f32.mrb[0].mxu0
        %v4461 = vpop.f32.mrb[0].mxu0
        %v4462 = vadd.f32 0.0, %v4461
        %v4463 = vpop.f32.mrb[0].mxu0
        %4464 = vdwg.mxu0
        %4473 = vrot.lane.b32.xlu0 %v4031, 64
        %v4474 = vpop.permute.xlu0 %4473
        %4475 = vrot.lane.b32.xlu0 %v4032, 64
        %v4476 = vpop.permute.xlu0 %4475
        %4477 = vrot.lane.b32.xlu0 %v4033, 64
        %v4478 = vpop.permute.xlu0 %4477
        %4479 = vrot.lane.b32.xlu0 %v4034, 64
        %v4480 = vpop.permute.xlu0 %4479
        %4481 = vrot.lane.b32.xlu0 %v4035, 64
        %v4482 = vpop.permute.xlu0 %4481
        %4483 = vrot.lane.b32.xlu0 %v4036, 64
        %v4484 = vpop.permute.xlu0 %4483
        %4485 = vrot.lane.b32.xlu0 %v4037, 64
        %v4486 = vpop.permute.xlu0 %4485
        %4487 = vrot.lane.b32.xlu0 %v4038, 64
        %v4488 = vpop.permute.xlu0 %4487
        %4497 = vrot.lane.b32.xlu0 %v4039, 64
        %v4498 = vpop.permute.xlu0 %4497
        %4499 = vrot.lane.b32.xlu0 %v4040, 64
        %v4500 = vpop.permute.xlu0 %4499
        %4501 = vrot.lane.b32.xlu0 %v4041, 64
        %v4502 = vpop.permute.xlu0 %4501
        %4503 = vrot.lane.b32.xlu0 %v4042, 64
        %v4504 = vpop.permute.xlu0 %4503
        %4505 = vrot.lane.b32.xlu0 %v4043, 64
        %v4506 = vpop.permute.xlu0 %4505
        %4507 = vrot.lane.b32.xlu0 %v4044, 64
        %v4508 = vpop.permute.xlu0 %4507
        %4509 = vrot.lane.b32.xlu0 %v4045, 64
        %v4510 = vpop.permute.xlu0 %4509
        %4511 = vrot.lane.b32.xlu0 %v4046, 64
        %v4512 = vpop.permute.xlu0 %4511
        %v4514 = vsel %vm3130, %v4474, 0
        %v4517 = vsel %vm3130, %v4476, 0
        %v4520 = vsel %vm3130, %v4478, 0
        %v4523 = vsel %vm3130, %v4480, 0
        %v4526 = vsel %vm3130, %v4482, 0
        %v4529 = vsel %vm3130, %v4484, 0
        %v4532 = vsel %vm3130, %v4486, 0
        %v4535 = vsel %vm3130, %v4488, 0
        %v4538 = vsel %vm3130, %v4498, 0
        %v4541 = vsel %vm3130, %v4500, 0
        %v4544 = vsel %vm3130, %v4502, 0
        %v4547 = vsel %vm3130, %v4504, 0
        %v4550 = vsel %vm3130, %v4506, 0
        %v4553 = vsel %vm3130, %v4508, 0
        %v4556 = vsel %vm3130, %v4510, 0
        %v4559 = vsel %vm3130, %v4512, 0
        %4561 = vmatprep.subr.bf16.mxu0 0
        %4562 = vmatpush1.bf16.xpose.msra.mxu0 %v4538
        %4563 = vmatprep.subr.bf16.mxu0 0
        %4564 = vmatpush1.bf16.xpose.msra.mxu0 %v4541
        %4565 = vmatprep.subr.bf16.mxu0 0
        %4566 = vmatpush1.bf16.xpose.msra.mxu0 %v4544
        %4567 = vmatprep.subr.bf16.mxu0 0
        %4568 = vmatpush1.bf16.xpose.msra.mxu0 %v4547
        %4569 = vmatprep.subr.bf16.mxu0 0
        %4570 = vmatpush1.bf16.xpose.msra.mxu0 %v4550
        %4571 = vmatprep.subr.bf16.mxu0 0
        %4572 = vmatpush1.bf16.xpose.msra.mxu0 %v4553
        %4573 = vmatprep.subr.bf16.mxu0 0
        %4574 = vmatpush1.bf16.xpose.msra.mxu0 %v4556
        %4575 = vmatprep.subr.bf16.mxu0 0
        %4576 = vmatpush1.bf16.xpose.msra.mxu0 %v4559
        %4577 = vmatprep.subr.bf16.mxu0 0
        %4578 = vmatpush1.bf16.xpose.msra.mxu0 0
        %4579 = vmatprep.subr.bf16.mxu0 0
        %4580 = vmatpush1.bf16.xpose.msra.mxu0 0
        %4581 = vmatprep.subr.bf16.mxu0 0
        %4582 = vmatpush1.bf16.xpose.msra.mxu0 0
        %4583 = vmatprep.subr.bf16.mxu0 0
        %4584 = vmatpush1.bf16.xpose.msra.mxu0 0
        %4585 = vmatprep.subr.bf16.mxu0 0
        %4586 = vmatpush1.bf16.xpose.msra.mxu0 0
        %4587 = vmatprep.subr.bf16.mxu0 0
        %4588 = vmatpush1.bf16.xpose.msra.mxu0 0
        %4589 = vmatprep.subr.bf16.mxu0 0
        %4590 = vmatpush1.bf16.xpose.msra.mxu0 0
        %4591 = vmatprep.subr.bf16.mxu0 0
        %4592 = vmatpush1.bf16.xpose.msra.mxu0 0
        %4593 = vmatprep.mubr.bf16.mxu0 0
        %4594 = vmatmul.mubr.bf16.gmra.mrb[0].mxu0 %v4514
        %v4595 = vpop.f32.mrb[0].mxu0
        %v4596 = vadd.f32 0.0, %v4595
        %v4597 = vpop.f32.mrb[0].mxu0
        %v4598 = vpop.f32.mrb[0].mxu0
        %v4599 = vadd.f32 0.0, %v4598
        %v4600 = vpop.f32.mrb[0].mxu0
        %4601 = vmatprep.mubr.bf16.mxu0 0
        %4602 = vmatmul.mubr.bf16.gmra.mrb[0].mxu0 %v4517
        %v4603 = vpop.f32.mrb[0].mxu0
        %v4604 = vadd.f32 0.0, %v4603
        %v4605 = vpop.f32.mrb[0].mxu0
        %v4606 = vpop.f32.mrb[0].mxu0
        %v4607 = vadd.f32 0.0, %v4606
        %v4608 = vpop.f32.mrb[0].mxu0
        %4609 = vmatprep.mubr.bf16.mxu0 0
        %4610 = vmatmul.mubr.bf16.gmra.mrb[0].mxu0 %v4520
        %v4611 = vpop.f32.mrb[0].mxu0
        %v4612 = vadd.f32 0.0, %v4611
        %v4613 = vpop.f32.mrb[0].mxu0
        %v4614 = vpop.f32.mrb[0].mxu0
        %v4615 = vadd.f32 0.0, %v4614
        %v4616 = vpop.f32.mrb[0].mxu0
        %4617 = vmatprep.mubr.bf16.mxu0 0
        %4618 = vmatmul.mubr.bf16.gmra.mrb[0].mxu0 %v4523
        %v4619 = vpop.f32.mrb[0].mxu0
        %v4620 = vadd.f32 0.0, %v4619
        %v4621 = vpop.f32.mrb[0].mxu0
        %v4622 = vpop.f32.mrb[0].mxu0
        %v4623 = vadd.f32 0.0, %v4622
        %v4624 = vpop.f32.mrb[0].mxu0
        %4625 = vmatprep.mubr.bf16.mxu0 0
        %4626 = vmatmul.mubr.bf16.gmra.mrb[0].mxu0 %v4526
        %v4627 = vpop.f32.mrb[0].mxu0
        %v4628 = vadd.f32 0.0, %v4627
        %v4629 = vpop.f32.mrb[0].mxu0
        %v4630 = vpop.f32.mrb[0].mxu0
        %v4631 = vadd.f32 0.0, %v4630
        %v4632 = vpop.f32.mrb[0].mxu0
        %4633 = vmatprep.mubr.bf16.mxu0 0
        %4634 = vmatmul.mubr.bf16.gmra.mrb[0].mxu0 %v4529
        %v4635 = vpop.f32.mrb[0].mxu0
        %v4636 = vadd.f32 0.0, %v4635
        %v4637 = vpop.f32.mrb[0].mxu0
        %v4638 = vpop.f32.mrb[0].mxu0
        %v4639 = vadd.f32 0.0, %v4638
        %v4640 = vpop.f32.mrb[0].mxu0
        %4641 = vmatprep.mubr.bf16.mxu0 0
        %4642 = vmatmul.mubr.bf16.gmra.mrb[0].mxu0 %v4532
        %v4643 = vpop.f32.mrb[0].mxu0
        %v4644 = vadd.f32 0.0, %v4643
        %v4645 = vpop.f32.mrb[0].mxu0
        %v4646 = vpop.f32.mrb[0].mxu0
        %v4647 = vadd.f32 0.0, %v4646
        %v4648 = vpop.f32.mrb[0].mxu0
        %4649 = vmatprep.mubr.bf16.mxu0 0
        %4650 = vmatmul.mubr.bf16.gmra.mrb[0].mxu0 %v4535
        %v4651 = vpop.f32.mrb[0].mxu0
        %v4652 = vadd.f32 0.0, %v4651
        %v4653 = vpop.f32.mrb[0].mxu0
        %v4654 = vpop.f32.mrb[0].mxu0
        %v4655 = vadd.f32 0.0, %v4654
        %v4656 = vpop.f32.mrb[0].mxu0
        %4657 = vdwg.mxu0
        %v4658 = vsel %vm3090, %v4596, -inf
        %v4659 = vsel %vm3091, %v4599, -inf
        %v4660 = vsel %vm3092, %v4604, -inf
        %v4661 = vsel %vm3093, %v4607, -inf
        %v4662 = vsel %vm3094, %v4612, -inf
        %v4663 = vsel %vm3095, %v4615, -inf
        %v4664 = vsel %vm3096, %v4620, -inf
        %v4665 = vsel %vm3097, %v4623, -inf
        %v4666 = vsel %vm3098, %v4628, -inf
        %v4667 = vsel %vm3099, %v4631, -inf
        %v4668 = vsel %vm3100, %v4636, -inf
        %v4669 = vsel %vm3101, %v4639, -inf
        %v4670 = vsel %vm3102, %v4644, -inf
        %v4671 = vsel %vm3103, %v4647, -inf
        %v4672 = vsel %vm3104, %v4652, -inf
        %v4673 = vsel %vm3105, %v4655, -inf
        %4674 = vmax.xlane.f32.xlu0 %v4658
        %v4675 = vpop.xlane.xlu0 %4674
        %4676 = vmax.xlane.f32.xlu0 %v4659
        %v4677 = vpop.xlane.xlu0 %4676
        %4678 = vmax.xlane.f32.xlu0 %v4660
        %v4679 = vpop.xlane.xlu0 %4678
        %4680 = vmax.xlane.f32.xlu0 %v4661
        %v4681 = vpop.xlane.xlu0 %4680
        %4682 = vmax.xlane.f32.xlu0 %v4662
        %v4683 = vpop.xlane.xlu0 %4682
        %4684 = vmax.xlane.f32.xlu0 %v4663
        %v4685 = vpop.xlane.xlu0 %4684
        %4686 = vmax.xlane.f32.xlu0 %v4664
        %v4687 = vpop.xlane.xlu0 %4686
        %4688 = vmax.xlane.f32.xlu0 %v4665
        %v4689 = vpop.xlane.xlu0 %4688
        %4690 = vmax.xlane.f32.xlu0 %v4666
        %v4691 = vpop.xlane.xlu0 %4690
        %4692 = vmax.xlane.f32.xlu0 %v4667
        %v4693 = vpop.xlane.xlu0 %4692
        %4694 = vmax.xlane.f32.xlu0 %v4668
        %v4695 = vpop.xlane.xlu0 %4694
        %4696 = vmax.xlane.f32.xlu0 %v4669
        %v4697 = vpop.xlane.xlu0 %4696
        %4698 = vmax.xlane.f32.xlu0 %v4670
        %v4699 = vpop.xlane.xlu0 %4698
        %4700 = vmax.xlane.f32.xlu0 %v4671
        %v4701 = vpop.xlane.xlu0 %4700
        %4702 = vmax.xlane.f32.xlu0 %v4672
        %v4703 = vpop.xlane.xlu0 %4702
        %4704 = vmax.xlane.f32.xlu0 %v4673
        %v4705 = vpop.xlane.xlu0 %4704
        %v4706 = vsub.f32 %v4658, %v4675
        %v4707 = vsub.f32 %v4659, %v4677
        %v4708 = vsub.f32 %v4660, %v4679
        %v4709 = vsub.f32 %v4661, %v4681
        %v4710 = vsub.f32 %v4662, %v4683
        %v4711 = vsub.f32 %v4663, %v4685
        %v4712 = vsub.f32 %v4664, %v4687
        %v4713 = vsub.f32 %v4665, %v4689
        %v4714 = vsub.f32 %v4666, %v4691
        %v4715 = vsub.f32 %v4667, %v4693
        %v4716 = vsub.f32 %v4668, %v4695
        %v4717 = vsub.f32 %v4669, %v4697
        %v4718 = vsub.f32 %v4670, %v4699
        %v4719 = vsub.f32 %v4671, %v4701
        %v4720 = vsub.f32 %v4672, %v4703
        %v4721 = vsub.f32 %v4673, %v4705
        %v4722 = vmul.f32 %v4706, 1.442695
        %v4723 = vpow.pop %v4722
        %v4724 = vmul.f32 %v4707, 1.442695
        %v4725 = vpow.pop %v4724
        %v4726 = vmul.f32 %v4708, 1.442695
        %v4727 = vpow.pop %v4726
        %v4728 = vmul.f32 %v4709, 1.442695
        %v4729 = vpow.pop %v4728
        %v4730 = vmul.f32 %v4710, 1.442695
        %v4731 = vpow.pop %v4730
        %v4732 = vmul.f32 %v4711, 1.442695
        %v4733 = vpow.pop %v4732
        %v4734 = vmul.f32 %v4712, 1.442695
        %v4735 = vpow.pop %v4734
        %v4736 = vmul.f32 %v4713, 1.442695
        %v4737 = vpow.pop %v4736
        %v4738 = vmul.f32 %v4714, 1.442695
        %v4739 = vpow.pop %v4738
        %v4740 = vmul.f32 %v4715, 1.442695
        %v4741 = vpow.pop %v4740
        %v4742 = vmul.f32 %v4716, 1.442695
        %v4743 = vpow.pop %v4742
        %v4744 = vmul.f32 %v4717, 1.442695
        %v4745 = vpow.pop %v4744
        %v4746 = vmul.f32 %v4718, 1.442695
        %v4747 = vpow.pop %v4746
        %v4748 = vmul.f32 %v4719, 1.442695
        %v4749 = vpow.pop %v4748
        %v4750 = vmul.f32 %v4720, 1.442695
        %v4751 = vpow.pop %v4750
        %v4752 = vmul.f32 %v4721, 1.442695
        %v4753 = vpow.pop %v4752
        %4754 = vadd.xlane.f32.xlu0 %v4723
        %v4755 = vpop.xlane.xlu0 %4754
        %4756 = vadd.xlane.f32.xlu0 %v4725
        %v4757 = vpop.xlane.xlu0 %4756
        %4758 = vadd.xlane.f32.xlu0 %v4727
        %v4759 = vpop.xlane.xlu0 %4758
        %4760 = vadd.xlane.f32.xlu0 %v4729
        %v4761 = vpop.xlane.xlu0 %4760
        %4762 = vadd.xlane.f32.xlu0 %v4731
        %v4763 = vpop.xlane.xlu0 %4762
        %4764 = vadd.xlane.f32.xlu0 %v4733
        %v4765 = vpop.xlane.xlu0 %4764
        %4766 = vadd.xlane.f32.xlu0 %v4735
        %v4767 = vpop.xlane.xlu0 %4766
        %4768 = vadd.xlane.f32.xlu0 %v4737
        %v4769 = vpop.xlane.xlu0 %4768
        %4770 = vadd.xlane.f32.xlu0 %v4739
        %v4771 = vpop.xlane.xlu0 %4770
        %4772 = vadd.xlane.f32.xlu0 %v4741
        %v4773 = vpop.xlane.xlu0 %4772
        %4774 = vadd.xlane.f32.xlu0 %v4743
        %v4775 = vpop.xlane.xlu0 %4774
        %4776 = vadd.xlane.f32.xlu0 %v4745
        %v4777 = vpop.xlane.xlu0 %4776
        %4778 = vadd.xlane.f32.xlu0 %v4747
        %v4779 = vpop.xlane.xlu0 %4778
        %4780 = vadd.xlane.f32.xlu0 %v4749
        %v4781 = vpop.xlane.xlu0 %4780
        %4782 = vadd.xlane.f32.xlu0 %v4751
        %v4783 = vpop.xlane.xlu0 %4782
        %4784 = vadd.xlane.f32.xlu0 %v4753
        %v4785 = vpop.xlane.xlu0 %4784
        %v4786 = vrcp.pop %v4755
        %v4787 = vrcp.pop %v4757
        %v4788 = vrcp.pop %v4759
        %v4789 = vrcp.pop %v4761
        %v4790 = vrcp.pop %v4763
        %v4791 = vrcp.pop %v4765
        %v4792 = vrcp.pop %v4767
        %v4793 = vrcp.pop %v4769
        %v4794 = vrcp.pop %v4771
        %v4795 = vrcp.pop %v4773
        %v4796 = vrcp.pop %v4775
        %v4797 = vrcp.pop %v4777
        %v4798 = vrcp.pop %v4779
        %v4799 = vrcp.pop %v4781
        %v4800 = vrcp.pop %v4783
        %v4801 = vrcp.pop %v4785
        %v4802 = vmul.f32 %v4723, %v4786
        %v4803 = vmul.f32 %v4725, %v4787
        %v4804 = vmul.f32 %v4727, %v4788
        %v4805 = vmul.f32 %v4729, %v4789
        %v4806 = vmul.f32 %v4731, %v4790
        %v4807 = vmul.f32 %v4733, %v4791
        %v4808 = vmul.f32 %v4735, %v4792
        %v4809 = vmul.f32 %v4737, %v4793
        %v4810 = vmul.f32 %v4739, %v4794
        %v4811 = vmul.f32 %v4741, %v4795
        %v4812 = vmul.f32 %v4743, %v4796
        %v4813 = vmul.f32 %v4745, %v4797
        %v4814 = vmul.f32 %v4747, %v4798
        %v4815 = vmul.f32 %v4749, %v4799
        %v4816 = vmul.f32 %v4751, %v4800
        %v4817 = vmul.f32 %v4753, %v4801
        %v4818 = vpack.c.bf16 %v4803, %v4802
        %v4819 = vpack.c.bf16 %v4805, %v4804
        %v4820 = vpack.c.bf16 %v4807, %v4806
        %v4821 = vpack.c.bf16 %v4809, %v4808
        %v4822 = vpack.c.bf16 %v4811, %v4810
        %v4823 = vpack.c.bf16 %v4813, %v4812
        %v4824 = vpack.c.bf16 %v4815, %v4814
        %v4825 = vpack.c.bf16 %v4817, %v4816
        %4834 = vrot.lane.b32.xlu0 %v4047, 64
        %v4835 = vpop.permute.xlu0 %4834
        %4836 = vrot.lane.b32.xlu0 %v4048, 64
        %v4837 = vpop.permute.xlu0 %4836
        %4838 = vrot.lane.b32.xlu0 %v4049, 64
        %v4839 = vpop.permute.xlu0 %4838
        %4840 = vrot.lane.b32.xlu0 %v4050, 64
        %v4841 = vpop.permute.xlu0 %4840
        %4842 = vrot.lane.b32.xlu0 %v4051, 64
        %v4843 = vpop.permute.xlu0 %4842
        %4844 = vrot.lane.b32.xlu0 %v4052, 64
        %v4845 = vpop.permute.xlu0 %4844
        %4846 = vrot.lane.b32.xlu0 %v4053, 64
        %v4847 = vpop.permute.xlu0 %4846
        %4848 = vrot.lane.b32.xlu0 %v4054, 64
        %v4849 = vpop.permute.xlu0 %4848
        %4858 = vmatprep.subr.bf16.mxu0 0
        %4859 = vmatpush1.bf16.msra.mxu0 %v4835
        %4860 = vmatprep.subr.bf16.mxu0 0
        %4861 = vmatpush1.bf16.msra.mxu0 %v4837
        %4862 = vmatprep.subr.bf16.mxu0 0
        %4863 = vmatpush1.bf16.msra.mxu0 %v4839
        %4864 = vmatprep.subr.bf16.mxu0 0
        %4865 = vmatpush1.bf16.msra.mxu0 %v4841
        %4866 = vmatprep.subr.bf16.mxu0 0
        %4867 = vmatpush1.bf16.msra.mxu0 %v4843
        %4868 = vmatprep.subr.bf16.mxu0 0
        %4869 = vmatpush1.bf16.msra.mxu0 %v4845
        %4870 = vmatprep.subr.bf16.mxu0 0
        %4871 = vmatpush1.bf16.msra.mxu0 %v4847
        %4872 = vmatprep.subr.bf16.mxu0 0
        %4873 = vmatpush1.bf16.msra.mxu0 %v4849
        %4874 = vmatprep.subr.bf16.mxu0 0
        %4875 = vmatpush1.bf16.msra.mxu0 0
        %4876 = vmatprep.subr.bf16.mxu0 0
        %4877 = vmatpush1.bf16.msra.mxu0 0
        %4878 = vmatprep.subr.bf16.mxu0 0
        %4879 = vmatpush1.bf16.msra.mxu0 0
        %4880 = vmatprep.subr.bf16.mxu0 0
        %4881 = vmatpush1.bf16.msra.mxu0 0
        %4882 = vmatprep.subr.bf16.mxu0 0
        %4883 = vmatpush1.bf16.msra.mxu0 0
        %4884 = vmatprep.subr.bf16.mxu0 0
        %4885 = vmatpush1.bf16.msra.mxu0 0
        %4886 = vmatprep.subr.bf16.mxu0 0
        %4887 = vmatpush1.bf16.msra.mxu0 0
        %4888 = vmatprep.subr.bf16.mxu0 0
        %4889 = vmatpush1.bf16.msra.mxu0 0
        %4890 = vmatprep.mubr.bf16.mxu0 0
        %4891 = vmatmul.mubr.bf16.gmra.mrb[0].mxu0 %v4818
        %v4892 = vpop.f32.mrb[0].mxu0
        %v4893 = vadd.f32 0.0, %v4892
        %v4894 = vpop.f32.mrb[0].mxu0
        %v4895 = vpop.f32.mrb[0].mxu0
        %v4896 = vadd.f32 0.0, %v4895
        %v4897 = vpop.f32.mrb[0].mxu0
        %4898 = vmatprep.mubr.bf16.mxu0 0
        %4899 = vmatmul.mubr.bf16.gmra.mrb[0].mxu0 %v4819
        %v4900 = vpop.f32.mrb[0].mxu0
        %v4901 = vadd.f32 0.0, %v4900
        %v4902 = vpop.f32.mrb[0].mxu0
        %v4903 = vpop.f32.mrb[0].mxu0
        %v4904 = vadd.f32 0.0, %v4903
        %v4905 = vpop.f32.mrb[0].mxu0
        %4906 = vmatprep.mubr.bf16.mxu0 0
        %4907 = vmatmul.mubr.bf16.gmra.mrb[0].mxu0 %v4820
        %v4908 = vpop.f32.mrb[0].mxu0
        %v4909 = vadd.f32 0.0, %v4908
        %v4910 = vpop.f32.mrb[0].mxu0
        %v4911 = vpop.f32.mrb[0].mxu0
        %v4912 = vadd.f32 0.0, %v4911
        %v4913 = vpop.f32.mrb[0].mxu0
        %4914 = vmatprep.mubr.bf16.mxu0 0
        %4915 = vmatmul.mubr.bf16.gmra.mrb[0].mxu0 %v4821
        %v4916 = vpop.f32.mrb[0].mxu0
        %v4917 = vadd.f32 0.0, %v4916
        %v4918 = vpop.f32.mrb[0].mxu0
        %v4919 = vpop.f32.mrb[0].mxu0
        %v4920 = vadd.f32 0.0, %v4919
        %v4921 = vpop.f32.mrb[0].mxu0
        %4922 = vmatprep.mubr.bf16.mxu0 0
        %4923 = vmatmul.mubr.bf16.gmra.mrb[0].mxu0 %v4822
        %v4924 = vpop.f32.mrb[0].mxu0
        %v4925 = vadd.f32 0.0, %v4924
        %v4926 = vpop.f32.mrb[0].mxu0
        %v4927 = vpop.f32.mrb[0].mxu0
        %v4928 = vadd.f32 0.0, %v4927
        %v4929 = vpop.f32.mrb[0].mxu0
        %4930 = vmatprep.mubr.bf16.mxu0 0
        %4931 = vmatmul.mubr.bf16.gmra.mrb[0].mxu0 %v4823
        %v4932 = vpop.f32.mrb[0].mxu0
        %v4933 = vadd.f32 0.0, %v4932
        %v4934 = vpop.f32.mrb[0].mxu0
        %v4935 = vpop.f32.mrb[0].mxu0
        %v4936 = vadd.f32 0.0, %v4935
        %v4937 = vpop.f32.mrb[0].mxu0
        %4938 = vmatprep.mubr.bf16.mxu0 0
        %4939 = vmatmul.mubr.bf16.gmra.mrb[0].mxu0 %v4824
        %v4940 = vpop.f32.mrb[0].mxu0
        %v4941 = vadd.f32 0.0, %v4940
        %v4942 = vpop.f32.mrb[0].mxu0
        %v4943 = vpop.f32.mrb[0].mxu0
        %v4944 = vadd.f32 0.0, %v4943
        %v4945 = vpop.f32.mrb[0].mxu0
        %4946 = vmatprep.mubr.bf16.mxu0 0
        %4947 = vmatmul.mubr.bf16.gmra.mrb[0].mxu0 %v4825
        %v4948 = vpop.f32.mrb[0].mxu0
        %v4949 = vadd.f32 0.0, %v4948
        %v4950 = vpop.f32.mrb[0].mxu0
        %v4951 = vpop.f32.mrb[0].mxu0
        %v4952 = vadd.f32 0.0, %v4951
        %v4953 = vpop.f32.mrb[0].mxu0
        %4954 = vdwg.mxu0
        %v4955 = vpack.c.bf16 %v1420, %v1417
        %v4956 = vpack.c.bf16 %v1426, %v1423
        %v4957 = vpack.c.bf16 %v1432, %v1429
        %v4958 = vpack.c.bf16 %v1438, %v1435
        %v4959 = vpack.c.bf16 %v1444, %v1441
        %v4960 = vpack.c.bf16 %v1450, %v1447
        %v4961 = vpack.c.bf16 %v1456, %v1453
        %v4962 = vpack.c.bf16 %v1462, %v1459
        %v4963 = vpack.c.bf16 %v2208, %v2205
        %v4964 = vpack.c.bf16 %v2216, %v2213
        %v4965 = vpack.c.bf16 %v2224, %v2221
        %v4966 = vpack.c.bf16 %v2232, %v2229
        %v4967 = vpack.c.bf16 %v2240, %v2237
        %v4968 = vpack.c.bf16 %v2248, %v2245
        %v4969 = vpack.c.bf16 %v2256, %v2253
        %v4970 = vpack.c.bf16 %v2264, %v2261
        %v4971 = vpack.c.bf16 %v3012, %v3009
        %v4972 = vpack.c.bf16 %v3020, %v3017
        %v4973 = vpack.c.bf16 %v3028, %v3025
        %v4974 = vpack.c.bf16 %v3036, %v3033
        %v4975 = vpack.c.bf16 %v3044, %v3041
        %v4976 = vpack.c.bf16 %v3052, %v3049
        %v4977 = vpack.c.bf16 %v3060, %v3057
        %v4978 = vpack.c.bf16 %v3068, %v3065
        %v4980 = vsel %vm3130, %v4955, 0
        %v4983 = vsel %vm3130, %v4956, 0
        %v4986 = vsel %vm3130, %v4957, 0
        %v4989 = vsel %vm3130, %v4958, 0
        %v4992 = vsel %vm3130, %v4959, 0
        %v4995 = vsel %vm3130, %v4960, 0
        %v4998 = vsel %vm3130, %v4961, 0
        %v5001 = vsel %vm3130, %v4962, 0
        %v5004 = vsel %vm3130, %v4963, 0
        %v5007 = vsel %vm3130, %v4964, 0
        %v5010 = vsel %vm3130, %v4965, 0
        %v5013 = vsel %vm3130, %v4966, 0
        %v5016 = vsel %vm3130, %v4967, 0
        %v5019 = vsel %vm3130, %v4968, 0
        %v5022 = vsel %vm3130, %v4969, 0
        %v5025 = vsel %vm3130, %v4970, 0
        %5027 = vmatprep.subr.bf16.mxu0 0
        %5028 = vmatpush1.bf16.xpose.msra.mxu0 %v5004
        %5029 = vmatprep.subr.bf16.mxu0 0
        %5030 = vmatpush1.bf16.xpose.msra.mxu0 %v5007
        %5031 = vmatprep.subr.bf16.mxu0 0
        %5032 = vmatpush1.bf16.xpose.msra.mxu0 %v5010
        %5033 = vmatprep.subr.bf16.mxu0 0
        %5034 = vmatpush1.bf16.xpose.msra.mxu0 %v5013
        %5035 = vmatprep.subr.bf16.mxu0 0
        %5036 = vmatpush1.bf16.xpose.msra.mxu0 %v5016
        %5037 = vmatprep.subr.bf16.mxu0 0
        %5038 = vmatpush1.bf16.xpose.msra.mxu0 %v5019
        %5039 = vmatprep.subr.bf16.mxu0 0
        %5040 = vmatpush1.bf16.xpose.msra.mxu0 %v5022
        %5041 = vmatprep.subr.bf16.mxu0 0
        %5042 = vmatpush1.bf16.xpose.msra.mxu0 %v5025
        %5043 = vmatprep.subr.bf16.mxu0 0
        %5044 = vmatpush1.bf16.xpose.msra.mxu0 0
        %5045 = vmatprep.subr.bf16.mxu0 0
        %5046 = vmatpush1.bf16.xpose.msra.mxu0 0
        %5047 = vmatprep.subr.bf16.mxu0 0
        %5048 = vmatpush1.bf16.xpose.msra.mxu0 0
        %5049 = vmatprep.subr.bf16.mxu0 0
        %5050 = vmatpush1.bf16.xpose.msra.mxu0 0
        %5051 = vmatprep.subr.bf16.mxu0 0
        %5052 = vmatpush1.bf16.xpose.msra.mxu0 0
        %5053 = vmatprep.subr.bf16.mxu0 0
        %5054 = vmatpush1.bf16.xpose.msra.mxu0 0
        %5055 = vmatprep.subr.bf16.mxu0 0
        %5056 = vmatpush1.bf16.xpose.msra.mxu0 0
        %5057 = vmatprep.subr.bf16.mxu0 0
        %5058 = vmatpush1.bf16.xpose.msra.mxu0 0
        %5059 = vmatprep.mubr.bf16.mxu0 0
        %5060 = vmatmul.mubr.bf16.gmra.mrb[0].mxu0 %v4980
        %v5061 = vpop.f32.mrb[0].mxu0
        %v5062 = vadd.f32 0.0, %v5061
        %v5063 = vpop.f32.mrb[0].mxu0
        %v5064 = vpop.f32.mrb[0].mxu0
        %v5065 = vadd.f32 0.0, %v5064
        %v5066 = vpop.f32.mrb[0].mxu0
        %5067 = vmatprep.mubr.bf16.mxu0 0
        %5068 = vmatmul.mubr.bf16.gmra.mrb[0].mxu0 %v4983
        %v5069 = vpop.f32.mrb[0].mxu0
        %v5070 = vadd.f32 0.0, %v5069
        %v5071 = vpop.f32.mrb[0].mxu0
        %v5072 = vpop.f32.mrb[0].mxu0
        %v5073 = vadd.f32 0.0, %v5072
        %v5074 = vpop.f32.mrb[0].mxu0
        %5075 = vmatprep.mubr.bf16.mxu0 0
        %5076 = vmatmul.mubr.bf16.gmra.mrb[0].mxu0 %v4986
        %v5077 = vpop.f32.mrb[0].mxu0
        %v5078 = vadd.f32 0.0, %v5077
        %v5079 = vpop.f32.mrb[0].mxu0
        %v5080 = vpop.f32.mrb[0].mxu0
        %v5081 = vadd.f32 0.0, %v5080
        %v5082 = vpop.f32.mrb[0].mxu0
        %5083 = vmatprep.mubr.bf16.mxu0 0
        %5084 = vmatmul.mubr.bf16.gmra.mrb[0].mxu0 %v4989
        %v5085 = vpop.f32.mrb[0].mxu0
        %v5086 = vadd.f32 0.0, %v5085
        %v5087 = vpop.f32.mrb[0].mxu0
        %v5088 = vpop.f32.mrb[0].mxu0
        %v5089 = vadd.f32 0.0, %v5088
        %v5090 = vpop.f32.mrb[0].mxu0
        %5091 = vmatprep.mubr.bf16.mxu0 0
        %5092 = vmatmul.mubr.bf16.gmra.mrb[0].mxu0 %v4992
        %v5093 = vpop.f32.mrb[0].mxu0
        %v5094 = vadd.f32 0.0, %v5093
        %v5095 = vpop.f32.mrb[0].mxu0
        %v5096 = vpop.f32.mrb[0].mxu0
        %v5097 = vadd.f32 0.0, %v5096
        %v5098 = vpop.f32.mrb[0].mxu0
        %5099 = vmatprep.mubr.bf16.mxu0 0
        %5100 = vmatmul.mubr.bf16.gmra.mrb[0].mxu0 %v4995
        %v5101 = vpop.f32.mrb[0].mxu0
        %v5102 = vadd.f32 0.0, %v5101
        %v5103 = vpop.f32.mrb[0].mxu0
        %v5104 = vpop.f32.mrb[0].mxu0
        %v5105 = vadd.f32 0.0, %v5104
        %v5106 = vpop.f32.mrb[0].mxu0
        %5107 = vmatprep.mubr.bf16.mxu0 0
        %5108 = vmatmul.mubr.bf16.gmra.mrb[0].mxu0 %v4998
        %v5109 = vpop.f32.mrb[0].mxu0
        %v5110 = vadd.f32 0.0, %v5109
        %v5111 = vpop.f32.mrb[0].mxu0
        %v5112 = vpop.f32.mrb[0].mxu0
        %v5113 = vadd.f32 0.0, %v5112
        %v5114 = vpop.f32.mrb[0].mxu0
        %5115 = vmatprep.mubr.bf16.mxu0 0
        %5116 = vmatmul.mubr.bf16.gmra.mrb[0].mxu0 %v5001
        %v5117 = vpop.f32.mrb[0].mxu0
        %v5118 = vadd.f32 0.0, %v5117
        %v5119 = vpop.f32.mrb[0].mxu0
        %v5120 = vpop.f32.mrb[0].mxu0
        %v5121 = vadd.f32 0.0, %v5120
        %v5122 = vpop.f32.mrb[0].mxu0
        %5123 = vdwg.mxu0
        %v5124 = vsel %vm3090, %v5062, -inf
        %v5125 = vsel %vm3091, %v5065, -inf
        %v5126 = vsel %vm3092, %v5070, -inf
        %v5127 = vsel %vm3093, %v5073, -inf
        %v5128 = vsel %vm3094, %v5078, -inf
        %v5129 = vsel %vm3095, %v5081, -inf
        %v5130 = vsel %vm3096, %v5086, -inf
        %v5131 = vsel %vm3097, %v5089, -inf
        %v5132 = vsel %vm3098, %v5094, -inf
        %v5133 = vsel %vm3099, %v5097, -inf
        %v5134 = vsel %vm3100, %v5102, -inf
        %v5135 = vsel %vm3101, %v5105, -inf
        %v5136 = vsel %vm3102, %v5110, -inf
        %v5137 = vsel %vm3103, %v5113, -inf
        %v5138 = vsel %vm3104, %v5118, -inf
        %v5139 = vsel %vm3105, %v5121, -inf
        %5140 = vmax.xlane.f32.xlu0 %v5124
        %v5141 = vpop.xlane.xlu0 %5140
        %5142 = vmax.xlane.f32.xlu0 %v5125
        %v5143 = vpop.xlane.xlu0 %5142
        %5144 = vmax.xlane.f32.xlu0 %v5126
        %v5145 = vpop.xlane.xlu0 %5144
        %5146 = vmax.xlane.f32.xlu0 %v5127
        %v5147 = vpop.xlane.xlu0 %5146
        %5148 = vmax.xlane.f32.xlu0 %v5128
        %v5149 = vpop.xlane.xlu0 %5148
        %5150 = vmax.xlane.f32.xlu0 %v5129
        %v5151 = vpop.xlane.xlu0 %5150
        %5152 = vmax.xlane.f32.xlu0 %v5130
        %v5153 = vpop.xlane.xlu0 %5152
        %5154 = vmax.xlane.f32.xlu0 %v5131
        %v5155 = vpop.xlane.xlu0 %5154
        %5156 = vmax.xlane.f32.xlu0 %v5132
        %v5157 = vpop.xlane.xlu0 %5156
        %5158 = vmax.xlane.f32.xlu0 %v5133
        %v5159 = vpop.xlane.xlu0 %5158
        %5160 = vmax.xlane.f32.xlu0 %v5134
        %v5161 = vpop.xlane.xlu0 %5160
        %5162 = vmax.xlane.f32.xlu0 %v5135
        %v5163 = vpop.xlane.xlu0 %5162
        %5164 = vmax.xlane.f32.xlu0 %v5136
        %v5165 = vpop.xlane.xlu0 %5164
        %5166 = vmax.xlane.f32.xlu0 %v5137
        %v5167 = vpop.xlane.xlu0 %5166
        %5168 = vmax.xlane.f32.xlu0 %v5138
        %v5169 = vpop.xlane.xlu0 %5168
        %5170 = vmax.xlane.f32.xlu0 %v5139
        %v5171 = vpop.xlane.xlu0 %5170
        %v5172 = vsub.f32 %v5124, %v5141
        %v5173 = vsub.f32 %v5125, %v5143
        %v5174 = vsub.f32 %v5126, %v5145
        %v5175 = vsub.f32 %v5127, %v5147
        %v5176 = vsub.f32 %v5128, %v5149
        %v5177 = vsub.f32 %v5129, %v5151
        %v5178 = vsub.f32 %v5130, %v5153
        %v5179 = vsub.f32 %v5131, %v5155
        %v5180 = vsub.f32 %v5132, %v5157
        %v5181 = vsub.f32 %v5133, %v5159
        %v5182 = vsub.f32 %v5134, %v5161
        %v5183 = vsub.f32 %v5135, %v5163
        %v5184 = vsub.f32 %v5136, %v5165
        %v5185 = vsub.f32 %v5137, %v5167
        %v5186 = vsub.f32 %v5138, %v5169
        %v5187 = vsub.f32 %v5139, %v5171
        %v5188 = vmul.f32 %v5172, 1.442695
        %v5189 = vpow.pop %v5188
        %v5190 = vmul.f32 %v5173, 1.442695
        %v5191 = vpow.pop %v5190
        %v5192 = vmul.f32 %v5174, 1.442695
        %v5193 = vpow.pop %v5192
        %v5194 = vmul.f32 %v5175, 1.442695
        %v5195 = vpow.pop %v5194
        %v5196 = vmul.f32 %v5176, 1.442695
        %v5197 = vpow.pop %v5196
        %v5198 = vmul.f32 %v5177, 1.442695
        %v5199 = vpow.pop %v5198
        %v5200 = vmul.f32 %v5178, 1.442695
        %v5201 = vpow.pop %v5200
        %v5202 = vmul.f32 %v5179, 1.442695
        %v5203 = vpow.pop %v5202
        %v5204 = vmul.f32 %v5180, 1.442695
        %v5205 = vpow.pop %v5204
        %v5206 = vmul.f32 %v5181, 1.442695
        %v5207 = vpow.pop %v5206
        %v5208 = vmul.f32 %v5182, 1.442695
        %v5209 = vpow.pop %v5208
        %v5210 = vmul.f32 %v5183, 1.442695
        %v5211 = vpow.pop %v5210
        %v5212 = vmul.f32 %v5184, 1.442695
        %v5213 = vpow.pop %v5212
        %v5214 = vmul.f32 %v5185, 1.442695
        %v5215 = vpow.pop %v5214
        %v5216 = vmul.f32 %v5186, 1.442695
        %v5217 = vpow.pop %v5216
        %v5218 = vmul.f32 %v5187, 1.442695
        %v5219 = vpow.pop %v5218
        %5220 = vadd.xlane.f32.xlu0 %v5189
        %v5221 = vpop.xlane.xlu0 %5220
        %5222 = vadd.xlane.f32.xlu0 %v5191
        %v5223 = vpop.xlane.xlu0 %5222
        %5224 = vadd.xlane.f32.xlu0 %v5193
        %v5225 = vpop.xlane.xlu0 %5224
        %5226 = vadd.xlane.f32.xlu0 %v5195
        %v5227 = vpop.xlane.xlu0 %5226
        %5228 = vadd.xlane.f32.xlu0 %v5197
        %v5229 = vpop.xlane.xlu0 %5228
        %5230 = vadd.xlane.f32.xlu0 %v5199
        %v5231 = vpop.xlane.xlu0 %5230
        %5232 = vadd.xlane.f32.xlu0 %v5201
        %v5233 = vpop.xlane.xlu0 %5232
        %5234 = vadd.xlane.f32.xlu0 %v5203
        %v5235 = vpop.xlane.xlu0 %5234
        %5236 = vadd.xlane.f32.xlu0 %v5205
        %v5237 = vpop.xlane.xlu0 %5236
        %5238 = vadd.xlane.f32.xlu0 %v5207
        %v5239 = vpop.xlane.xlu0 %5238
        %5240 = vadd.xlane.f32.xlu0 %v5209
        %v5241 = vpop.xlane.xlu0 %5240
        %5242 = vadd.xlane.f32.xlu0 %v5211
        %v5243 = vpop.xlane.xlu0 %5242
        %5244 = vadd.xlane.f32.xlu0 %v5213
        %v5245 = vpop.xlane.xlu0 %5244
        %5246 = vadd.xlane.f32.xlu0 %v5215
        %v5247 = vpop.xlane.xlu0 %5246
        %5248 = vadd.xlane.f32.xlu0 %v5217
        %v5249 = vpop.xlane.xlu0 %5248
        %5250 = vadd.xlane.f32.xlu0 %v5219
        %v5251 = vpop.xlane.xlu0 %5250
        %v5252 = vrcp.pop %v5221
        %v5253 = vrcp.pop %v5223
        %v5254 = vrcp.pop %v5225
        %v5255 = vrcp.pop %v5227
        %v5256 = vrcp.pop %v5229
        %v5257 = vrcp.pop %v5231
        %v5258 = vrcp.pop %v5233
        %v5259 = vrcp.pop %v5235
        %v5260 = vrcp.pop %v5237
        %v5261 = vrcp.pop %v5239
        %v5262 = vrcp.pop %v5241
        %v5263 = vrcp.pop %v5243
        %v5264 = vrcp.pop %v5245
        %v5265 = vrcp.pop %v5247
        %v5266 = vrcp.pop %v5249
        %v5267 = vrcp.pop %v5251
        %v5268 = vmul.f32 %v5189, %v5252
        %v5269 = vmul.f32 %v5191, %v5253
        %v5270 = vmul.f32 %v5193, %v5254
        %v5271 = vmul.f32 %v5195, %v5255
        %v5272 = vmul.f32 %v5197, %v5256
        %v5273 = vmul.f32 %v5199, %v5257
        %v5274 = vmul.f32 %v5201, %v5258
        %v5275 = vmul.f32 %v5203, %v5259
        %v5276 = vmul.f32 %v5205, %v5260
        %v5277 = vmul.f32 %v5207, %v5261
        %v5278 = vmul.f32 %v5209, %v5262
        %v5279 = vmul.f32 %v5211, %v5263
        %v5280 = vmul.f32 %v5213, %v5264
        %v5281 = vmul.f32 %v5215, %v5265
        %v5282 = vmul.f32 %v5217, %v5266
        %v5283 = vmul.f32 %v5219, %v5267
        %v5284 = vpack.c.bf16 %v5269, %v5268
        %v5285 = vpack.c.bf16 %v5271, %v5270
        %v5286 = vpack.c.bf16 %v5273, %v5272
        %v5287 = vpack.c.bf16 %v5275, %v5274
        %v5288 = vpack.c.bf16 %v5277, %v5276
        %v5289 = vpack.c.bf16 %v5279, %v5278
        %v5290 = vpack.c.bf16 %v5281, %v5280
        %v5291 = vpack.c.bf16 %v5283, %v5282
        %5292 = vmatprep.subr.bf16.mxu0 0
        %5293 = vmatpush1.bf16.msra.mxu0 %v4971
        %5294 = vmatprep.subr.bf16.mxu0 0
        %5295 = vmatpush1.bf16.msra.mxu0 %v4972
        %5296 = vmatprep.subr.bf16.mxu0 0
        %5297 = vmatpush1.bf16.msra.mxu0 %v4973
        %5298 = vmatprep.subr.bf16.mxu0 0
        %5299 = vmatpush1.bf16.msra.mxu0 %v4974
        %5300 = vmatprep.subr.bf16.mxu0 0
        %5301 = vmatpush1.bf16.msra.mxu0 %v4975
        %5302 = vmatprep.subr.bf16.mxu0 0
        %5303 = vmatpush1.bf16.msra.mxu0 %v4976
        %5304 = vmatprep.subr.bf16.mxu0 0
        %5305 = vmatpush1.bf16.msra.mxu0 %v4977
        %5306 = vmatprep.subr.bf16.mxu0 0
        %5307 = vmatpush1.bf16.msra.mxu0 %v4978
        %5308 = vmatprep.subr.bf16.mxu0 0
        %5309 = vmatpush1.bf16.msra.mxu0 0
        %5310 = vmatprep.subr.bf16.mxu0 0
        %5311 = vmatpush1.bf16.msra.mxu0 0
        %5312 = vmatprep.subr.bf16.mxu0 0
        %5313 = vmatpush1.bf16.msra.mxu0 0
        %5314 = vmatprep.subr.bf16.mxu0 0
        %5315 = vmatpush1.bf16.msra.mxu0 0
        %5316 = vmatprep.subr.bf16.mxu0 0
        %5317 = vmatpush1.bf16.msra.mxu0 0
        %5318 = vmatprep.subr.bf16.mxu0 0
        %5319 = vmatpush1.bf16.msra.mxu0 0
        %5320 = vmatprep.subr.bf16.mxu0 0
        %5321 = vmatpush1.bf16.msra.mxu0 0
        %5322 = vmatprep.subr.bf16.mxu0 0
        %5323 = vmatpush1.bf16.msra.mxu0 0
        %5324 = vmatprep.mubr.bf16.mxu0 0
        %5325 = vmatmul.mubr.bf16.gmra.mrb[0].mxu0 %v5284
        %v5326 = vpop.f32.mrb[0].mxu0
        %v5327 = vadd.f32 0.0, %v5326
        %v5328 = vpop.f32.mrb[0].mxu0
        %v5329 = vpop.f32.mrb[0].mxu0
        %v5330 = vadd.f32 0.0, %v5329
        %v5331 = vpop.f32.mrb[0].mxu0
        %5332 = vmatprep.mubr.bf16.mxu0 0
        %5333 = vmatmul.mubr.bf16.gmra.mrb[0].mxu0 %v5285
        %v5334 = vpop.f32.mrb[0].mxu0
        %v5335 = vadd.f32 0.0, %v5334
        %v5336 = vpop.f32.mrb[0].mxu0
        %v5337 = vpop.f32.mrb[0].mxu0
        %v5338 = vadd.f32 0.0, %v5337
        %v5339 = vpop.f32.mrb[0].mxu0
        %5340 = vmatprep.mubr.bf16.mxu0 0
        %5341 = vmatmul.mubr.bf16.gmra.mrb[0].mxu0 %v5286
        %v5342 = vpop.f32.mrb[0].mxu0
        %v5343 = vadd.f32 0.0, %v5342
        %v5344 = vpop.f32.mrb[0].mxu0
        %v5345 = vpop.f32.mrb[0].mxu0
        %v5346 = vadd.f32 0.0, %v5345
        %v5347 = vpop.f32.mrb[0].mxu0
        %5348 = vmatprep.mubr.bf16.mxu0 0
        %5349 = vmatmul.mubr.bf16.gmra.mrb[0].mxu0 %v5287
        %v5350 = vpop.f32.mrb[0].mxu0
        %v5351 = vadd.f32 0.0, %v5350
        %v5352 = vpop.f32.mrb[0].mxu0
        %v5353 = vpop.f32.mrb[0].mxu0
        %v5354 = vadd.f32 0.0, %v5353
        %v5355 = vpop.f32.mrb[0].mxu0
        %5356 = vmatprep.mubr.bf16.mxu0 0
        %5357 = vmatmul.mubr.bf16.gmra.mrb[0].mxu0 %v5288
        %v5358 = vpop.f32.mrb[0].mxu0
        %v5359 = vadd.f32 0.0, %v5358
        %v5360 = vpop.f32.mrb[0].mxu0
        %v5361 = vpop.f32.mrb[0].mxu0
        %v5362 = vadd.f32 0.0, %v5361
        %v5363 = vpop.f32.mrb[0].mxu0
        %5364 = vmatprep.mubr.bf16.mxu0 0
        %5365 = vmatmul.mubr.bf16.gmra.mrb[0].mxu0 %v5289
        %v5366 = vpop.f32.mrb[0].mxu0
        %v5367 = vadd.f32 0.0, %v5366
        %v5368 = vpop.f32.mrb[0].mxu0
        %v5369 = vpop.f32.mrb[0].mxu0
        %v5370 = vadd.f32 0.0, %v5369
        %v5371 = vpop.f32.mrb[0].mxu0
        %5372 = vmatprep.mubr.bf16.mxu0 0
        %5373 = vmatmul.mubr.bf16.gmra.mrb[0].mxu0 %v5290
        %v5374 = vpop.f32.mrb[0].mxu0
        %v5375 = vadd.f32 0.0, %v5374
        %v5376 = vpop.f32.mrb[0].mxu0
        %v5377 = vpop.f32.mrb[0].mxu0
        %v5378 = vadd.f32 0.0, %v5377
        %v5379 = vpop.f32.mrb[0].mxu0
        %5380 = vmatprep.mubr.bf16.mxu0 0
        %5381 = vmatmul.mubr.bf16.gmra.mrb[0].mxu0 %v5291
        %v5382 = vpop.f32.mrb[0].mxu0
        %v5383 = vadd.f32 0.0, %v5382
        %v5384 = vpop.f32.mrb[0].mxu0
        %v5385 = vpop.f32.mrb[0].mxu0
        %v5386 = vadd.f32 0.0, %v5385
        %v5387 = vpop.f32.mrb[0].mxu0
        %5388 = vdwg.mxu0
        %5397 = vrot.lane.b32.xlu0 %v4955, 64
        %v5398 = vpop.permute.xlu0 %5397
        %5399 = vrot.lane.b32.xlu0 %v4956, 64
        %v5400 = vpop.permute.xlu0 %5399
        %5401 = vrot.lane.b32.xlu0 %v4957, 64
        %v5402 = vpop.permute.xlu0 %5401
        %5403 = vrot.lane.b32.xlu0 %v4958, 64
        %v5404 = vpop.permute.xlu0 %5403
        %5405 = vrot.lane.b32.xlu0 %v4959, 64
        %v5406 = vpop.permute.xlu0 %5405
        %5407 = vrot.lane.b32.xlu0 %v4960, 64
        %v5408 = vpop.permute.xlu0 %5407
        %5409 = vrot.lane.b32.xlu0 %v4961, 64
        %v5410 = vpop.permute.xlu0 %5409
        %5411 = vrot.lane.b32.xlu0 %v4962, 64
        %v5412 = vpop.permute.xlu0 %5411
        %5421 = vrot.lane.b32.xlu0 %v4963, 64
        %v5422 = vpop.permute.xlu0 %5421
        %5423 = vrot.lane.b32.xlu0 %v4964, 64
        %v5424 = vpop.permute.xlu0 %5423
        %5425 = vrot.lane.b32.xlu0 %v4965, 64
        %v5426 = vpop.permute.xlu0 %5425
        %5427 = vrot.lane.b32.xlu0 %v4966, 64
        %v5428 = vpop.permute.xlu0 %5427
        %5429 = vrot.lane.b32.xlu0 %v4967, 64
        %v5430 = vpop.permute.xlu0 %5429
        %5431 = vrot.lane.b32.xlu0 %v4968, 64
        %v5432 = vpop.permute.xlu0 %5431
        %5433 = vrot.lane.b32.xlu0 %v4969, 64
        %v5434 = vpop.permute.xlu0 %5433
        %5435 = vrot.lane.b32.xlu0 %v4970, 64
        %v5436 = vpop.permute.xlu0 %5435
        %v5438 = vsel %vm3130, %v5398, 0
        %v5441 = vsel %vm3130, %v5400, 0
        %v5444 = vsel %vm3130, %v5402, 0
        %v5447 = vsel %vm3130, %v5404, 0
        %v5450 = vsel %vm3130, %v5406, 0
        %v5453 = vsel %vm3130, %v5408, 0
        %v5456 = vsel %vm3130, %v5410, 0
        %v5459 = vsel %vm3130, %v5412, 0
        %v5462 = vsel %vm3130, %v5422, 0
        %v5465 = vsel %vm3130, %v5424, 0
        %v5468 = vsel %vm3130, %v5426, 0
        %v5471 = vsel %vm3130, %v5428, 0
        %v5474 = vsel %vm3130, %v5430, 0
        %v5477 = vsel %vm3130, %v5432, 0
        %v5480 = vsel %vm3130, %v5434, 0
        %v5483 = vsel %vm3130, %v5436, 0
        %5485 = vmatprep.subr.bf16.mxu0 0
        %5486 = vmatpush1.bf16.xpose.msra.mxu0 %v5462
        %5487 = vmatprep.subr.bf16.mxu0 0
        %5488 = vmatpush1.bf16.xpose.msra.mxu0 %v5465
        %5489 = vmatprep.subr.bf16.mxu0 0
        %5490 = vmatpush1.bf16.xpose.msra.mxu0 %v5468
        %5491 = vmatprep.subr.bf16.mxu0 0
        %5492 = vmatpush1.bf16.xpose.msra.mxu0 %v5471
        %5493 = vmatprep.subr.bf16.mxu0 0
        %5494 = vmatpush1.bf16.xpose.msra.mxu0 %v5474
        %5495 = vmatprep.subr.bf16.mxu0 0
        %5496 = vmatpush1.bf16.xpose.msra.mxu0 %v5477
        %5497 = vmatprep.subr.bf16.mxu0 0
        %5498 = vmatpush1.bf16.xpose.msra.mxu0 %v5480
        %5499 = vmatprep.subr.bf16.mxu0 0
        %5500 = vmatpush1.bf16.xpose.msra.mxu0 %v5483
        %5501 = vmatprep.subr.bf16.mxu0 0
        %5502 = vmatpush1.bf16.xpose.msra.mxu0 0
        %5503 = vmatprep.subr.bf16.mxu0 0
        %5504 = vmatpush1.bf16.xpose.msra.mxu0 0
        %5505 = vmatprep.subr.bf16.mxu0 0
        %5506 = vmatpush1.bf16.xpose.msra.mxu0 0
        %5507 = vmatprep.subr.bf16.mxu0 0
        %5508 = vmatpush1.bf16.xpose.msra.mxu0 0
        %5509 = vmatprep.subr.bf16.mxu0 0
        %5510 = vmatpush1.bf16.xpose.msra.mxu0 0
        %5511 = vmatprep.subr.bf16.mxu0 0
        %5512 = vmatpush1.bf16.xpose.msra.mxu0 0
        %5513 = vmatprep.subr.bf16.mxu0 0
        %5514 = vmatpush1.bf16.xpose.msra.mxu0 0
        %5515 = vmatprep.subr.bf16.mxu0 0
        %5516 = vmatpush1.bf16.xpose.msra.mxu0 0
        %5517 = vmatprep.mubr.bf16.mxu0 0
        %5518 = vmatmul.mubr.bf16.gmra.mrb[0].mxu0 %v5438
        %v5519 = vpop.f32.mrb[0].mxu0
        %v5520 = vadd.f32 0.0, %v5519
        %v5521 = vpop.f32.mrb[0].mxu0
        %v5522 = vpop.f32.mrb[0].mxu0
        %v5523 = vadd.f32 0.0, %v5522
        %v5524 = vpop.f32.mrb[0].mxu0
        %5525 = vmatprep.mubr.bf16.mxu0 0
        %5526 = vmatmul.mubr.bf16.gmra.mrb[0].mxu0 %v5441
        %v5527 = vpop.f32.mrb[0].mxu0
        %v5528 = vadd.f32 0.0, %v5527
        %v5529 = vpop.f32.mrb[0].mxu0
        %v5530 = vpop.f32.mrb[0].mxu0
        %v5531 = vadd.f32 0.0, %v5530
        %v5532 = vpop.f32.mrb[0].mxu0
        %5533 = vmatprep.mubr.bf16.mxu0 0
        %5534 = vmatmul.mubr.bf16.gmra.mrb[0].mxu0 %v5444
        %v5535 = vpop.f32.mrb[0].mxu0
        %v5536 = vadd.f32 0.0, %v5535
        %v5537 = vpop.f32.mrb[0].mxu0
        %v5538 = vpop.f32.mrb[0].mxu0
        %v5539 = vadd.f32 0.0, %v5538
        %v5540 = vpop.f32.mrb[0].mxu0
        %5541 = vmatprep.mubr.bf16.mxu0 0
        %5542 = vmatmul.mubr.bf16.gmra.mrb[0].mxu0 %v5447
        %v5543 = vpop.f32.mrb[0].mxu0
        %v5544 = vadd.f32 0.0, %v5543
        %v5545 = vpop.f32.mrb[0].mxu0
        %v5546 = vpop.f32.mrb[0].mxu0
        %v5547 = vadd.f32 0.0, %v5546
        %v5548 = vpop.f32.mrb[0].mxu0
        %5549 = vmatprep.mubr.bf16.mxu0 0
        %5550 = vmatmul.mubr.bf16.gmra.mrb[0].mxu0 %v5450
        %v5551 = vpop.f32.mrb[0].mxu0
        %v5552 = vadd.f32 0.0, %v5551
        %v5553 = vpop.f32.mrb[0].mxu0
        %v5554 = vpop.f32.mrb[0].mxu0
        %v5555 = vadd.f32 0.0, %v5554
        %v5556 = vpop.f32.mrb[0].mxu0
        %5557 = vmatprep.mubr.bf16.mxu0 0
        %5558 = vmatmul.mubr.bf16.gmra.mrb[0].mxu0 %v5453
        %v5559 = vpop.f32.mrb[0].mxu0
        %v5560 = vadd.f32 0.0, %v5559
        %v5561 = vpop.f32.mrb[0].mxu0
        %v5562 = vpop.f32.mrb[0].mxu0
        %v5563 = vadd.f32 0.0, %v5562
        %v5564 = vpop.f32.mrb[0].mxu0
        %5565 = vmatprep.mubr.bf16.mxu0 0
        %5566 = vmatmul.mubr.bf16.gmra.mrb[0].mxu0 %v5456
        %v5567 = vpop.f32.mrb[0].mxu0
        %v5568 = vadd.f32 0.0, %v5567
        %v5569 = vpop.f32.mrb[0].mxu0
        %v5570 = vpop.f32.mrb[0].mxu0
        %v5571 = vadd.f32 0.0, %v5570
        %v5572 = vpop.f32.mrb[0].mxu0
        %5573 = vmatprep.mubr.bf16.mxu0 0
        %5574 = vmatmul.mubr.bf16.gmra.mrb[0].mxu0 %v5459
        %v5575 = vpop.f32.mrb[0].mxu0
        %v5576 = vadd.f32 0.0, %v5575
        %v5577 = vpop.f32.mrb[0].mxu0
        %v5578 = vpop.f32.mrb[0].mxu0
        %v5579 = vadd.f32 0.0, %v5578
        %v5580 = vpop.f32.mrb[0].mxu0
        %5581 = vdwg.mxu0
        %v5582 = vsel %vm3090, %v5520, -inf
        %v5583 = vsel %vm3091, %v5523, -inf
        %v5584 = vsel %vm3092, %v5528, -inf
        %v5585 = vsel %vm3093, %v5531, -inf
        %v5586 = vsel %vm3094, %v5536, -inf
        %v5587 = vsel %vm3095, %v5539, -inf
        %v5588 = vsel %vm3096, %v5544, -inf
        %v5589 = vsel %vm3097, %v5547, -inf
        %v5590 = vsel %vm3098, %v5552, -inf
        %v5591 = vsel %vm3099, %v5555, -inf
        %v5592 = vsel %vm3100, %v5560, -inf
        %v5593 = vsel %vm3101, %v5563, -inf
        %v5594 = vsel %vm3102, %v5568, -inf
        %v5595 = vsel %vm3103, %v5571, -inf
        %v5596 = vsel %vm3104, %v5576, -inf
        %v5597 = vsel %vm3105, %v5579, -inf
        %5598 = vmax.xlane.f32.xlu0 %v5582
        %v5599 = vpop.xlane.xlu0 %5598
        %5600 = vmax.xlane.f32.xlu0 %v5583
        %v5601 = vpop.xlane.xlu0 %5600
        %5602 = vmax.xlane.f32.xlu0 %v5584
        %v5603 = vpop.xlane.xlu0 %5602
        %5604 = vmax.xlane.f32.xlu0 %v5585
        %v5605 = vpop.xlane.xlu0 %5604
        %5606 = vmax.xlane.f32.xlu0 %v5586
        %v5607 = vpop.xlane.xlu0 %5606
        %5608 = vmax.xlane.f32.xlu0 %v5587
        %v5609 = vpop.xlane.xlu0 %5608
        %5610 = vmax.xlane.f32.xlu0 %v5588
        %v5611 = vpop.xlane.xlu0 %5610
        %5612 = vmax.xlane.f32.xlu0 %v5589
        %v5613 = vpop.xlane.xlu0 %5612
        %5614 = vmax.xlane.f32.xlu0 %v5590
        %v5615 = vpop.xlane.xlu0 %5614
        %5616 = vmax.xlane.f32.xlu0 %v5591
        %v5617 = vpop.xlane.xlu0 %5616
        %5618 = vmax.xlane.f32.xlu0 %v5592
        %v5619 = vpop.xlane.xlu0 %5618
        %5620 = vmax.xlane.f32.xlu0 %v5593
        %v5621 = vpop.xlane.xlu0 %5620
        %5622 = vmax.xlane.f32.xlu0 %v5594
        %v5623 = vpop.xlane.xlu0 %5622
        %5624 = vmax.xlane.f32.xlu0 %v5595
        %v5625 = vpop.xlane.xlu0 %5624
        %5626 = vmax.xlane.f32.xlu0 %v5596
        %v5627 = vpop.xlane.xlu0 %5626
        %5628 = vmax.xlane.f32.xlu0 %v5597
        %v5629 = vpop.xlane.xlu0 %5628
        %v5630 = vsub.f32 %v5582, %v5599
        %v5631 = vsub.f32 %v5583, %v5601
        %v5632 = vsub.f32 %v5584, %v5603
        %v5633 = vsub.f32 %v5585, %v5605
        %v5634 = vsub.f32 %v5586, %v5607
        %v5635 = vsub.f32 %v5587, %v5609
        %v5636 = vsub.f32 %v5588, %v5611
        %v5637 = vsub.f32 %v5589, %v5613
        %v5638 = vsub.f32 %v5590, %v5615
        %v5639 = vsub.f32 %v5591, %v5617
        %v5640 = vsub.f32 %v5592, %v5619
        %v5641 = vsub.f32 %v5593, %v5621
        %v5642 = vsub.f32 %v5594, %v5623
        %v5643 = vsub.f32 %v5595, %v5625
        %v5644 = vsub.f32 %v5596, %v5627
        %v5645 = vsub.f32 %v5597, %v5629
        %v5646 = vmul.f32 %v5630, 1.442695
        %v5647 = vpow.pop %v5646
        %v5648 = vmul.f32 %v5631, 1.442695
        %v5649 = vpow.pop %v5648
        %v5650 = vmul.f32 %v5632, 1.442695
        %v5651 = vpow.pop %v5650
        %v5652 = vmul.f32 %v5633, 1.442695
        %v5653 = vpow.pop %v5652
        %v5654 = vmul.f32 %v5634, 1.442695
        %v5655 = vpow.pop %v5654
        %v5656 = vmul.f32 %v5635, 1.442695
        %v5657 = vpow.pop %v5656
        %v5658 = vmul.f32 %v5636, 1.442695
        %v5659 = vpow.pop %v5658
        %v5660 = vmul.f32 %v5637, 1.442695
        %v5661 = vpow.pop %v5660
        %v5662 = vmul.f32 %v5638, 1.442695
        %v5663 = vpow.pop %v5662
        %v5664 = vmul.f32 %v5639, 1.442695
        %v5665 = vpow.pop %v5664
        %v5666 = vmul.f32 %v5640, 1.442695
        %v5667 = vpow.pop %v5666
        %v5668 = vmul.f32 %v5641, 1.442695
        %v5669 = vpow.pop %v5668
        %v5670 = vmul.f32 %v5642, 1.442695
        %v5671 = vpow.pop %v5670
        %v5672 = vmul.f32 %v5643, 1.442695
        %v5673 = vpow.pop %v5672
        %v5674 = vmul.f32 %v5644, 1.442695
        %v5675 = vpow.pop %v5674
        %v5676 = vmul.f32 %v5645, 1.442695
        %v5677 = vpow.pop %v5676
        %5678 = vadd.xlane.f32.xlu0 %v5647
        %v5679 = vpop.xlane.xlu0 %5678
        %5680 = vadd.xlane.f32.xlu0 %v5649
        %v5681 = vpop.xlane.xlu0 %5680
        %5682 = vadd.xlane.f32.xlu0 %v5651
        %v5683 = vpop.xlane.xlu0 %5682
        %5684 = vadd.xlane.f32.xlu0 %v5653
        %v5685 = vpop.xlane.xlu0 %5684
        %5686 = vadd.xlane.f32.xlu0 %v5655
        %v5687 = vpop.xlane.xlu0 %5686
        %5688 = vadd.xlane.f32.xlu0 %v5657
        %v5689 = vpop.xlane.xlu0 %5688
        %5690 = vadd.xlane.f32.xlu0 %v5659
        %v5691 = vpop.xlane.xlu0 %5690
        %5692 = vadd.xlane.f32.xlu0 %v5661
        %v5693 = vpop.xlane.xlu0 %5692
        %5694 = vadd.xlane.f32.xlu0 %v5663
        %v5695 = vpop.xlane.xlu0 %5694
        %5696 = vadd.xlane.f32.xlu0 %v5665
        %v5697 = vpop.xlane.xlu0 %5696
        %5698 = vadd.xlane.f32.xlu0 %v5667
        %v5699 = vpop.xlane.xlu0 %5698
        %5700 = vadd.xlane.f32.xlu0 %v5669
        %v5701 = vpop.xlane.xlu0 %5700
        %5702 = vadd.xlane.f32.xlu0 %v5671
        %v5703 = vpop.xlane.xlu0 %5702
        %5704 = vadd.xlane.f32.xlu0 %v5673
        %v5705 = vpop.xlane.xlu0 %5704
        %5706 = vadd.xlane.f32.xlu0 %v5675
        %v5707 = vpop.xlane.xlu0 %5706
        %5708 = vadd.xlane.f32.xlu0 %v5677
        %v5709 = vpop.xlane.xlu0 %5708
        %v5710 = vrcp.pop %v5679
        %v5711 = vrcp.pop %v5681
        %v5712 = vrcp.pop %v5683
        %v5713 = vrcp.pop %v5685
        %v5714 = vrcp.pop %v5687
        %v5715 = vrcp.pop %v5689
        %v5716 = vrcp.pop %v5691
        %v5717 = vrcp.pop %v5693
        %v5718 = vrcp.pop %v5695
        %v5719 = vrcp.pop %v5697
        %v5720 = vrcp.pop %v5699
        %v5721 = vrcp.pop %v5701
        %v5722 = vrcp.pop %v5703
        %v5723 = vrcp.pop %v5705
        %v5724 = vrcp.pop %v5707
        %v5725 = vrcp.pop %v5709
        %v5726 = vmul.f32 %v5647, %v5710
        %v5727 = vmul.f32 %v5649, %v5711
        %v5728 = vmul.f32 %v5651, %v5712
        %v5729 = vmul.f32 %v5653, %v5713
        %v5730 = vmul.f32 %v5655, %v5714
        %v5731 = vmul.f32 %v5657, %v5715
        %v5732 = vmul.f32 %v5659, %v5716
        %v5733 = vmul.f32 %v5661, %v5717
        %v5734 = vmul.f32 %v5663, %v5718
        %v5735 = vmul.f32 %v5665, %v5719
        %v5736 = vmul.f32 %v5667, %v5720
        %v5737 = vmul.f32 %v5669, %v5721
        %v5738 = vmul.f32 %v5671, %v5722
        %v5739 = vmul.f32 %v5673, %v5723
        %v5740 = vmul.f32 %v5675, %v5724
        %v5741 = vmul.f32 %v5677, %v5725
        %v5742 = vpack.c.bf16 %v5727, %v5726
        %v5743 = vpack.c.bf16 %v5729, %v5728
        %v5744 = vpack.c.bf16 %v5731, %v5730
        %v5745 = vpack.c.bf16 %v5733, %v5732
        %v5746 = vpack.c.bf16 %v5735, %v5734
        %v5747 = vpack.c.bf16 %v5737, %v5736
        %v5748 = vpack.c.bf16 %v5739, %v5738
        %v5749 = vpack.c.bf16 %v5741, %v5740
        %5758 = vrot.lane.b32.xlu0 %v4971, 64
        %v5759 = vpop.permute.xlu0 %5758
        %5760 = vrot.lane.b32.xlu0 %v4972, 64
        %v5761 = vpop.permute.xlu0 %5760
        %5762 = vrot.lane.b32.xlu0 %v4973, 64
        %v5763 = vpop.permute.xlu0 %5762
        %5764 = vrot.lane.b32.xlu0 %v4974, 64
        %v5765 = vpop.permute.xlu0 %5764
        %5766 = vrot.lane.b32.xlu0 %v4975, 64
        %v5767 = vpop.permute.xlu0 %5766
        %5768 = vrot.lane.b32.xlu0 %v4976, 64
        %v5769 = vpop.permute.xlu0 %5768
        %5770 = vrot.lane.b32.xlu0 %v4977, 64
        %v5771 = vpop.permute.xlu0 %5770
        %5772 = vrot.lane.b32.xlu0 %v4978, 64
        %v5773 = vpop.permute.xlu0 %5772
        %5782 = vmatprep.subr.bf16.mxu0 0
        %5783 = vmatpush1.bf16.msra.mxu0 %v5759
        %5784 = vmatprep.subr.bf16.mxu0 0
        %5785 = vmatpush1.bf16.msra.mxu0 %v5761
        %5786 = vmatprep.subr.bf16.mxu0 0
        %5787 = vmatpush1.bf16.msra.mxu0 %v5763
        %5788 = vmatprep.subr.bf16.mxu0 0
        %5789 = vmatpush1.bf16.msra.mxu0 %v5765
        %5790 = vmatprep.subr.bf16.mxu0 0
        %5791 = vmatpush1.bf16.msra.mxu0 %v5767
        %5792 = vmatprep.subr.bf16.mxu0 0
        %5793 = vmatpush1.bf16.msra.mxu0 %v5769
        %5794 = vmatprep.subr.bf16.mxu0 0
        %5795 = vmatpush1.bf16.msra.mxu0 %v5771
        %5796 = vmatprep.subr.bf16.mxu0 0
        %5797 = vmatpush1.bf16.msra.mxu0 %v5773
        %5798 = vmatprep.subr.bf16.mxu0 0
        %5799 = vmatpush1.bf16.msra.mxu0 0
        %5800 = vmatprep.subr.bf16.mxu0 0
        %5801 = vmatpush1.bf16.msra.mxu0 0
        %5802 = vmatprep.subr.bf16.mxu0 0
        %5803 = vmatpush1.bf16.msra.mxu0 0
        %5804 = vmatprep.subr.bf16.mxu0 0
        %5805 = vmatpush1.bf16.msra.mxu0 0
        %5806 = vmatprep.subr.bf16.mxu0 0
        %5807 = vmatpush1.bf16.msra.mxu0 0
        %5808 = vmatprep.subr.bf16.mxu0 0
        %5809 = vmatpush1.bf16.msra.mxu0 0
        %5810 = vmatprep.subr.bf16.mxu0 0
        %5811 = vmatpush1.bf16.msra.mxu0 0
        %5812 = vmatprep.subr.bf16.mxu0 0
        %5813 = vmatpush1.bf16.msra.mxu0 0
        %5814 = vmatprep.mubr.bf16.mxu0 0
        %5815 = vmatmul.mubr.bf16.gmra.mrb[0].mxu0 %v5742
        %v5816 = vpop.f32.mrb[0].mxu0
        %v5817 = vadd.f32 0.0, %v5816
        %v5818 = vpop.f32.mrb[0].mxu0
        %v5819 = vpop.f32.mrb[0].mxu0
        %v5820 = vadd.f32 0.0, %v5819
        %v5821 = vpop.f32.mrb[0].mxu0
        %5822 = vmatprep.mubr.bf16.mxu0 0
        %5823 = vmatmul.mubr.bf16.gmra.mrb[0].mxu0 %v5743
        %v5824 = vpop.f32.mrb[0].mxu0
        %v5825 = vadd.f32 0.0, %v5824
        %v5826 = vpop.f32.mrb[0].mxu0
        %v5827 = vpop.f32.mrb[0].mxu0
        %v5828 = vadd.f32 0.0, %v5827
        %v5829 = vpop.f32.mrb[0].mxu0
        %5830 = vmatprep.mubr.bf16.mxu0 0
        %5831 = vmatmul.mubr.bf16.gmra.mrb[0].mxu0 %v5744
        %v5832 = vpop.f32.mrb[0].mxu0
        %v5833 = vadd.f32 0.0, %v5832
        %v5834 = vpop.f32.mrb[0].mxu0
        %v5835 = vpop.f32.mrb[0].mxu0
        %v5836 = vadd.f32 0.0, %v5835
        %v5837 = vpop.f32.mrb[0].mxu0
        %5838 = vmatprep.mubr.bf16.mxu0 0
        %5839 = vmatmul.mubr.bf16.gmra.mrb[0].mxu0 %v5745
        %v5840 = vpop.f32.mrb[0].mxu0
        %v5841 = vadd.f32 0.0, %v5840
        %v5842 = vpop.f32.mrb[0].mxu0
        %v5843 = vpop.f32.mrb[0].mxu0
        %v5844 = vadd.f32 0.0, %v5843
        %v5845 = vpop.f32.mrb[0].mxu0
        %5846 = vmatprep.mubr.bf16.mxu0 0
        %5847 = vmatmul.mubr.bf16.gmra.mrb[0].mxu0 %v5746
        %v5848 = vpop.f32.mrb[0].mxu0
        %v5849 = vadd.f32 0.0, %v5848
        %v5850 = vpop.f32.mrb[0].mxu0
        %v5851 = vpop.f32.mrb[0].mxu0
        %v5852 = vadd.f32 0.0, %v5851
        %v5853 = vpop.f32.mrb[0].mxu0
        %5854 = vmatprep.mubr.bf16.mxu0 0
        %5855 = vmatmul.mubr.bf16.gmra.mrb[0].mxu0 %v5747
        %v5856 = vpop.f32.mrb[0].mxu0
        %v5857 = vadd.f32 0.0, %v5856
        %v5858 = vpop.f32.mrb[0].mxu0
        %v5859 = vpop.f32.mrb[0].mxu0
        %v5860 = vadd.f32 0.0, %v5859
        %v5861 = vpop.f32.mrb[0].mxu0
        %5862 = vmatprep.mubr.bf16.mxu0 0
        %5863 = vmatmul.mubr.bf16.gmra.mrb[0].mxu0 %v5748
        %v5864 = vpop.f32.mrb[0].mxu0
        %v5865 = vadd.f32 0.0, %v5864
        %v5866 = vpop.f32.mrb[0].mxu0
        %v5867 = vpop.f32.mrb[0].mxu0
        %v5868 = vadd.f32 0.0, %v5867
        %v5869 = vpop.f32.mrb[0].mxu0
        %5870 = vmatprep.mubr.bf16.mxu0 0
        %5871 = vmatmul.mubr.bf16.gmra.mrb[0].mxu0 %v5749
        %v5872 = vpop.f32.mrb[0].mxu0
        %v5873 = vadd.f32 0.0, %v5872
        %v5874 = vpop.f32.mrb[0].mxu0
        %v5875 = vpop.f32.mrb[0].mxu0
        %v5876 = vadd.f32 0.0, %v5875
        %v5877 = vpop.f32.mrb[0].mxu0
        %5878 = vdwg.mxu0
        %5895 = vrot.lane.b32.xlu0 %v3969, 64
        %v5896 = vpop.permute.xlu0 %5895
        %5897 = vrot.lane.b32.xlu0 %v3972, 64
        %v5898 = vpop.permute.xlu0 %5897
        %5899 = vrot.lane.b32.xlu0 %v3977, 64
        %v5900 = vpop.permute.xlu0 %5899
        %5901 = vrot.lane.b32.xlu0 %v3980, 64
        %v5902 = vpop.permute.xlu0 %5901
        %5903 = vrot.lane.b32.xlu0 %v3985, 64
        %v5904 = vpop.permute.xlu0 %5903
        %5905 = vrot.lane.b32.xlu0 %v3988, 64
        %v5906 = vpop.permute.xlu0 %5905
        %5907 = vrot.lane.b32.xlu0 %v3993, 64
        %v5908 = vpop.permute.xlu0 %5907
        %5909 = vrot.lane.b32.xlu0 %v3996, 64
        %v5910 = vpop.permute.xlu0 %5909
        %5911 = vrot.lane.b32.xlu0 %v4001, 64
        %v5912 = vpop.permute.xlu0 %5911
        %5913 = vrot.lane.b32.xlu0 %v4004, 64
        %v5914 = vpop.permute.xlu0 %5913
        %5915 = vrot.lane.b32.xlu0 %v4009, 64
        %v5916 = vpop.permute.xlu0 %5915
        %5917 = vrot.lane.b32.xlu0 %v4012, 64
        %v5918 = vpop.permute.xlu0 %5917
        %5919 = vrot.lane.b32.xlu0 %v4017, 64
        %v5920 = vpop.permute.xlu0 %5919
        %5921 = vrot.lane.b32.xlu0 %v4020, 64
        %v5922 = vpop.permute.xlu0 %5921
        %5923 = vrot.lane.b32.xlu0 %v4025, 64
        %v5924 = vpop.permute.xlu0 %5923
        %5925 = vrot.lane.b32.xlu0 %v4028, 64
        %v5926 = vpop.permute.xlu0 %5925
        %5959 = vrot.lane.b32.xlu0 %v4893, 64
        %v5960 = vpop.permute.xlu0 %5959
        %5961 = vrot.lane.b32.xlu0 %v4896, 64
        %v5962 = vpop.permute.xlu0 %5961
        %5963 = vrot.lane.b32.xlu0 %v4901, 64
        %v5964 = vpop.permute.xlu0 %5963
        %5965 = vrot.lane.b32.xlu0 %v4904, 64
        %v5966 = vpop.permute.xlu0 %5965
        %5967 = vrot.lane.b32.xlu0 %v4909, 64
        %v5968 = vpop.permute.xlu0 %5967
        %5969 = vrot.lane.b32.xlu0 %v4912, 64
        %v5970 = vpop.permute.xlu0 %5969
        %5971 = vrot.lane.b32.xlu0 %v4917, 64
        %v5972 = vpop.permute.xlu0 %5971
        %5973 = vrot.lane.b32.xlu0 %v4920, 64
        %v5974 = vpop.permute.xlu0 %5973
        %5975 = vrot.lane.b32.xlu0 %v4925, 64
        %v5976 = vpop.permute.xlu0 %5975
        %5977 = vrot.lane.b32.xlu0 %v4928, 64
        %v5978 = vpop.permute.xlu0 %5977
        %5979 = vrot.lane.b32.xlu0 %v4933, 64
        %v5980 = vpop.permute.xlu0 %5979
        %5981 = vrot.lane.b32.xlu0 %v4936, 64
        %v5982 = vpop.permute.xlu0 %5981
        %5983 = vrot.lane.b32.xlu0 %v4941, 64
        %v5984 = vpop.permute.xlu0 %5983
        %5985 = vrot.lane.b32.xlu0 %v4944, 64
        %v5986 = vpop.permute.xlu0 %5985
        %5987 = vrot.lane.b32.xlu0 %v4949, 64
        %v5988 = vpop.permute.xlu0 %5987
        %5989 = vrot.lane.b32.xlu0 %v4952, 64
        %v5990 = vpop.permute.xlu0 %5989
        %6023 = vrot.lane.b32.xlu0 %v5817, 64
        %v6024 = vpop.permute.xlu0 %6023
        %6025 = vrot.lane.b32.xlu0 %v5820, 64
        %v6026 = vpop.permute.xlu0 %6025
        %6027 = vrot.lane.b32.xlu0 %v5825, 64
        %v6028 = vpop.permute.xlu0 %6027
        %6029 = vrot.lane.b32.xlu0 %v5828, 64
        %v6030 = vpop.permute.xlu0 %6029
        %6031 = vrot.lane.b32.xlu0 %v5833, 64
        %v6032 = vpop.permute.xlu0 %6031
        %6033 = vrot.lane.b32.xlu0 %v5836, 64
        %v6034 = vpop.permute.xlu0 %6033
        %6035 = vrot.lane.b32.xlu0 %v5841, 64
        %v6036 = vpop.permute.xlu0 %6035
        %6037 = vrot.lane.b32.xlu0 %v5844, 64
        %v6038 = vpop.permute.xlu0 %6037
        %6039 = vrot.lane.b32.xlu0 %v5849, 64
        %v6040 = vpop.permute.xlu0 %6039
        %6041 = vrot.lane.b32.xlu0 %v5852, 64
        %v6042 = vpop.permute.xlu0 %6041
        %6043 = vrot.lane.b32.xlu0 %v5857, 64
        %v6044 = vpop.permute.xlu0 %6043
        %6045 = vrot.lane.b32.xlu0 %v5860, 64
        %v6046 = vpop.permute.xlu0 %6045
        %6047 = vrot.lane.b32.xlu0 %v5865, 64
        %v6048 = vpop.permute.xlu0 %6047
        %6049 = vrot.lane.b32.xlu0 %v5868, 64
        %v6050 = vpop.permute.xlu0 %6049
        %6051 = vrot.lane.b32.xlu0 %v5873, 64
        %v6052 = vpop.permute.xlu0 %6051
        %6053 = vrot.lane.b32.xlu0 %v5876, 64
        %v6054 = vpop.permute.xlu0 %6053
        %v6071 = vsel %vm3130, %v3479, %v5896
        %v6072 = vsel %vm3130, %v3482, %v5898
        %v6073 = vsel %vm3130, %v3487, %v5900
        %v6074 = vsel %vm3130, %v3490, %v5902
        %v6075 = vsel %vm3130, %v3495, %v5904
        %v6076 = vsel %vm3130, %v3498, %v5906
        %v6077 = vsel %vm3130, %v3503, %v5908
        %v6078 = vsel %vm3130, %v3506, %v5910
        %v6079 = vsel %vm3130, %v3511, %v5912
        %v6080 = vsel %vm3130, %v3514, %v5914
        %v6081 = vsel %vm3130, %v3519, %v5916
        %v6082 = vsel %vm3130, %v3522, %v5918
        %v6083 = vsel %vm3130, %v3527, %v5920
        %v6084 = vsel %vm3130, %v3530, %v5922
        %v6085 = vsel %vm3130, %v3535, %v5924
        %v6086 = vsel %vm3130, %v3538, %v5926
        %v6087 = vsel %vm3130, %v4403, %v5960
        %v6088 = vsel %vm3130, %v4406, %v5962
        %v6089 = vsel %vm3130, %v4411, %v5964
        %v6090 = vsel %vm3130, %v4414, %v5966
        %v6091 = vsel %vm3130, %v4419, %v5968
        %v6092 = vsel %vm3130, %v4422, %v5970
        %v6093 = vsel %vm3130, %v4427, %v5972
        %v6094 = vsel %vm3130, %v4430, %v5974
        %v6095 = vsel %vm3130, %v4435, %v5976
        %v6096 = vsel %vm3130, %v4438, %v5978
        %v6097 = vsel %vm3130, %v4443, %v5980
        %v6098 = vsel %vm3130, %v4446, %v5982
        %v6099 = vsel %vm3130, %v4451, %v5984
        %v6100 = vsel %vm3130, %v4454, %v5986
        %v6101 = vsel %vm3130, %v4459, %v5988
        %v6102 = vsel %vm3130, %v4462, %v5990
        %v6103 = vsel %vm3130, %v5327, %v6024
        %v6104 = vsel %vm3130, %v5330, %v6026
        %v6105 = vsel %vm3130, %v5335, %v6028
        %v6106 = vsel %vm3130, %v5338, %v6030
        %v6107 = vsel %vm3130, %v5343, %v6032
        %v6108 = vsel %vm3130, %v5346, %v6034
        %v6109 = vsel %vm3130, %v5351, %v6036
        %v6110 = vsel %vm3130, %v5354, %v6038
        %v6111 = vsel %vm3130, %v5359, %v6040
        %v6112 = vsel %vm3130, %v5362, %v6042
        %v6113 = vsel %vm3130, %v5367, %v6044
        %v6114 = vsel %vm3130, %v5370, %v6046
        %v6115 = vsel %vm3130, %v5375, %v6048
        %v6116 = vsel %vm3130, %v5378, %v6050
        %v6117 = vsel %vm3130, %v5383, %v6052
        %v6118 = vsel %vm3130, %v5386, %v6054
        %v6119 = vpack.c.bf16 %v6072, %v6071
        %v6120 = vpack.c.bf16 %v6088, %v6087
        %v6121 = vpack.c.bf16 %v6104, %v6103
        %v6122 = vpack.c.bf16 %v6074, %v6073
        %v6123 = vpack.c.bf16 %v6090, %v6089
        %v6124 = vpack.c.bf16 %v6106, %v6105
        %v6125 = vpack.c.bf16 %v6076, %v6075
        %v6126 = vpack.c.bf16 %v6092, %v6091
        %v6127 = vpack.c.bf16 %v6108, %v6107
        %v6128 = vpack.c.bf16 %v6078, %v6077
        %v6129 = vpack.c.bf16 %v6094, %v6093
        %v6130 = vpack.c.bf16 %v6110, %v6109
        %v6131 = vpack.c.bf16 %v6080, %v6079
        %v6132 = vpack.c.bf16 %v6096, %v6095
        %v6133 = vpack.c.bf16 %v6112, %v6111
        %v6134 = vpack.c.bf16 %v6082, %v6081
        %v6135 = vpack.c.bf16 %v6098, %v6097
        %v6136 = vpack.c.bf16 %v6114, %v6113
        %v6137 = vpack.c.bf16 %v6084, %v6083
        %v6138 = vpack.c.bf16 %v6100, %v6099
        %v6139 = vpack.c.bf16 %v6116, %v6115
        %v6140 = vpack.c.bf16 %v6086, %v6085
        %v6141 = vpack.c.bf16 %v6102, %v6101
        %v6142 = vpack.c.bf16 %v6118, %v6117
        %v6143 = vld [vmem:[%s4] sm:$0xff]
        %v6144 = vld [vmem:[%s4 + $0x8] sm:$0xf]
        %v6145 = vld [vmem:[%s4 + $0xc] sm:$0xff]
        %v6146 = vld [vmem:[%s4 + $0x14] sm:$0xf]
        %v6147 = vld [vmem:[%s4 + $0x18] sm:$0xff]
        %v6148 = vld [vmem:[%s4 + $0x20] sm:$0xf]
        %v6149 = vld [vmem:[%s4 + $0x24] sm:$0xff]
        %v6150 = vld [vmem:[%s4 + $0x2c] sm:$0xf]
        %v6151 = vld [vmem:[%s4 + $0x30] sm:$0xff]
        %v6152 = vld [vmem:[%s4 + $0x38] sm:$0xf]
        %v6153 = vld [vmem:[%s4 + $0x3c] sm:$0xff]
        %v6154 = vld [vmem:[%s4 + $0x44] sm:$0xf]
        %v6155 = vld [vmem:[%s4 + $0x48] sm:$0xff]
        %v6156 = vld [vmem:[%s4 + $0x50] sm:$0xf]
        %v6157 = vld [vmem:[%s4 + $0x54] sm:$0xff]
        %v6158 = vld [vmem:[%s4 + $0x5c] sm:$0xf]
        %v6159 = vld [vmem:[%s4 + $0x60] sm:$0xff]
        %v6160 = vld [vmem:[%s4 + $0x68] sm:$0xf]
        %v6161 = vld [vmem:[%s4 + $0x6c] sm:$0xff]
        %v6162 = vld [vmem:[%s4 + $0x74] sm:$0xf]
        %v6163 = vld [vmem:[%s4 + $0x78] sm:$0xff]
        %v6164 = vld [vmem:[%s4 + $0x80] sm:$0xf]
        %v6165 = vld [vmem:[%s4 + $0x84] sm:$0xff]
        %v6166 = vld [vmem:[%s4 + $0x8c] sm:$0xf]
        %v6167 = vld [vmem:[%s4 + $0x90] sm:$0xff]
        %v6168 = vld [vmem:[%s4 + $0x98] sm:$0xf]
        %v6169 = vld [vmem:[%s4 + $0x9c] sm:$0xff]
        %v6170 = vld [vmem:[%s4 + $0xa4] sm:$0xf]
        %v6171 = vld [vmem:[%s4 + $0xa8] sm:$0xff]
        %v6172 = vld [vmem:[%s4 + $0xb0] sm:$0xf]
        %v6173 = vld [vmem:[%s4 + $0xb4] sm:$0xff]
        %v6174 = vld [vmem:[%s4 + $0xbc] sm:$0xf]
        %v6175 = vld [vmem:[%s4 + $0xc0] sm:$0xff]
        %v6176 = vld [vmem:[%s4 + $0xc8] sm:$0xf]
        %v6177 = vld [vmem:[%s4 + $0xcc] sm:$0xff]
        %v6178 = vld [vmem:[%s4 + $0xd4] sm:$0xf]
        %v6179 = vld [vmem:[%s4 + $0xd8] sm:$0xff]
        %v6180 = vld [vmem:[%s4 + $0xe0] sm:$0xf]
        %v6181 = vld [vmem:[%s4 + $0xe4] sm:$0xff]
        %v6182 = vld [vmem:[%s4 + $0xec] sm:$0xf]
        %v6183 = vld [vmem:[%s4 + $0xf0] sm:$0xff]
        %v6184 = vld [vmem:[%s4 + $0xf8] sm:$0xf]
        %v6185 = vld [vmem:[%s4 + $0xfc] sm:$0xff]
        %v6186 = vld [vmem:[%s4 + $0x104] sm:$0xf]
        %v6187 = vld [vmem:[%s4 + $0x108] sm:$0xff]
        %v6188 = vld [vmem:[%s4 + $0x110] sm:$0xf]
        %v6189 = vld [vmem:[%s4 + $0x114] sm:$0xff]
        %v6190 = vld [vmem:[%s4 + $0x11c] sm:$0xf]
        %v6191 = vld [vmem:[%s4 + $0x120] sm:$0xff]
        %v6192 = vld [vmem:[%s4 + $0x128] sm:$0xf]
        %v6193 = vld [vmem:[%s4 + $0x12c] sm:$0xff]
        %v6194 = vld [vmem:[%s4 + $0x134] sm:$0xf]
        %v6195 = vld [vmem:[%s4 + $0x138] sm:$0xff]
        %v6196 = vld [vmem:[%s4 + $0x140] sm:$0xf]
        %v6197 = vld [vmem:[%s4 + $0x144] sm:$0xff]
        %v6198 = vld [vmem:[%s4 + $0x14c] sm:$0xf]
        %v6199 = vld [vmem:[%s4 + $0x150] sm:$0xff]
        %v6200 = vld [vmem:[%s4 + $0x158] sm:$0xf]
        %v6201 = vld [vmem:[%s4 + $0x15c] sm:$0xff]
        %v6202 = vld [vmem:[%s4 + $0x164] sm:$0xf]
        %v6203 = vld [vmem:[%s4 + $0x168] sm:$0xff]
        %v6204 = vld [vmem:[%s4 + $0x170] sm:$0xf]
        %v6205 = vld [vmem:[%s4 + $0x174] sm:$0xff]
        %v6206 = vld [vmem:[%s4 + $0x17c] sm:$0xf]
        %v6207 = vld [vmem:[%s4 + $0x180] sm:$0xff]
        %v6208 = vld [vmem:[%s4 + $0x188] sm:$0xf]
        %v6209 = vld [vmem:[%s4 + $0x18c] sm:$0xff]
        %v6210 = vld [vmem:[%s4 + $0x194] sm:$0xf]
        %v6211 = vld [vmem:[%s4 + $0x198] sm:$0xff]
        %v6212 = vld [vmem:[%s4 + $0x1a0] sm:$0xf]
        %v6213 = vld [vmem:[%s4 + $0x1a4] sm:$0xff]
        %v6214 = vld [vmem:[%s4 + $0x1ac] sm:$0xf]
        %v6215 = vld [vmem:[%s4 + $0x1b0] sm:$0xff]
        %v6216 = vld [vmem:[%s4 + $0x1b8] sm:$0xf]
        %v6217 = vld [vmem:[%s4 + $0x1bc] sm:$0xff]
        %v6218 = vld [vmem:[%s4 + $0x1c4] sm:$0xf]
        %v6219 = vld [vmem:[%s4 + $0x1c8] sm:$0xff]
        %v6220 = vld [vmem:[%s4 + $0x1d0] sm:$0xf]
        %v6221 = vld [vmem:[%s4 + $0x1d4] sm:$0xff]
        %v6222 = vld [vmem:[%s4 + $0x1dc] sm:$0xf]
        %v6223 = vld [vmem:[%s4 + $0x1e0] sm:$0xff]
        %v6224 = vld [vmem:[%s4 + $0x1e8] sm:$0xf]
        %v6225 = vld [vmem:[%s4 + $0x1ec] sm:$0xff]
        %v6226 = vld [vmem:[%s4 + $0x1f4] sm:$0xf]
        %v6227 = vld [vmem:[%s4 + $0x1f8] sm:$0xff]
        %v6228 = vld [vmem:[%s4 + $0x200] sm:$0xf]
        %v6229 = vld [vmem:[%s4 + $0x204] sm:$0xff]
        %v6230 = vld [vmem:[%s4 + $0x20c] sm:$0xf]
        %v6231 = vld [vmem:[%s4 + $0x210] sm:$0xff]
        %v6232 = vld [vmem:[%s4 + $0x218] sm:$0xf]
        %v6233 = vld [vmem:[%s4 + $0x21c] sm:$0xff]
        %v6234 = vld [vmem:[%s4 + $0x224] sm:$0xf]
        %v6235 = vld [vmem:[%s4 + $0x228] sm:$0xff]
        %v6236 = vld [vmem:[%s4 + $0x230] sm:$0xf]
        %v6237 = vld [vmem:[%s4 + $0x234] sm:$0xff]
        %v6238 = vld [vmem:[%s4 + $0x23c] sm:$0xf]
        %v6239 = vld [vmem:[%s5] sm:$0x7]
        %v6241 = vlaneseq
        %v6242 = vshrl.u32 %v6241, 7
        %v6243 = vsub.s32 0, %v6242
        %v6244 = vrot.slane %v6239, %v6243
        %v6245 = vlaneseq
        %v6246 = vshrl.u32 %v6245, 7
        %v6247 = vsub.s32 1, %v6246
        %v6248 = vrot.slane %v6239, %v6247
        %v6249 = vlaneseq
        %v6250 = vshrl.u32 %v6249, 7
        %v6251 = vsub.s32 2, %v6250
        %v6252 = vrot.slane %v6239, %v6251
        %v6352 = vunpack.c.l.b16 %v6143
        %v6353 = vunpack.c.h.b16 %v6143
        %v6354 = vunpack.c.l.b16 %v6144
        %v6355 = vunpack.c.l.b16 %v6145
        %v6356 = vunpack.c.h.b16 %v6145
        %v6357 = vunpack.c.l.b16 %v6146
        %v6358 = vunpack.c.l.b16 %v6147
        %v6359 = vunpack.c.h.b16 %v6147
        %v6360 = vunpack.c.l.b16 %v6148
        %v6361 = vunpack.c.l.b16 %v6149
        %v6362 = vunpack.c.h.b16 %v6149
        %v6363 = vunpack.c.l.b16 %v6150
        %v6364 = vunpack.c.l.b16 %v6151
        %v6365 = vunpack.c.h.b16 %v6151
        %v6366 = vunpack.c.l.b16 %v6152
        %v6367 = vunpack.c.l.b16 %v6153
        %v6368 = vunpack.c.h.b16 %v6153
        %v6369 = vunpack.c.l.b16 %v6154
        %v6370 = vunpack.c.l.b16 %v6155
        %v6371 = vunpack.c.h.b16 %v6155
        %v6372 = vunpack.c.l.b16 %v6156
        %v6373 = vunpack.c.l.b16 %v6157
        %v6374 = vunpack.c.h.b16 %v6157
        %v6375 = vunpack.c.l.b16 %v6158
        %v6376 = vunpack.c.l.b16 %v6159
        %v6377 = vunpack.c.h.b16 %v6159
        %v6378 = vunpack.c.l.b16 %v6160
        %v6379 = vunpack.c.l.b16 %v6161
        %v6380 = vunpack.c.h.b16 %v6161
        %v6381 = vunpack.c.l.b16 %v6162
        %v6382 = vunpack.c.l.b16 %v6163
        %v6383 = vunpack.c.h.b16 %v6163
        %v6384 = vunpack.c.l.b16 %v6164
        %v6385 = vunpack.c.l.b16 %v6165
        %v6386 = vunpack.c.h.b16 %v6165
        %v6387 = vunpack.c.l.b16 %v6166
        %v6388 = vunpack.c.l.b16 %v6167
        %v6389 = vunpack.c.h.b16 %v6167
        %v6390 = vunpack.c.l.b16 %v6168
        %v6391 = vunpack.c.l.b16 %v6169
        %v6392 = vunpack.c.h.b16 %v6169
        %v6393 = vunpack.c.l.b16 %v6170
        %v6394 = vunpack.c.l.b16 %v6171
        %v6395 = vunpack.c.h.b16 %v6171
        %v6396 = vunpack.c.l.b16 %v6172
        %v6397 = vunpack.c.l.b16 %v6173
        %v6398 = vunpack.c.h.b16 %v6173
        %v6399 = vunpack.c.l.b16 %v6174
        %v6400 = vunpack.c.l.b16 %v6175
        %v6401 = vunpack.c.h.b16 %v6175
        %v6402 = vunpack.c.l.b16 %v6176
        %v6403 = vunpack.c.l.b16 %v6177
        %v6404 = vunpack.c.h.b16 %v6177
        %v6405 = vunpack.c.l.b16 %v6178
        %v6406 = vunpack.c.l.b16 %v6179
        %v6407 = vunpack.c.h.b16 %v6179
        %v6408 = vunpack.c.l.b16 %v6180
        %v6409 = vunpack.c.l.b16 %v6181
        %v6410 = vunpack.c.h.b16 %v6181
        %v6411 = vunpack.c.l.b16 %v6182
        %v6412 = vunpack.c.l.b16 %v6183
        %v6413 = vunpack.c.h.b16 %v6183
        %v6414 = vunpack.c.l.b16 %v6184
        %v6415 = vunpack.c.l.b16 %v6185
        %v6416 = vunpack.c.h.b16 %v6185
        %v6417 = vunpack.c.l.b16 %v6186
        %v6418 = vunpack.c.l.b16 %v6187
        %v6419 = vunpack.c.h.b16 %v6187
        %v6420 = vunpack.c.l.b16 %v6188
        %v6421 = vunpack.c.l.b16 %v6189
        %v6422 = vunpack.c.h.b16 %v6189
        %v6423 = vunpack.c.l.b16 %v6190
        %v6424 = vunpack.c.l.b16 %v6191
        %v6425 = vunpack.c.h.b16 %v6191
        %v6426 = vunpack.c.l.b16 %v6192
        %v6427 = vunpack.c.l.b16 %v6193
        %v6428 = vunpack.c.h.b16 %v6193
        %v6429 = vunpack.c.l.b16 %v6194
        %v6430 = vunpack.c.l.b16 %v6195
        %v6431 = vunpack.c.h.b16 %v6195
        %v6432 = vunpack.c.l.b16 %v6196
        %v6433 = vunpack.c.l.b16 %v6197
        %v6434 = vunpack.c.h.b16 %v6197
        %v6435 = vunpack.c.l.b16 %v6198
        %v6436 = vunpack.c.l.b16 %v6199
        %v6437 = vunpack.c.h.b16 %v6199
        %v6438 = vunpack.c.l.b16 %v6200
        %v6439 = vunpack.c.l.b16 %v6201
        %v6440 = vunpack.c.h.b16 %v6201
        %v6441 = vunpack.c.l.b16 %v6202
        %v6442 = vunpack.c.l.b16 %v6203
        %v6443 = vunpack.c.h.b16 %v6203
        %v6444 = vunpack.c.l.b16 %v6204
        %v6445 = vunpack.c.l.b16 %v6205
        %v6446 = vunpack.c.h.b16 %v6205
        %v6447 = vunpack.c.l.b16 %v6206
        %v6448 = vunpack.c.l.b16 %v6207
        %v6449 = vunpack.c.h.b16 %v6207
        %v6450 = vunpack.c.l.b16 %v6208
        %v6451 = vunpack.c.l.b16 %v6209
        %v6452 = vunpack.c.h.b16 %v6209
        %v6453 = vunpack.c.l.b16 %v6210
        %v6454 = vunpack.c.l.b16 %v6211
        %v6455 = vunpack.c.h.b16 %v6211
        %v6456 = vunpack.c.l.b16 %v6212
        %v6457 = vunpack.c.l.b16 %v6213
        %v6458 = vunpack.c.h.b16 %v6213
        %v6459 = vunpack.c.l.b16 %v6214
        %v6460 = vunpack.c.l.b16 %v6215
        %v6461 = vunpack.c.h.b16 %v6215
        %v6462 = vunpack.c.l.b16 %v6216
        %v6463 = vunpack.c.l.b16 %v6217
        %v6464 = vunpack.c.h.b16 %v6217
        %v6465 = vunpack.c.l.b16 %v6218
        %v6466 = vunpack.c.l.b16 %v6219
        %v6467 = vunpack.c.h.b16 %v6219
        %v6468 = vunpack.c.l.b16 %v6220
        %v6469 = vunpack.c.l.b16 %v6221
        %v6470 = vunpack.c.h.b16 %v6221
        %v6471 = vunpack.c.l.b16 %v6222
        %v6472 = vunpack.c.l.b16 %v6223
        %v6473 = vunpack.c.h.b16 %v6223
        %v6474 = vunpack.c.l.b16 %v6224
        %v6475 = vunpack.c.l.b16 %v6225
        %v6476 = vunpack.c.h.b16 %v6225
        %v6477 = vunpack.c.l.b16 %v6226
        %v6478 = vunpack.c.l.b16 %v6227
        %v6479 = vunpack.c.h.b16 %v6227
        %v6480 = vunpack.c.l.b16 %v6228
        %v6481 = vunpack.c.l.b16 %v6229
        %v6482 = vunpack.c.h.b16 %v6229
        %v6483 = vunpack.c.l.b16 %v6230
        %v6484 = vunpack.c.l.b16 %v6231
        %v6485 = vunpack.c.h.b16 %v6231
        %v6486 = vunpack.c.l.b16 %v6232
        %v6487 = vunpack.c.l.b16 %v6233
        %v6488 = vunpack.c.h.b16 %v6233
        %v6489 = vunpack.c.l.b16 %v6234
        %v6490 = vunpack.c.l.b16 %v6235
        %v6491 = vunpack.c.h.b16 %v6235
        %v6492 = vunpack.c.l.b16 %v6236
        %v6493 = vunpack.c.l.b16 %v6237
        %v6494 = vunpack.c.h.b16 %v6237
        %v6495 = vunpack.c.l.b16 %v6238
        %v6496 = vpack.c.b16 %v6355, %v6352
        %v6497 = vpack.c.b16 %v6356, %v6353
        %v6498 = vpack.c.b16 %v6357, %v6354
        %v6499 = vpack.c.b16 %v6361, %v6358
        %v6500 = vpack.c.b16 %v6362, %v6359
        %v6501 = vpack.c.b16 %v6363, %v6360
        %v6502 = vpack.c.b16 %v6367, %v6364
        %v6503 = vpack.c.b16 %v6368, %v6365
        %v6504 = vpack.c.b16 %v6369, %v6366
        %v6505 = vpack.c.b16 %v6373, %v6370
        %v6506 = vpack.c.b16 %v6374, %v6371
        %v6507 = vpack.c.b16 %v6375, %v6372
        %v6508 = vpack.c.b16 %v6379, %v6376
        %v6509 = vpack.c.b16 %v6380, %v6377
        %v6510 = vpack.c.b16 %v6381, %v6378
        %v6511 = vpack.c.b16 %v6385, %v6382
        %v6512 = vpack.c.b16 %v6386, %v6383
        %v6513 = vpack.c.b16 %v6387, %v6384
        %v6514 = vpack.c.b16 %v6391, %v6388
        %v6515 = vpack.c.b16 %v6392, %v6389
        %v6516 = vpack.c.b16 %v6393, %v6390
        %v6517 = vpack.c.b16 %v6397, %v6394
        %v6518 = vpack.c.b16 %v6398, %v6395
        %v6519 = vpack.c.b16 %v6399, %v6396
        %v6520 = vpack.c.b16 %v6403, %v6400
        %v6521 = vpack.c.b16 %v6404, %v6401
        %v6522 = vpack.c.b16 %v6405, %v6402
        %v6523 = vpack.c.b16 %v6409, %v6406
        %v6524 = vpack.c.b16 %v6410, %v6407
        %v6525 = vpack.c.b16 %v6411, %v6408
        %v6526 = vpack.c.b16 %v6415, %v6412
        %v6527 = vpack.c.b16 %v6416, %v6413
        %v6528 = vpack.c.b16 %v6417, %v6414
        %v6529 = vpack.c.b16 %v6421, %v6418
        %v6530 = vpack.c.b16 %v6422, %v6419
        %v6531 = vpack.c.b16 %v6423, %v6420
        %v6532 = vpack.c.b16 %v6427, %v6424
        %v6533 = vpack.c.b16 %v6428, %v6425
        %v6534 = vpack.c.b16 %v6429, %v6426
        %v6535 = vpack.c.b16 %v6433, %v6430
        %v6536 = vpack.c.b16 %v6434, %v6431
        %v6537 = vpack.c.b16 %v6435, %v6432
        %v6538 = vpack.c.b16 %v6439, %v6436
        %v6539 = vpack.c.b16 %v6440, %v6437
        %v6540 = vpack.c.b16 %v6441, %v6438
        %v6541 = vpack.c.b16 %v6445, %v6442
        %v6542 = vpack.c.b16 %v6446, %v6443
        %v6543 = vpack.c.b16 %v6447, %v6444
        %v6544 = vpack.c.b16 %v6451, %v6448
        %v6545 = vpack.c.b16 %v6452, %v6449
        %v6546 = vpack.c.b16 %v6453, %v6450
        %v6547 = vpack.c.b16 %v6457, %v6454
        %v6548 = vpack.c.b16 %v6458, %v6455
        %v6549 = vpack.c.b16 %v6459, %v6456
        %v6550 = vpack.c.b16 %v6463, %v6460
        %v6551 = vpack.c.b16 %v6464, %v6461
        %v6552 = vpack.c.b16 %v6465, %v6462
        %v6553 = vpack.c.b16 %v6469, %v6466
        %v6554 = vpack.c.b16 %v6470, %v6467
        %v6555 = vpack.c.b16 %v6471, %v6468
        %v6556 = vpack.c.b16 %v6475, %v6472
        %v6557 = vpack.c.b16 %v6476, %v6473
        %v6558 = vpack.c.b16 %v6477, %v6474
        %v6559 = vpack.c.b16 %v6481, %v6478
        %v6560 = vpack.c.b16 %v6482, %v6479
        %v6561 = vpack.c.b16 %v6483, %v6480
        %v6562 = vpack.c.b16 %v6487, %v6484
        %v6563 = vpack.c.b16 %v6488, %v6485
        %v6564 = vpack.c.b16 %v6489, %v6486
        %v6565 = vpack.c.b16 %v6493, %v6490
        %v6566 = vpack.c.b16 %v6494, %v6491
        %v6567 = vpack.c.b16 %v6495, %v6492
        %6640 = vmatprep.subr.bf16.mxu0 %v6497
        %6641 = vmatpush1.bf16.msra.mxu0 %v6496
        %6642 = vmatprep.subr.bf16.mxu0 %v6500
        %6643 = vmatpush1.bf16.msra.mxu0 %v6499
        %6644 = vmatprep.subr.bf16.mxu0 %v6503
        %6645 = vmatpush1.bf16.msra.mxu0 %v6502
        %6646 = vmatprep.subr.bf16.mxu0 %v6506
        %6647 = vmatpush1.bf16.msra.mxu0 %v6505
        %6648 = vmatprep.subr.bf16.mxu0 %v6509
        %6649 = vmatpush1.bf16.msra.mxu0 %v6508
        %6650 = vmatprep.subr.bf16.mxu0 %v6512
        %6651 = vmatpush1.bf16.msra.mxu0 %v6511
        %6652 = vmatprep.subr.bf16.mxu0 %v6515
        %6653 = vmatpush1.bf16.msra.mxu0 %v6514
        %6654 = vmatprep.subr.bf16.mxu0 %v6518
        %6655 = vmatpush1.bf16.msra.mxu0 %v6517
        %6656 = vmatprep.subr.bf16.mxu0 %v6521
        %6657 = vmatpush1.bf16.msra.mxu0 %v6520
        %6658 = vmatprep.subr.bf16.mxu0 %v6524
        %6659 = vmatpush1.bf16.msra.mxu0 %v6523
        %6660 = vmatprep.subr.bf16.mxu0 %v6527
        %6661 = vmatpush1.bf16.msra.mxu0 %v6526
        %6662 = vmatprep.subr.bf16.mxu0 %v6530
        %6663 = vmatpush1.bf16.msra.mxu0 %v6529
        %6664 = vmatprep.subr.bf16.mxu0 %v6533
        %6665 = vmatpush1.bf16.msra.mxu0 %v6532
        %6666 = vmatprep.subr.bf16.mxu0 %v6536
        %6667 = vmatpush1.bf16.msra.mxu0 %v6535
        %6668 = vmatprep.subr.bf16.mxu0 %v6539
        %6669 = vmatpush1.bf16.msra.mxu0 %v6538
        %6670 = vmatprep.subr.bf16.mxu0 %v6542
        %6671 = vmatpush1.bf16.msra.mxu0 %v6541
        %6672 = vmatprep.mubr.bf16.mxu0 %v6120
        %6673 = vmatmul.mubr.bf16.gmra.mrb[0].mxu0 %v6119
        %v6674 = vpop.f32.mrb[0].mxu0
        %v6675 = vadd.f32 %v6244, %v6674
        %v6676 = vpop.f32.mrb[0].mxu0
        %v6677 = vadd.f32 %v6248, %v6676
        %v6678 = vpop.f32.mrb[0].mxu0
        %v6679 = vadd.f32 %v6244, %v6678
        %v6680 = vpop.f32.mrb[0].mxu0
        %v6681 = vadd.f32 %v6248, %v6680
        %6682 = vmatprep.mubr.bf16.mxu0 %v6123
        %6683 = vmatmul.mubr.bf16.gmra.mrb[0].mxu0 %v6122
        %v6684 = vpop.f32.mrb[0].mxu0
        %v6685 = vadd.f32 %v6244, %v6684
        %v6686 = vpop.f32.mrb[0].mxu0
        %v6687 = vadd.f32 %v6248, %v6686
        %v6688 = vpop.f32.mrb[0].mxu0
        %v6689 = vadd.f32 %v6244, %v6688
        %v6690 = vpop.f32.mrb[0].mxu0
        %v6691 = vadd.f32 %v6248, %v6690
        %6692 = vmatprep.mubr.bf16.mxu0 %v6126
        %6693 = vmatmul.mubr.bf16.gmra.mrb[0].mxu0 %v6125
        %v6694 = vpop.f32.mrb[0].mxu0
        %v6695 = vadd.f32 %v6244, %v6694
        %v6696 = vpop.f32.mrb[0].mxu0
        %v6697 = vadd.f32 %v6248, %v6696
        %v6698 = vpop.f32.mrb[0].mxu0
        %v6699 = vadd.f32 %v6244, %v6698
        %v6700 = vpop.f32.mrb[0].mxu0
        %v6701 = vadd.f32 %v6248, %v6700
        %6702 = vmatprep.mubr.bf16.mxu0 %v6129
        %6703 = vmatmul.mubr.bf16.gmra.mrb[0].mxu0 %v6128
        %v6704 = vpop.f32.mrb[0].mxu0
        %v6705 = vadd.f32 %v6244, %v6704
        %v6706 = vpop.f32.mrb[0].mxu0
        %v6707 = vadd.f32 %v6248, %v6706
        %v6708 = vpop.f32.mrb[0].mxu0
        %v6709 = vadd.f32 %v6244, %v6708
        %v6710 = vpop.f32.mrb[0].mxu0
        %v6711 = vadd.f32 %v6248, %v6710
        %6712 = vmatprep.mubr.bf16.mxu0 %v6132
        %6713 = vmatmul.mubr.bf16.gmra.mrb[0].mxu0 %v6131
        %v6714 = vpop.f32.mrb[0].mxu0
        %v6715 = vadd.f32 %v6244, %v6714
        %v6716 = vpop.f32.mrb[0].mxu0
        %v6717 = vadd.f32 %v6248, %v6716
        %v6718 = vpop.f32.mrb[0].mxu0
        %v6719 = vadd.f32 %v6244, %v6718
        %v6720 = vpop.f32.mrb[0].mxu0
        %v6721 = vadd.f32 %v6248, %v6720
        %6722 = vmatprep.mubr.bf16.mxu0 %v6135
        %6723 = vmatmul.mubr.bf16.gmra.mrb[0].mxu0 %v6134
        %v6724 = vpop.f32.mrb[0].mxu0
        %v6725 = vadd.f32 %v6244, %v6724
        %v6726 = vpop.f32.mrb[0].mxu0
        %v6727 = vadd.f32 %v6248, %v6726
        %v6728 = vpop.f32.mrb[0].mxu0
        %v6729 = vadd.f32 %v6244, %v6728
        %v6730 = vpop.f32.mrb[0].mxu0
        %v6731 = vadd.f32 %v6248, %v6730
        %6732 = vmatprep.mubr.bf16.mxu0 %v6138
        %6733 = vmatmul.mubr.bf16.gmra.mrb[0].mxu0 %v6137
        %v6734 = vpop.f32.mrb[0].mxu0
        %v6735 = vadd.f32 %v6244, %v6734
        %v6736 = vpop.f32.mrb[0].mxu0
        %v6737 = vadd.f32 %v6248, %v6736
        %v6738 = vpop.f32.mrb[0].mxu0
        %v6739 = vadd.f32 %v6244, %v6738
        %v6740 = vpop.f32.mrb[0].mxu0
        %v6741 = vadd.f32 %v6248, %v6740
        %6742 = vmatprep.mubr.bf16.mxu0 %v6141
        %6743 = vmatmul.mubr.bf16.gmra.mrb[0].mxu0 %v6140
        %v6744 = vpop.f32.mrb[0].mxu0
        %v6745 = vadd.f32 %v6244, %v6744
        %v6746 = vpop.f32.mrb[0].mxu0
        %v6747 = vadd.f32 %v6248, %v6746
        %v6748 = vpop.f32.mrb[0].mxu0
        %v6749 = vadd.f32 %v6244, %v6748
        %v6750 = vpop.f32.mrb[0].mxu0
        %v6751 = vadd.f32 %v6248, %v6750
        %6752 = vdwg.mxu0
        %6753 = vmatprep.subr.bf16.mxu0 %v6545
        %6754 = vmatpush1.bf16.msra.mxu0 %v6544
        %6755 = vmatprep.subr.bf16.mxu0 %v6548
        %6756 = vmatpush1.bf16.msra.mxu0 %v6547
        %6757 = vmatprep.subr.bf16.mxu0 %v6551
        %6758 = vmatpush1.bf16.msra.mxu0 %v6550
        %6759 = vmatprep.subr.bf16.mxu0 %v6554
        %6760 = vmatpush1.bf16.msra.mxu0 %v6553
        %6761 = vmatprep.subr.bf16.mxu0 %v6557
        %6762 = vmatpush1.bf16.msra.mxu0 %v6556
        %6763 = vmatprep.subr.bf16.mxu0 %v6560
        %6764 = vmatpush1.bf16.msra.mxu0 %v6559
        %6765 = vmatprep.subr.bf16.mxu0 %v6563
        %6766 = vmatpush1.bf16.msra.mxu0 %v6562
        %6767 = vmatprep.subr.bf16.mxu0 %v6566
        %6768 = vmatpush1.bf16.msra.mxu0 %v6565
        %6769 = vmatprep.subr.bf16.mxu0 0
        %6770 = vmatpush1.bf16.msra.mxu0 0
        %6771 = vmatprep.subr.bf16.mxu0 0
        %6772 = vmatpush1.bf16.msra.mxu0 0
        %6773 = vmatprep.subr.bf16.mxu0 0
        %6774 = vmatpush1.bf16.msra.mxu0 0
        %6775 = vmatprep.subr.bf16.mxu0 0
        %6776 = vmatpush1.bf16.msra.mxu0 0
        %6777 = vmatprep.subr.bf16.mxu0 0
        %6778 = vmatpush1.bf16.msra.mxu0 0
        %6779 = vmatprep.subr.bf16.mxu0 0
        %6780 = vmatpush1.bf16.msra.mxu0 0
        %6781 = vmatprep.subr.bf16.mxu0 0
        %6782 = vmatpush1.bf16.msra.mxu0 0
        %6783 = vmatprep.subr.bf16.mxu0 0
        %6784 = vmatpush1.bf16.msra.mxu0 0
        %6785 = vmatprep.mubr.bf16.mxu0 0
        %6786 = vmatmul.mubr.bf16.gmra.mrb[0].mxu0 %v6121
        %v6787 = vpop.f32.mrb[0].mxu0
        %v6788 = vadd.f32 %v6675, %v6787
        %v6789 = vpop.f32.mrb[0].mxu0
        %v6790 = vadd.f32 %v6677, %v6789
        %v6791 = vpop.f32.mrb[0].mxu0
        %v6792 = vadd.f32 %v6679, %v6791
        %v6793 = vpop.f32.mrb[0].mxu0
        %v6794 = vadd.f32 %v6681, %v6793
        %6795 = vmatprep.mubr.bf16.mxu0 0
        %6796 = vmatmul.mubr.bf16.gmra.mrb[0].mxu0 %v6124
        %v6797 = vpop.f32.mrb[0].mxu0
        %v6798 = vadd.f32 %v6685, %v6797
        %v6799 = vpop.f32.mrb[0].mxu0
        %v6800 = vadd.f32 %v6687, %v6799
        %v6801 = vpop.f32.mrb[0].mxu0
        %v6802 = vadd.f32 %v6689, %v6801
        %v6803 = vpop.f32.mrb[0].mxu0
        %v6804 = vadd.f32 %v6691, %v6803
        %6805 = vmatprep.mubr.bf16.mxu0 0
        %6806 = vmatmul.mubr.bf16.gmra.mrb[0].mxu0 %v6127
        %v6807 = vpop.f32.mrb[0].mxu0
        %v6808 = vadd.f32 %v6695, %v6807
        %v6809 = vpop.f32.mrb[0].mxu0
        %v6810 = vadd.f32 %v6697, %v6809
        %v6811 = vpop.f32.mrb[0].mxu0
        %v6812 = vadd.f32 %v6699, %v6811
        %v6813 = vpop.f32.mrb[0].mxu0
        %v6814 = vadd.f32 %v6701, %v6813
        %6815 = vmatprep.mubr.bf16.mxu0 0
        %6816 = vmatmul.mubr.bf16.gmra.mrb[0].mxu0 %v6130
        %v6817 = vpop.f32.mrb[0].mxu0
        %v6818 = vadd.f32 %v6705, %v6817
        %v6819 = vpop.f32.mrb[0].mxu0
        %v6820 = vadd.f32 %v6707, %v6819
        %v6821 = vpop.f32.mrb[0].mxu0
        %v6822 = vadd.f32 %v6709, %v6821
        %v6823 = vpop.f32.mrb[0].mxu0
        %v6824 = vadd.f32 %v6711, %v6823
        %6825 = vmatprep.mubr.bf16.mxu0 0
        %6826 = vmatmul.mubr.bf16.gmra.mrb[0].mxu0 %v6133
        %v6827 = vpop.f32.mrb[0].mxu0
        %v6828 = vadd.f32 %v6715, %v6827
        %v6829 = vpop.f32.mrb[0].mxu0
        %v6830 = vadd.f32 %v6717, %v6829
        %v6831 = vpop.f32.mrb[0].mxu0
        %v6832 = vadd.f32 %v6719, %v6831
        %v6833 = vpop.f32.mrb[0].mxu0
        %v6834 = vadd.f32 %v6721, %v6833
        %6835 = vmatprep.mubr.bf16.mxu0 0
        %6836 = vmatmul.mubr.bf16.gmra.mrb[0].mxu0 %v6136
        %v6837 = vpop.f32.mrb[0].mxu0
        %v6838 = vadd.f32 %v6725, %v6837
        %v6839 = vpop.f32.mrb[0].mxu0
        %v6840 = vadd.f32 %v6727, %v6839
        %v6841 = vpop.f32.mrb[0].mxu0
        %v6842 = vadd.f32 %v6729, %v6841
        %v6843 = vpop.f32.mrb[0].mxu0
        %v6844 = vadd.f32 %v6731, %v6843
        %6845 = vmatprep.mubr.bf16.mxu0 0
        %6846 = vmatmul.mubr.bf16.gmra.mrb[0].mxu0 %v6139
        %v6847 = vpop.f32.mrb[0].mxu0
        %v6848 = vadd.f32 %v6735, %v6847
        %v6849 = vpop.f32.mrb[0].mxu0
        %v6850 = vadd.f32 %v6737, %v6849
        %v6851 = vpop.f32.mrb[0].mxu0
        %v6852 = vadd.f32 %v6739, %v6851
        %v6853 = vpop.f32.mrb[0].mxu0
        %v6854 = vadd.f32 %v6741, %v6853
        %6855 = vmatprep.mubr.bf16.mxu0 0
        %6856 = vmatmul.mubr.bf16.gmra.mrb[0].mxu0 %v6142
        %v6857 = vpop.f32.mrb[0].mxu0
        %v6858 = vadd.f32 %v6745, %v6857
        %v6859 = vpop.f32.mrb[0].mxu0
        %v6860 = vadd.f32 %v6747, %v6859
        %v6861 = vpop.f32.mrb[0].mxu0
        %v6862 = vadd.f32 %v6749, %v6861
        %v6863 = vpop.f32.mrb[0].mxu0
        %v6864 = vadd.f32 %v6751, %v6863
        %6865 = vdwg.mxu0
        %6866 = vmatprep.subr.bf16.mxu0 0
        %6867 = vmatpush1.bf16.msra.mxu0 %v6498
        %6868 = vmatprep.subr.bf16.mxu0 0
        %6869 = vmatpush1.bf16.msra.mxu0 %v6501
        %6870 = vmatprep.subr.bf16.mxu0 0
        %6871 = vmatpush1.bf16.msra.mxu0 %v6504
        %6872 = vmatprep.subr.bf16.mxu0 0
        %6873 = vmatpush1.bf16.msra.mxu0 %v6507
        %6874 = vmatprep.subr.bf16.mxu0 0
        %6875 = vmatpush1.bf16.msra.mxu0 %v6510
        %6876 = vmatprep.subr.bf16.mxu0 0
        %6877 = vmatpush1.bf16.msra.mxu0 %v6513
        %6878 = vmatprep.subr.bf16.mxu0 0
        %6879 = vmatpush1.bf16.msra.mxu0 %v6516
        %6880 = vmatprep.subr.bf16.mxu0 0
        %6881 = vmatpush1.bf16.msra.mxu0 %v6519
        %6882 = vmatprep.subr.bf16.mxu0 0
        %6883 = vmatpush1.bf16.msra.mxu0 %v6522
        %6884 = vmatprep.subr.bf16.mxu0 0
        %6885 = vmatpush1.bf16.msra.mxu0 %v6525
        %6886 = vmatprep.subr.bf16.mxu0 0
        %6887 = vmatpush1.bf16.msra.mxu0 %v6528
        %6888 = vmatprep.subr.bf16.mxu0 0
        %6889 = vmatpush1.bf16.msra.mxu0 %v6531
        %6890 = vmatprep.subr.bf16.mxu0 0
        %6891 = vmatpush1.bf16.msra.mxu0 %v6534
        %6892 = vmatprep.subr.bf16.mxu0 0
        %6893 = vmatpush1.bf16.msra.mxu0 %v6537
        %6894 = vmatprep.subr.bf16.mxu0 0
        %6895 = vmatpush1.bf16.msra.mxu0 %v6540
        %6896 = vmatprep.subr.bf16.mxu0 0
        %6897 = vmatpush1.bf16.msra.mxu0 %v6543
        %6898 = vmatprep.mubr.bf16.mxu0 %v6120
        %6899 = vmatmul.mubr.bf16.gmra.mrb[0].mxu0 %v6119
        %v6900 = vpop.f32.mrb[0].mxu0
        %v6901 = vadd.f32 %v6252, %v6900
        %v6902 = vpop.f32.mrb[0].mxu0
        %v6903 = vpop.f32.mrb[0].mxu0
        %v6904 = vadd.f32 %v6252, %v6903
        %v6905 = vpop.f32.mrb[0].mxu0
        %6906 = vmatprep.mubr.bf16.mxu0 %v6123
        %6907 = vmatmul.mubr.bf16.gmra.mrb[0].mxu0 %v6122
        %v6908 = vpop.f32.mrb[0].mxu0
        %v6909 = vadd.f32 %v6252, %v6908
        %v6910 = vpop.f32.mrb[0].mxu0
        %v6911 = vpop.f32.mrb[0].mxu0
        %v6912 = vadd.f32 %v6252, %v6911
        %v6913 = vpop.f32.mrb[0].mxu0
        %6914 = vmatprep.mubr.bf16.mxu0 %v6126
        %6915 = vmatmul.mubr.bf16.gmra.mrb[0].mxu0 %v6125
        %v6916 = vpop.f32.mrb[0].mxu0
        %v6917 = vadd.f32 %v6252, %v6916
        %v6918 = vpop.f32.mrb[0].mxu0
        %v6919 = vpop.f32.mrb[0].mxu0
        %v6920 = vadd.f32 %v6252, %v6919
        %v6921 = vpop.f32.mrb[0].mxu0
        %6922 = vmatprep.mubr.bf16.mxu0 %v6129
        %6923 = vmatmul.mubr.bf16.gmra.mrb[0].mxu0 %v6128
        %v6924 = vpop.f32.mrb[0].mxu0
        %v6925 = vadd.f32 %v6252, %v6924
        %v6926 = vpop.f32.mrb[0].mxu0
        %v6927 = vpop.f32.mrb[0].mxu0
        %v6928 = vadd.f32 %v6252, %v6927
        %v6929 = vpop.f32.mrb[0].mxu0
        %6930 = vmatprep.mubr.bf16.mxu0 %v6132
        %6931 = vmatmul.mubr.bf16.gmra.mrb[0].mxu0 %v6131
        %v6932 = vpop.f32.mrb[0].mxu0
        %v6933 = vadd.f32 %v6252, %v6932
        %v6934 = vpop.f32.mrb[0].mxu0
        %v6935 = vpop.f32.mrb[0].mxu0
        %v6936 = vadd.f32 %v6252, %v6935
        %v6937 = vpop.f32.mrb[0].mxu0
        %6938 = vmatprep.mubr.bf16.mxu0 %v6135
        %6939 = vmatmul.mubr.bf16.gmra.mrb[0].mxu0 %v6134
        %v6940 = vpop.f32.mrb[0].mxu0
        %v6941 = vadd.f32 %v6252, %v6940
        %v6942 = vpop.f32.mrb[0].mxu0
        %v6943 = vpop.f32.mrb[0].mxu0
        %v6944 = vadd.f32 %v6252, %v6943
        %v6945 = vpop.f32.mrb[0].mxu0
        %6946 = vmatprep.mubr.bf16.mxu0 %v6138
        %6947 = vmatmul.mubr.bf16.gmra.mrb[0].mxu0 %v6137
        %v6948 = vpop.f32.mrb[0].mxu0
        %v6949 = vadd.f32 %v6252, %v6948
        %v6950 = vpop.f32.mrb[0].mxu0
        %v6951 = vpop.f32.mrb[0].mxu0
        %v6952 = vadd.f32 %v6252, %v6951
        %v6953 = vpop.f32.mrb[0].mxu0
        %6954 = vmatprep.mubr.bf16.mxu0 %v6141
        %6955 = vmatmul.mubr.bf16.gmra.mrb[0].mxu0 %v6140
        %v6956 = vpop.f32.mrb[0].mxu0
        %v6957 = vadd.f32 %v6252, %v6956
        %v6958 = vpop.f32.mrb[0].mxu0
        %v6959 = vpop.f32.mrb[0].mxu0
        %v6960 = vadd.f32 %v6252, %v6959
        %v6961 = vpop.f32.mrb[0].mxu0
        %6962 = vdwg.mxu0
        %6963 = vmatprep.subr.bf16.mxu0 0
        %6964 = vmatpush1.bf16.msra.mxu0 %v6546
        %6965 = vmatprep.subr.bf16.mxu0 0
        %6966 = vmatpush1.bf16.msra.mxu0 %v6549
        %6967 = vmatprep.subr.bf16.mxu0 0
        %6968 = vmatpush1.bf16.msra.mxu0 %v6552
        %6969 = vmatprep.subr.bf16.mxu0 0
        %6970 = vmatpush1.bf16.msra.mxu0 %v6555
        %6971 = vmatprep.subr.bf16.mxu0 0
        %6972 = vmatpush1.bf16.msra.mxu0 %v6558
        %6973 = vmatprep.subr.bf16.mxu0 0
        %6974 = vmatpush1.bf16.msra.mxu0 %v6561
        %6975 = vmatprep.subr.bf16.mxu0 0
        %6976 = vmatpush1.bf16.msra.mxu0 %v6564
        %6977 = vmatprep.subr.bf16.mxu0 0
        %6978 = vmatpush1.bf16.msra.mxu0 %v6567
        %6979 = vmatprep.subr.bf16.mxu0 0
        %6980 = vmatpush1.bf16.msra.mxu0 0
        %6981 = vmatprep.subr.bf16.mxu0 0
        %6982 = vmatpush1.bf16.msra.mxu0 0
        %6983 = vmatprep.subr.bf16.mxu0 0
        %6984 = vmatpush1.bf16.msra.mxu0 0
        %6985 = vmatprep.subr.bf16.mxu0 0
        %6986 = vmatpush1.bf16.msra.mxu0 0
        %6987 = vmatprep.subr.bf16.mxu0 0
        %6988 = vmatpush1.bf16.msra.mxu0 0
        %6989 = vmatprep.subr.bf16.mxu0 0
        %6990 = vmatpush1.bf16.msra.mxu0 0
        %6991 = vmatprep.subr.bf16.mxu0 0
        %6992 = vmatpush1.bf16.msra.mxu0 0
        %6993 = vmatprep.subr.bf16.mxu0 0
        %6994 = vmatpush1.bf16.msra.mxu0 0
        %6995 = vmatprep.mubr.bf16.mxu0 0
        %6996 = vmatmul.mubr.bf16.gmra.mrb[0].mxu0 %v6121
        %v6997 = vpop.f32.mrb[0].mxu0
        %v6998 = vadd.f32 %v6901, %v6997
        %v6999 = vpop.f32.mrb[0].mxu0
        %v7000 = vpop.f32.mrb[0].mxu0
        %v7001 = vadd.f32 %v6904, %v7000
        %v7002 = vpop.f32.mrb[0].mxu0
        %7003 = vmatprep.mubr.bf16.mxu0 0
        %7004 = vmatmul.mubr.bf16.gmra.mrb[0].mxu0 %v6124
        %v7005 = vpop.f32.mrb[0].mxu0
        %v7006 = vadd.f32 %v6909, %v7005
        %v7007 = vpop.f32.mrb[0].mxu0
        %v7008 = vpop.f32.mrb[0].mxu0
        %v7009 = vadd.f32 %v6912, %v7008
        %v7010 = vpop.f32.mrb[0].mxu0
        %7011 = vmatprep.mubr.bf16.mxu0 0
        %7012 = vmatmul.mubr.bf16.gmra.mrb[0].mxu0 %v6127
        %v7013 = vpop.f32.mrb[0].mxu0
        %v7014 = vadd.f32 %v6917, %v7013
        %v7015 = vpop.f32.mrb[0].mxu0
        %v7016 = vpop.f32.mrb[0].mxu0
        %v7017 = vadd.f32 %v6920, %v7016
        %v7018 = vpop.f32.mrb[0].mxu0
        %7019 = vmatprep.mubr.bf16.mxu0 0
        %7020 = vmatmul.mubr.bf16.gmra.mrb[0].mxu0 %v6130
        %v7021 = vpop.f32.mrb[0].mxu0
        %v7022 = vadd.f32 %v6925, %v7021
        %v7023 = vpop.f32.mrb[0].mxu0
        %v7024 = vpop.f32.mrb[0].mxu0
        %v7025 = vadd.f32 %v6928, %v7024
        %v7026 = vpop.f32.mrb[0].mxu0
        %7027 = vmatprep.mubr.bf16.mxu0 0
        %7028 = vmatmul.mubr.bf16.gmra.mrb[0].mxu0 %v6133
        %v7029 = vpop.f32.mrb[0].mxu0
        %v7030 = vadd.f32 %v6933, %v7029
        %v7031 = vpop.f32.mrb[0].mxu0
        %v7032 = vpop.f32.mrb[0].mxu0
        %v7033 = vadd.f32 %v6936, %v7032
        %v7034 = vpop.f32.mrb[0].mxu0
        %7035 = vmatprep.mubr.bf16.mxu0 0
        %7036 = vmatmul.mubr.bf16.gmra.mrb[0].mxu0 %v6136
        %v7037 = vpop.f32.mrb[0].mxu0
        %v7038 = vadd.f32 %v6941, %v7037
        %v7039 = vpop.f32.mrb[0].mxu0
        %v7040 = vpop.f32.mrb[0].mxu0
        %v7041 = vadd.f32 %v6944, %v7040
        %v7042 = vpop.f32.mrb[0].mxu0
        %7043 = vmatprep.mubr.bf16.mxu0 0
        %7044 = vmatmul.mubr.bf16.gmra.mrb[0].mxu0 %v6139
        %v7045 = vpop.f32.mrb[0].mxu0
        %v7046 = vadd.f32 %v6949, %v7045
        %v7047 = vpop.f32.mrb[0].mxu0
        %v7048 = vpop.f32.mrb[0].mxu0
        %v7049 = vadd.f32 %v6952, %v7048
        %v7050 = vpop.f32.mrb[0].mxu0
        %7051 = vmatprep.mubr.bf16.mxu0 0
        %7052 = vmatmul.mubr.bf16.gmra.mrb[0].mxu0 %v6142
        %v7053 = vpop.f32.mrb[0].mxu0
        %v7054 = vadd.f32 %v6957, %v7053
        %v7055 = vpop.f32.mrb[0].mxu0
        %v7056 = vpop.f32.mrb[0].mxu0
        %v7057 = vadd.f32 %v6960, %v7056
        %v7058 = vpop.f32.mrb[0].mxu0
        %7059 = vdwg.mxu0
        %7060 = vst [vmem:[%s244] sm:$0xff] %v6788
        %7061 = vst [vmem:[%s244 + $0x8] sm:$0xff] %v6790
        %7062 = vst [vmem:[%s244 + $0x10] sm:$0xff] %v6998
        %7063 = vst [vmem:[%s244 + $0x18] sm:$0xff] %v6792
        %7064 = vst [vmem:[%s244 + $0x20] sm:$0xff] %v6794
        %7065 = vst [vmem:[%s244 + $0x28] sm:$0xff] %v7001
        %7066 = vst [vmem:[%s244 + $0x30] sm:$0xff] %v6798
        %7067 = vst [vmem:[%s244 + $0x38] sm:$0xff] %v6800
        %7068 = vst [vmem:[%s244 + $0x40] sm:$0xff] %v7006
        %7069 = vst [vmem:[%s244 + $0x48] sm:$0xff] %v6802
        %7070 = vst [vmem:[%s244 + $0x50] sm:$0xff] %v6804
        %7071 = vst [vmem:[%s244 + $0x58] sm:$0xff] %v7009
        %7072 = vst [vmem:[%s244 + $0x60] sm:$0xff] %v6808
        %7073 = vst [vmem:[%s244 + $0x68] sm:$0xff] %v6810
        %7074 = vst [vmem:[%s244 + $0x70] sm:$0xff] %v7014
        %7075 = vst [vmem:[%s244 + $0x78] sm:$0xff] %v6812
        %7076 = vst [vmem:[%s244 + $0x80] sm:$0xff] %v6814
        %7077 = vst [vmem:[%s244 + $0x88] sm:$0xff] %v7017
        %7078 = vst [vmem:[%s244 + $0x90] sm:$0xff] %v6818
        %7079 = vst [vmem:[%s244 + $0x98] sm:$0xff] %v6820
        %7080 = vst [vmem:[%s244 + $0xa0] sm:$0xff] %v7022
        %7081 = vst [vmem:[%s244 + $0xa8] sm:$0xff] %v6822
        %7082 = vst [vmem:[%s244 + $0xb0] sm:$0xff] %v6824
        %7083 = vst [vmem:[%s244 + $0xb8] sm:$0xff] %v7025
        %7084 = vst [vmem:[%s244 + $0xc0] sm:$0xff] %v6828
        %7085 = vst [vmem:[%s244 + $0xc8] sm:$0xff] %v6830
        %7086 = vst [vmem:[%s244 + $0xd0] sm:$0xff] %v7030
        %7087 = vst [vmem:[%s244 + $0xd8] sm:$0xff] %v6832
        %7088 = vst [vmem:[%s244 + $0xe0] sm:$0xff] %v6834
        %7089 = vst [vmem:[%s244 + $0xe8] sm:$0xff] %v7033
        %7090 = vst [vmem:[%s244 + $0xf0] sm:$0xff] %v6838
        %7091 = vst [vmem:[%s244 + $0xf8] sm:$0xff] %v6840
        %7092 = vst [vmem:[%s244 + $0x100] sm:$0xff] %v7038
        %7093 = vst [vmem:[%s244 + $0x108] sm:$0xff] %v6842
        %7094 = vst [vmem:[%s244 + $0x110] sm:$0xff] %v6844
        %7095 = vst [vmem:[%s244 + $0x118] sm:$0xff] %v7041
        %7096 = vst [vmem:[%s244 + $0x120] sm:$0xff] %v6848
        %7097 = vst [vmem:[%s244 + $0x128] sm:$0xff] %v6850
        %7098 = vst [vmem:[%s244 + $0x130] sm:$0xff] %v7046
        %7099 = vst [vmem:[%s244 + $0x138] sm:$0xff] %v6852
        %7100 = vst [vmem:[%s244 + $0x140] sm:$0xff] %v6854
        %7101 = vst [vmem:[%s244 + $0x148] sm:$0xff] %v7049
        %7102 = vst [vmem:[%s244 + $0x150] sm:$0xff] %v6858
        %7103 = vst [vmem:[%s244 + $0x158] sm:$0xff] %v6860
        %7104 = vst [vmem:[%s244 + $0x160] sm:$0xff] %v7054
        %7105 = vst [vmem:[%s244 + $0x168] sm:$0xff] %v6862
        %7106 = vst [vmem:[%s244 + $0x170] sm:$0xff] %v6864
        %7107 = vst [vmem:[%s244 + $0x178] sm:$0xff] %v7057
        %s7108 = sand.u32 %s159, 1
        %s7109 = scalar_lea.sflag [#allocation3], %s7108
        %s7110 = sand.u32 %s159, 1
        %s7111 = smul.addr %s7110, 384
        %s7112 = scalar_lea.vmem [#allocation2], %s7111
        // Predicated region
        $region45: #{multi_head_attention.1} parent=43 // pred_check
          %p7113 = pneg %p169
        $region46: #{multi_head_attention.1} parent=43 // pred_check_branch
          %7115 = sbr.rel (%p7113) target = $region48
        $region47: #{multi_head_attention.1} parent=43 // pred_region
          %s7117 = ssub.s32 6144, 6144
          %7118 = vsyncadd %s7109, %s7117
          %s7119 = smul.addr %s20, 48
          %s7120 = smul.addr %s7119, 128
          %s7121 = scalar_lea.hbm %s6, %s7120
          %s7122 = sshll.u32 %s7112, 4
          %s7123 = int_to_ptr.vmem [resolvable:$true] %s7122
          %7128 = dma.vmem_to_hbm [thread:$0]  %s7123, 6144, %s7121, %s7109, 384, 384, 24
        $region48: #{multi_head_attention.1} parent=43 // pred_fallthru
          _
      $region44: #{multi_head_attention.1} parent=5 // pred_fallthru
        _
      %p7129 = scmp.le.s32.totalorder 2, %s15
      // Predicated region
      $region49: #{multi_head_attention.1} parent=5 // pred_check
        %p7130 = pneg %p7129
      $region50: #{multi_head_attention.1} parent=5 // pred_check_branch
        %7132 = sbr.rel (%p7130) target = $region52
      $region51: #{multi_head_attention.1} parent=5 // pred_region
        %s7133 = ssub.s32 %s15, 2
        // Predicated region
        $region53: #{multi_head_attention.1} parent=51 // pred_check
          %p7134 = pneg %p175
        $region54: #{multi_head_attention.1} parent=51 // pred_check_branch
          %7136 = sbr.rel (%p7134) target = $region56
        $region55: #{multi_head_attention.1} parent=51 // pred_region
          %s7137 = sand.u32 %s160, 1
          %s7138 = scalar_lea.sflag [#allocation3], %s7137
          %s7139 = sand.u32 %s160, 1
          %s7140 = smul.addr %s7139, 384
          %s7141 = scalar_lea.vmem [#allocation2], %s7140
          %7142 = dma.done %s7138, 6144
        $region56: #{multi_head_attention.1} parent=51 // pred_fallthru
          _
      $region52: #{multi_head_attention.1} parent=5 // pred_fallthru
        _
    $region6: #{multi_head_attention.1} parent=1 // loop_footer
      %s19 = sadd.s32 1, %s15
    $region7: #{multi_head_attention.1} parent=1 // loop_footer_branch
      %14 = sbr.rel target = $region3
    $region8: #{multi_head_attention.1} parent=1 // loop_exit
      _
    %7143 = vsyncpa [#allocation3], 1
    %s7144 = scalar_lea.sflag [#allocation3], 1
    %7145 = vsyncpa %s7144, 1

</llo_original>
